<compile_context>
chip_gen: v6e
topology: v6e:2x2x1
jax: 0.10.0
libtpu: 0.0.40
codegen_flags: <defaults>
</compile_context>

<pallas_src>
import jax
import jax.numpy as jnp
from jax.experimental import pallas as pl
from jax.experimental.pallas import tpu as pltpu


def _leaky_relu(h, slope=0.01):
    # PyTorch F.leaky_relu default negative_slope = 0.01
    return jnp.where(h > 0, h, slope * h)


def edge_mlp_kernel(hu_ref, hv_ref,
                    w1a_ref, w1b_ref, b1_ref,
                    w2_ref, b2_ref,
                    w3_ref, b3_ref,
                    w4_ref, b4_ref,
                    out_ref):
    """One tile of edges: ([TM,256], [TM,256]) -> (TM/128, 128) scores."""
    # Layer 1: split-K matmul over the two gathered halves (no concat needed).
    h = jnp.dot(hu_ref[...], w1a_ref[...], preferred_element_type=jnp.float32)
    h = h + jnp.dot(hv_ref[...], w1b_ref[...], preferred_element_type=jnp.float32)
    h = _leaky_relu(h + b1_ref[...])                          # (TM, 256) f32

    h = jnp.dot(h.astype(w2_ref.dtype), w2_ref[...],
                preferred_element_type=jnp.float32)
    h = _leaky_relu(h + b2_ref[...])                          # (TM, 128) f32

    h = jnp.dot(h.astype(w3_ref.dtype), w3_ref[...],
                preferred_element_type=jnp.float32)
    h = _leaky_relu(h + b3_ref[...])                          # (TM, 64) f32

    # Layer 4 (64 -> 1) as a lane reduction (VPU/XLU) instead of an MXU matmul
    # with one useful output column; result is lane-dense (TM/128, 128).
    tm = h.shape[0]
    h3 = h.reshape(tm // 128, 128, 64)                        # cheap leading split
    w4 = w4_ref[...]                                          # (1, 64) f32
    logit = jnp.sum(h3 * w4, axis=-1) + b4_ref[0]             # (TM/128, 128)
    out_ref[...] = jax.nn.sigmoid(logit).astype(out_ref.dtype)


def edge_regression_pallas(x, src, dst, params, *, tile_m=1024, use_bf16=True):
    """Per-edge scores: sigmoid(MLP(concat(x[src], x[dst]))).

    Args:
      x:    [N, 256] float32 node features.
      src:  [E] int32 source node ids.
      dst:  [E] int32 destination node ids.
      params: dict with w1..w4 in (in, out) layout, biases (1, out).

    Returns:
      scores: [E, 1] float32.
    """
    if tile_m % 1024 != 0:
        raise ValueError("tile_m must be a multiple of 1024")

    E = src.shape[0]
    F = x.shape[1]                                    # 256
    mm_dtype = jnp.bfloat16 if use_bf16 else jnp.float32

    # Gather (XLA) — concat is avoided entirely (w1 split below).
    h_u = x[src].astype(mm_dtype)                     # (E, 256)
    h_v = x[dst].astype(mm_dtype)                     # (E, 256)

    E_pad = pl.cdiv(E, tile_m) * tile_m
    if E_pad != E:
        pad = ((0, E_pad - E), (0, 0))
        h_u = jnp.pad(h_u, pad)
        h_v = jnp.pad(h_v, pad)

    w1 = params["w1"]
    w1a = w1[:F].astype(mm_dtype)                     # (256, 256) — multiplies x[src]
    w1b = w1[F:].astype(mm_dtype)                     # (256, 256) — multiplies x[dst]
    b1 = params["b1"].astype(jnp.float32)             # (1, 256)
    w2 = params["w2"].astype(mm_dtype)                # (256, 128)
    b2 = params["b2"].astype(jnp.float32)             # (1, 128)
    w3 = params["w3"].astype(mm_dtype)                # (128, 64)
    b3 = params["b3"].astype(jnp.float32)             # (1, 64)
    w4 = params["w4"].reshape(1, -1).astype(jnp.float32)   # (1, 64) row
    b4 = params["b4"].reshape(-1).astype(jnp.float32)      # (1,) SMEM scalar

    rows_out = tile_m // 128
    full = lambda i: (0, 0)   # weights/bias: same (whole) block for every step

    flops = 2 * E_pad * (F * 256 * 2 + 256 * 128 + 128 * 64 + 64)
    bytes_accessed = (
        (h_u.size + h_v.size) * h_u.dtype.itemsize
        + sum(a.size * a.dtype.itemsize
              for a in (w1a, w1b, b1, w2, b2, w3, b3, w4, b4))
        + E_pad * 4)

    out = pl.pallas_call(
        edge_mlp_kernel,
        out_shape=jax.ShapeDtypeStruct((E_pad // 128, 128), jnp.float32),
        grid_spec=pltpu.PrefetchScalarGridSpec(
            num_scalar_prefetch=0,
            grid=(E_pad // tile_m,),
            in_specs=[
                pl.BlockSpec((tile_m, F), lambda i: (i, 0)),   # x[src] tile
                pl.BlockSpec((tile_m, F), lambda i: (i, 0)),   # x[dst] tile
                pl.BlockSpec((F, 256), full),                  # w1a
                pl.BlockSpec((F, 256), full),                  # w1b
                pl.BlockSpec((1, 256), full),                  # b1
                pl.BlockSpec((256, 128), full),                # w2
                pl.BlockSpec((1, 128), full),                  # b2
                pl.BlockSpec((128, 64), full),                 # w3
                pl.BlockSpec((1, 64), full),                   # b3
                pl.BlockSpec((1, 64), full),                   # w4 row
                pl.BlockSpec(memory_space=pltpu.MemorySpace.SMEM),  # b4 scalar
            ],
            out_specs=pl.BlockSpec((rows_out, 128), lambda i: (i, 0)),
        ),
        compiler_params=pltpu.CompilerParams(
            dimension_semantics=("parallel",),
            vmem_limit_bytes=32 * 1024 * 1024),
        cost_estimate=pl.CostEstimate(
            flops=int(flops),
            transcendentals=int(E_pad),
            bytes_accessed=int(bytes_accessed)),
    )(h_u, h_v, w1a, w1b, b1, w2, b2, w3, b3, w4, b4)

    # Lane-dense (E_pad/128, 128) -> (E, 1); row-major flatten recovers edge order.
    return out.reshape(E_pad, 1)[:E]


def init_params(key):
    """Deterministic init matching nn.Linear shapes (stored as (in, out))."""
    dims = [(512, 256), (256, 128), (128, 64), (64, 1)]
    params = {}
    for idx, (fin, fout) in enumerate(dims, start=1):
        key, kw, kb = jax.random.split(key, 3)
        bound = 1.0 / (fin ** 0.5)
        # PyTorch Linear stores weight as (out, in); we store transposed (in, out).
        params[f"w{idx}"] = jax.random.uniform(
            kw, (fin, fout), jnp.float32, -bound, bound)
        params[f"b{idx}"] = jax.random.uniform(
            kb, (1, fout), jnp.float32, -bound, bound)
    return params


def edge_regression_ref(x, src, dst, params):
    """Pure-JAX reference for correctness checking."""
    h = jnp.concatenate([x[src], x[dst]], axis=1)
    h = _leaky_relu(h @ params["w1"] + params["b1"])
    h = _leaky_relu(h @ params["w2"] + params["b2"])
    h = _leaky_relu(h @ params["w3"] + params["b3"])
    h = h @ params["w4"] + params["b4"]
    return jax.nn.sigmoid(h)


if __name__ == "__main__":
    key = jax.random.PRNGKey(0)
    k_param, k_x, k_src, k_dst = jax.random.split(key, 4)

    N = 16        # nodes
    E = 8         # edges
    F = 256       # per-node feature dim (MLP input is 2*F = 512)

    params = init_params(k_param)
    x = jax.random.normal(k_x, (N, F), jnp.float32)
    src = jax.random.randint(k_src, (E,), 0, N, jnp.int32)
    dst = jax.random.randint(k_dst, (E,), 0, N, jnp.int32)

    ref = edge_regression_ref(x, src, dst, params)

    # f32 path: tight check of structural correctness.
    scores_f32 = edge_regression_pallas(x, src, dst, params, use_bf16=False)
    scores_f32 = jax.block_until_ready(scores_f32)
    assert scores_f32.shape == (E, 1)
    assert jnp.allclose(scores_f32, ref, atol=1e-5, rtol=1e-5)

    # bf16 path (default / perf path): relaxed tolerance.
    scores = edge_regression_pallas(x, src, dst, params)
    scores = jax.block_until_ready(scores)
    assert scores.shape == (E, 1)
    assert jnp.allclose(scores, ref, atol=2e-2, rtol=2e-2)

    print("KERNEL_OK")
</pallas_src>

<mosaic_0001>
module attributes {stable_mosaic.version = 11 : i64} {
  func.func @edge_mlp_kernel(%arg0: i32, %arg1: memref<1024x256xf32, #tpu.memory_space<vmem>>, %arg2: memref<1024x256xf32, #tpu.memory_space<vmem>>, %arg3: memref<256x256xf32, #tpu.memory_space<vmem>>, %arg4: memref<256x256xf32, #tpu.memory_space<vmem>>, %arg5: memref<1x256xf32, #tpu.memory_space<vmem>>, %arg6: memref<256x128xf32, #tpu.memory_space<vmem>>, %arg7: memref<1x128xf32, #tpu.memory_space<vmem>>, %arg8: memref<128x64xf32, #tpu.memory_space<vmem>>, %arg9: memref<1x64xf32, #tpu.memory_space<vmem>>, %arg10: memref<1x64xf32, #tpu.memory_space<vmem>>, %arg11: memref<1xf32, #tpu.memory_space<smem>>, %arg12: memref<8x128xf32, #tpu.memory_space<vmem>>) attributes {dimension_semantics = [#tpu.dimension_semantics<parallel>], iteration_bounds = array<i64: 1>, scalar_prefetch = 0 : i64, scratch_operands = 0 : i64, tpu.core_type = #tpu.core_type<tc>, window_params = [{transform_indices = @transform_0, window_bounds = array<i64: 1024, 256>}, {transform_indices = @transform_1, window_bounds = array<i64: 1024, 256>}, {pipeline_mode = #tpu.pipeline_mode<synchronous>, transform_indices = @transform_2, window_bounds = array<i64: 256, 256>}, {pipeline_mode = #tpu.pipeline_mode<synchronous>, transform_indices = @transform_3, window_bounds = array<i64: 256, 256>}, {pipeline_mode = #tpu.pipeline_mode<synchronous>, transform_indices = @transform_4, window_bounds = array<i64: 1, 256>}, {pipeline_mode = #tpu.pipeline_mode<synchronous>, transform_indices = @transform_5, window_bounds = array<i64: 256, 128>}, {pipeline_mode = #tpu.pipeline_mode<synchronous>, transform_indices = @transform_6, window_bounds = array<i64: 1, 128>}, {pipeline_mode = #tpu.pipeline_mode<synchronous>, transform_indices = @transform_7, window_bounds = array<i64: 128, 64>}, {pipeline_mode = #tpu.pipeline_mode<synchronous>, transform_indices = @transform_8, window_bounds = array<i64: 1, 64>}, {pipeline_mode = #tpu.pipeline_mode<synchronous>, transform_indices = @transform_9, window_bounds = array<i64: 1, 64>}, {transform_indices = @transform_10, window_bounds = array<i64: 1>}, {transform_indices = @transform_11, window_bounds = array<i64: 8, 128>}]} {
    %c0 = arith.constant 0 : index
    %c0_0 = arith.constant 0 : index
    %0 = vector.load %arg1[%c0, %c0_0] : memref<1024x256xf32, #tpu.memory_space<vmem>>, vector<1024x256xf32>
    %c0_1 = arith.constant 0 : index
    %c0_2 = arith.constant 0 : index
    %1 = vector.load %arg3[%c0_1, %c0_2] : memref<256x256xf32, #tpu.memory_space<vmem>>, vector<256x256xf32>
    %cst = arith.constant dense<0.000000e+00> : vector<1024x256xf32>
    %2 = tpu.matmul %0, %1, %cst {dimension_numbers = #tpu.dot_dimension_numbers<[1], [0], [0], [1], [0, 0, 1, 1], [], []>} : vector<1024x256xf32>, vector<256x256xf32>, vector<1024x256xf32> -> vector<1024x256xf32>
    %c0_3 = arith.constant 0 : index
    %c0_4 = arith.constant 0 : index
    %3 = vector.load %arg2[%c0_3, %c0_4] : memref<1024x256xf32, #tpu.memory_space<vmem>>, vector<1024x256xf32>
    %c0_5 = arith.constant 0 : index
    %c0_6 = arith.constant 0 : index
    %4 = vector.load %arg4[%c0_5, %c0_6] : memref<256x256xf32, #tpu.memory_space<vmem>>, vector<256x256xf32>
    %cst_7 = arith.constant dense<0.000000e+00> : vector<1024x256xf32>
    %5 = tpu.matmul %3, %4, %cst_7 {dimension_numbers = #tpu.dot_dimension_numbers<[1], [0], [0], [1], [0, 0, 1, 1], [], []>} : vector<1024x256xf32>, vector<256x256xf32>, vector<1024x256xf32> -> vector<1024x256xf32>
    %6 = arith.addf %2, %5 : vector<1024x256xf32>
    %c0_8 = arith.constant 0 : index
    %c0_9 = arith.constant 0 : index
    %7 = vector.load %arg5[%c0_8, %c0_9] : memref<1x256xf32, #tpu.memory_space<vmem>>, vector<1x256xf32>
    %8 = vector.broadcast %7 : vector<1x256xf32> to vector<1024x256xf32>
    %9 = arith.addf %6, %8 : vector<1024x256xf32>
    %cst_10 = arith.constant 0.000000e+00 : f32
    %10 = vector.broadcast %cst_10 : f32 to vector<1024x256xf32>
    %11 = arith.cmpf ogt, %9, %10 : vector<1024x256xf32>
    %cst_11 = arith.constant 0.00999999977 : f32
    %12 = vector.broadcast %cst_11 : f32 to vector<1024x256xf32>
    %13 = arith.mulf %12, %9 : vector<1024x256xf32>
    %14 = arith.select %11, %9, %13 : vector<1024x256xi1>, vector<1024x256xf32>
    %c0_12 = arith.constant 0 : index
    %c0_13 = arith.constant 0 : index
    %15 = vector.load %arg6[%c0_12, %c0_13] : memref<256x128xf32, #tpu.memory_space<vmem>>, vector<256x128xf32>
    %cst_14 = arith.constant dense<0.000000e+00> : vector<1024x128xf32>
    %16 = tpu.matmul %14, %15, %cst_14 {dimension_numbers = #tpu.dot_dimension_numbers<[1], [0], [0], [1], [0, 0, 1, 1], [], []>} : vector<1024x256xf32>, vector<256x128xf32>, vector<1024x128xf32> -> vector<1024x128xf32>
    %c0_15 = arith.constant 0 : index
    %c0_16 = arith.constant 0 : index
    %17 = vector.load %arg7[%c0_15, %c0_16] : memref<1x128xf32, #tpu.memory_space<vmem>>, vector<1x128xf32>
    %18 = vector.broadcast %17 : vector<1x128xf32> to vector<1024x128xf32>
    %19 = arith.addf %16, %18 : vector<1024x128xf32>
    %cst_17 = arith.constant 0.000000e+00 : f32
    %20 = vector.broadcast %cst_17 : f32 to vector<1024x128xf32>
    %21 = arith.cmpf ogt, %19, %20 : vector<1024x128xf32>
    %cst_18 = arith.constant 0.00999999977 : f32
    %22 = vector.broadcast %cst_18 : f32 to vector<1024x128xf32>
    %23 = arith.mulf %22, %19 : vector<1024x128xf32>
    %24 = arith.select %21, %19, %23 : vector<1024x128xi1>, vector<1024x128xf32>
    %c0_19 = arith.constant 0 : index
    %c0_20 = arith.constant 0 : index
    %25 = vector.load %arg8[%c0_19, %c0_20] : memref<128x64xf32, #tpu.memory_space<vmem>>, vector<128x64xf32>
    %cst_21 = arith.constant dense<0.000000e+00> : vector<1024x64xf32>
    %26 = tpu.matmul %24, %25, %cst_21 {dimension_numbers = #tpu.dot_dimension_numbers<[1], [0], [0], [1], [0, 0, 1, 1], [], []>} : vector<1024x128xf32>, vector<128x64xf32>, vector<1024x64xf32> -> vector<1024x64xf32>
    %c0_22 = arith.constant 0 : index
    %c0_23 = arith.constant 0 : index
    %27 = vector.load %arg9[%c0_22, %c0_23] : memref<1x64xf32, #tpu.memory_space<vmem>>, vector<1x64xf32>
    %28 = vector.broadcast %27 : vector<1x64xf32> to vector<1024x64xf32>
    %29 = arith.addf %26, %28 : vector<1024x64xf32>
    %cst_24 = arith.constant 0.000000e+00 : f32
    %30 = vector.broadcast %cst_24 : f32 to vector<1024x64xf32>
    %31 = arith.cmpf ogt, %29, %30 : vector<1024x64xf32>
    %cst_25 = arith.constant 0.00999999977 : f32
    %32 = vector.broadcast %cst_25 : f32 to vector<1024x64xf32>
    %33 = arith.mulf %32, %29 : vector<1024x64xf32>
    %34 = arith.select %31, %29, %33 : vector<1024x64xi1>, vector<1024x64xf32>
    %35 = vector.shape_cast %34 : vector<1024x64xf32> to vector<8x128x64xf32>
    %c0_26 = arith.constant 0 : index
    %c0_27 = arith.constant 0 : index
    %36 = vector.load %arg10[%c0_26, %c0_27] : memref<1x64xf32, #tpu.memory_space<vmem>>, vector<1x64xf32>
    %37 = vector.shape_cast %36 : vector<1x64xf32> to vector<1x1x64xf32>
    %38 = vector.broadcast %37 : vector<1x1x64xf32> to vector<8x128x64xf32>
    %39 = arith.mulf %35, %38 : vector<8x128x64xf32>
    %cst_28 = arith.constant dense<0.000000e+00> : vector<8x128xf32>
    %40 = vector.multi_reduction <add>, %39, %cst_28 [2] : vector<8x128x64xf32> to vector<8x128xf32>
    %c0_29 = arith.constant 0 : index
    %41 = memref.load %arg11[%c0_29] : memref<1xf32, #tpu.memory_space<smem>>
    %42 = vector.broadcast %41 : f32 to vector<8x128xf32>
    %43 = arith.addf %40, %42 : vector<8x128xf32>
    %44 = arith.negf %43 : vector<8x128xf32>
    %45 = math.exp %44 : vector<8x128xf32>
    %cst_30 = arith.constant 1.000000e+00 : f32
    %46 = vector.broadcast %cst_30 : f32 to vector<8x128xf32>
    %47 = arith.addf %46, %45 : vector<8x128xf32>
    %48 = arith.divf %46, %47 : vector<8x128xf32>
    %c0_31 = arith.constant 0 : index
    %c0_32 = arith.constant 0 : index
    %49 = vector.load %arg12[%c0_31, %c0_32] : memref<8x128xf32, #tpu.memory_space<vmem>>, vector<8x128xf32>
    tpu.vector_store %arg12[%c0_31, %c0_32], %48 {strides = array<i32>} : memref<8x128xf32, #tpu.memory_space<vmem>>, vector<8x128xf32>,
    return
  }
  func.func @transform_0(%arg0: i32) -> (i32, i32) {
    %c0_i32 = arith.constant 0 : i32
    %c0_i32_0 = arith.constant 0 : i32
    return %arg0, %c0_i32 : i32, i32
  }
  func.func @transform_1(%arg0: i32) -> (i32, i32) {
    %c0_i32 = arith.constant 0 : i32
    %c0_i32_0 = arith.constant 0 : i32
    return %arg0, %c0_i32 : i32, i32
  }
  func.func @transform_2(%arg0: i32) -> (i32, i32) {
    %c0_i32 = arith.constant 0 : i32
    %c0_i32_0 = arith.constant 0 : i32
    %c0_i32_1 = arith.constant 0 : i32
    return %c0_i32, %c0_i32_0 : i32, i32
  }
  func.func @transform_3(%arg0: i32) -> (i32, i32) {
    %c0_i32 = arith.constant 0 : i32
    %c0_i32_0 = arith.constant 0 : i32
    %c0_i32_1 = arith.constant 0 : i32
    return %c0_i32, %c0_i32_0 : i32, i32
  }
  func.func @transform_4(%arg0: i32) -> (i32, i32) {
    %c0_i32 = arith.constant 0 : i32
    %c0_i32_0 = arith.constant 0 : i32
    %c0_i32_1 = arith.constant 0 : i32
    return %c0_i32, %c0_i32_0 : i32, i32
  }
  func.func @transform_5(%arg0: i32) -> (i32, i32) {
    %c0_i32 = arith.constant 0 : i32
    %c0_i32_0 = arith.constant 0 : i32
    %c0_i32_1 = arith.constant 0 : i32
    return %c0_i32, %c0_i32_0 : i32, i32
  }
  func.func @transform_6(%arg0: i32) -> (i32, i32) {
    %c0_i32 = arith.constant 0 : i32
    %c0_i32_0 = arith.constant 0 : i32
    %c0_i32_1 = arith.constant 0 : i32
    return %c0_i32, %c0_i32_0 : i32, i32
  }
  func.func @transform_7(%arg0: i32) -> (i32, i32) {
    %c0_i32 = arith.constant 0 : i32
    %c0_i32_0 = arith.constant 0 : i32
    %c0_i32_1 = arith.constant 0 : i32
    return %c0_i32, %c0_i32_0 : i32, i32
  }
  func.func @transform_8(%arg0: i32) -> (i32, i32) {
    %c0_i32 = arith.constant 0 : i32
    %c0_i32_0 = arith.constant 0 : i32
    %c0_i32_1 = arith.constant 0 : i32
    return %c0_i32, %c0_i32_0 : i32, i32
  }
  func.func @transform_9(%arg0: i32) -> (i32, i32) {
    %c0_i32 = arith.constant 0 : i32
    %c0_i32_0 = arith.constant 0 : i32
    %c0_i32_1 = arith.constant 0 : i32
    return %c0_i32, %c0_i32_0 : i32, i32
  }
  func.func @transform_10(%arg0: i32) -> i32 {
    %c0_i32 = arith.constant 0 : i32
    %c0_i32_0 = arith.constant 0 : i32
    return %c0_i32 : i32
  }
  func.func @transform_11(%arg0: i32) -> (i32, i32) {
    %c0_i32 = arith.constant 0 : i32
    %c0_i32_0 = arith.constant 0 : i32
    return %arg0, %c0_i32 : i32, i32
  }
}

</mosaic_0001>

<llo_original>
// kernel: tpu_custom_call.1
$region0: #{tpu_custom_call.1}
  #allocation0 [shape = 'u32[]', space=smem, size = 0x4, offset = 0x4, fixed_abs, tag = 'smem constant byte address 0x4 - core index']
  #allocation1 [shape = 'u32[144,128]{1,0:T(1,128)}', space=vmem, size = 0x12000, scoped, tag = 'internal scratch']
  #allocation2 [shape = 'f32[1]{0:T(128)S(6)}', space=smem, size = 0x200, scoped, tag = 'scoped memory for tpu_custom_call.1']
  %s0 = inlined_call_operand.hbm [shape: f32[1024,256], index: 0, kind: input, shape index: {}]
  %s1 = inlined_call_operand.hbm [shape: f32[1024,256], index: 1, kind: input, shape index: {}]
  %s2 = inlined_call_operand.hbm [shape: f32[256,256], index: 2, kind: input, shape index: {}]
  %s3 = inlined_call_operand.hbm [shape: f32[256,256], index: 3, kind: input, shape index: {}]
  %s4 = inlined_call_operand.vmem [shape: f32[1,256], index: 4, kind: input, shape index: {}]
  %s5 = inlined_call_operand.hbm [shape: f32[256,128], index: 5, kind: input, shape index: {}]
  %s6 = inlined_call_operand.vmem [shape: f32[1,128], index: 6, kind: input, shape index: {}]
  %s7 = inlined_call_operand.vmem [shape: f32[128,64], index: 7, kind: input, shape index: {}]
  %s8 = inlined_call_operand.vmem [shape: f32[1,64], index: 8, kind: input, shape index: {}]
  %s9 = inlined_call_operand.vmem [shape: f32[1,64], index: 9, kind: input, shape index: {}]
  %s10 = inlined_call_operand.<no memory space> [shape: f32[1], index: 10, kind: input, shape index: {}]
  %s11 = inlined_call_operand.hbm [shape: f32[8,128], index: 11, kind: output, shape index: {}]
  %s12 = sld [smem:[#allocation0]]
  $region74: #{tpu_custom_call.1} parent=0
    _
  %s14 = ssub.s32 1, %s12
  %s15 = scalar_select 0, %s14, %s12
  %16 = sst [smem:[#allocation2]] %s10
  $region1: #{tpu_custom_call.1} parent=0
    #allocation3 [shape = 'u8[1048576]{0}', space=vmem, size = 0x100000, scoped, tag = 'input window, operand 0, single buffered']
    #allocation4 [shape = 's32[1]{0}', space=sflag, size = 0x4, scoped, tag = 'scoped memory for tpu_custom_call.1']
    #allocation5 [shape = 's32[1]{0}', space=sflag, size = 0x4, scoped, tag = 'scoped memory for tpu_custom_call.1']
    #allocation6 [shape = 'u8[1048576]{0}', space=vmem, size = 0x100000, scoped, tag = 'input window, operand 1, single buffered']
    #allocation7 [shape = 's32[1]{0}', space=sflag, size = 0x4, scoped, tag = 'scoped memory for tpu_custom_call.1']
    #allocation8 [shape = 'u8[262144]{0}', space=vmem, size = 0x40000, scoped, tag = 'input window, operand 2, single buffered']
    #allocation9 [shape = 'u8[262144]{0}', space=vmem, size = 0x40000, scoped, tag = 'input window, operand 3, single buffered']
    #allocation10 [shape = 's32[1]{0}', space=sflag, size = 0x4, scoped, tag = 'scoped memory for tpu_custom_call.1']
    #allocation11 [shape = 'u8[131072]{0}', space=vmem, size = 0x20000, scoped, tag = 'input window, operand 5, single buffered']
    #allocation12 [shape = 'u8[4096]{0}', space=vmem, size = 0x1000, scoped, tag = 'output window, operand 0, single buffered']
    %17 = vsyncpa [#allocation4], 0
    %18 = vsyncpa [#allocation7], 0
    %19 = vsyncpa [#allocation10], 0
    %20 = vsyncpa [#allocation5], 0
    // Predicated region
    $region2: #{tpu_custom_call.1} parent=1 // pred_check
      _
    $region3: #{tpu_custom_call.1} parent=1 // pred_check_branch
      %22 = sbr.rel (0) target = $region5
    $region4: #{tpu_custom_call.1} parent=1 // pred_region
      %s24 = ssub.s32 32768, 32768
      %25 = vsyncadd [#allocation4], %s24
      %s26 = sshll.u32 [#allocation3], 4
      %s27 = int_to_ptr.vmem [resolvable:$true] %s26
      %32 = dma.hbm_to_vmem [thread:$0]  %s0, 32768, %s27, [#allocation4], 256, 256, 16
    $region5: #{tpu_custom_call.1} parent=1 // pred_fallthru
      _
    // Predicated region
    $region6: #{tpu_custom_call.1} parent=1 // pred_check
      _
    $region7: #{tpu_custom_call.1} parent=1 // pred_check_branch
      %34 = sbr.rel (0) target = $region9
    $region8: #{tpu_custom_call.1} parent=1 // pred_region
      %s36 = ssub.s32 32768, 32768
      %37 = vsyncadd [#allocation7], %s36
      %s38 = sshll.u32 [#allocation6], 4
      %s39 = int_to_ptr.vmem [resolvable:$true] %s38
      %44 = dma.hbm_to_vmem [thread:$0]  %s1, 32768, %s39, [#allocation7], 256, 256, 16
    $region9: #{tpu_custom_call.1} parent=1 // pred_fallthru
      _
    // Predicated region
    $region10: #{tpu_custom_call.1} parent=1 // pred_check
      _
    $region11: #{tpu_custom_call.1} parent=1 // pred_check_branch
      %46 = sbr.rel (0) target = $region13
    $region12: #{tpu_custom_call.1} parent=1 // pred_region
      %s48 = ssub.s32 8192, 8192
      %49 = vsyncadd [#allocation7], %s48
      %s50 = sshll.u32 [#allocation8], 4
      %s51 = int_to_ptr.vmem [resolvable:$true] %s50
      %56 = dma.hbm_to_vmem [thread:$0]  %s2, 8192, %s51, [#allocation7], 256, 256, 16
    $region13: #{tpu_custom_call.1} parent=1 // pred_fallthru
      _
    // Predicated region
    $region14: #{tpu_custom_call.1} parent=1 // pred_check
      _
    $region15: #{tpu_custom_call.1} parent=1 // pred_check_branch
      %58 = sbr.rel (0) target = $region17
    $region16: #{tpu_custom_call.1} parent=1 // pred_region
      %s60 = ssub.s32 8192, 8192
      %61 = vsyncadd [#allocation10], %s60
      %s62 = sshll.u32 [#allocation9], 4
      %s63 = int_to_ptr.vmem [resolvable:$true] %s62
      %68 = dma.hbm_to_vmem [thread:$0]  %s3, 8192, %s63, [#allocation10], 256, 256, 16
    $region17: #{tpu_custom_call.1} parent=1 // pred_fallthru
      _
    // Predicated region
    $region18: #{tpu_custom_call.1} parent=1 // pred_check
      _
    $region19: #{tpu_custom_call.1} parent=1 // pred_check_branch
      %70 = sbr.rel (0) target = $region21
    $region20: #{tpu_custom_call.1} parent=1 // pred_region
      _
    $region21: #{tpu_custom_call.1} parent=1 // pred_fallthru
      _
    // Predicated region
    $region22: #{tpu_custom_call.1} parent=1 // pred_check
      _
    $region23: #{tpu_custom_call.1} parent=1 // pred_check_branch
      %72 = sbr.rel (0) target = $region25
    $region24: #{tpu_custom_call.1} parent=1 // pred_region
      %s74 = ssub.s32 4096, 4096
      %75 = vsyncadd [#allocation10], %s74
      %s76 = sshll.u32 [#allocation11], 4
      %s77 = int_to_ptr.vmem [resolvable:$true] %s76
      %82 = dma.hbm_to_vmem [thread:$0]  %s5, 4096, %s77, [#allocation10], 128, 128, 8
    $region25: #{tpu_custom_call.1} parent=1 // pred_fallthru
      _
    // Predicated region
    $region26: #{tpu_custom_call.1} parent=1 // pred_check
      _
    $region27: #{tpu_custom_call.1} parent=1 // pred_check_branch
      %84 = sbr.rel (0) target = $region29
    $region28: #{tpu_custom_call.1} parent=1 // pred_region
      _
    $region29: #{tpu_custom_call.1} parent=1 // pred_fallthru
      _
    // Predicated region
    $region30: #{tpu_custom_call.1} parent=1 // pred_check
      _
    $region31: #{tpu_custom_call.1} parent=1 // pred_check_branch
      %86 = sbr.rel (0) target = $region33
    $region32: #{tpu_custom_call.1} parent=1 // pred_region
      _
    $region33: #{tpu_custom_call.1} parent=1 // pred_fallthru
      _
    // Predicated region
    $region34: #{tpu_custom_call.1} parent=1 // pred_check
      _
    $region35: #{tpu_custom_call.1} parent=1 // pred_check_branch
      %88 = sbr.rel (0) target = $region37
    $region36: #{tpu_custom_call.1} parent=1 // pred_region
      _
    $region37: #{tpu_custom_call.1} parent=1 // pred_fallthru
      _
    // Predicated region
    $region38: #{tpu_custom_call.1} parent=1 // pred_check
      _
    $region39: #{tpu_custom_call.1} parent=1 // pred_check_branch
      %90 = sbr.rel (0) target = $region41
    $region40: #{tpu_custom_call.1} parent=1 // pred_region
      _
    $region41: #{tpu_custom_call.1} parent=1 // pred_fallthru
      _
    // Predicated region
    $region42: #{tpu_custom_call.1} parent=1 // pred_check
      _
    $region43: #{tpu_custom_call.1} parent=1 // pred_check_branch
      %92 = sbr.rel (0) target = $region45
    $region44: #{tpu_custom_call.1} parent=1 // pred_region
      _
    $region45: #{tpu_custom_call.1} parent=1 // pred_fallthru
      _
    // Predicated region
    $region46: #{tpu_custom_call.1} parent=1 // pred_check
      _
    $region47: #{tpu_custom_call.1} parent=1 // pred_check_branch
      %94 = sbr.rel (0) target = $region49
    $region48: #{tpu_custom_call.1} parent=1 // pred_region
      %95 = dma.done [#allocation4], 32768
    $region49: #{tpu_custom_call.1} parent=1 // pred_fallthru
      _
    // Predicated region
    $region50: #{tpu_custom_call.1} parent=1 // pred_check
      _
    $region51: #{tpu_custom_call.1} parent=1 // pred_check_branch
      %97 = sbr.rel (0) target = $region53
    $region52: #{tpu_custom_call.1} parent=1 // pred_region
      %98 = dma.done [#allocation7], 32768
    $region53: #{tpu_custom_call.1} parent=1 // pred_fallthru
      _
    // Predicated region
    $region54: #{tpu_custom_call.1} parent=1 // pred_check
      _
    $region55: #{tpu_custom_call.1} parent=1 // pred_check_branch
      %100 = sbr.rel (0) target = $region57
    $region56: #{tpu_custom_call.1} parent=1 // pred_region
      %101 = dma.done [#allocation7], 8192
    $region57: #{tpu_custom_call.1} parent=1 // pred_fallthru
      _
    // Predicated region
    $region58: #{tpu_custom_call.1} parent=1 // pred_check
      _
    $region59: #{tpu_custom_call.1} parent=1 // pred_check_branch
      %103 = sbr.rel (0) target = $region61
    $region60: #{tpu_custom_call.1} parent=1 // pred_region
      %104 = dma.done [#allocation10], 8192
    $region61: #{tpu_custom_call.1} parent=1 // pred_fallthru
      _
    // Predicated region
    $region62: #{tpu_custom_call.1} parent=1 // pred_check
      _
    $region63: #{tpu_custom_call.1} parent=1 // pred_check_branch
      %106 = sbr.rel (0) target = $region65
    $region64: #{tpu_custom_call.1} parent=1 // pred_region
      %107 = dma.done [#allocation10], 4096
    $region65: #{tpu_custom_call.1} parent=1 // pred_fallthru
      _
    %v108 = vld [vmem:[#allocation3] sm:$0xff]
    %v109 = vld [vmem:[#allocation3 + $0x8] sm:$0xff]
    %v110 = vld [vmem:[#allocation3 + $0x10] sm:$0xff]
    %v111 = vld [vmem:[#allocation3 + $0x18] sm:$0xff]
    %v112 = vld [vmem:[#allocation3 + $0x20] sm:$0xff]
    %v113 = vld [vmem:[#allocation3 + $0x28] sm:$0xff]
    %v114 = vld [vmem:[#allocation3 + $0x30] sm:$0xff]
    %v115 = vld [vmem:[#allocation3 + $0x38] sm:$0xff]
    %v116 = vld [vmem:[#allocation3 + $0x40] sm:$0xff]
    %v117 = vld [vmem:[#allocation3 + $0x48] sm:$0xff]
    %v118 = vld [vmem:[#allocation3 + $0x50] sm:$0xff]
    %v119 = vld [vmem:[#allocation3 + $0x58] sm:$0xff]
    %v120 = vld [vmem:[#allocation3 + $0x60] sm:$0xff]
    %v121 = vld [vmem:[#allocation3 + $0x68] sm:$0xff]
    %v122 = vld [vmem:[#allocation3 + $0x70] sm:$0xff]
    %v123 = vld [vmem:[#allocation3 + $0x78] sm:$0xff]
    %v124 = vld [vmem:[#allocation3 + $0x80] sm:$0xff]
    %v125 = vld [vmem:[#allocation3 + $0x88] sm:$0xff]
    %v126 = vld [vmem:[#allocation3 + $0x90] sm:$0xff]
    %v127 = vld [vmem:[#allocation3 + $0x98] sm:$0xff]
    %v128 = vld [vmem:[#allocation3 + $0xa0] sm:$0xff]
    %v129 = vld [vmem:[#allocation3 + $0xa8] sm:$0xff]
    %v130 = vld [vmem:[#allocation3 + $0xb0] sm:$0xff]
    %v131 = vld [vmem:[#allocation3 + $0xb8] sm:$0xff]
    %v132 = vld [vmem:[#allocation3 + $0xc0] sm:$0xff]
    %v133 = vld [vmem:[#allocation3 + $0xc8] sm:$0xff]
    %v134 = vld [vmem:[#allocation3 + $0xd0] sm:$0xff]
    %v135 = vld [vmem:[#allocation3 + $0xd8] sm:$0xff]
    %v136 = vld [vmem:[#allocation3 + $0xe0] sm:$0xff]
    %v137 = vld [vmem:[#allocation3 + $0xe8] sm:$0xff]
    %v138 = vld [vmem:[#allocation3 + $0xf0] sm:$0xff]
    %v139 = vld [vmem:[#allocation3 + $0xf8] sm:$0xff]
    %v140 = vld [vmem:[#allocation3 + $0x100] sm:$0xff]
    %v141 = vld [vmem:[#allocation3 + $0x108] sm:$0xff]
    %v142 = vld [vmem:[#allocation3 + $0x110] sm:$0xff]
    %v143 = vld [vmem:[#allocation3 + $0x118] sm:$0xff]
    %v144 = vld [vmem:[#allocation3 + $0x120] sm:$0xff]
    %v145 = vld [vmem:[#allocation3 + $0x128] sm:$0xff]
    %v146 = vld [vmem:[#allocation3 + $0x130] sm:$0xff]
    %v147 = vld [vmem:[#allocation3 + $0x138] sm:$0xff]
    %v148 = vld [vmem:[#allocation3 + $0x140] sm:$0xff]
    %v149 = vld [vmem:[#allocation3 + $0x148] sm:$0xff]
    %v150 = vld [vmem:[#allocation3 + $0x150] sm:$0xff]
    %v151 = vld [vmem:[#allocation3 + $0x158] sm:$0xff]
    %v152 = vld [vmem:[#allocation3 + $0x160] sm:$0xff]
    %v153 = vld [vmem:[#allocation3 + $0x168] sm:$0xff]
    %v154 = vld [vmem:[#allocation3 + $0x170] sm:$0xff]
    %v155 = vld [vmem:[#allocation3 + $0x178] sm:$0xff]
    %v156 = vld [vmem:[#allocation3 + $0x180] sm:$0xff]
    %v157 = vld [vmem:[#allocation3 + $0x188] sm:$0xff]
    %v158 = vld [vmem:[#allocation3 + $0x190] sm:$0xff]
    %v159 = vld [vmem:[#allocation3 + $0x198] sm:$0xff]
    %v160 = vld [vmem:[#allocation3 + $0x1a0] sm:$0xff]
    %v161 = vld [vmem:[#allocation3 + $0x1a8] sm:$0xff]
    %v162 = vld [vmem:[#allocation3 + $0x1b0] sm:$0xff]
    %v163 = vld [vmem:[#allocation3 + $0x1b8] sm:$0xff]
    %v164 = vld [vmem:[#allocation3 + $0x1c0] sm:$0xff]
    %v165 = vld [vmem:[#allocation3 + $0x1c8] sm:$0xff]
    %v166 = vld [vmem:[#allocation3 + $0x1d0] sm:$0xff]
    %v167 = vld [vmem:[#allocation3 + $0x1d8] sm:$0xff]
    %v168 = vld [vmem:[#allocation3 + $0x1e0] sm:$0xff]
    %v169 = vld [vmem:[#allocation3 + $0x1e8] sm:$0xff]
    %v170 = vld [vmem:[#allocation3 + $0x1f0] sm:$0xff]
    %v171 = vld [vmem:[#allocation3 + $0x1f8] sm:$0xff]
    %v172 = vld [vmem:[#allocation3 + $0x200] sm:$0xff]
    %v173 = vld [vmem:[#allocation3 + $0x208] sm:$0xff]
    %v174 = vld [vmem:[#allocation3 + $0x210] sm:$0xff]
    %v175 = vld [vmem:[#allocation3 + $0x218] sm:$0xff]
    %v176 = vld [vmem:[#allocation3 + $0x220] sm:$0xff]
    %v177 = vld [vmem:[#allocation3 + $0x228] sm:$0xff]
    %v178 = vld [vmem:[#allocation3 + $0x230] sm:$0xff]
    %v179 = vld [vmem:[#allocation3 + $0x238] sm:$0xff]
    %v180 = vld [vmem:[#allocation3 + $0x240] sm:$0xff]
    %v181 = vld [vmem:[#allocation3 + $0x248] sm:$0xff]
    %v182 = vld [vmem:[#allocation3 + $0x250] sm:$0xff]
    %v183 = vld [vmem:[#allocation3 + $0x258] sm:$0xff]
    %v184 = vld [vmem:[#allocation3 + $0x260] sm:$0xff]
    %v185 = vld [vmem:[#allocation3 + $0x268] sm:$0xff]
    %v186 = vld [vmem:[#allocation3 + $0x270] sm:$0xff]
    %v187 = vld [vmem:[#allocation3 + $0x278] sm:$0xff]
    %v188 = vld [vmem:[#allocation3 + $0x280] sm:$0xff]
    %v189 = vld [vmem:[#allocation3 + $0x288] sm:$0xff]
    %v190 = vld [vmem:[#allocation3 + $0x290] sm:$0xff]
    %v191 = vld [vmem:[#allocation3 + $0x298] sm:$0xff]
    %v192 = vld [vmem:[#allocation3 + $0x2a0] sm:$0xff]
    %v193 = vld [vmem:[#allocation3 + $0x2a8] sm:$0xff]
    %v194 = vld [vmem:[#allocation3 + $0x2b0] sm:$0xff]
    %v195 = vld [vmem:[#allocation3 + $0x2b8] sm:$0xff]
    %v196 = vld [vmem:[#allocation3 + $0x2c0] sm:$0xff]
    %v197 = vld [vmem:[#allocation3 + $0x2c8] sm:$0xff]
    %v198 = vld [vmem:[#allocation3 + $0x2d0] sm:$0xff]
    %v199 = vld [vmem:[#allocation3 + $0x2d8] sm:$0xff]
    %v200 = vld [vmem:[#allocation3 + $0x2e0] sm:$0xff]
    %v201 = vld [vmem:[#allocation3 + $0x2e8] sm:$0xff]
    %v202 = vld [vmem:[#allocation3 + $0x2f0] sm:$0xff]
    %v203 = vld [vmem:[#allocation3 + $0x2f8] sm:$0xff]
    %v204 = vld [vmem:[#allocation3 + $0x300] sm:$0xff]
    %v205 = vld [vmem:[#allocation3 + $0x308] sm:$0xff]
    %v206 = vld [vmem:[#allocation3 + $0x310] sm:$0xff]
    %v207 = vld [vmem:[#allocation3 + $0x318] sm:$0xff]
    %v208 = vld [vmem:[#allocation3 + $0x320] sm:$0xff]
    %v209 = vld [vmem:[#allocation3 + $0x328] sm:$0xff]
    %v210 = vld [vmem:[#allocation3 + $0x330] sm:$0xff]
    %v211 = vld [vmem:[#allocation3 + $0x338] sm:$0xff]
    %v212 = vld [vmem:[#allocation3 + $0x340] sm:$0xff]
    %v213 = vld [vmem:[#allocation3 + $0x348] sm:$0xff]
    %v214 = vld [vmem:[#allocation3 + $0x350] sm:$0xff]
    %v215 = vld [vmem:[#allocation3 + $0x358] sm:$0xff]
    %v216 = vld [vmem:[#allocation3 + $0x360] sm:$0xff]
    %v217 = vld [vmem:[#allocation3 + $0x368] sm:$0xff]
    %v218 = vld [vmem:[#allocation3 + $0x370] sm:$0xff]
    %v219 = vld [vmem:[#allocation3 + $0x378] sm:$0xff]
    %v220 = vld [vmem:[#allocation3 + $0x380] sm:$0xff]
    %v221 = vld [vmem:[#allocation3 + $0x388] sm:$0xff]
    %v222 = vld [vmem:[#allocation3 + $0x390] sm:$0xff]
    %v223 = vld [vmem:[#allocation3 + $0x398] sm:$0xff]
    %v224 = vld [vmem:[#allocation3 + $0x3a0] sm:$0xff]
    %v225 = vld [vmem:[#allocation3 + $0x3a8] sm:$0xff]
    %v226 = vld [vmem:[#allocation3 + $0x3b0] sm:$0xff]
    %v227 = vld [vmem:[#allocation3 + $0x3b8] sm:$0xff]
    %v228 = vld [vmem:[#allocation3 + $0x3c0] sm:$0xff]
    %v229 = vld [vmem:[#allocation3 + $0x3c8] sm:$0xff]
    %v230 = vld [vmem:[#allocation3 + $0x3d0] sm:$0xff]
    %v231 = vld [vmem:[#allocation3 + $0x3d8] sm:$0xff]
    %v232 = vld [vmem:[#allocation3 + $0x3e0] sm:$0xff]
    %v233 = vld [vmem:[#allocation3 + $0x3e8] sm:$0xff]
    %v234 = vld [vmem:[#allocation3 + $0x3f0] sm:$0xff]
    %v235 = vld [vmem:[#allocation3 + $0x3f8] sm:$0xff]
    %v236 = vld [vmem:[#allocation3 + $0x400] sm:$0xff]
    %v237 = vld [vmem:[#allocation3 + $0x408] sm:$0xff]
    %v238 = vld [vmem:[#allocation3 + $0x410] sm:$0xff]
    %v239 = vld [vmem:[#allocation3 + $0x418] sm:$0xff]
    %v240 = vld [vmem:[#allocation3 + $0x420] sm:$0xff]
    %v241 = vld [vmem:[#allocation3 + $0x428] sm:$0xff]
    %v242 = vld [vmem:[#allocation3 + $0x430] sm:$0xff]
    %v243 = vld [vmem:[#allocation3 + $0x438] sm:$0xff]
    %v244 = vld [vmem:[#allocation3 + $0x440] sm:$0xff]
    %v245 = vld [vmem:[#allocation3 + $0x448] sm:$0xff]
    %v246 = vld [vmem:[#allocation3 + $0x450] sm:$0xff]
    %v247 = vld [vmem:[#allocation3 + $0x458] sm:$0xff]
    %v248 = vld [vmem:[#allocation3 + $0x460] sm:$0xff]
    %v249 = vld [vmem:[#allocation3 + $0x468] sm:$0xff]
    %v250 = vld [vmem:[#allocation3 + $0x470] sm:$0xff]
    %v251 = vld [vmem:[#allocation3 + $0x478] sm:$0xff]
    %v252 = vld [vmem:[#allocation3 + $0x480] sm:$0xff]
    %v253 = vld [vmem:[#allocation3 + $0x488] sm:$0xff]
    %v254 = vld [vmem:[#allocation3 + $0x490] sm:$0xff]
    %v255 = vld [vmem:[#allocation3 + $0x498] sm:$0xff]
    %v256 = vld [vmem:[#allocation3 + $0x4a0] sm:$0xff]
    %v257 = vld [vmem:[#allocation3 + $0x4a8] sm:$0xff]
    %v258 = vld [vmem:[#allocation3 + $0x4b0] sm:$0xff]
    %v259 = vld [vmem:[#allocation3 + $0x4b8] sm:$0xff]
    %v260 = vld [vmem:[#allocation3 + $0x4c0] sm:$0xff]
    %v261 = vld [vmem:[#allocation3 + $0x4c8] sm:$0xff]
    %v262 = vld [vmem:[#allocation3 + $0x4d0] sm:$0xff]
    %v263 = vld [vmem:[#allocation3 + $0x4d8] sm:$0xff]
    %v264 = vld [vmem:[#allocation3 + $0x4e0] sm:$0xff]
    %v265 = vld [vmem:[#allocation3 + $0x4e8] sm:$0xff]
    %v266 = vld [vmem:[#allocation3 + $0x4f0] sm:$0xff]
    %v267 = vld [vmem:[#allocation3 + $0x4f8] sm:$0xff]
    %v268 = vld [vmem:[#allocation3 + $0x500] sm:$0xff]
    %v269 = vld [vmem:[#allocation3 + $0x508] sm:$0xff]
    %v270 = vld [vmem:[#allocation3 + $0x510] sm:$0xff]
    %v271 = vld [vmem:[#allocation3 + $0x518] sm:$0xff]
    %v272 = vld [vmem:[#allocation3 + $0x520] sm:$0xff]
    %v273 = vld [vmem:[#allocation3 + $0x528] sm:$0xff]
    %v274 = vld [vmem:[#allocation3 + $0x530] sm:$0xff]
    %v275 = vld [vmem:[#allocation3 + $0x538] sm:$0xff]
    %v276 = vld [vmem:[#allocation3 + $0x540] sm:$0xff]
    %v277 = vld [vmem:[#allocation3 + $0x548] sm:$0xff]
    %v278 = vld [vmem:[#allocation3 + $0x550] sm:$0xff]
    %v279 = vld [vmem:[#allocation3 + $0x558] sm:$0xff]
    %v280 = vld [vmem:[#allocation3 + $0x560] sm:$0xff]
    %v281 = vld [vmem:[#allocation3 + $0x568] sm:$0xff]
    %v282 = vld [vmem:[#allocation3 + $0x570] sm:$0xff]
    %v283 = vld [vmem:[#allocation3 + $0x578] sm:$0xff]
    %v284 = vld [vmem:[#allocation3 + $0x580] sm:$0xff]
    %v285 = vld [vmem:[#allocation3 + $0x588] sm:$0xff]
    %v286 = vld [vmem:[#allocation3 + $0x590] sm:$0xff]
    %v287 = vld [vmem:[#allocation3 + $0x598] sm:$0xff]
    %v288 = vld [vmem:[#allocation3 + $0x5a0] sm:$0xff]
    %v289 = vld [vmem:[#allocation3 + $0x5a8] sm:$0xff]
    %v290 = vld [vmem:[#allocation3 + $0x5b0] sm:$0xff]
    %v291 = vld [vmem:[#allocation3 + $0x5b8] sm:$0xff]
    %v292 = vld [vmem:[#allocation3 + $0x5c0] sm:$0xff]
    %v293 = vld [vmem:[#allocation3 + $0x5c8] sm:$0xff]
    %v294 = vld [vmem:[#allocation3 + $0x5d0] sm:$0xff]
    %v295 = vld [vmem:[#allocation3 + $0x5d8] sm:$0xff]
    %v296 = vld [vmem:[#allocation3 + $0x5e0] sm:$0xff]
    %v297 = vld [vmem:[#allocation3 + $0x5e8] sm:$0xff]
    %v298 = vld [vmem:[#allocation3 + $0x5f0] sm:$0xff]
    %v299 = vld [vmem:[#allocation3 + $0x5f8] sm:$0xff]
    %v300 = vld [vmem:[#allocation3 + $0x600] sm:$0xff]
    %v301 = vld [vmem:[#allocation3 + $0x608] sm:$0xff]
    %v302 = vld [vmem:[#allocation3 + $0x610] sm:$0xff]
    %v303 = vld [vmem:[#allocation3 + $0x618] sm:$0xff]
    %v304 = vld [vmem:[#allocation3 + $0x620] sm:$0xff]
    %v305 = vld [vmem:[#allocation3 + $0x628] sm:$0xff]
    %v306 = vld [vmem:[#allocation3 + $0x630] sm:$0xff]
    %v307 = vld [vmem:[#allocation3 + $0x638] sm:$0xff]
    %v308 = vld [vmem:[#allocation3 + $0x640] sm:$0xff]
    %v309 = vld [vmem:[#allocation3 + $0x648] sm:$0xff]
    %v310 = vld [vmem:[#allocation3 + $0x650] sm:$0xff]
    %v311 = vld [vmem:[#allocation3 + $0x658] sm:$0xff]
    %v312 = vld [vmem:[#allocation3 + $0x660] sm:$0xff]
    %v313 = vld [vmem:[#allocation3 + $0x668] sm:$0xff]
    %v314 = vld [vmem:[#allocation3 + $0x670] sm:$0xff]
    %v315 = vld [vmem:[#allocation3 + $0x678] sm:$0xff]
    %v316 = vld [vmem:[#allocation3 + $0x680] sm:$0xff]
    %v317 = vld [vmem:[#allocation3 + $0x688] sm:$0xff]
    %v318 = vld [vmem:[#allocation3 + $0x690] sm:$0xff]
    %v319 = vld [vmem:[#allocation3 + $0x698] sm:$0xff]
    %v320 = vld [vmem:[#allocation3 + $0x6a0] sm:$0xff]
    %v321 = vld [vmem:[#allocation3 + $0x6a8] sm:$0xff]
    %v322 = vld [vmem:[#allocation3 + $0x6b0] sm:$0xff]
    %v323 = vld [vmem:[#allocation3 + $0x6b8] sm:$0xff]
    %v324 = vld [vmem:[#allocation3 + $0x6c0] sm:$0xff]
    %v325 = vld [vmem:[#allocation3 + $0x6c8] sm:$0xff]
    %v326 = vld [vmem:[#allocation3 + $0x6d0] sm:$0xff]
    %v327 = vld [vmem:[#allocation3 + $0x6d8] sm:$0xff]
    %v328 = vld [vmem:[#allocation3 + $0x6e0] sm:$0xff]
    %v329 = vld [vmem:[#allocation3 + $0x6e8] sm:$0xff]
    %v330 = vld [vmem:[#allocation3 + $0x6f0] sm:$0xff]
    %v331 = vld [vmem:[#allocation3 + $0x6f8] sm:$0xff]
    %v332 = vld [vmem:[#allocation3 + $0x700] sm:$0xff]
    %v333 = vld [vmem:[#allocation3 + $0x708] sm:$0xff]
    %v334 = vld [vmem:[#allocation3 + $0x710] sm:$0xff]
    %v335 = vld [vmem:[#allocation3 + $0x718] sm:$0xff]
    %v336 = vld [vmem:[#allocation3 + $0x720] sm:$0xff]
    %v337 = vld [vmem:[#allocation3 + $0x728] sm:$0xff]
    %v338 = vld [vmem:[#allocation3 + $0x730] sm:$0xff]
    %v339 = vld [vmem:[#allocation3 + $0x738] sm:$0xff]
    %v340 = vld [vmem:[#allocation3 + $0x740] sm:$0xff]
    %v341 = vld [vmem:[#allocation3 + $0x748] sm:$0xff]
    %v342 = vld [vmem:[#allocation3 + $0x750] sm:$0xff]
    %v343 = vld [vmem:[#allocation3 + $0x758] sm:$0xff]
    %v344 = vld [vmem:[#allocation3 + $0x760] sm:$0xff]
    %v345 = vld [vmem:[#allocation3 + $0x768] sm:$0xff]
    %v346 = vld [vmem:[#allocation3 + $0x770] sm:$0xff]
    %v347 = vld [vmem:[#allocation3 + $0x778] sm:$0xff]
    %v348 = vld [vmem:[#allocation3 + $0x780] sm:$0xff]
    %v349 = vld [vmem:[#allocation3 + $0x788] sm:$0xff]
    %v350 = vld [vmem:[#allocation3 + $0x790] sm:$0xff]
    %v351 = vld [vmem:[#allocation3 + $0x798] sm:$0xff]
    %v352 = vld [vmem:[#allocation3 + $0x7a0] sm:$0xff]
    %v353 = vld [vmem:[#allocation3 + $0x7a8] sm:$0xff]
    %v354 = vld [vmem:[#allocation3 + $0x7b0] sm:$0xff]
    %v355 = vld [vmem:[#allocation3 + $0x7b8] sm:$0xff]
    %v356 = vld [vmem:[#allocation3 + $0x7c0] sm:$0xff]
    %v357 = vld [vmem:[#allocation3 + $0x7c8] sm:$0xff]
    %v358 = vld [vmem:[#allocation3 + $0x7d0] sm:$0xff]
    %v359 = vld [vmem:[#allocation3 + $0x7d8] sm:$0xff]
    %v360 = vld [vmem:[#allocation3 + $0x7e0] sm:$0xff]
    %v361 = vld [vmem:[#allocation3 + $0x7e8] sm:$0xff]
    %v362 = vld [vmem:[#allocation3 + $0x7f0] sm:$0xff]
    %v363 = vld [vmem:[#allocation3 + $0x7f8] sm:$0xff]
    %v364 = vld [vmem:[#allocation8] sm:$0xff]
    %v365 = vld [vmem:[#allocation8 + $0x8] sm:$0xff]
    %v366 = vld [vmem:[#allocation8 + $0x10] sm:$0xff]
    %v367 = vld [vmem:[#allocation8 + $0x18] sm:$0xff]
    %v368 = vld [vmem:[#allocation8 + $0x20] sm:$0xff]
    %v369 = vld [vmem:[#allocation8 + $0x28] sm:$0xff]
    %v370 = vld [vmem:[#allocation8 + $0x30] sm:$0xff]
    %v371 = vld [vmem:[#allocation8 + $0x38] sm:$0xff]
    %v372 = vld [vmem:[#allocation8 + $0x40] sm:$0xff]
    %v373 = vld [vmem:[#allocation8 + $0x48] sm:$0xff]
    %v374 = vld [vmem:[#allocation8 + $0x50] sm:$0xff]
    %v375 = vld [vmem:[#allocation8 + $0x58] sm:$0xff]
    %v376 = vld [vmem:[#allocation8 + $0x60] sm:$0xff]
    %v377 = vld [vmem:[#allocation8 + $0x68] sm:$0xff]
    %v378 = vld [vmem:[#allocation8 + $0x70] sm:$0xff]
    %v379 = vld [vmem:[#allocation8 + $0x78] sm:$0xff]
    %v380 = vld [vmem:[#allocation8 + $0x80] sm:$0xff]
    %v381 = vld [vmem:[#allocation8 + $0x88] sm:$0xff]
    %v382 = vld [vmem:[#allocation8 + $0x90] sm:$0xff]
    %v383 = vld [vmem:[#allocation8 + $0x98] sm:$0xff]
    %v384 = vld [vmem:[#allocation8 + $0xa0] sm:$0xff]
    %v385 = vld [vmem:[#allocation8 + $0xa8] sm:$0xff]
    %v386 = vld [vmem:[#allocation8 + $0xb0] sm:$0xff]
    %v387 = vld [vmem:[#allocation8 + $0xb8] sm:$0xff]
    %v388 = vld [vmem:[#allocation8 + $0xc0] sm:$0xff]
    %v389 = vld [vmem:[#allocation8 + $0xc8] sm:$0xff]
    %v390 = vld [vmem:[#allocation8 + $0xd0] sm:$0xff]
    %v391 = vld [vmem:[#allocation8 + $0xd8] sm:$0xff]
    %v392 = vld [vmem:[#allocation8 + $0xe0] sm:$0xff]
    %v393 = vld [vmem:[#allocation8 + $0xe8] sm:$0xff]
    %v394 = vld [vmem:[#allocation8 + $0xf0] sm:$0xff]
    %v395 = vld [vmem:[#allocation8 + $0xf8] sm:$0xff]
    %v396 = vld [vmem:[#allocation8 + $0x100] sm:$0xff]
    %v397 = vld [vmem:[#allocation8 + $0x108] sm:$0xff]
    %v398 = vld [vmem:[#allocation8 + $0x110] sm:$0xff]
    %v399 = vld [vmem:[#allocation8 + $0x118] sm:$0xff]
    %v400 = vld [vmem:[#allocation8 + $0x120] sm:$0xff]
    %v401 = vld [vmem:[#allocation8 + $0x128] sm:$0xff]
    %v402 = vld [vmem:[#allocation8 + $0x130] sm:$0xff]
    %v403 = vld [vmem:[#allocation8 + $0x138] sm:$0xff]
    %v404 = vld [vmem:[#allocation8 + $0x140] sm:$0xff]
    %v405 = vld [vmem:[#allocation8 + $0x148] sm:$0xff]
    %v406 = vld [vmem:[#allocation8 + $0x150] sm:$0xff]
    %v407 = vld [vmem:[#allocation8 + $0x158] sm:$0xff]
    %v408 = vld [vmem:[#allocation8 + $0x160] sm:$0xff]
    %v409 = vld [vmem:[#allocation8 + $0x168] sm:$0xff]
    %v410 = vld [vmem:[#allocation8 + $0x170] sm:$0xff]
    %v411 = vld [vmem:[#allocation8 + $0x178] sm:$0xff]
    %v412 = vld [vmem:[#allocation8 + $0x180] sm:$0xff]
    %v413 = vld [vmem:[#allocation8 + $0x188] sm:$0xff]
    %v414 = vld [vmem:[#allocation8 + $0x190] sm:$0xff]
    %v415 = vld [vmem:[#allocation8 + $0x198] sm:$0xff]
    %v416 = vld [vmem:[#allocation8 + $0x1a0] sm:$0xff]
    %v417 = vld [vmem:[#allocation8 + $0x1a8] sm:$0xff]
    %v418 = vld [vmem:[#allocation8 + $0x1b0] sm:$0xff]
    %v419 = vld [vmem:[#allocation8 + $0x1b8] sm:$0xff]
    %v420 = vld [vmem:[#allocation8 + $0x1c0] sm:$0xff]
    %v421 = vld [vmem:[#allocation8 + $0x1c8] sm:$0xff]
    %v422 = vld [vmem:[#allocation8 + $0x1d0] sm:$0xff]
    %v423 = vld [vmem:[#allocation8 + $0x1d8] sm:$0xff]
    %v424 = vld [vmem:[#allocation8 + $0x1e0] sm:$0xff]
    %v425 = vld [vmem:[#allocation8 + $0x1e8] sm:$0xff]
    %v426 = vld [vmem:[#allocation8 + $0x1f0] sm:$0xff]
    %v427 = vld [vmem:[#allocation8 + $0x1f8] sm:$0xff]
    %v428 = vld [vmem:[#allocation6] sm:$0xff]
    %v429 = vld [vmem:[#allocation6 + $0x8] sm:$0xff]
    %v430 = vld [vmem:[#allocation6 + $0x10] sm:$0xff]
    %v431 = vld [vmem:[#allocation6 + $0x18] sm:$0xff]
    %v432 = vld [vmem:[#allocation6 + $0x20] sm:$0xff]
    %v433 = vld [vmem:[#allocation6 + $0x28] sm:$0xff]
    %v434 = vld [vmem:[#allocation6 + $0x30] sm:$0xff]
    %v435 = vld [vmem:[#allocation6 + $0x38] sm:$0xff]
    %v436 = vld [vmem:[#allocation6 + $0x40] sm:$0xff]
    %v437 = vld [vmem:[#allocation6 + $0x48] sm:$0xff]
    %v438 = vld [vmem:[#allocation6 + $0x50] sm:$0xff]
    %v439 = vld [vmem:[#allocation6 + $0x58] sm:$0xff]
    %v440 = vld [vmem:[#allocation6 + $0x60] sm:$0xff]
    %v441 = vld [vmem:[#allocation6 + $0x68] sm:$0xff]
    %v442 = vld [vmem:[#allocation6 + $0x70] sm:$0xff]
    %v443 = vld [vmem:[#allocation6 + $0x78] sm:$0xff]
    %v444 = vld [vmem:[#allocation6 + $0x80] sm:$0xff]
    %v445 = vld [vmem:[#allocation6 + $0x88] sm:$0xff]
    %v446 = vld [vmem:[#allocation6 + $0x90] sm:$0xff]
    %v447 = vld [vmem:[#allocation6 + $0x98] sm:$0xff]
    %v448 = vld [vmem:[#allocation6 + $0xa0] sm:$0xff]
    %v449 = vld [vmem:[#allocation6 + $0xa8] sm:$0xff]
    %v450 = vld [vmem:[#allocation6 + $0xb0] sm:$0xff]
    %v451 = vld [vmem:[#allocation6 + $0xb8] sm:$0xff]
    %v452 = vld [vmem:[#allocation6 + $0xc0] sm:$0xff]
    %v453 = vld [vmem:[#allocation6 + $0xc8] sm:$0xff]
    %v454 = vld [vmem:[#allocation6 + $0xd0] sm:$0xff]
    %v455 = vld [vmem:[#allocation6 + $0xd8] sm:$0xff]
    %v456 = vld [vmem:[#allocation6 + $0xe0] sm:$0xff]
    %v457 = vld [vmem:[#allocation6 + $0xe8] sm:$0xff]
    %v458 = vld [vmem:[#allocation6 + $0xf0] sm:$0xff]
    %v459 = vld [vmem:[#allocation6 + $0xf8] sm:$0xff]
    %v460 = vld [vmem:[#allocation6 + $0x100] sm:$0xff]
    %v461 = vld [vmem:[#allocation6 + $0x108] sm:$0xff]
    %v462 = vld [vmem:[#allocation6 + $0x110] sm:$0xff]
    %v463 = vld [vmem:[#allocation6 + $0x118] sm:$0xff]
    %v464 = vld [vmem:[#allocation6 + $0x120] sm:$0xff]
    %v465 = vld [vmem:[#allocation6 + $0x128] sm:$0xff]
    %v466 = vld [vmem:[#allocation6 + $0x130] sm:$0xff]
    %v467 = vld [vmem:[#allocation6 + $0x138] sm:$0xff]
    %v468 = vld [vmem:[#allocation6 + $0x140] sm:$0xff]
    %v469 = vld [vmem:[#allocation6 + $0x148] sm:$0xff]
    %v470 = vld [vmem:[#allocation6 + $0x150] sm:$0xff]
    %v471 = vld [vmem:[#allocation6 + $0x158] sm:$0xff]
    %v472 = vld [vmem:[#allocation6 + $0x160] sm:$0xff]
    %v473 = vld [vmem:[#allocation6 + $0x168] sm:$0xff]
    %v474 = vld [vmem:[#allocation6 + $0x170] sm:$0xff]
    %v475 = vld [vmem:[#allocation6 + $0x178] sm:$0xff]
    %v476 = vld [vmem:[#allocation6 + $0x180] sm:$0xff]
    %v477 = vld [vmem:[#allocation6 + $0x188] sm:$0xff]
    %v478 = vld [vmem:[#allocation6 + $0x190] sm:$0xff]
    %v479 = vld [vmem:[#allocation6 + $0x198] sm:$0xff]
    %v480 = vld [vmem:[#allocation6 + $0x1a0] sm:$0xff]
    %v481 = vld [vmem:[#allocation6 + $0x1a8] sm:$0xff]
    %v482 = vld [vmem:[#allocation6 + $0x1b0] sm:$0xff]
    %v483 = vld [vmem:[#allocation6 + $0x1b8] sm:$0xff]
    %v484 = vld [vmem:[#allocation6 + $0x1c0] sm:$0xff]
    %v485 = vld [vmem:[#allocation6 + $0x1c8] sm:$0xff]
    %v486 = vld [vmem:[#allocation6 + $0x1d0] sm:$0xff]
    %v487 = vld [vmem:[#allocation6 + $0x1d8] sm:$0xff]
    %v488 = vld [vmem:[#allocation6 + $0x1e0] sm:$0xff]
    %v489 = vld [vmem:[#allocation6 + $0x1e8] sm:$0xff]
    %v490 = vld [vmem:[#allocation6 + $0x1f0] sm:$0xff]
    %v491 = vld [vmem:[#allocation6 + $0x1f8] sm:$0xff]
    %v492 = vld [vmem:[#allocation6 + $0x200] sm:$0xff]
    %v493 = vld [vmem:[#allocation6 + $0x208] sm:$0xff]
    %v494 = vld [vmem:[#allocation6 + $0x210] sm:$0xff]
    %v495 = vld [vmem:[#allocation6 + $0x218] sm:$0xff]
    %v496 = vld [vmem:[#allocation6 + $0x220] sm:$0xff]
    %v497 = vld [vmem:[#allocation6 + $0x228] sm:$0xff]
    %v498 = vld [vmem:[#allocation6 + $0x230] sm:$0xff]
    %v499 = vld [vmem:[#allocation6 + $0x238] sm:$0xff]
    %v500 = vld [vmem:[#allocation6 + $0x240] sm:$0xff]
    %v501 = vld [vmem:[#allocation6 + $0x248] sm:$0xff]
    %v502 = vld [vmem:[#allocation6 + $0x250] sm:$0xff]
    %v503 = vld [vmem:[#allocation6 + $0x258] sm:$0xff]
    %v504 = vld [vmem:[#allocation6 + $0x260] sm:$0xff]
    %v505 = vld [vmem:[#allocation6 + $0x268] sm:$0xff]
    %v506 = vld [vmem:[#allocation6 + $0x270] sm:$0xff]
    %v507 = vld [vmem:[#allocation6 + $0x278] sm:$0xff]
    %v508 = vld [vmem:[#allocation6 + $0x280] sm:$0xff]
    %v509 = vld [vmem:[#allocation6 + $0x288] sm:$0xff]
    %v510 = vld [vmem:[#allocation6 + $0x290] sm:$0xff]
    %v511 = vld [vmem:[#allocation6 + $0x298] sm:$0xff]
    %v512 = vld [vmem:[#allocation6 + $0x2a0] sm:$0xff]
    %v513 = vld [vmem:[#allocation6 + $0x2a8] sm:$0xff]
    %v514 = vld [vmem:[#allocation6 + $0x2b0] sm:$0xff]
    %v515 = vld [vmem:[#allocation6 + $0x2b8] sm:$0xff]
    %v516 = vld [vmem:[#allocation6 + $0x2c0] sm:$0xff]
    %v517 = vld [vmem:[#allocation6 + $0x2c8] sm:$0xff]
    %v518 = vld [vmem:[#allocation6 + $0x2d0] sm:$0xff]
    %v519 = vld [vmem:[#allocation6 + $0x2d8] sm:$0xff]
    %v520 = vld [vmem:[#allocation6 + $0x2e0] sm:$0xff]
    %v521 = vld [vmem:[#allocation6 + $0x2e8] sm:$0xff]
    %v522 = vld [vmem:[#allocation6 + $0x2f0] sm:$0xff]
    %v523 = vld [vmem:[#allocation6 + $0x2f8] sm:$0xff]
    %v524 = vld [vmem:[#allocation6 + $0x300] sm:$0xff]
    %v525 = vld [vmem:[#allocation6 + $0x308] sm:$0xff]
    %v526 = vld [vmem:[#allocation6 + $0x310] sm:$0xff]
    %v527 = vld [vmem:[#allocation6 + $0x318] sm:$0xff]
    %v528 = vld [vmem:[#allocation6 + $0x320] sm:$0xff]
    %v529 = vld [vmem:[#allocation6 + $0x328] sm:$0xff]
    %v530 = vld [vmem:[#allocation6 + $0x330] sm:$0xff]
    %v531 = vld [vmem:[#allocation6 + $0x338] sm:$0xff]
    %v532 = vld [vmem:[#allocation6 + $0x340] sm:$0xff]
    %v533 = vld [vmem:[#allocation6 + $0x348] sm:$0xff]
    %v534 = vld [vmem:[#allocation6 + $0x350] sm:$0xff]
    %v535 = vld [vmem:[#allocation6 + $0x358] sm:$0xff]
    %v536 = vld [vmem:[#allocation6 + $0x360] sm:$0xff]
    %v537 = vld [vmem:[#allocation6 + $0x368] sm:$0xff]
    %v538 = vld [vmem:[#allocation6 + $0x370] sm:$0xff]
    %v539 = vld [vmem:[#allocation6 + $0x378] sm:$0xff]
    %v540 = vld [vmem:[#allocation6 + $0x380] sm:$0xff]
    %v541 = vld [vmem:[#allocation6 + $0x388] sm:$0xff]
    %v542 = vld [vmem:[#allocation6 + $0x390] sm:$0xff]
    %v543 = vld [vmem:[#allocation6 + $0x398] sm:$0xff]
    %v544 = vld [vmem:[#allocation6 + $0x3a0] sm:$0xff]
    %v545 = vld [vmem:[#allocation6 + $0x3a8] sm:$0xff]
    %v546 = vld [vmem:[#allocation6 + $0x3b0] sm:$0xff]
    %v547 = vld [vmem:[#allocation6 + $0x3b8] sm:$0xff]
    %v548 = vld [vmem:[#allocation6 + $0x3c0] sm:$0xff]
    %v549 = vld [vmem:[#allocation6 + $0x3c8] sm:$0xff]
    %v550 = vld [vmem:[#allocation6 + $0x3d0] sm:$0xff]
    %v551 = vld [vmem:[#allocation6 + $0x3d8] sm:$0xff]
    %v552 = vld [vmem:[#allocation6 + $0x3e0] sm:$0xff]
    %v553 = vld [vmem:[#allocation6 + $0x3e8] sm:$0xff]
    %v554 = vld [vmem:[#allocation6 + $0x3f0] sm:$0xff]
    %v555 = vld [vmem:[#allocation6 + $0x3f8] sm:$0xff]
    %v556 = vld [vmem:[#allocation6 + $0x400] sm:$0xff]
    %v557 = vld [vmem:[#allocation6 + $0x408] sm:$0xff]
    %v558 = vld [vmem:[#allocation6 + $0x410] sm:$0xff]
    %v559 = vld [vmem:[#allocation6 + $0x418] sm:$0xff]
    %v560 = vld [vmem:[#allocation6 + $0x420] sm:$0xff]
    %v561 = vld [vmem:[#allocation6 + $0x428] sm:$0xff]
    %v562 = vld [vmem:[#allocation6 + $0x430] sm:$0xff]
    %v563 = vld [vmem:[#allocation6 + $0x438] sm:$0xff]
    %v564 = vld [vmem:[#allocation6 + $0x440] sm:$0xff]
    %v565 = vld [vmem:[#allocation6 + $0x448] sm:$0xff]
    %v566 = vld [vmem:[#allocation6 + $0x450] sm:$0xff]
    %v567 = vld [vmem:[#allocation6 + $0x458] sm:$0xff]
    %v568 = vld [vmem:[#allocation6 + $0x460] sm:$0xff]
    %v569 = vld [vmem:[#allocation6 + $0x468] sm:$0xff]
    %v570 = vld [vmem:[#allocation6 + $0x470] sm:$0xff]
    %v571 = vld [vmem:[#allocation6 + $0x478] sm:$0xff]
    %v572 = vld [vmem:[#allocation6 + $0x480] sm:$0xff]
    %v573 = vld [vmem:[#allocation6 + $0x488] sm:$0xff]
    %v574 = vld [vmem:[#allocation6 + $0x490] sm:$0xff]
    %v575 = vld [vmem:[#allocation6 + $0x498] sm:$0xff]
    %v576 = vld [vmem:[#allocation6 + $0x4a0] sm:$0xff]
    %v577 = vld [vmem:[#allocation6 + $0x4a8] sm:$0xff]
    %v578 = vld [vmem:[#allocation6 + $0x4b0] sm:$0xff]
    %v579 = vld [vmem:[#allocation6 + $0x4b8] sm:$0xff]
    %v580 = vld [vmem:[#allocation6 + $0x4c0] sm:$0xff]
    %v581 = vld [vmem:[#allocation6 + $0x4c8] sm:$0xff]
    %v582 = vld [vmem:[#allocation6 + $0x4d0] sm:$0xff]
    %v583 = vld [vmem:[#allocation6 + $0x4d8] sm:$0xff]
    %v584 = vld [vmem:[#allocation6 + $0x4e0] sm:$0xff]
    %v585 = vld [vmem:[#allocation6 + $0x4e8] sm:$0xff]
    %v586 = vld [vmem:[#allocation6 + $0x4f0] sm:$0xff]
    %v587 = vld [vmem:[#allocation6 + $0x4f8] sm:$0xff]
    %v588 = vld [vmem:[#allocation6 + $0x500] sm:$0xff]
    %v589 = vld [vmem:[#allocation6 + $0x508] sm:$0xff]
    %v590 = vld [vmem:[#allocation6 + $0x510] sm:$0xff]
    %v591 = vld [vmem:[#allocation6 + $0x518] sm:$0xff]
    %v592 = vld [vmem:[#allocation6 + $0x520] sm:$0xff]
    %v593 = vld [vmem:[#allocation6 + $0x528] sm:$0xff]
    %v594 = vld [vmem:[#allocation6 + $0x530] sm:$0xff]
    %v595 = vld [vmem:[#allocation6 + $0x538] sm:$0xff]
    %v596 = vld [vmem:[#allocation6 + $0x540] sm:$0xff]
    %v597 = vld [vmem:[#allocation6 + $0x548] sm:$0xff]
    %v598 = vld [vmem:[#allocation6 + $0x550] sm:$0xff]
    %v599 = vld [vmem:[#allocation6 + $0x558] sm:$0xff]
    %v600 = vld [vmem:[#allocation6 + $0x560] sm:$0xff]
    %v601 = vld [vmem:[#allocation6 + $0x568] sm:$0xff]
    %v602 = vld [vmem:[#allocation6 + $0x570] sm:$0xff]
    %v603 = vld [vmem:[#allocation6 + $0x578] sm:$0xff]
    %v604 = vld [vmem:[#allocation6 + $0x580] sm:$0xff]
    %v605 = vld [vmem:[#allocation6 + $0x588] sm:$0xff]
    %v606 = vld [vmem:[#allocation6 + $0x590] sm:$0xff]
    %v607 = vld [vmem:[#allocation6 + $0x598] sm:$0xff]
    %v608 = vld [vmem:[#allocation6 + $0x5a0] sm:$0xff]
    %v609 = vld [vmem:[#allocation6 + $0x5a8] sm:$0xff]
    %v610 = vld [vmem:[#allocation6 + $0x5b0] sm:$0xff]
    %v611 = vld [vmem:[#allocation6 + $0x5b8] sm:$0xff]
    %v612 = vld [vmem:[#allocation6 + $0x5c0] sm:$0xff]
    %v613 = vld [vmem:[#allocation6 + $0x5c8] sm:$0xff]
    %v614 = vld [vmem:[#allocation6 + $0x5d0] sm:$0xff]
    %v615 = vld [vmem:[#allocation6 + $0x5d8] sm:$0xff]
    %v616 = vld [vmem:[#allocation6 + $0x5e0] sm:$0xff]
    %v617 = vld [vmem:[#allocation6 + $0x5e8] sm:$0xff]
    %v618 = vld [vmem:[#allocation6 + $0x5f0] sm:$0xff]
    %v619 = vld [vmem:[#allocation6 + $0x5f8] sm:$0xff]
    %v620 = vld [vmem:[#allocation6 + $0x600] sm:$0xff]
    %v621 = vld [vmem:[#allocation6 + $0x608] sm:$0xff]
    %v622 = vld [vmem:[#allocation6 + $0x610] sm:$0xff]
    %v623 = vld [vmem:[#allocation6 + $0x618] sm:$0xff]
    %v624 = vld [vmem:[#allocation6 + $0x620] sm:$0xff]
    %v625 = vld [vmem:[#allocation6 + $0x628] sm:$0xff]
    %v626 = vld [vmem:[#allocation6 + $0x630] sm:$0xff]
    %v627 = vld [vmem:[#allocation6 + $0x638] sm:$0xff]
    %v628 = vld [vmem:[#allocation6 + $0x640] sm:$0xff]
    %v629 = vld [vmem:[#allocation6 + $0x648] sm:$0xff]
    %v630 = vld [vmem:[#allocation6 + $0x650] sm:$0xff]
    %v631 = vld [vmem:[#allocation6 + $0x658] sm:$0xff]
    %v632 = vld [vmem:[#allocation6 + $0x660] sm:$0xff]
    %v633 = vld [vmem:[#allocation6 + $0x668] sm:$0xff]
    %v634 = vld [vmem:[#allocation6 + $0x670] sm:$0xff]
    %v635 = vld [vmem:[#allocation6 + $0x678] sm:$0xff]
    %v636 = vld [vmem:[#allocation6 + $0x680] sm:$0xff]
    %v637 = vld [vmem:[#allocation6 + $0x688] sm:$0xff]
    %v638 = vld [vmem:[#allocation6 + $0x690] sm:$0xff]
    %v639 = vld [vmem:[#allocation6 + $0x698] sm:$0xff]
    %v640 = vld [vmem:[#allocation6 + $0x6a0] sm:$0xff]
    %v641 = vld [vmem:[#allocation6 + $0x6a8] sm:$0xff]
    %v642 = vld [vmem:[#allocation6 + $0x6b0] sm:$0xff]
    %v643 = vld [vmem:[#allocation6 + $0x6b8] sm:$0xff]
    %v644 = vld [vmem:[#allocation6 + $0x6c0] sm:$0xff]
    %v645 = vld [vmem:[#allocation6 + $0x6c8] sm:$0xff]
    %v646 = vld [vmem:[#allocation6 + $0x6d0] sm:$0xff]
    %v647 = vld [vmem:[#allocation6 + $0x6d8] sm:$0xff]
    %v648 = vld [vmem:[#allocation6 + $0x6e0] sm:$0xff]
    %v649 = vld [vmem:[#allocation6 + $0x6e8] sm:$0xff]
    %v650 = vld [vmem:[#allocation6 + $0x6f0] sm:$0xff]
    %v651 = vld [vmem:[#allocation6 + $0x6f8] sm:$0xff]
    %v652 = vld [vmem:[#allocation6 + $0x700] sm:$0xff]
    %v653 = vld [vmem:[#allocation6 + $0x708] sm:$0xff]
    %v654 = vld [vmem:[#allocation6 + $0x710] sm:$0xff]
    %v655 = vld [vmem:[#allocation6 + $0x718] sm:$0xff]
    %v656 = vld [vmem:[#allocation6 + $0x720] sm:$0xff]
    %v657 = vld [vmem:[#allocation6 + $0x728] sm:$0xff]
    %v658 = vld [vmem:[#allocation6 + $0x730] sm:$0xff]
    %v659 = vld [vmem:[#allocation6 + $0x738] sm:$0xff]
    %v660 = vld [vmem:[#allocation6 + $0x740] sm:$0xff]
    %v661 = vld [vmem:[#allocation6 + $0x748] sm:$0xff]
    %v662 = vld [vmem:[#allocation6 + $0x750] sm:$0xff]
    %v663 = vld [vmem:[#allocation6 + $0x758] sm:$0xff]
    %v664 = vld [vmem:[#allocation6 + $0x760] sm:$0xff]
    %v665 = vld [vmem:[#allocation6 + $0x768] sm:$0xff]
    %v666 = vld [vmem:[#allocation6 + $0x770] sm:$0xff]
    %v667 = vld [vmem:[#allocation6 + $0x778] sm:$0xff]
    %v668 = vld [vmem:[#allocation6 + $0x780] sm:$0xff]
    %v669 = vld [vmem:[#allocation6 + $0x788] sm:$0xff]
    %v670 = vld [vmem:[#allocation6 + $0x790] sm:$0xff]
    %v671 = vld [vmem:[#allocation6 + $0x798] sm:$0xff]
    %v672 = vld [vmem:[#allocation6 + $0x7a0] sm:$0xff]
    %v673 = vld [vmem:[#allocation6 + $0x7a8] sm:$0xff]
    %v674 = vld [vmem:[#allocation6 + $0x7b0] sm:$0xff]
    %v675 = vld [vmem:[#allocation6 + $0x7b8] sm:$0xff]
    %v676 = vld [vmem:[#allocation6 + $0x7c0] sm:$0xff]
    %v677 = vld [vmem:[#allocation6 + $0x7c8] sm:$0xff]
    %v678 = vld [vmem:[#allocation6 + $0x7d0] sm:$0xff]
    %v679 = vld [vmem:[#allocation6 + $0x7d8] sm:$0xff]
    %v680 = vld [vmem:[#allocation6 + $0x7e0] sm:$0xff]
    %v681 = vld [vmem:[#allocation6 + $0x7e8] sm:$0xff]
    %v682 = vld [vmem:[#allocation6 + $0x7f0] sm:$0xff]
    %v683 = vld [vmem:[#allocation6 + $0x7f8] sm:$0xff]
    %v684 = vld [vmem:[#allocation9] sm:$0xff]
    %v685 = vld [vmem:[#allocation9 + $0x8] sm:$0xff]
    %v686 = vld [vmem:[#allocation9 + $0x10] sm:$0xff]
    %v687 = vld [vmem:[#allocation9 + $0x18] sm:$0xff]
    %v688 = vld [vmem:[#allocation9 + $0x20] sm:$0xff]
    %v689 = vld [vmem:[#allocation9 + $0x28] sm:$0xff]
    %v690 = vld [vmem:[#allocation9 + $0x30] sm:$0xff]
    %v691 = vld [vmem:[#allocation9 + $0x38] sm:$0xff]
    %v692 = vld [vmem:[#allocation9 + $0x40] sm:$0xff]
    %v693 = vld [vmem:[#allocation9 + $0x48] sm:$0xff]
    %v694 = vld [vmem:[#allocation9 + $0x50] sm:$0xff]
    %v695 = vld [vmem:[#allocation9 + $0x58] sm:$0xff]
    %v696 = vld [vmem:[#allocation9 + $0x60] sm:$0xff]
    %v697 = vld [vmem:[#allocation9 + $0x68] sm:$0xff]
    %v698 = vld [vmem:[#allocation9 + $0x70] sm:$0xff]
    %v699 = vld [vmem:[#allocation9 + $0x78] sm:$0xff]
    %v700 = vld [vmem:[#allocation9 + $0x80] sm:$0xff]
    %v701 = vld [vmem:[#allocation9 + $0x88] sm:$0xff]
    %v702 = vld [vmem:[#allocation9 + $0x90] sm:$0xff]
    %v703 = vld [vmem:[#allocation9 + $0x98] sm:$0xff]
    %v704 = vld [vmem:[#allocation9 + $0xa0] sm:$0xff]
    %v705 = vld [vmem:[#allocation9 + $0xa8] sm:$0xff]
    %v706 = vld [vmem:[#allocation9 + $0xb0] sm:$0xff]
    %v707 = vld [vmem:[#allocation9 + $0xb8] sm:$0xff]
    %v708 = vld [vmem:[#allocation9 + $0xc0] sm:$0xff]
    %v709 = vld [vmem:[#allocation9 + $0xc8] sm:$0xff]
    %v710 = vld [vmem:[#allocation9 + $0xd0] sm:$0xff]
    %v711 = vld [vmem:[#allocation9 + $0xd8] sm:$0xff]
    %v712 = vld [vmem:[#allocation9 + $0xe0] sm:$0xff]
    %v713 = vld [vmem:[#allocation9 + $0xe8] sm:$0xff]
    %v714 = vld [vmem:[#allocation9 + $0xf0] sm:$0xff]
    %v715 = vld [vmem:[#allocation9 + $0xf8] sm:$0xff]
    %v716 = vld [vmem:[#allocation9 + $0x100] sm:$0xff]
    %v717 = vld [vmem:[#allocation9 + $0x108] sm:$0xff]
    %v718 = vld [vmem:[#allocation9 + $0x110] sm:$0xff]
    %v719 = vld [vmem:[#allocation9 + $0x118] sm:$0xff]
    %v720 = vld [vmem:[#allocation9 + $0x120] sm:$0xff]
    %v721 = vld [vmem:[#allocation9 + $0x128] sm:$0xff]
    %v722 = vld [vmem:[#allocation9 + $0x130] sm:$0xff]
    %v723 = vld [vmem:[#allocation9 + $0x138] sm:$0xff]
    %v724 = vld [vmem:[#allocation9 + $0x140] sm:$0xff]
    %v725 = vld [vmem:[#allocation9 + $0x148] sm:$0xff]
    %v726 = vld [vmem:[#allocation9 + $0x150] sm:$0xff]
    %v727 = vld [vmem:[#allocation9 + $0x158] sm:$0xff]
    %v728 = vld [vmem:[#allocation9 + $0x160] sm:$0xff]
    %v729 = vld [vmem:[#allocation9 + $0x168] sm:$0xff]
    %v730 = vld [vmem:[#allocation9 + $0x170] sm:$0xff]
    %v731 = vld [vmem:[#allocation9 + $0x178] sm:$0xff]
    %v732 = vld [vmem:[#allocation9 + $0x180] sm:$0xff]
    %v733 = vld [vmem:[#allocation9 + $0x188] sm:$0xff]
    %v734 = vld [vmem:[#allocation9 + $0x190] sm:$0xff]
    %v735 = vld [vmem:[#allocation9 + $0x198] sm:$0xff]
    %v736 = vld [vmem:[#allocation9 + $0x1a0] sm:$0xff]
    %v737 = vld [vmem:[#allocation9 + $0x1a8] sm:$0xff]
    %v738 = vld [vmem:[#allocation9 + $0x1b0] sm:$0xff]
    %v739 = vld [vmem:[#allocation9 + $0x1b8] sm:$0xff]
    %v740 = vld [vmem:[#allocation9 + $0x1c0] sm:$0xff]
    %v741 = vld [vmem:[#allocation9 + $0x1c8] sm:$0xff]
    %v742 = vld [vmem:[#allocation9 + $0x1d0] sm:$0xff]
    %v743 = vld [vmem:[#allocation9 + $0x1d8] sm:$0xff]
    %v744 = vld [vmem:[#allocation9 + $0x1e0] sm:$0xff]
    %v745 = vld [vmem:[#allocation9 + $0x1e8] sm:$0xff]
    %v746 = vld [vmem:[#allocation9 + $0x1f0] sm:$0xff]
    %v747 = vld [vmem:[#allocation9 + $0x1f8] sm:$0xff]
    %748 = vmatprep.subr.mxu0 %v715
    %749 = vmatpush1.msra.mxu0 %v714
    %750 = vmatprep.subr.mxu0 %v713
    %751 = vmatpush1.msra.mxu0 %v712
    %752 = vmatprep.subr.mxu0 %v711
    %753 = vmatpush1.msra.mxu0 %v710
    %754 = vmatprep.subr.mxu0 %v709
    %755 = vmatpush1.msra.mxu0 %v708
    %756 = vmatprep.subr.mxu0 %v707
    %757 = vmatpush1.msra.mxu0 %v706
    %758 = vmatprep.subr.mxu0 %v705
    %759 = vmatpush1.msra.mxu0 %v704
    %760 = vmatprep.subr.mxu0 %v703
    %761 = vmatpush1.msra.mxu0 %v702
    %762 = vmatprep.subr.mxu0 %v701
    %763 = vmatpush1.msra.mxu0 %v700
    %764 = vmatprep.subr.mxu0 %v699
    %765 = vmatpush1.msra.mxu0 %v698
    %766 = vmatprep.subr.mxu0 %v697
    %767 = vmatpush1.msra.mxu0 %v696
    %768 = vmatprep.subr.mxu0 %v695
    %769 = vmatpush1.msra.mxu0 %v694
    %770 = vmatprep.subr.mxu0 %v693
    %771 = vmatpush1.msra.mxu0 %v692
    %772 = vmatprep.subr.mxu0 %v691
    %773 = vmatpush1.msra.mxu0 %v690
    %774 = vmatprep.subr.mxu0 %v689
    %775 = vmatpush1.msra.mxu0 %v688
    %776 = vmatprep.subr.mxu0 %v687
    %777 = vmatpush1.msra.mxu0 %v686
    %778 = vmatprep.subr.mxu0 %v685
    %779 = vmatpush1.msra.mxu0 %v684
    %780 = vmatprep.subr.mxu0 %v747
    %781 = vmatpush2.msra.mxu0 %v746
    %782 = vmatprep.subr.mxu0 %v745
    %783 = vmatpush2.msra.mxu0 %v744
    %784 = vmatprep.subr.mxu0 %v743
    %785 = vmatpush2.msra.mxu0 %v742
    %786 = vmatprep.subr.mxu0 %v741
    %787 = vmatpush2.msra.mxu0 %v740
    %788 = vmatprep.subr.mxu0 %v739
    %789 = vmatpush2.msra.mxu0 %v738
    %790 = vmatprep.subr.mxu0 %v737
    %791 = vmatpush2.msra.mxu0 %v736
    %792 = vmatprep.subr.mxu0 %v735
    %793 = vmatpush2.msra.mxu0 %v734
    %794 = vmatprep.subr.mxu0 %v733
    %795 = vmatpush2.msra.mxu0 %v732
    %796 = vmatprep.subr.mxu0 %v731
    %797 = vmatpush2.msra.mxu0 %v730
    %798 = vmatprep.subr.mxu0 %v729
    %799 = vmatpush2.msra.mxu0 %v728
    %800 = vmatprep.subr.mxu0 %v727
    %801 = vmatpush2.msra.mxu0 %v726
    %802 = vmatprep.subr.mxu0 %v725
    %803 = vmatpush2.msra.mxu0 %v724
    %804 = vmatprep.subr.mxu0 %v723
    %805 = vmatpush2.msra.mxu0 %v722
    %806 = vmatprep.subr.mxu0 %v721
    %807 = vmatpush2.msra.mxu0 %v720
    %808 = vmatprep.subr.mxu0 %v719
    %809 = vmatpush2.msra.mxu0 %v718
    %810 = vmatprep.subr.mxu0 %v717
    %811 = vmatpush2.msra.mxu0 %v716
    %812 = vmatprep.mubr.f32.mxu0 %v429
    %813 = vmatmul.mubr.f32.gmra.mxu0 %v428
    %v814 = vpop.f32.mrf.mxu0
    %v815 = vadd.f32 0.0, %v814
    %v816 = vpop.f32.mrf.mxu0
    %v817 = vadd.f32 0.0, %v816
    %818 = vmatprep.mubr.f32.mxu0 %v431
    %819 = vmatmul.mubr.f32.gmra.mxu0 %v430
    %v820 = vpop.f32.mrf.mxu0
    %v821 = vadd.f32 0.0, %v820
    %v822 = vpop.f32.mrf.mxu0
    %v823 = vadd.f32 0.0, %v822
    %824 = vmatprep.mubr.f32.mxu0 %v433
    %825 = vmatmul.mubr.f32.gmra.mxu0 %v432
    %v826 = vpop.f32.mrf.mxu0
    %v827 = vadd.f32 0.0, %v826
    %v828 = vpop.f32.mrf.mxu0
    %v829 = vadd.f32 0.0, %v828
    %830 = vmatprep.mubr.f32.mxu0 %v435
    %831 = vmatmul.mubr.f32.gmra.mxu0 %v434
    %v832 = vpop.f32.mrf.mxu0
    %v833 = vadd.f32 0.0, %v832
    %v834 = vpop.f32.mrf.mxu0
    %v835 = vadd.f32 0.0, %v834
    %836 = vmatprep.mubr.f32.mxu0 %v437
    %837 = vmatmul.mubr.f32.gmra.mxu0 %v436
    %v838 = vpop.f32.mrf.mxu0
    %v839 = vadd.f32 0.0, %v838
    %v840 = vpop.f32.mrf.mxu0
    %v841 = vadd.f32 0.0, %v840
    %842 = vmatprep.mubr.f32.mxu0 %v439
    %843 = vmatmul.mubr.f32.gmra.mxu0 %v438
    %v844 = vpop.f32.mrf.mxu0
    %v845 = vadd.f32 0.0, %v844
    %v846 = vpop.f32.mrf.mxu0
    %v847 = vadd.f32 0.0, %v846
    %848 = vmatprep.mubr.f32.mxu0 %v441
    %849 = vmatmul.mubr.f32.gmra.mxu0 %v440
    %v850 = vpop.f32.mrf.mxu0
    %v851 = vadd.f32 0.0, %v850
    %v852 = vpop.f32.mrf.mxu0
    %v853 = vadd.f32 0.0, %v852
    %854 = vmatprep.mubr.f32.mxu0 %v443
    %855 = vmatmul.mubr.f32.gmra.mxu0 %v442
    %v856 = vpop.f32.mrf.mxu0
    %v857 = vadd.f32 0.0, %v856
    %v858 = vpop.f32.mrf.mxu0
    %v859 = vadd.f32 0.0, %v858
    %860 = vmatprep.mubr.f32.mxu0 %v445
    %861 = vmatmul.mubr.f32.gmra.mxu0 %v444
    %v862 = vpop.f32.mrf.mxu0
    %v863 = vadd.f32 0.0, %v862
    %v864 = vpop.f32.mrf.mxu0
    %v865 = vadd.f32 0.0, %v864
    %866 = vmatprep.mubr.f32.mxu0 %v447
    %867 = vmatmul.mubr.f32.gmra.mxu0 %v446
    %v868 = vpop.f32.mrf.mxu0
    %v869 = vadd.f32 0.0, %v868
    %v870 = vpop.f32.mrf.mxu0
    %v871 = vadd.f32 0.0, %v870
    %872 = vmatprep.mubr.f32.mxu0 %v449
    %873 = vmatmul.mubr.f32.gmra.mxu0 %v448
    %v874 = vpop.f32.mrf.mxu0
    %v875 = vadd.f32 0.0, %v874
    %v876 = vpop.f32.mrf.mxu0
    %v877 = vadd.f32 0.0, %v876
    %878 = vmatprep.mubr.f32.mxu0 %v451
    %879 = vmatmul.mubr.f32.gmra.mxu0 %v450
    %v880 = vpop.f32.mrf.mxu0
    %v881 = vadd.f32 0.0, %v880
    %v882 = vpop.f32.mrf.mxu0
    %v883 = vadd.f32 0.0, %v882
    %884 = vmatprep.mubr.f32.mxu0 %v453
    %885 = vmatmul.mubr.f32.gmra.mxu0 %v452
    %v886 = vpop.f32.mrf.mxu0
    %v887 = vadd.f32 0.0, %v886
    %v888 = vpop.f32.mrf.mxu0
    %v889 = vadd.f32 0.0, %v888
    %890 = vmatprep.mubr.f32.mxu0 %v455
    %891 = vmatmul.mubr.f32.gmra.mxu0 %v454
    %v892 = vpop.f32.mrf.mxu0
    %v893 = vadd.f32 0.0, %v892
    %v894 = vpop.f32.mrf.mxu0
    %v895 = vadd.f32 0.0, %v894
    %896 = vmatprep.mubr.f32.mxu0 %v457
    %897 = vmatmul.mubr.f32.gmra.mxu0 %v456
    %v898 = vpop.f32.mrf.mxu0
    %v899 = vadd.f32 0.0, %v898
    %v900 = vpop.f32.mrf.mxu0
    %v901 = vadd.f32 0.0, %v900
    %902 = vmatprep.mubr.f32.mxu0 %v459
    %903 = vmatmul.mubr.f32.gmra.mxu0 %v458
    %v904 = vpop.f32.mrf.mxu0
    %v905 = vadd.f32 0.0, %v904
    %v906 = vpop.f32.mrf.mxu0
    %v907 = vadd.f32 0.0, %v906
    %908 = vmatprep.mubr.f32.mxu0 %v461
    %909 = vmatmul.mubr.f32.gmra.mxu0 %v460
    %v910 = vpop.f32.mrf.mxu0
    %v911 = vadd.f32 0.0, %v910
    %v912 = vpop.f32.mrf.mxu0
    %v913 = vadd.f32 0.0, %v912
    %914 = vmatprep.mubr.f32.mxu0 %v463
    %915 = vmatmul.mubr.f32.gmra.mxu0 %v462
    %v916 = vpop.f32.mrf.mxu0
    %v917 = vadd.f32 0.0, %v916
    %v918 = vpop.f32.mrf.mxu0
    %v919 = vadd.f32 0.0, %v918
    %920 = vmatprep.mubr.f32.mxu0 %v465
    %921 = vmatmul.mubr.f32.gmra.mxu0 %v464
    %v922 = vpop.f32.mrf.mxu0
    %v923 = vadd.f32 0.0, %v922
    %v924 = vpop.f32.mrf.mxu0
    %v925 = vadd.f32 0.0, %v924
    %926 = vmatprep.mubr.f32.mxu0 %v467
    %927 = vmatmul.mubr.f32.gmra.mxu0 %v466
    %v928 = vpop.f32.mrf.mxu0
    %v929 = vadd.f32 0.0, %v928
    %v930 = vpop.f32.mrf.mxu0
    %v931 = vadd.f32 0.0, %v930
    %932 = vmatprep.mubr.f32.mxu0 %v469
    %933 = vmatmul.mubr.f32.gmra.mxu0 %v468
    %v934 = vpop.f32.mrf.mxu0
    %v935 = vadd.f32 0.0, %v934
    %v936 = vpop.f32.mrf.mxu0
    %v937 = vadd.f32 0.0, %v936
    %938 = vmatprep.mubr.f32.mxu0 %v471
    %939 = vmatmul.mubr.f32.gmra.mxu0 %v470
    %v940 = vpop.f32.mrf.mxu0
    %v941 = vadd.f32 0.0, %v940
    %v942 = vpop.f32.mrf.mxu0
    %v943 = vadd.f32 0.0, %v942
    %944 = vmatprep.mubr.f32.mxu0 %v473
    %945 = vmatmul.mubr.f32.gmra.mxu0 %v472
    %v946 = vpop.f32.mrf.mxu0
    %v947 = vadd.f32 0.0, %v946
    %v948 = vpop.f32.mrf.mxu0
    %v949 = vadd.f32 0.0, %v948
    %950 = vmatprep.mubr.f32.mxu0 %v475
    %951 = vmatmul.mubr.f32.gmra.mxu0 %v474
    %v952 = vpop.f32.mrf.mxu0
    %v953 = vadd.f32 0.0, %v952
    %v954 = vpop.f32.mrf.mxu0
    %v955 = vadd.f32 0.0, %v954
    %956 = vmatprep.mubr.f32.mxu0 %v477
    %957 = vmatmul.mubr.f32.gmra.mxu0 %v476
    %v958 = vpop.f32.mrf.mxu0
    %v959 = vadd.f32 0.0, %v958
    %v960 = vpop.f32.mrf.mxu0
    %v961 = vadd.f32 0.0, %v960
    %962 = vmatprep.mubr.f32.mxu0 %v479
    %963 = vmatmul.mubr.f32.gmra.mxu0 %v478
    %v964 = vpop.f32.mrf.mxu0
    %v965 = vadd.f32 0.0, %v964
    %v966 = vpop.f32.mrf.mxu0
    %v967 = vadd.f32 0.0, %v966
    %968 = vmatprep.mubr.f32.mxu0 %v481
    %969 = vmatmul.mubr.f32.gmra.mxu0 %v480
    %v970 = vpop.f32.mrf.mxu0
    %v971 = vadd.f32 0.0, %v970
    %v972 = vpop.f32.mrf.mxu0
    %v973 = vadd.f32 0.0, %v972
    %974 = vmatprep.mubr.f32.mxu0 %v483
    %975 = vmatmul.mubr.f32.gmra.mxu0 %v482
    %v976 = vpop.f32.mrf.mxu0
    %v977 = vadd.f32 0.0, %v976
    %v978 = vpop.f32.mrf.mxu0
    %v979 = vadd.f32 0.0, %v978
    %980 = vmatprep.mubr.f32.mxu0 %v485
    %981 = vmatmul.mubr.f32.gmra.mxu0 %v484
    %v982 = vpop.f32.mrf.mxu0
    %v983 = vadd.f32 0.0, %v982
    %v984 = vpop.f32.mrf.mxu0
    %v985 = vadd.f32 0.0, %v984
    %986 = vmatprep.mubr.f32.mxu0 %v487
    %987 = vmatmul.mubr.f32.gmra.mxu0 %v486
    %v988 = vpop.f32.mrf.mxu0
    %v989 = vadd.f32 0.0, %v988
    %v990 = vpop.f32.mrf.mxu0
    %v991 = vadd.f32 0.0, %v990
    %992 = vmatprep.mubr.f32.mxu0 %v489
    %993 = vmatmul.mubr.f32.gmra.mxu0 %v488
    %v994 = vpop.f32.mrf.mxu0
    %v995 = vadd.f32 0.0, %v994
    %v996 = vpop.f32.mrf.mxu0
    %v997 = vadd.f32 0.0, %v996
    %998 = vmatprep.mubr.f32.mxu0 %v491
    %999 = vmatmul.mubr.f32.gmra.mxu0 %v490
    %v1000 = vpop.f32.mrf.mxu0
    %v1001 = vadd.f32 0.0, %v1000
    %v1002 = vpop.f32.mrf.mxu0
    %v1003 = vadd.f32 0.0, %v1002
    %1004 = vmatprep.mubr.f32.mxu0 %v493
    %1005 = vmatmul.mubr.f32.gmra.mxu0 %v492
    %v1006 = vpop.f32.mrf.mxu0
    %v1007 = vadd.f32 0.0, %v1006
    %v1008 = vpop.f32.mrf.mxu0
    %v1009 = vadd.f32 0.0, %v1008
    %1010 = vmatprep.mubr.f32.mxu0 %v495
    %1011 = vmatmul.mubr.f32.gmra.mxu0 %v494
    %v1012 = vpop.f32.mrf.mxu0
    %v1013 = vadd.f32 0.0, %v1012
    %v1014 = vpop.f32.mrf.mxu0
    %v1015 = vadd.f32 0.0, %v1014
    %1016 = vmatprep.mubr.f32.mxu0 %v497
    %1017 = vmatmul.mubr.f32.gmra.mxu0 %v496
    %v1018 = vpop.f32.mrf.mxu0
    %v1019 = vadd.f32 0.0, %v1018
    %v1020 = vpop.f32.mrf.mxu0
    %v1021 = vadd.f32 0.0, %v1020
    %1022 = vmatprep.mubr.f32.mxu0 %v499
    %1023 = vmatmul.mubr.f32.gmra.mxu0 %v498
    %v1024 = vpop.f32.mrf.mxu0
    %v1025 = vadd.f32 0.0, %v1024
    %v1026 = vpop.f32.mrf.mxu0
    %v1027 = vadd.f32 0.0, %v1026
    %1028 = vmatprep.mubr.f32.mxu0 %v501
    %1029 = vmatmul.mubr.f32.gmra.mxu0 %v500
    %v1030 = vpop.f32.mrf.mxu0
    %v1031 = vadd.f32 0.0, %v1030
    %v1032 = vpop.f32.mrf.mxu0
    %v1033 = vadd.f32 0.0, %v1032
    %1034 = vmatprep.mubr.f32.mxu0 %v503
    %1035 = vmatmul.mubr.f32.gmra.mxu0 %v502
    %v1036 = vpop.f32.mrf.mxu0
    %v1037 = vadd.f32 0.0, %v1036
    %v1038 = vpop.f32.mrf.mxu0
    %v1039 = vadd.f32 0.0, %v1038
    %1040 = vmatprep.mubr.f32.mxu0 %v505
    %1041 = vmatmul.mubr.f32.gmra.mxu0 %v504
    %v1042 = vpop.f32.mrf.mxu0
    %v1043 = vadd.f32 0.0, %v1042
    %v1044 = vpop.f32.mrf.mxu0
    %v1045 = vadd.f32 0.0, %v1044
    %1046 = vmatprep.mubr.f32.mxu0 %v507
    %1047 = vmatmul.mubr.f32.gmra.mxu0 %v506
    %v1048 = vpop.f32.mrf.mxu0
    %v1049 = vadd.f32 0.0, %v1048
    %v1050 = vpop.f32.mrf.mxu0
    %v1051 = vadd.f32 0.0, %v1050
    %1052 = vmatprep.mubr.f32.mxu0 %v509
    %1053 = vmatmul.mubr.f32.gmra.mxu0 %v508
    %v1054 = vpop.f32.mrf.mxu0
    %v1055 = vadd.f32 0.0, %v1054
    %v1056 = vpop.f32.mrf.mxu0
    %v1057 = vadd.f32 0.0, %v1056
    %1058 = vmatprep.mubr.f32.mxu0 %v511
    %1059 = vmatmul.mubr.f32.gmra.mxu0 %v510
    %v1060 = vpop.f32.mrf.mxu0
    %v1061 = vadd.f32 0.0, %v1060
    %v1062 = vpop.f32.mrf.mxu0
    %v1063 = vadd.f32 0.0, %v1062
    %1064 = vmatprep.mubr.f32.mxu0 %v513
    %1065 = vmatmul.mubr.f32.gmra.mxu0 %v512
    %v1066 = vpop.f32.mrf.mxu0
    %v1067 = vadd.f32 0.0, %v1066
    %v1068 = vpop.f32.mrf.mxu0
    %v1069 = vadd.f32 0.0, %v1068
    %1070 = vmatprep.mubr.f32.mxu0 %v515
    %1071 = vmatmul.mubr.f32.gmra.mxu0 %v514
    %v1072 = vpop.f32.mrf.mxu0
    %v1073 = vadd.f32 0.0, %v1072
    %v1074 = vpop.f32.mrf.mxu0
    %v1075 = vadd.f32 0.0, %v1074
    %1076 = vmatprep.mubr.f32.mxu0 %v517
    %1077 = vmatmul.mubr.f32.gmra.mxu0 %v516
    %v1078 = vpop.f32.mrf.mxu0
    %v1079 = vadd.f32 0.0, %v1078
    %v1080 = vpop.f32.mrf.mxu0
    %v1081 = vadd.f32 0.0, %v1080
    %1082 = vmatprep.mubr.f32.mxu0 %v519
    %1083 = vmatmul.mubr.f32.gmra.mxu0 %v518
    %v1084 = vpop.f32.mrf.mxu0
    %v1085 = vadd.f32 0.0, %v1084
    %v1086 = vpop.f32.mrf.mxu0
    %v1087 = vadd.f32 0.0, %v1086
    %1088 = vmatprep.mubr.f32.mxu0 %v521
    %1089 = vmatmul.mubr.f32.gmra.mxu0 %v520
    %v1090 = vpop.f32.mrf.mxu0
    %v1091 = vadd.f32 0.0, %v1090
    %v1092 = vpop.f32.mrf.mxu0
    %v1093 = vadd.f32 0.0, %v1092
    %1094 = vmatprep.mubr.f32.mxu0 %v523
    %1095 = vmatmul.mubr.f32.gmra.mxu0 %v522
    %v1096 = vpop.f32.mrf.mxu0
    %v1097 = vadd.f32 0.0, %v1096
    %v1098 = vpop.f32.mrf.mxu0
    %v1099 = vadd.f32 0.0, %v1098
    %1100 = vmatprep.mubr.f32.mxu0 %v525
    %1101 = vmatmul.mubr.f32.gmra.mxu0 %v524
    %v1102 = vpop.f32.mrf.mxu0
    %v1103 = vadd.f32 0.0, %v1102
    %v1104 = vpop.f32.mrf.mxu0
    %v1105 = vadd.f32 0.0, %v1104
    %1106 = vmatprep.mubr.f32.mxu0 %v527
    %1107 = vmatmul.mubr.f32.gmra.mxu0 %v526
    %v1108 = vpop.f32.mrf.mxu0
    %v1109 = vadd.f32 0.0, %v1108
    %v1110 = vpop.f32.mrf.mxu0
    %v1111 = vadd.f32 0.0, %v1110
    %1112 = vmatprep.mubr.f32.mxu0 %v529
    %1113 = vmatmul.mubr.f32.gmra.mxu0 %v528
    %v1114 = vpop.f32.mrf.mxu0
    %v1115 = vadd.f32 0.0, %v1114
    %v1116 = vpop.f32.mrf.mxu0
    %v1117 = vadd.f32 0.0, %v1116
    %1118 = vmatprep.mubr.f32.mxu0 %v531
    %1119 = vmatmul.mubr.f32.gmra.mxu0 %v530
    %v1120 = vpop.f32.mrf.mxu0
    %v1121 = vadd.f32 0.0, %v1120
    %v1122 = vpop.f32.mrf.mxu0
    %v1123 = vadd.f32 0.0, %v1122
    %1124 = vmatprep.mubr.f32.mxu0 %v533
    %1125 = vmatmul.mubr.f32.gmra.mxu0 %v532
    %v1126 = vpop.f32.mrf.mxu0
    %v1127 = vadd.f32 0.0, %v1126
    %v1128 = vpop.f32.mrf.mxu0
    %v1129 = vadd.f32 0.0, %v1128
    %1130 = vmatprep.mubr.f32.mxu0 %v535
    %1131 = vmatmul.mubr.f32.gmra.mxu0 %v534
    %v1132 = vpop.f32.mrf.mxu0
    %v1133 = vadd.f32 0.0, %v1132
    %v1134 = vpop.f32.mrf.mxu0
    %v1135 = vadd.f32 0.0, %v1134
    %1136 = vmatprep.mubr.f32.mxu0 %v537
    %1137 = vmatmul.mubr.f32.gmra.mxu0 %v536
    %v1138 = vpop.f32.mrf.mxu0
    %v1139 = vadd.f32 0.0, %v1138
    %v1140 = vpop.f32.mrf.mxu0
    %v1141 = vadd.f32 0.0, %v1140
    %1142 = vmatprep.mubr.f32.mxu0 %v539
    %1143 = vmatmul.mubr.f32.gmra.mxu0 %v538
    %v1144 = vpop.f32.mrf.mxu0
    %v1145 = vadd.f32 0.0, %v1144
    %v1146 = vpop.f32.mrf.mxu0
    %v1147 = vadd.f32 0.0, %v1146
    %1148 = vmatprep.mubr.f32.mxu0 %v541
    %1149 = vmatmul.mubr.f32.gmra.mxu0 %v540
    %v1150 = vpop.f32.mrf.mxu0
    %v1151 = vadd.f32 0.0, %v1150
    %v1152 = vpop.f32.mrf.mxu0
    %v1153 = vadd.f32 0.0, %v1152
    %1154 = vmatprep.mubr.f32.mxu0 %v543
    %1155 = vmatmul.mubr.f32.gmra.mxu0 %v542
    %v1156 = vpop.f32.mrf.mxu0
    %v1157 = vadd.f32 0.0, %v1156
    %v1158 = vpop.f32.mrf.mxu0
    %v1159 = vadd.f32 0.0, %v1158
    %1160 = vmatprep.mubr.f32.mxu0 %v545
    %1161 = vmatmul.mubr.f32.gmra.mxu0 %v544
    %v1162 = vpop.f32.mrf.mxu0
    %v1163 = vadd.f32 0.0, %v1162
    %v1164 = vpop.f32.mrf.mxu0
    %v1165 = vadd.f32 0.0, %v1164
    %1166 = vmatprep.mubr.f32.mxu0 %v547
    %1167 = vmatmul.mubr.f32.gmra.mxu0 %v546
    %v1168 = vpop.f32.mrf.mxu0
    %v1169 = vadd.f32 0.0, %v1168
    %v1170 = vpop.f32.mrf.mxu0
    %v1171 = vadd.f32 0.0, %v1170
    %1172 = vmatprep.mubr.f32.mxu0 %v549
    %1173 = vmatmul.mubr.f32.gmra.mxu0 %v548
    %v1174 = vpop.f32.mrf.mxu0
    %v1175 = vadd.f32 0.0, %v1174
    %v1176 = vpop.f32.mrf.mxu0
    %v1177 = vadd.f32 0.0, %v1176
    %1178 = vmatprep.mubr.f32.mxu0 %v551
    %1179 = vmatmul.mubr.f32.gmra.mxu0 %v550
    %v1180 = vpop.f32.mrf.mxu0
    %v1181 = vadd.f32 0.0, %v1180
    %v1182 = vpop.f32.mrf.mxu0
    %v1183 = vadd.f32 0.0, %v1182
    %1184 = vmatprep.mubr.f32.mxu0 %v553
    %1185 = vmatmul.mubr.f32.gmra.mxu0 %v552
    %v1186 = vpop.f32.mrf.mxu0
    %v1187 = vadd.f32 0.0, %v1186
    %v1188 = vpop.f32.mrf.mxu0
    %v1189 = vadd.f32 0.0, %v1188
    %1190 = vmatprep.mubr.f32.mxu0 %v555
    %1191 = vmatmul.mubr.f32.gmra.mxu0 %v554
    %v1192 = vpop.f32.mrf.mxu0
    %v1193 = vadd.f32 0.0, %v1192
    %v1194 = vpop.f32.mrf.mxu0
    %v1195 = vadd.f32 0.0, %v1194
    %1196 = vmatprep.mubr.f32.mxu0 %v557
    %1197 = vmatmul.mubr.f32.gmra.mxu0 %v556
    %v1198 = vpop.f32.mrf.mxu0
    %v1199 = vadd.f32 0.0, %v1198
    %v1200 = vpop.f32.mrf.mxu0
    %v1201 = vadd.f32 0.0, %v1200
    %1202 = vmatprep.mubr.f32.mxu0 %v559
    %1203 = vmatmul.mubr.f32.gmra.mxu0 %v558
    %v1204 = vpop.f32.mrf.mxu0
    %v1205 = vadd.f32 0.0, %v1204
    %v1206 = vpop.f32.mrf.mxu0
    %v1207 = vadd.f32 0.0, %v1206
    %1208 = vmatprep.mubr.f32.mxu0 %v561
    %1209 = vmatmul.mubr.f32.gmra.mxu0 %v560
    %v1210 = vpop.f32.mrf.mxu0
    %v1211 = vadd.f32 0.0, %v1210
    %v1212 = vpop.f32.mrf.mxu0
    %v1213 = vadd.f32 0.0, %v1212
    %1214 = vmatprep.mubr.f32.mxu0 %v563
    %1215 = vmatmul.mubr.f32.gmra.mxu0 %v562
    %v1216 = vpop.f32.mrf.mxu0
    %v1217 = vadd.f32 0.0, %v1216
    %v1218 = vpop.f32.mrf.mxu0
    %v1219 = vadd.f32 0.0, %v1218
    %1220 = vmatprep.mubr.f32.mxu0 %v565
    %1221 = vmatmul.mubr.f32.gmra.mxu0 %v564
    %v1222 = vpop.f32.mrf.mxu0
    %v1223 = vadd.f32 0.0, %v1222
    %v1224 = vpop.f32.mrf.mxu0
    %v1225 = vadd.f32 0.0, %v1224
    %1226 = vmatprep.mubr.f32.mxu0 %v567
    %1227 = vmatmul.mubr.f32.gmra.mxu0 %v566
    %v1228 = vpop.f32.mrf.mxu0
    %v1229 = vadd.f32 0.0, %v1228
    %v1230 = vpop.f32.mrf.mxu0
    %v1231 = vadd.f32 0.0, %v1230
    %1232 = vmatprep.mubr.f32.mxu0 %v569
    %1233 = vmatmul.mubr.f32.gmra.mxu0 %v568
    %v1234 = vpop.f32.mrf.mxu0
    %v1235 = vadd.f32 0.0, %v1234
    %v1236 = vpop.f32.mrf.mxu0
    %v1237 = vadd.f32 0.0, %v1236
    %1238 = vmatprep.mubr.f32.mxu0 %v571
    %1239 = vmatmul.mubr.f32.gmra.mxu0 %v570
    %v1240 = vpop.f32.mrf.mxu0
    %v1241 = vadd.f32 0.0, %v1240
    %v1242 = vpop.f32.mrf.mxu0
    %v1243 = vadd.f32 0.0, %v1242
    %1244 = vmatprep.mubr.f32.mxu0 %v573
    %1245 = vmatmul.mubr.f32.gmra.mxu0 %v572
    %v1246 = vpop.f32.mrf.mxu0
    %v1247 = vadd.f32 0.0, %v1246
    %v1248 = vpop.f32.mrf.mxu0
    %v1249 = vadd.f32 0.0, %v1248
    %1250 = vmatprep.mubr.f32.mxu0 %v575
    %1251 = vmatmul.mubr.f32.gmra.mxu0 %v574
    %v1252 = vpop.f32.mrf.mxu0
    %v1253 = vadd.f32 0.0, %v1252
    %v1254 = vpop.f32.mrf.mxu0
    %v1255 = vadd.f32 0.0, %v1254
    %1256 = vmatprep.mubr.f32.mxu0 %v577
    %1257 = vmatmul.mubr.f32.gmra.mxu0 %v576
    %v1258 = vpop.f32.mrf.mxu0
    %v1259 = vadd.f32 0.0, %v1258
    %v1260 = vpop.f32.mrf.mxu0
    %v1261 = vadd.f32 0.0, %v1260
    %1262 = vmatprep.mubr.f32.mxu0 %v579
    %1263 = vmatmul.mubr.f32.gmra.mxu0 %v578
    %v1264 = vpop.f32.mrf.mxu0
    %v1265 = vadd.f32 0.0, %v1264
    %v1266 = vpop.f32.mrf.mxu0
    %v1267 = vadd.f32 0.0, %v1266
    %1268 = vmatprep.mubr.f32.mxu0 %v581
    %1269 = vmatmul.mubr.f32.gmra.mxu0 %v580
    %v1270 = vpop.f32.mrf.mxu0
    %v1271 = vadd.f32 0.0, %v1270
    %v1272 = vpop.f32.mrf.mxu0
    %v1273 = vadd.f32 0.0, %v1272
    %1274 = vmatprep.mubr.f32.mxu0 %v583
    %1275 = vmatmul.mubr.f32.gmra.mxu0 %v582
    %v1276 = vpop.f32.mrf.mxu0
    %v1277 = vadd.f32 0.0, %v1276
    %v1278 = vpop.f32.mrf.mxu0
    %v1279 = vadd.f32 0.0, %v1278
    %1280 = vmatprep.mubr.f32.mxu0 %v585
    %1281 = vmatmul.mubr.f32.gmra.mxu0 %v584
    %v1282 = vpop.f32.mrf.mxu0
    %v1283 = vadd.f32 0.0, %v1282
    %v1284 = vpop.f32.mrf.mxu0
    %v1285 = vadd.f32 0.0, %v1284
    %1286 = vmatprep.mubr.f32.mxu0 %v587
    %1287 = vmatmul.mubr.f32.gmra.mxu0 %v586
    %v1288 = vpop.f32.mrf.mxu0
    %v1289 = vadd.f32 0.0, %v1288
    %v1290 = vpop.f32.mrf.mxu0
    %v1291 = vadd.f32 0.0, %v1290
    %1292 = vmatprep.mubr.f32.mxu0 %v589
    %1293 = vmatmul.mubr.f32.gmra.mxu0 %v588
    %v1294 = vpop.f32.mrf.mxu0
    %v1295 = vadd.f32 0.0, %v1294
    %v1296 = vpop.f32.mrf.mxu0
    %v1297 = vadd.f32 0.0, %v1296
    %1298 = vmatprep.mubr.f32.mxu0 %v591
    %1299 = vmatmul.mubr.f32.gmra.mxu0 %v590
    %v1300 = vpop.f32.mrf.mxu0
    %v1301 = vadd.f32 0.0, %v1300
    %v1302 = vpop.f32.mrf.mxu0
    %v1303 = vadd.f32 0.0, %v1302
    %1304 = vmatprep.mubr.f32.mxu0 %v593
    %1305 = vmatmul.mubr.f32.gmra.mxu0 %v592
    %v1306 = vpop.f32.mrf.mxu0
    %v1307 = vadd.f32 0.0, %v1306
    %v1308 = vpop.f32.mrf.mxu0
    %v1309 = vadd.f32 0.0, %v1308
    %1310 = vmatprep.mubr.f32.mxu0 %v595
    %1311 = vmatmul.mubr.f32.gmra.mxu0 %v594
    %v1312 = vpop.f32.mrf.mxu0
    %v1313 = vadd.f32 0.0, %v1312
    %v1314 = vpop.f32.mrf.mxu0
    %v1315 = vadd.f32 0.0, %v1314
    %1316 = vmatprep.mubr.f32.mxu0 %v597
    %1317 = vmatmul.mubr.f32.gmra.mxu0 %v596
    %v1318 = vpop.f32.mrf.mxu0
    %v1319 = vadd.f32 0.0, %v1318
    %v1320 = vpop.f32.mrf.mxu0
    %v1321 = vadd.f32 0.0, %v1320
    %1322 = vmatprep.mubr.f32.mxu0 %v599
    %1323 = vmatmul.mubr.f32.gmra.mxu0 %v598
    %v1324 = vpop.f32.mrf.mxu0
    %v1325 = vadd.f32 0.0, %v1324
    %v1326 = vpop.f32.mrf.mxu0
    %v1327 = vadd.f32 0.0, %v1326
    %1328 = vmatprep.mubr.f32.mxu0 %v601
    %1329 = vmatmul.mubr.f32.gmra.mxu0 %v600
    %v1330 = vpop.f32.mrf.mxu0
    %v1331 = vadd.f32 0.0, %v1330
    %v1332 = vpop.f32.mrf.mxu0
    %v1333 = vadd.f32 0.0, %v1332
    %1334 = vmatprep.mubr.f32.mxu0 %v603
    %1335 = vmatmul.mubr.f32.gmra.mxu0 %v602
    %v1336 = vpop.f32.mrf.mxu0
    %v1337 = vadd.f32 0.0, %v1336
    %v1338 = vpop.f32.mrf.mxu0
    %v1339 = vadd.f32 0.0, %v1338
    %1340 = vmatprep.mubr.f32.mxu0 %v605
    %1341 = vmatmul.mubr.f32.gmra.mxu0 %v604
    %v1342 = vpop.f32.mrf.mxu0
    %v1343 = vadd.f32 0.0, %v1342
    %v1344 = vpop.f32.mrf.mxu0
    %v1345 = vadd.f32 0.0, %v1344
    %1346 = vmatprep.mubr.f32.mxu0 %v607
    %1347 = vmatmul.mubr.f32.gmra.mxu0 %v606
    %v1348 = vpop.f32.mrf.mxu0
    %v1349 = vadd.f32 0.0, %v1348
    %v1350 = vpop.f32.mrf.mxu0
    %v1351 = vadd.f32 0.0, %v1350
    %1352 = vmatprep.mubr.f32.mxu0 %v609
    %1353 = vmatmul.mubr.f32.gmra.mxu0 %v608
    %v1354 = vpop.f32.mrf.mxu0
    %v1355 = vadd.f32 0.0, %v1354
    %v1356 = vpop.f32.mrf.mxu0
    %v1357 = vadd.f32 0.0, %v1356
    %1358 = vmatprep.mubr.f32.mxu0 %v611
    %1359 = vmatmul.mubr.f32.gmra.mxu0 %v610
    %v1360 = vpop.f32.mrf.mxu0
    %v1361 = vadd.f32 0.0, %v1360
    %v1362 = vpop.f32.mrf.mxu0
    %v1363 = vadd.f32 0.0, %v1362
    %1364 = vmatprep.mubr.f32.mxu0 %v613
    %1365 = vmatmul.mubr.f32.gmra.mxu0 %v612
    %v1366 = vpop.f32.mrf.mxu0
    %v1367 = vadd.f32 0.0, %v1366
    %v1368 = vpop.f32.mrf.mxu0
    %v1369 = vadd.f32 0.0, %v1368
    %1370 = vmatprep.mubr.f32.mxu0 %v615
    %1371 = vmatmul.mubr.f32.gmra.mxu0 %v614
    %v1372 = vpop.f32.mrf.mxu0
    %v1373 = vadd.f32 0.0, %v1372
    %v1374 = vpop.f32.mrf.mxu0
    %v1375 = vadd.f32 0.0, %v1374
    %1376 = vmatprep.mubr.f32.mxu0 %v617
    %1377 = vmatmul.mubr.f32.gmra.mxu0 %v616
    %v1378 = vpop.f32.mrf.mxu0
    %v1379 = vadd.f32 0.0, %v1378
    %v1380 = vpop.f32.mrf.mxu0
    %v1381 = vadd.f32 0.0, %v1380
    %1382 = vmatprep.mubr.f32.mxu0 %v619
    %1383 = vmatmul.mubr.f32.gmra.mxu0 %v618
    %v1384 = vpop.f32.mrf.mxu0
    %v1385 = vadd.f32 0.0, %v1384
    %v1386 = vpop.f32.mrf.mxu0
    %v1387 = vadd.f32 0.0, %v1386
    %1388 = vmatprep.mubr.f32.mxu0 %v621
    %1389 = vmatmul.mubr.f32.gmra.mxu0 %v620
    %v1390 = vpop.f32.mrf.mxu0
    %v1391 = vadd.f32 0.0, %v1390
    %v1392 = vpop.f32.mrf.mxu0
    %v1393 = vadd.f32 0.0, %v1392
    %1394 = vmatprep.mubr.f32.mxu0 %v623
    %1395 = vmatmul.mubr.f32.gmra.mxu0 %v622
    %v1396 = vpop.f32.mrf.mxu0
    %v1397 = vadd.f32 0.0, %v1396
    %v1398 = vpop.f32.mrf.mxu0
    %v1399 = vadd.f32 0.0, %v1398
    %1400 = vmatprep.mubr.f32.mxu0 %v625
    %1401 = vmatmul.mubr.f32.gmra.mxu0 %v624
    %v1402 = vpop.f32.mrf.mxu0
    %v1403 = vadd.f32 0.0, %v1402
    %v1404 = vpop.f32.mrf.mxu0
    %v1405 = vadd.f32 0.0, %v1404
    %1406 = vmatprep.mubr.f32.mxu0 %v627
    %1407 = vmatmul.mubr.f32.gmra.mxu0 %v626
    %v1408 = vpop.f32.mrf.mxu0
    %v1409 = vadd.f32 0.0, %v1408
    %v1410 = vpop.f32.mrf.mxu0
    %v1411 = vadd.f32 0.0, %v1410
    %1412 = vmatprep.mubr.f32.mxu0 %v629
    %1413 = vmatmul.mubr.f32.gmra.mxu0 %v628
    %v1414 = vpop.f32.mrf.mxu0
    %v1415 = vadd.f32 0.0, %v1414
    %v1416 = vpop.f32.mrf.mxu0
    %v1417 = vadd.f32 0.0, %v1416
    %1418 = vmatprep.mubr.f32.mxu0 %v631
    %1419 = vmatmul.mubr.f32.gmra.mxu0 %v630
    %v1420 = vpop.f32.mrf.mxu0
    %v1421 = vadd.f32 0.0, %v1420
    %v1422 = vpop.f32.mrf.mxu0
    %v1423 = vadd.f32 0.0, %v1422
    %1424 = vmatprep.mubr.f32.mxu0 %v633
    %1425 = vmatmul.mubr.f32.gmra.mxu0 %v632
    %v1426 = vpop.f32.mrf.mxu0
    %v1427 = vadd.f32 0.0, %v1426
    %v1428 = vpop.f32.mrf.mxu0
    %v1429 = vadd.f32 0.0, %v1428
    %1430 = vmatprep.mubr.f32.mxu0 %v635
    %1431 = vmatmul.mubr.f32.gmra.mxu0 %v634
    %v1432 = vpop.f32.mrf.mxu0
    %v1433 = vadd.f32 0.0, %v1432
    %v1434 = vpop.f32.mrf.mxu0
    %v1435 = vadd.f32 0.0, %v1434
    %1436 = vmatprep.mubr.f32.mxu0 %v637
    %1437 = vmatmul.mubr.f32.gmra.mxu0 %v636
    %v1438 = vpop.f32.mrf.mxu0
    %v1439 = vadd.f32 0.0, %v1438
    %v1440 = vpop.f32.mrf.mxu0
    %v1441 = vadd.f32 0.0, %v1440
    %1442 = vmatprep.mubr.f32.mxu0 %v639
    %1443 = vmatmul.mubr.f32.gmra.mxu0 %v638
    %v1444 = vpop.f32.mrf.mxu0
    %v1445 = vadd.f32 0.0, %v1444
    %v1446 = vpop.f32.mrf.mxu0
    %v1447 = vadd.f32 0.0, %v1446
    %1448 = vmatprep.mubr.f32.mxu0 %v641
    %1449 = vmatmul.mubr.f32.gmra.mxu0 %v640
    %v1450 = vpop.f32.mrf.mxu0
    %v1451 = vadd.f32 0.0, %v1450
    %v1452 = vpop.f32.mrf.mxu0
    %v1453 = vadd.f32 0.0, %v1452
    %1454 = vmatprep.mubr.f32.mxu0 %v643
    %1455 = vmatmul.mubr.f32.gmra.mxu0 %v642
    %v1456 = vpop.f32.mrf.mxu0
    %v1457 = vadd.f32 0.0, %v1456
    %v1458 = vpop.f32.mrf.mxu0
    %v1459 = vadd.f32 0.0, %v1458
    %1460 = vmatprep.mubr.f32.mxu0 %v645
    %1461 = vmatmul.mubr.f32.gmra.mxu0 %v644
    %v1462 = vpop.f32.mrf.mxu0
    %v1463 = vadd.f32 0.0, %v1462
    %v1464 = vpop.f32.mrf.mxu0
    %v1465 = vadd.f32 0.0, %v1464
    %1466 = vmatprep.mubr.f32.mxu0 %v647
    %1467 = vmatmul.mubr.f32.gmra.mxu0 %v646
    %v1468 = vpop.f32.mrf.mxu0
    %v1469 = vadd.f32 0.0, %v1468
    %v1470 = vpop.f32.mrf.mxu0
    %v1471 = vadd.f32 0.0, %v1470
    %1472 = vmatprep.mubr.f32.mxu0 %v649
    %1473 = vmatmul.mubr.f32.gmra.mxu0 %v648
    %v1474 = vpop.f32.mrf.mxu0
    %v1475 = vadd.f32 0.0, %v1474
    %v1476 = vpop.f32.mrf.mxu0
    %v1477 = vadd.f32 0.0, %v1476
    %1478 = vmatprep.mubr.f32.mxu0 %v651
    %1479 = vmatmul.mubr.f32.gmra.mxu0 %v650
    %v1480 = vpop.f32.mrf.mxu0
    %v1481 = vadd.f32 0.0, %v1480
    %v1482 = vpop.f32.mrf.mxu0
    %v1483 = vadd.f32 0.0, %v1482
    %1484 = vmatprep.mubr.f32.mxu0 %v653
    %1485 = vmatmul.mubr.f32.gmra.mxu0 %v652
    %v1486 = vpop.f32.mrf.mxu0
    %v1487 = vadd.f32 0.0, %v1486
    %v1488 = vpop.f32.mrf.mxu0
    %v1489 = vadd.f32 0.0, %v1488
    %1490 = vmatprep.mubr.f32.mxu0 %v655
    %1491 = vmatmul.mubr.f32.gmra.mxu0 %v654
    %v1492 = vpop.f32.mrf.mxu0
    %v1493 = vadd.f32 0.0, %v1492
    %v1494 = vpop.f32.mrf.mxu0
    %v1495 = vadd.f32 0.0, %v1494
    %1496 = vmatprep.mubr.f32.mxu0 %v657
    %1497 = vmatmul.mubr.f32.gmra.mxu0 %v656
    %v1498 = vpop.f32.mrf.mxu0
    %v1499 = vadd.f32 0.0, %v1498
    %v1500 = vpop.f32.mrf.mxu0
    %v1501 = vadd.f32 0.0, %v1500
    %1502 = vmatprep.mubr.f32.mxu0 %v659
    %1503 = vmatmul.mubr.f32.gmra.mxu0 %v658
    %v1504 = vpop.f32.mrf.mxu0
    %v1505 = vadd.f32 0.0, %v1504
    %v1506 = vpop.f32.mrf.mxu0
    %v1507 = vadd.f32 0.0, %v1506
    %1508 = vmatprep.mubr.f32.mxu0 %v661
    %1509 = vmatmul.mubr.f32.gmra.mxu0 %v660
    %v1510 = vpop.f32.mrf.mxu0
    %v1511 = vadd.f32 0.0, %v1510
    %v1512 = vpop.f32.mrf.mxu0
    %v1513 = vadd.f32 0.0, %v1512
    %1514 = vmatprep.mubr.f32.mxu0 %v663
    %1515 = vmatmul.mubr.f32.gmra.mxu0 %v662
    %v1516 = vpop.f32.mrf.mxu0
    %v1517 = vadd.f32 0.0, %v1516
    %v1518 = vpop.f32.mrf.mxu0
    %v1519 = vadd.f32 0.0, %v1518
    %1520 = vmatprep.mubr.f32.mxu0 %v665
    %1521 = vmatmul.mubr.f32.gmra.mxu0 %v664
    %v1522 = vpop.f32.mrf.mxu0
    %v1523 = vadd.f32 0.0, %v1522
    %v1524 = vpop.f32.mrf.mxu0
    %v1525 = vadd.f32 0.0, %v1524
    %1526 = vmatprep.mubr.f32.mxu0 %v667
    %1527 = vmatmul.mubr.f32.gmra.mxu0 %v666
    %v1528 = vpop.f32.mrf.mxu0
    %v1529 = vadd.f32 0.0, %v1528
    %v1530 = vpop.f32.mrf.mxu0
    %v1531 = vadd.f32 0.0, %v1530
    %1532 = vmatprep.mubr.f32.mxu0 %v669
    %1533 = vmatmul.mubr.f32.gmra.mxu0 %v668
    %v1534 = vpop.f32.mrf.mxu0
    %v1535 = vadd.f32 0.0, %v1534
    %v1536 = vpop.f32.mrf.mxu0
    %v1537 = vadd.f32 0.0, %v1536
    %1538 = vmatprep.mubr.f32.mxu0 %v671
    %1539 = vmatmul.mubr.f32.gmra.mxu0 %v670
    %v1540 = vpop.f32.mrf.mxu0
    %v1541 = vadd.f32 0.0, %v1540
    %v1542 = vpop.f32.mrf.mxu0
    %v1543 = vadd.f32 0.0, %v1542
    %1544 = vmatprep.mubr.f32.mxu0 %v673
    %1545 = vmatmul.mubr.f32.gmra.mxu0 %v672
    %v1546 = vpop.f32.mrf.mxu0
    %v1547 = vadd.f32 0.0, %v1546
    %v1548 = vpop.f32.mrf.mxu0
    %v1549 = vadd.f32 0.0, %v1548
    %1550 = vmatprep.mubr.f32.mxu0 %v675
    %1551 = vmatmul.mubr.f32.gmra.mxu0 %v674
    %v1552 = vpop.f32.mrf.mxu0
    %v1553 = vadd.f32 0.0, %v1552
    %v1554 = vpop.f32.mrf.mxu0
    %v1555 = vadd.f32 0.0, %v1554
    %1556 = vmatprep.mubr.f32.mxu0 %v677
    %1557 = vmatmul.mubr.f32.gmra.mxu0 %v676
    %v1558 = vpop.f32.mrf.mxu0
    %v1559 = vadd.f32 0.0, %v1558
    %v1560 = vpop.f32.mrf.mxu0
    %v1561 = vadd.f32 0.0, %v1560
    %1562 = vmatprep.mubr.f32.mxu0 %v679
    %1563 = vmatmul.mubr.f32.gmra.mxu0 %v678
    %v1564 = vpop.f32.mrf.mxu0
    %v1565 = vadd.f32 0.0, %v1564
    %v1566 = vpop.f32.mrf.mxu0
    %v1567 = vadd.f32 0.0, %v1566
    %1568 = vmatprep.mubr.f32.mxu0 %v681
    %1569 = vmatmul.mubr.f32.gmra.mxu0 %v680
    %v1570 = vpop.f32.mrf.mxu0
    %v1571 = vadd.f32 0.0, %v1570
    %v1572 = vpop.f32.mrf.mxu0
    %v1573 = vadd.f32 0.0, %v1572
    %1574 = vmatprep.mubr.f32.mxu0 %v683
    %1575 = vmatmul.mubr.f32.gmra.mxu0 %v682
    %v1576 = vpop.f32.mrf.mxu0
    %v1577 = vadd.f32 0.0, %v1576
    %v1578 = vpop.f32.mrf.mxu0
    %v1579 = vadd.f32 0.0, %v1578
    %1580 = vdwg.mxu0
    %1581 = vmatprep.subr.mxu0 %v395
    %1582 = vmatpush1.msra.mxu0 %v394
    %1583 = vmatprep.subr.mxu0 %v393
    %1584 = vmatpush1.msra.mxu0 %v392
    %1585 = vmatprep.subr.mxu0 %v391
    %1586 = vmatpush1.msra.mxu0 %v390
    %1587 = vmatprep.subr.mxu0 %v389
    %1588 = vmatpush1.msra.mxu0 %v388
    %1589 = vmatprep.subr.mxu0 %v387
    %1590 = vmatpush1.msra.mxu0 %v386
    %1591 = vmatprep.subr.mxu0 %v385
    %1592 = vmatpush1.msra.mxu0 %v384
    %1593 = vmatprep.subr.mxu0 %v383
    %1594 = vmatpush1.msra.mxu0 %v382
    %1595 = vmatprep.subr.mxu0 %v381
    %1596 = vmatpush1.msra.mxu0 %v380
    %1597 = vmatprep.subr.mxu0 %v379
    %1598 = vmatpush1.msra.mxu0 %v378
    %1599 = vmatprep.subr.mxu0 %v377
    %1600 = vmatpush1.msra.mxu0 %v376
    %1601 = vmatprep.subr.mxu0 %v375
    %1602 = vmatpush1.msra.mxu0 %v374
    %1603 = vmatprep.subr.mxu0 %v373
    %1604 = vmatpush1.msra.mxu0 %v372
    %1605 = vmatprep.subr.mxu0 %v371
    %1606 = vmatpush1.msra.mxu0 %v370
    %1607 = vmatprep.subr.mxu0 %v369
    %1608 = vmatpush1.msra.mxu0 %v368
    %1609 = vmatprep.subr.mxu0 %v367
    %1610 = vmatpush1.msra.mxu0 %v366
    %1611 = vmatprep.subr.mxu0 %v365
    %1612 = vmatpush1.msra.mxu0 %v364
    %1613 = vmatprep.subr.mxu0 %v427
    %1614 = vmatpush2.msra.mxu0 %v426
    %1615 = vmatprep.subr.mxu0 %v425
    %1616 = vmatpush2.msra.mxu0 %v424
    %1617 = vmatprep.subr.mxu0 %v423
    %1618 = vmatpush2.msra.mxu0 %v422
    %1619 = vmatprep.subr.mxu0 %v421
    %1620 = vmatpush2.msra.mxu0 %v420
    %1621 = vmatprep.subr.mxu0 %v419
    %1622 = vmatpush2.msra.mxu0 %v418
    %1623 = vmatprep.subr.mxu0 %v417
    %1624 = vmatpush2.msra.mxu0 %v416
    %1625 = vmatprep.subr.mxu0 %v415
    %1626 = vmatpush2.msra.mxu0 %v414
    %1627 = vmatprep.subr.mxu0 %v413
    %1628 = vmatpush2.msra.mxu0 %v412
    %1629 = vmatprep.subr.mxu0 %v411
    %1630 = vmatpush2.msra.mxu0 %v410
    %1631 = vmatprep.subr.mxu0 %v409
    %1632 = vmatpush2.msra.mxu0 %v408
    %1633 = vmatprep.subr.mxu0 %v407
    %1634 = vmatpush2.msra.mxu0 %v406
    %1635 = vmatprep.subr.mxu0 %v405
    %1636 = vmatpush2.msra.mxu0 %v404
    %1637 = vmatprep.subr.mxu0 %v403
    %1638 = vmatpush2.msra.mxu0 %v402
    %1639 = vmatprep.subr.mxu0 %v401
    %1640 = vmatpush2.msra.mxu0 %v400
    %1641 = vmatprep.subr.mxu0 %v399
    %1642 = vmatpush2.msra.mxu0 %v398
    %1643 = vmatprep.subr.mxu0 %v397
    %1644 = vmatpush2.msra.mxu0 %v396
    %1645 = vmatprep.mubr.f32.mxu0 %v109
    %1646 = vmatmul.mubr.f32.gmra.mxu0 %v108
    %v1647 = vpop.f32.mrf.mxu0
    %v1648 = vadd.f32 %v815, %v1647
    %v1649 = vpop.f32.mrf.mxu0
    %v1650 = vadd.f32 %v817, %v1649
    %1651 = vmatprep.mubr.f32.mxu0 %v111
    %1652 = vmatmul.mubr.f32.gmra.mxu0 %v110
    %v1653 = vpop.f32.mrf.mxu0
    %v1654 = vadd.f32 %v821, %v1653
    %v1655 = vpop.f32.mrf.mxu0
    %v1656 = vadd.f32 %v823, %v1655
    %1657 = vmatprep.mubr.f32.mxu0 %v113
    %1658 = vmatmul.mubr.f32.gmra.mxu0 %v112
    %v1659 = vpop.f32.mrf.mxu0
    %v1660 = vadd.f32 %v827, %v1659
    %v1661 = vpop.f32.mrf.mxu0
    %v1662 = vadd.f32 %v829, %v1661
    %1663 = vmatprep.mubr.f32.mxu0 %v115
    %1664 = vmatmul.mubr.f32.gmra.mxu0 %v114
    %v1665 = vpop.f32.mrf.mxu0
    %v1666 = vadd.f32 %v833, %v1665
    %v1667 = vpop.f32.mrf.mxu0
    %v1668 = vadd.f32 %v835, %v1667
    %1669 = vmatprep.mubr.f32.mxu0 %v117
    %1670 = vmatmul.mubr.f32.gmra.mxu0 %v116
    %v1671 = vpop.f32.mrf.mxu0
    %v1672 = vadd.f32 %v839, %v1671
    %v1673 = vpop.f32.mrf.mxu0
    %v1674 = vadd.f32 %v841, %v1673
    %1675 = vmatprep.mubr.f32.mxu0 %v119
    %1676 = vmatmul.mubr.f32.gmra.mxu0 %v118
    %v1677 = vpop.f32.mrf.mxu0
    %v1678 = vadd.f32 %v845, %v1677
    %v1679 = vpop.f32.mrf.mxu0
    %v1680 = vadd.f32 %v847, %v1679
    %1681 = vmatprep.mubr.f32.mxu0 %v121
    %1682 = vmatmul.mubr.f32.gmra.mxu0 %v120
    %v1683 = vpop.f32.mrf.mxu0
    %v1684 = vadd.f32 %v851, %v1683
    %v1685 = vpop.f32.mrf.mxu0
    %v1686 = vadd.f32 %v853, %v1685
    %1687 = vmatprep.mubr.f32.mxu0 %v123
    %1688 = vmatmul.mubr.f32.gmra.mxu0 %v122
    %v1689 = vpop.f32.mrf.mxu0
    %v1690 = vadd.f32 %v857, %v1689
    %v1691 = vpop.f32.mrf.mxu0
    %v1692 = vadd.f32 %v859, %v1691
    %1693 = vmatprep.mubr.f32.mxu0 %v125
    %1694 = vmatmul.mubr.f32.gmra.mxu0 %v124
    %v1695 = vpop.f32.mrf.mxu0
    %v1696 = vadd.f32 %v863, %v1695
    %v1697 = vpop.f32.mrf.mxu0
    %v1698 = vadd.f32 %v865, %v1697
    %1699 = vmatprep.mubr.f32.mxu0 %v127
    %1700 = vmatmul.mubr.f32.gmra.mxu0 %v126
    %v1701 = vpop.f32.mrf.mxu0
    %v1702 = vadd.f32 %v869, %v1701
    %v1703 = vpop.f32.mrf.mxu0
    %v1704 = vadd.f32 %v871, %v1703
    %1705 = vmatprep.mubr.f32.mxu0 %v129
    %1706 = vmatmul.mubr.f32.gmra.mxu0 %v128
    %v1707 = vpop.f32.mrf.mxu0
    %v1708 = vadd.f32 %v875, %v1707
    %v1709 = vpop.f32.mrf.mxu0
    %v1710 = vadd.f32 %v877, %v1709
    %1711 = vmatprep.mubr.f32.mxu0 %v131
    %1712 = vmatmul.mubr.f32.gmra.mxu0 %v130
    %v1713 = vpop.f32.mrf.mxu0
    %v1714 = vadd.f32 %v881, %v1713
    %v1715 = vpop.f32.mrf.mxu0
    %v1716 = vadd.f32 %v883, %v1715
    %1717 = vmatprep.mubr.f32.mxu0 %v133
    %1718 = vmatmul.mubr.f32.gmra.mxu0 %v132
    %v1719 = vpop.f32.mrf.mxu0
    %v1720 = vadd.f32 %v887, %v1719
    %v1721 = vpop.f32.mrf.mxu0
    %v1722 = vadd.f32 %v889, %v1721
    %1723 = vmatprep.mubr.f32.mxu0 %v135
    %1724 = vmatmul.mubr.f32.gmra.mxu0 %v134
    %v1725 = vpop.f32.mrf.mxu0
    %v1726 = vadd.f32 %v893, %v1725
    %v1727 = vpop.f32.mrf.mxu0
    %v1728 = vadd.f32 %v895, %v1727
    %1729 = vmatprep.mubr.f32.mxu0 %v137
    %1730 = vmatmul.mubr.f32.gmra.mxu0 %v136
    %v1731 = vpop.f32.mrf.mxu0
    %v1732 = vadd.f32 %v899, %v1731
    %v1733 = vpop.f32.mrf.mxu0
    %v1734 = vadd.f32 %v901, %v1733
    %1735 = vmatprep.mubr.f32.mxu0 %v139
    %1736 = vmatmul.mubr.f32.gmra.mxu0 %v138
    %v1737 = vpop.f32.mrf.mxu0
    %v1738 = vadd.f32 %v905, %v1737
    %v1739 = vpop.f32.mrf.mxu0
    %v1740 = vadd.f32 %v907, %v1739
    %1741 = vmatprep.mubr.f32.mxu0 %v141
    %1742 = vmatmul.mubr.f32.gmra.mxu0 %v140
    %v1743 = vpop.f32.mrf.mxu0
    %v1744 = vadd.f32 %v911, %v1743
    %v1745 = vpop.f32.mrf.mxu0
    %v1746 = vadd.f32 %v913, %v1745
    %1747 = vmatprep.mubr.f32.mxu0 %v143
    %1748 = vmatmul.mubr.f32.gmra.mxu0 %v142
    %v1749 = vpop.f32.mrf.mxu0
    %v1750 = vadd.f32 %v917, %v1749
    %v1751 = vpop.f32.mrf.mxu0
    %v1752 = vadd.f32 %v919, %v1751
    %1753 = vmatprep.mubr.f32.mxu0 %v145
    %1754 = vmatmul.mubr.f32.gmra.mxu0 %v144
    %v1755 = vpop.f32.mrf.mxu0
    %v1756 = vadd.f32 %v923, %v1755
    %v1757 = vpop.f32.mrf.mxu0
    %v1758 = vadd.f32 %v925, %v1757
    %1759 = vmatprep.mubr.f32.mxu0 %v147
    %1760 = vmatmul.mubr.f32.gmra.mxu0 %v146
    %v1761 = vpop.f32.mrf.mxu0
    %v1762 = vadd.f32 %v929, %v1761
    %v1763 = vpop.f32.mrf.mxu0
    %v1764 = vadd.f32 %v931, %v1763
    %1765 = vmatprep.mubr.f32.mxu0 %v149
    %1766 = vmatmul.mubr.f32.gmra.mxu0 %v148
    %v1767 = vpop.f32.mrf.mxu0
    %v1768 = vadd.f32 %v935, %v1767
    %v1769 = vpop.f32.mrf.mxu0
    %v1770 = vadd.f32 %v937, %v1769
    %1771 = vmatprep.mubr.f32.mxu0 %v151
    %1772 = vmatmul.mubr.f32.gmra.mxu0 %v150
    %v1773 = vpop.f32.mrf.mxu0
    %v1774 = vadd.f32 %v941, %v1773
    %v1775 = vpop.f32.mrf.mxu0
    %v1776 = vadd.f32 %v943, %v1775
    %1777 = vmatprep.mubr.f32.mxu0 %v153
    %1778 = vmatmul.mubr.f32.gmra.mxu0 %v152
    %v1779 = vpop.f32.mrf.mxu0
    %v1780 = vadd.f32 %v947, %v1779
    %v1781 = vpop.f32.mrf.mxu0
    %v1782 = vadd.f32 %v949, %v1781
    %1783 = vmatprep.mubr.f32.mxu0 %v155
    %1784 = vmatmul.mubr.f32.gmra.mxu0 %v154
    %v1785 = vpop.f32.mrf.mxu0
    %v1786 = vadd.f32 %v953, %v1785
    %v1787 = vpop.f32.mrf.mxu0
    %v1788 = vadd.f32 %v955, %v1787
    %1789 = vmatprep.mubr.f32.mxu0 %v157
    %1790 = vmatmul.mubr.f32.gmra.mxu0 %v156
    %v1791 = vpop.f32.mrf.mxu0
    %v1792 = vadd.f32 %v959, %v1791
    %v1793 = vpop.f32.mrf.mxu0
    %v1794 = vadd.f32 %v961, %v1793
    %1795 = vmatprep.mubr.f32.mxu0 %v159
    %1796 = vmatmul.mubr.f32.gmra.mxu0 %v158
    %v1797 = vpop.f32.mrf.mxu0
    %v1798 = vadd.f32 %v965, %v1797
    %v1799 = vpop.f32.mrf.mxu0
    %v1800 = vadd.f32 %v967, %v1799
    %1801 = vmatprep.mubr.f32.mxu0 %v161
    %1802 = vmatmul.mubr.f32.gmra.mxu0 %v160
    %v1803 = vpop.f32.mrf.mxu0
    %v1804 = vadd.f32 %v971, %v1803
    %v1805 = vpop.f32.mrf.mxu0
    %v1806 = vadd.f32 %v973, %v1805
    %1807 = vmatprep.mubr.f32.mxu0 %v163
    %1808 = vmatmul.mubr.f32.gmra.mxu0 %v162
    %v1809 = vpop.f32.mrf.mxu0
    %v1810 = vadd.f32 %v977, %v1809
    %v1811 = vpop.f32.mrf.mxu0
    %v1812 = vadd.f32 %v979, %v1811
    %1813 = vmatprep.mubr.f32.mxu0 %v165
    %1814 = vmatmul.mubr.f32.gmra.mxu0 %v164
    %v1815 = vpop.f32.mrf.mxu0
    %v1816 = vadd.f32 %v983, %v1815
    %v1817 = vpop.f32.mrf.mxu0
    %v1818 = vadd.f32 %v985, %v1817
    %1819 = vmatprep.mubr.f32.mxu0 %v167
    %1820 = vmatmul.mubr.f32.gmra.mxu0 %v166
    %v1821 = vpop.f32.mrf.mxu0
    %v1822 = vadd.f32 %v989, %v1821
    %v1823 = vpop.f32.mrf.mxu0
    %v1824 = vadd.f32 %v991, %v1823
    %1825 = vmatprep.mubr.f32.mxu0 %v169
    %1826 = vmatmul.mubr.f32.gmra.mxu0 %v168
    %v1827 = vpop.f32.mrf.mxu0
    %v1828 = vadd.f32 %v995, %v1827
    %v1829 = vpop.f32.mrf.mxu0
    %v1830 = vadd.f32 %v997, %v1829
    %1831 = vmatprep.mubr.f32.mxu0 %v171
    %1832 = vmatmul.mubr.f32.gmra.mxu0 %v170
    %v1833 = vpop.f32.mrf.mxu0
    %v1834 = vadd.f32 %v1001, %v1833
    %v1835 = vpop.f32.mrf.mxu0
    %v1836 = vadd.f32 %v1003, %v1835
    %1837 = vmatprep.mubr.f32.mxu0 %v173
    %1838 = vmatmul.mubr.f32.gmra.mxu0 %v172
    %v1839 = vpop.f32.mrf.mxu0
    %v1840 = vadd.f32 %v1007, %v1839
    %v1841 = vpop.f32.mrf.mxu0
    %v1842 = vadd.f32 %v1009, %v1841
    %1843 = vmatprep.mubr.f32.mxu0 %v175
    %1844 = vmatmul.mubr.f32.gmra.mxu0 %v174
    %v1845 = vpop.f32.mrf.mxu0
    %v1846 = vadd.f32 %v1013, %v1845
    %v1847 = vpop.f32.mrf.mxu0
    %v1848 = vadd.f32 %v1015, %v1847
    %1849 = vmatprep.mubr.f32.mxu0 %v177
    %1850 = vmatmul.mubr.f32.gmra.mxu0 %v176
    %v1851 = vpop.f32.mrf.mxu0
    %v1852 = vadd.f32 %v1019, %v1851
    %v1853 = vpop.f32.mrf.mxu0
    %v1854 = vadd.f32 %v1021, %v1853
    %1855 = vmatprep.mubr.f32.mxu0 %v179
    %1856 = vmatmul.mubr.f32.gmra.mxu0 %v178
    %v1857 = vpop.f32.mrf.mxu0
    %v1858 = vadd.f32 %v1025, %v1857
    %v1859 = vpop.f32.mrf.mxu0
    %v1860 = vadd.f32 %v1027, %v1859
    %1861 = vmatprep.mubr.f32.mxu0 %v181
    %1862 = vmatmul.mubr.f32.gmra.mxu0 %v180
    %v1863 = vpop.f32.mrf.mxu0
    %v1864 = vadd.f32 %v1031, %v1863
    %v1865 = vpop.f32.mrf.mxu0
    %v1866 = vadd.f32 %v1033, %v1865
    %1867 = vmatprep.mubr.f32.mxu0 %v183
    %1868 = vmatmul.mubr.f32.gmra.mxu0 %v182
    %v1869 = vpop.f32.mrf.mxu0
    %v1870 = vadd.f32 %v1037, %v1869
    %v1871 = vpop.f32.mrf.mxu0
    %v1872 = vadd.f32 %v1039, %v1871
    %1873 = vmatprep.mubr.f32.mxu0 %v185
    %1874 = vmatmul.mubr.f32.gmra.mxu0 %v184
    %v1875 = vpop.f32.mrf.mxu0
    %v1876 = vadd.f32 %v1043, %v1875
    %v1877 = vpop.f32.mrf.mxu0
    %v1878 = vadd.f32 %v1045, %v1877
    %1879 = vmatprep.mubr.f32.mxu0 %v187
    %1880 = vmatmul.mubr.f32.gmra.mxu0 %v186
    %v1881 = vpop.f32.mrf.mxu0
    %v1882 = vadd.f32 %v1049, %v1881
    %v1883 = vpop.f32.mrf.mxu0
    %v1884 = vadd.f32 %v1051, %v1883
    %1885 = vmatprep.mubr.f32.mxu0 %v189
    %1886 = vmatmul.mubr.f32.gmra.mxu0 %v188
    %v1887 = vpop.f32.mrf.mxu0
    %v1888 = vadd.f32 %v1055, %v1887
    %v1889 = vpop.f32.mrf.mxu0
    %v1890 = vadd.f32 %v1057, %v1889
    %1891 = vmatprep.mubr.f32.mxu0 %v191
    %1892 = vmatmul.mubr.f32.gmra.mxu0 %v190
    %v1893 = vpop.f32.mrf.mxu0
    %v1894 = vadd.f32 %v1061, %v1893
    %v1895 = vpop.f32.mrf.mxu0
    %v1896 = vadd.f32 %v1063, %v1895
    %1897 = vmatprep.mubr.f32.mxu0 %v193
    %1898 = vmatmul.mubr.f32.gmra.mxu0 %v192
    %v1899 = vpop.f32.mrf.mxu0
    %v1900 = vadd.f32 %v1067, %v1899
    %v1901 = vpop.f32.mrf.mxu0
    %v1902 = vadd.f32 %v1069, %v1901
    %1903 = vmatprep.mubr.f32.mxu0 %v195
    %1904 = vmatmul.mubr.f32.gmra.mxu0 %v194
    %v1905 = vpop.f32.mrf.mxu0
    %v1906 = vadd.f32 %v1073, %v1905
    %v1907 = vpop.f32.mrf.mxu0
    %v1908 = vadd.f32 %v1075, %v1907
    %1909 = vmatprep.mubr.f32.mxu0 %v197
    %1910 = vmatmul.mubr.f32.gmra.mxu0 %v196
    %v1911 = vpop.f32.mrf.mxu0
    %v1912 = vadd.f32 %v1079, %v1911
    %v1913 = vpop.f32.mrf.mxu0
    %v1914 = vadd.f32 %v1081, %v1913
    %1915 = vmatprep.mubr.f32.mxu0 %v199
    %1916 = vmatmul.mubr.f32.gmra.mxu0 %v198
    %v1917 = vpop.f32.mrf.mxu0
    %v1918 = vadd.f32 %v1085, %v1917
    %v1919 = vpop.f32.mrf.mxu0
    %v1920 = vadd.f32 %v1087, %v1919
    %1921 = vmatprep.mubr.f32.mxu0 %v201
    %1922 = vmatmul.mubr.f32.gmra.mxu0 %v200
    %v1923 = vpop.f32.mrf.mxu0
    %v1924 = vadd.f32 %v1091, %v1923
    %v1925 = vpop.f32.mrf.mxu0
    %v1926 = vadd.f32 %v1093, %v1925
    %1927 = vmatprep.mubr.f32.mxu0 %v203
    %1928 = vmatmul.mubr.f32.gmra.mxu0 %v202
    %v1929 = vpop.f32.mrf.mxu0
    %v1930 = vadd.f32 %v1097, %v1929
    %v1931 = vpop.f32.mrf.mxu0
    %v1932 = vadd.f32 %v1099, %v1931
    %1933 = vmatprep.mubr.f32.mxu0 %v205
    %1934 = vmatmul.mubr.f32.gmra.mxu0 %v204
    %v1935 = vpop.f32.mrf.mxu0
    %v1936 = vadd.f32 %v1103, %v1935
    %v1937 = vpop.f32.mrf.mxu0
    %v1938 = vadd.f32 %v1105, %v1937
    %1939 = vmatprep.mubr.f32.mxu0 %v207
    %1940 = vmatmul.mubr.f32.gmra.mxu0 %v206
    %v1941 = vpop.f32.mrf.mxu0
    %v1942 = vadd.f32 %v1109, %v1941
    %v1943 = vpop.f32.mrf.mxu0
    %v1944 = vadd.f32 %v1111, %v1943
    %1945 = vmatprep.mubr.f32.mxu0 %v209
    %1946 = vmatmul.mubr.f32.gmra.mxu0 %v208
    %v1947 = vpop.f32.mrf.mxu0
    %v1948 = vadd.f32 %v1115, %v1947
    %v1949 = vpop.f32.mrf.mxu0
    %v1950 = vadd.f32 %v1117, %v1949
    %1951 = vmatprep.mubr.f32.mxu0 %v211
    %1952 = vmatmul.mubr.f32.gmra.mxu0 %v210
    %v1953 = vpop.f32.mrf.mxu0
    %v1954 = vadd.f32 %v1121, %v1953
    %v1955 = vpop.f32.mrf.mxu0
    %v1956 = vadd.f32 %v1123, %v1955
    %1957 = vmatprep.mubr.f32.mxu0 %v213
    %1958 = vmatmul.mubr.f32.gmra.mxu0 %v212
    %v1959 = vpop.f32.mrf.mxu0
    %v1960 = vadd.f32 %v1127, %v1959
    %v1961 = vpop.f32.mrf.mxu0
    %v1962 = vadd.f32 %v1129, %v1961
    %1963 = vmatprep.mubr.f32.mxu0 %v215
    %1964 = vmatmul.mubr.f32.gmra.mxu0 %v214
    %v1965 = vpop.f32.mrf.mxu0
    %v1966 = vadd.f32 %v1133, %v1965
    %v1967 = vpop.f32.mrf.mxu0
    %v1968 = vadd.f32 %v1135, %v1967
    %1969 = vmatprep.mubr.f32.mxu0 %v217
    %1970 = vmatmul.mubr.f32.gmra.mxu0 %v216
    %v1971 = vpop.f32.mrf.mxu0
    %v1972 = vadd.f32 %v1139, %v1971
    %v1973 = vpop.f32.mrf.mxu0
    %v1974 = vadd.f32 %v1141, %v1973
    %1975 = vmatprep.mubr.f32.mxu0 %v219
    %1976 = vmatmul.mubr.f32.gmra.mxu0 %v218
    %v1977 = vpop.f32.mrf.mxu0
    %v1978 = vadd.f32 %v1145, %v1977
    %v1979 = vpop.f32.mrf.mxu0
    %v1980 = vadd.f32 %v1147, %v1979
    %1981 = vmatprep.mubr.f32.mxu0 %v221
    %1982 = vmatmul.mubr.f32.gmra.mxu0 %v220
    %v1983 = vpop.f32.mrf.mxu0
    %v1984 = vadd.f32 %v1151, %v1983
    %v1985 = vpop.f32.mrf.mxu0
    %v1986 = vadd.f32 %v1153, %v1985
    %1987 = vmatprep.mubr.f32.mxu0 %v223
    %1988 = vmatmul.mubr.f32.gmra.mxu0 %v222
    %v1989 = vpop.f32.mrf.mxu0
    %v1990 = vadd.f32 %v1157, %v1989
    %v1991 = vpop.f32.mrf.mxu0
    %v1992 = vadd.f32 %v1159, %v1991
    %1993 = vmatprep.mubr.f32.mxu0 %v225
    %1994 = vmatmul.mubr.f32.gmra.mxu0 %v224
    %v1995 = vpop.f32.mrf.mxu0
    %v1996 = vadd.f32 %v1163, %v1995
    %v1997 = vpop.f32.mrf.mxu0
    %v1998 = vadd.f32 %v1165, %v1997
    %1999 = vmatprep.mubr.f32.mxu0 %v227
    %2000 = vmatmul.mubr.f32.gmra.mxu0 %v226
    %v2001 = vpop.f32.mrf.mxu0
    %v2002 = vadd.f32 %v1169, %v2001
    %v2003 = vpop.f32.mrf.mxu0
    %v2004 = vadd.f32 %v1171, %v2003
    %2005 = vmatprep.mubr.f32.mxu0 %v229
    %2006 = vmatmul.mubr.f32.gmra.mxu0 %v228
    %v2007 = vpop.f32.mrf.mxu0
    %v2008 = vadd.f32 %v1175, %v2007
    %v2009 = vpop.f32.mrf.mxu0
    %v2010 = vadd.f32 %v1177, %v2009
    %2011 = vmatprep.mubr.f32.mxu0 %v231
    %2012 = vmatmul.mubr.f32.gmra.mxu0 %v230
    %v2013 = vpop.f32.mrf.mxu0
    %v2014 = vadd.f32 %v1181, %v2013
    %v2015 = vpop.f32.mrf.mxu0
    %v2016 = vadd.f32 %v1183, %v2015
    %2017 = vmatprep.mubr.f32.mxu0 %v233
    %2018 = vmatmul.mubr.f32.gmra.mxu0 %v232
    %v2019 = vpop.f32.mrf.mxu0
    %v2020 = vadd.f32 %v1187, %v2019
    %v2021 = vpop.f32.mrf.mxu0
    %v2022 = vadd.f32 %v1189, %v2021
    %2023 = vmatprep.mubr.f32.mxu0 %v235
    %2024 = vmatmul.mubr.f32.gmra.mxu0 %v234
    %v2025 = vpop.f32.mrf.mxu0
    %v2026 = vadd.f32 %v1193, %v2025
    %v2027 = vpop.f32.mrf.mxu0
    %v2028 = vadd.f32 %v1195, %v2027
    %2029 = vmatprep.mubr.f32.mxu0 %v237
    %2030 = vmatmul.mubr.f32.gmra.mxu0 %v236
    %v2031 = vpop.f32.mrf.mxu0
    %v2032 = vadd.f32 %v1199, %v2031
    %v2033 = vpop.f32.mrf.mxu0
    %v2034 = vadd.f32 %v1201, %v2033
    %2035 = vmatprep.mubr.f32.mxu0 %v239
    %2036 = vmatmul.mubr.f32.gmra.mxu0 %v238
    %v2037 = vpop.f32.mrf.mxu0
    %v2038 = vadd.f32 %v1205, %v2037
    %v2039 = vpop.f32.mrf.mxu0
    %v2040 = vadd.f32 %v1207, %v2039
    %2041 = vmatprep.mubr.f32.mxu0 %v241
    %2042 = vmatmul.mubr.f32.gmra.mxu0 %v240
    %v2043 = vpop.f32.mrf.mxu0
    %v2044 = vadd.f32 %v1211, %v2043
    %v2045 = vpop.f32.mrf.mxu0
    %v2046 = vadd.f32 %v1213, %v2045
    %2047 = vmatprep.mubr.f32.mxu0 %v243
    %2048 = vmatmul.mubr.f32.gmra.mxu0 %v242
    %v2049 = vpop.f32.mrf.mxu0
    %v2050 = vadd.f32 %v1217, %v2049
    %v2051 = vpop.f32.mrf.mxu0
    %v2052 = vadd.f32 %v1219, %v2051
    %2053 = vmatprep.mubr.f32.mxu0 %v245
    %2054 = vmatmul.mubr.f32.gmra.mxu0 %v244
    %v2055 = vpop.f32.mrf.mxu0
    %v2056 = vadd.f32 %v1223, %v2055
    %v2057 = vpop.f32.mrf.mxu0
    %v2058 = vadd.f32 %v1225, %v2057
    %2059 = vmatprep.mubr.f32.mxu0 %v247
    %2060 = vmatmul.mubr.f32.gmra.mxu0 %v246
    %v2061 = vpop.f32.mrf.mxu0
    %v2062 = vadd.f32 %v1229, %v2061
    %v2063 = vpop.f32.mrf.mxu0
    %v2064 = vadd.f32 %v1231, %v2063
    %2065 = vmatprep.mubr.f32.mxu0 %v249
    %2066 = vmatmul.mubr.f32.gmra.mxu0 %v248
    %v2067 = vpop.f32.mrf.mxu0
    %v2068 = vadd.f32 %v1235, %v2067
    %v2069 = vpop.f32.mrf.mxu0
    %v2070 = vadd.f32 %v1237, %v2069
    %2071 = vmatprep.mubr.f32.mxu0 %v251
    %2072 = vmatmul.mubr.f32.gmra.mxu0 %v250
    %v2073 = vpop.f32.mrf.mxu0
    %v2074 = vadd.f32 %v1241, %v2073
    %v2075 = vpop.f32.mrf.mxu0
    %v2076 = vadd.f32 %v1243, %v2075
    %2077 = vmatprep.mubr.f32.mxu0 %v253
    %2078 = vmatmul.mubr.f32.gmra.mxu0 %v252
    %v2079 = vpop.f32.mrf.mxu0
    %v2080 = vadd.f32 %v1247, %v2079
    %v2081 = vpop.f32.mrf.mxu0
    %v2082 = vadd.f32 %v1249, %v2081
    %2083 = vmatprep.mubr.f32.mxu0 %v255
    %2084 = vmatmul.mubr.f32.gmra.mxu0 %v254
    %v2085 = vpop.f32.mrf.mxu0
    %v2086 = vadd.f32 %v1253, %v2085
    %v2087 = vpop.f32.mrf.mxu0
    %v2088 = vadd.f32 %v1255, %v2087
    %2089 = vmatprep.mubr.f32.mxu0 %v257
    %2090 = vmatmul.mubr.f32.gmra.mxu0 %v256
    %v2091 = vpop.f32.mrf.mxu0
    %v2092 = vadd.f32 %v1259, %v2091
    %v2093 = vpop.f32.mrf.mxu0
    %v2094 = vadd.f32 %v1261, %v2093
    %2095 = vmatprep.mubr.f32.mxu0 %v259
    %2096 = vmatmul.mubr.f32.gmra.mxu0 %v258
    %v2097 = vpop.f32.mrf.mxu0
    %v2098 = vadd.f32 %v1265, %v2097
    %v2099 = vpop.f32.mrf.mxu0
    %v2100 = vadd.f32 %v1267, %v2099
    %2101 = vmatprep.mubr.f32.mxu0 %v261
    %2102 = vmatmul.mubr.f32.gmra.mxu0 %v260
    %v2103 = vpop.f32.mrf.mxu0
    %v2104 = vadd.f32 %v1271, %v2103
    %v2105 = vpop.f32.mrf.mxu0
    %v2106 = vadd.f32 %v1273, %v2105
    %2107 = vmatprep.mubr.f32.mxu0 %v263
    %2108 = vmatmul.mubr.f32.gmra.mxu0 %v262
    %v2109 = vpop.f32.mrf.mxu0
    %v2110 = vadd.f32 %v1277, %v2109
    %v2111 = vpop.f32.mrf.mxu0
    %v2112 = vadd.f32 %v1279, %v2111
    %2113 = vmatprep.mubr.f32.mxu0 %v265
    %2114 = vmatmul.mubr.f32.gmra.mxu0 %v264
    %v2115 = vpop.f32.mrf.mxu0
    %v2116 = vadd.f32 %v1283, %v2115
    %v2117 = vpop.f32.mrf.mxu0
    %v2118 = vadd.f32 %v1285, %v2117
    %2119 = vmatprep.mubr.f32.mxu0 %v267
    %2120 = vmatmul.mubr.f32.gmra.mxu0 %v266
    %v2121 = vpop.f32.mrf.mxu0
    %v2122 = vadd.f32 %v1289, %v2121
    %v2123 = vpop.f32.mrf.mxu0
    %v2124 = vadd.f32 %v1291, %v2123
    %2125 = vmatprep.mubr.f32.mxu0 %v269
    %2126 = vmatmul.mubr.f32.gmra.mxu0 %v268
    %v2127 = vpop.f32.mrf.mxu0
    %v2128 = vadd.f32 %v1295, %v2127
    %v2129 = vpop.f32.mrf.mxu0
    %v2130 = vadd.f32 %v1297, %v2129
    %2131 = vmatprep.mubr.f32.mxu0 %v271
    %2132 = vmatmul.mubr.f32.gmra.mxu0 %v270
    %v2133 = vpop.f32.mrf.mxu0
    %v2134 = vadd.f32 %v1301, %v2133
    %v2135 = vpop.f32.mrf.mxu0
    %v2136 = vadd.f32 %v1303, %v2135
    %2137 = vmatprep.mubr.f32.mxu0 %v273
    %2138 = vmatmul.mubr.f32.gmra.mxu0 %v272
    %v2139 = vpop.f32.mrf.mxu0
    %v2140 = vadd.f32 %v1307, %v2139
    %v2141 = vpop.f32.mrf.mxu0
    %v2142 = vadd.f32 %v1309, %v2141
    %2143 = vmatprep.mubr.f32.mxu0 %v275
    %2144 = vmatmul.mubr.f32.gmra.mxu0 %v274
    %v2145 = vpop.f32.mrf.mxu0
    %v2146 = vadd.f32 %v1313, %v2145
    %v2147 = vpop.f32.mrf.mxu0
    %v2148 = vadd.f32 %v1315, %v2147
    %2149 = vmatprep.mubr.f32.mxu0 %v277
    %2150 = vmatmul.mubr.f32.gmra.mxu0 %v276
    %v2151 = vpop.f32.mrf.mxu0
    %v2152 = vadd.f32 %v1319, %v2151
    %v2153 = vpop.f32.mrf.mxu0
    %v2154 = vadd.f32 %v1321, %v2153
    %2155 = vmatprep.mubr.f32.mxu0 %v279
    %2156 = vmatmul.mubr.f32.gmra.mxu0 %v278
    %v2157 = vpop.f32.mrf.mxu0
    %v2158 = vadd.f32 %v1325, %v2157
    %v2159 = vpop.f32.mrf.mxu0
    %v2160 = vadd.f32 %v1327, %v2159
    %2161 = vmatprep.mubr.f32.mxu0 %v281
    %2162 = vmatmul.mubr.f32.gmra.mxu0 %v280
    %v2163 = vpop.f32.mrf.mxu0
    %v2164 = vadd.f32 %v1331, %v2163
    %v2165 = vpop.f32.mrf.mxu0
    %v2166 = vadd.f32 %v1333, %v2165
    %2167 = vmatprep.mubr.f32.mxu0 %v283
    %2168 = vmatmul.mubr.f32.gmra.mxu0 %v282
    %v2169 = vpop.f32.mrf.mxu0
    %v2170 = vadd.f32 %v1337, %v2169
    %v2171 = vpop.f32.mrf.mxu0
    %v2172 = vadd.f32 %v1339, %v2171
    %2173 = vmatprep.mubr.f32.mxu0 %v285
    %2174 = vmatmul.mubr.f32.gmra.mxu0 %v284
    %v2175 = vpop.f32.mrf.mxu0
    %v2176 = vadd.f32 %v1343, %v2175
    %v2177 = vpop.f32.mrf.mxu0
    %v2178 = vadd.f32 %v1345, %v2177
    %2179 = vmatprep.mubr.f32.mxu0 %v287
    %2180 = vmatmul.mubr.f32.gmra.mxu0 %v286
    %v2181 = vpop.f32.mrf.mxu0
    %v2182 = vadd.f32 %v1349, %v2181
    %v2183 = vpop.f32.mrf.mxu0
    %v2184 = vadd.f32 %v1351, %v2183
    %2185 = vmatprep.mubr.f32.mxu0 %v289
    %2186 = vmatmul.mubr.f32.gmra.mxu0 %v288
    %v2187 = vpop.f32.mrf.mxu0
    %v2188 = vadd.f32 %v1355, %v2187
    %v2189 = vpop.f32.mrf.mxu0
    %v2190 = vadd.f32 %v1357, %v2189
    %2191 = vmatprep.mubr.f32.mxu0 %v291
    %2192 = vmatmul.mubr.f32.gmra.mxu0 %v290
    %v2193 = vpop.f32.mrf.mxu0
    %v2194 = vadd.f32 %v1361, %v2193
    %v2195 = vpop.f32.mrf.mxu0
    %v2196 = vadd.f32 %v1363, %v2195
    %2197 = vmatprep.mubr.f32.mxu0 %v293
    %2198 = vmatmul.mubr.f32.gmra.mxu0 %v292
    %v2199 = vpop.f32.mrf.mxu0
    %v2200 = vadd.f32 %v1367, %v2199
    %v2201 = vpop.f32.mrf.mxu0
    %v2202 = vadd.f32 %v1369, %v2201
    %2203 = vmatprep.mubr.f32.mxu0 %v295
    %2204 = vmatmul.mubr.f32.gmra.mxu0 %v294
    %v2205 = vpop.f32.mrf.mxu0
    %v2206 = vadd.f32 %v1373, %v2205
    %v2207 = vpop.f32.mrf.mxu0
    %v2208 = vadd.f32 %v1375, %v2207
    %2209 = vmatprep.mubr.f32.mxu0 %v297
    %2210 = vmatmul.mubr.f32.gmra.mxu0 %v296
    %v2211 = vpop.f32.mrf.mxu0
    %v2212 = vadd.f32 %v1379, %v2211
    %v2213 = vpop.f32.mrf.mxu0
    %v2214 = vadd.f32 %v1381, %v2213
    %2215 = vmatprep.mubr.f32.mxu0 %v299
    %2216 = vmatmul.mubr.f32.gmra.mxu0 %v298
    %v2217 = vpop.f32.mrf.mxu0
    %v2218 = vadd.f32 %v1385, %v2217
    %v2219 = vpop.f32.mrf.mxu0
    %v2220 = vadd.f32 %v1387, %v2219
    %2221 = vmatprep.mubr.f32.mxu0 %v301
    %2222 = vmatmul.mubr.f32.gmra.mxu0 %v300
    %v2223 = vpop.f32.mrf.mxu0
    %v2224 = vadd.f32 %v1391, %v2223
    %v2225 = vpop.f32.mrf.mxu0
    %v2226 = vadd.f32 %v1393, %v2225
    %2227 = vmatprep.mubr.f32.mxu0 %v303
    %2228 = vmatmul.mubr.f32.gmra.mxu0 %v302
    %v2229 = vpop.f32.mrf.mxu0
    %v2230 = vadd.f32 %v1397, %v2229
    %v2231 = vpop.f32.mrf.mxu0
    %v2232 = vadd.f32 %v1399, %v2231
    %2233 = vmatprep.mubr.f32.mxu0 %v305
    %2234 = vmatmul.mubr.f32.gmra.mxu0 %v304
    %v2235 = vpop.f32.mrf.mxu0
    %v2236 = vadd.f32 %v1403, %v2235
    %v2237 = vpop.f32.mrf.mxu0
    %v2238 = vadd.f32 %v1405, %v2237
    %2239 = vmatprep.mubr.f32.mxu0 %v307
    %2240 = vmatmul.mubr.f32.gmra.mxu0 %v306
    %v2241 = vpop.f32.mrf.mxu0
    %v2242 = vadd.f32 %v1409, %v2241
    %v2243 = vpop.f32.mrf.mxu0
    %v2244 = vadd.f32 %v1411, %v2243
    %2245 = vmatprep.mubr.f32.mxu0 %v309
    %2246 = vmatmul.mubr.f32.gmra.mxu0 %v308
    %v2247 = vpop.f32.mrf.mxu0
    %v2248 = vadd.f32 %v1415, %v2247
    %v2249 = vpop.f32.mrf.mxu0
    %v2250 = vadd.f32 %v1417, %v2249
    %2251 = vmatprep.mubr.f32.mxu0 %v311
    %2252 = vmatmul.mubr.f32.gmra.mxu0 %v310
    %v2253 = vpop.f32.mrf.mxu0
    %v2254 = vadd.f32 %v1421, %v2253
    %v2255 = vpop.f32.mrf.mxu0
    %v2256 = vadd.f32 %v1423, %v2255
    %2257 = vmatprep.mubr.f32.mxu0 %v313
    %2258 = vmatmul.mubr.f32.gmra.mxu0 %v312
    %v2259 = vpop.f32.mrf.mxu0
    %v2260 = vadd.f32 %v1427, %v2259
    %v2261 = vpop.f32.mrf.mxu0
    %v2262 = vadd.f32 %v1429, %v2261
    %2263 = vmatprep.mubr.f32.mxu0 %v315
    %2264 = vmatmul.mubr.f32.gmra.mxu0 %v314
    %v2265 = vpop.f32.mrf.mxu0
    %v2266 = vadd.f32 %v1433, %v2265
    %v2267 = vpop.f32.mrf.mxu0
    %v2268 = vadd.f32 %v1435, %v2267
    %2269 = vmatprep.mubr.f32.mxu0 %v317
    %2270 = vmatmul.mubr.f32.gmra.mxu0 %v316
    %v2271 = vpop.f32.mrf.mxu0
    %v2272 = vadd.f32 %v1439, %v2271
    %v2273 = vpop.f32.mrf.mxu0
    %v2274 = vadd.f32 %v1441, %v2273
    %2275 = vmatprep.mubr.f32.mxu0 %v319
    %2276 = vmatmul.mubr.f32.gmra.mxu0 %v318
    %v2277 = vpop.f32.mrf.mxu0
    %v2278 = vadd.f32 %v1445, %v2277
    %v2279 = vpop.f32.mrf.mxu0
    %v2280 = vadd.f32 %v1447, %v2279
    %2281 = vmatprep.mubr.f32.mxu0 %v321
    %2282 = vmatmul.mubr.f32.gmra.mxu0 %v320
    %v2283 = vpop.f32.mrf.mxu0
    %v2284 = vadd.f32 %v1451, %v2283
    %v2285 = vpop.f32.mrf.mxu0
    %v2286 = vadd.f32 %v1453, %v2285
    %2287 = vmatprep.mubr.f32.mxu0 %v323
    %2288 = vmatmul.mubr.f32.gmra.mxu0 %v322
    %v2289 = vpop.f32.mrf.mxu0
    %v2290 = vadd.f32 %v1457, %v2289
    %v2291 = vpop.f32.mrf.mxu0
    %v2292 = vadd.f32 %v1459, %v2291
    %2293 = vmatprep.mubr.f32.mxu0 %v325
    %2294 = vmatmul.mubr.f32.gmra.mxu0 %v324
    %v2295 = vpop.f32.mrf.mxu0
    %v2296 = vadd.f32 %v1463, %v2295
    %v2297 = vpop.f32.mrf.mxu0
    %v2298 = vadd.f32 %v1465, %v2297
    %2299 = vmatprep.mubr.f32.mxu0 %v327
    %2300 = vmatmul.mubr.f32.gmra.mxu0 %v326
    %v2301 = vpop.f32.mrf.mxu0
    %v2302 = vadd.f32 %v1469, %v2301
    %v2303 = vpop.f32.mrf.mxu0
    %v2304 = vadd.f32 %v1471, %v2303
    %2305 = vmatprep.mubr.f32.mxu0 %v329
    %2306 = vmatmul.mubr.f32.gmra.mxu0 %v328
    %v2307 = vpop.f32.mrf.mxu0
    %v2308 = vadd.f32 %v1475, %v2307
    %v2309 = vpop.f32.mrf.mxu0
    %v2310 = vadd.f32 %v1477, %v2309
    %2311 = vmatprep.mubr.f32.mxu0 %v331
    %2312 = vmatmul.mubr.f32.gmra.mxu0 %v330
    %v2313 = vpop.f32.mrf.mxu0
    %v2314 = vadd.f32 %v1481, %v2313
    %v2315 = vpop.f32.mrf.mxu0
    %v2316 = vadd.f32 %v1483, %v2315
    %2317 = vmatprep.mubr.f32.mxu0 %v333
    %2318 = vmatmul.mubr.f32.gmra.mxu0 %v332
    %v2319 = vpop.f32.mrf.mxu0
    %v2320 = vadd.f32 %v1487, %v2319
    %v2321 = vpop.f32.mrf.mxu0
    %v2322 = vadd.f32 %v1489, %v2321
    %2323 = vmatprep.mubr.f32.mxu0 %v335
    %2324 = vmatmul.mubr.f32.gmra.mxu0 %v334
    %v2325 = vpop.f32.mrf.mxu0
    %v2326 = vadd.f32 %v1493, %v2325
    %v2327 = vpop.f32.mrf.mxu0
    %v2328 = vadd.f32 %v1495, %v2327
    %2329 = vmatprep.mubr.f32.mxu0 %v337
    %2330 = vmatmul.mubr.f32.gmra.mxu0 %v336
    %v2331 = vpop.f32.mrf.mxu0
    %v2332 = vadd.f32 %v1499, %v2331
    %v2333 = vpop.f32.mrf.mxu0
    %v2334 = vadd.f32 %v1501, %v2333
    %2335 = vmatprep.mubr.f32.mxu0 %v339
    %2336 = vmatmul.mubr.f32.gmra.mxu0 %v338
    %v2337 = vpop.f32.mrf.mxu0
    %v2338 = vadd.f32 %v1505, %v2337
    %v2339 = vpop.f32.mrf.mxu0
    %v2340 = vadd.f32 %v1507, %v2339
    %2341 = vmatprep.mubr.f32.mxu0 %v341
    %2342 = vmatmul.mubr.f32.gmra.mxu0 %v340
    %v2343 = vpop.f32.mrf.mxu0
    %v2344 = vadd.f32 %v1511, %v2343
    %v2345 = vpop.f32.mrf.mxu0
    %v2346 = vadd.f32 %v1513, %v2345
    %2347 = vmatprep.mubr.f32.mxu0 %v343
    %2348 = vmatmul.mubr.f32.gmra.mxu0 %v342
    %v2349 = vpop.f32.mrf.mxu0
    %v2350 = vadd.f32 %v1517, %v2349
    %v2351 = vpop.f32.mrf.mxu0
    %v2352 = vadd.f32 %v1519, %v2351
    %2353 = vmatprep.mubr.f32.mxu0 %v345
    %2354 = vmatmul.mubr.f32.gmra.mxu0 %v344
    %v2355 = vpop.f32.mrf.mxu0
    %v2356 = vadd.f32 %v1523, %v2355
    %v2357 = vpop.f32.mrf.mxu0
    %v2358 = vadd.f32 %v1525, %v2357
    %2359 = vmatprep.mubr.f32.mxu0 %v347
    %2360 = vmatmul.mubr.f32.gmra.mxu0 %v346
    %v2361 = vpop.f32.mrf.mxu0
    %v2362 = vadd.f32 %v1529, %v2361
    %v2363 = vpop.f32.mrf.mxu0
    %v2364 = vadd.f32 %v1531, %v2363
    %2365 = vmatprep.mubr.f32.mxu0 %v349
    %2366 = vmatmul.mubr.f32.gmra.mxu0 %v348
    %v2367 = vpop.f32.mrf.mxu0
    %v2368 = vadd.f32 %v1535, %v2367
    %v2369 = vpop.f32.mrf.mxu0
    %v2370 = vadd.f32 %v1537, %v2369
    %2371 = vmatprep.mubr.f32.mxu0 %v351
    %2372 = vmatmul.mubr.f32.gmra.mxu0 %v350
    %v2373 = vpop.f32.mrf.mxu0
    %v2374 = vadd.f32 %v1541, %v2373
    %v2375 = vpop.f32.mrf.mxu0
    %v2376 = vadd.f32 %v1543, %v2375
    %2377 = vmatprep.mubr.f32.mxu0 %v353
    %2378 = vmatmul.mubr.f32.gmra.mxu0 %v352
    %v2379 = vpop.f32.mrf.mxu0
    %v2380 = vadd.f32 %v1547, %v2379
    %v2381 = vpop.f32.mrf.mxu0
    %v2382 = vadd.f32 %v1549, %v2381
    %2383 = vmatprep.mubr.f32.mxu0 %v355
    %2384 = vmatmul.mubr.f32.gmra.mxu0 %v354
    %v2385 = vpop.f32.mrf.mxu0
    %v2386 = vadd.f32 %v1553, %v2385
    %v2387 = vpop.f32.mrf.mxu0
    %v2388 = vadd.f32 %v1555, %v2387
    %2389 = vmatprep.mubr.f32.mxu0 %v357
    %2390 = vmatmul.mubr.f32.gmra.mxu0 %v356
    %v2391 = vpop.f32.mrf.mxu0
    %v2392 = vadd.f32 %v1559, %v2391
    %v2393 = vpop.f32.mrf.mxu0
    %v2394 = vadd.f32 %v1561, %v2393
    %2395 = vmatprep.mubr.f32.mxu0 %v359
    %2396 = vmatmul.mubr.f32.gmra.mxu0 %v358
    %v2397 = vpop.f32.mrf.mxu0
    %v2398 = vadd.f32 %v1565, %v2397
    %v2399 = vpop.f32.mrf.mxu0
    %v2400 = vadd.f32 %v1567, %v2399
    %2401 = vmatprep.mubr.f32.mxu0 %v361
    %2402 = vmatmul.mubr.f32.gmra.mxu0 %v360
    %v2403 = vpop.f32.mrf.mxu0
    %v2404 = vadd.f32 %v1571, %v2403
    %v2405 = vpop.f32.mrf.mxu0
    %v2406 = vadd.f32 %v1573, %v2405
    %2407 = vmatprep.mubr.f32.mxu0 %v363
    %2408 = vmatmul.mubr.f32.gmra.mxu0 %v362
    %v2409 = vpop.f32.mrf.mxu0
    %v2410 = vadd.f32 %v1577, %v2409
    %v2411 = vpop.f32.mrf.mxu0
    %v2412 = vadd.f32 %v1579, %v2411
    %2413 = vdwg.mxu0
    %v2414 = vld [vmem:[%s4] sm:$0x3]
    %v2416 = vlaneseq
    %v2417 = vshrl.u32 %v2416, 7
    %v2418 = vsub.s32 0, %v2417
    %v2419 = vrot.slane %v2414, %v2418
    %v2420 = vlaneseq
    %v2421 = vshrl.u32 %v2420, 7
    %v2422 = vsub.s32 1, %v2421
    %v2423 = vrot.slane %v2414, %v2422
    %v2426 = vadd.f32 %v1648, %v2419
    %v2427 = vadd.f32 %v1650, %v2423
    %v2428 = vadd.f32 %v1654, %v2419
    %v2429 = vadd.f32 %v1656, %v2423
    %v2430 = vadd.f32 %v1660, %v2419
    %v2431 = vadd.f32 %v1662, %v2423
    %v2432 = vadd.f32 %v1666, %v2419
    %v2433 = vadd.f32 %v1668, %v2423
    %v2434 = vadd.f32 %v1672, %v2419
    %v2435 = vadd.f32 %v1674, %v2423
    %v2436 = vadd.f32 %v1678, %v2419
    %v2437 = vadd.f32 %v1680, %v2423
    %v2438 = vadd.f32 %v1684, %v2419
    %v2439 = vadd.f32 %v1686, %v2423
    %v2440 = vadd.f32 %v1690, %v2419
    %v2441 = vadd.f32 %v1692, %v2423
    %v2442 = vadd.f32 %v1696, %v2419
    %v2443 = vadd.f32 %v1698, %v2423
    %v2444 = vadd.f32 %v1702, %v2419
    %v2445 = vadd.f32 %v1704, %v2423
    %v2446 = vadd.f32 %v1708, %v2419
    %v2447 = vadd.f32 %v1710, %v2423
    %v2448 = vadd.f32 %v1714, %v2419
    %v2449 = vadd.f32 %v1716, %v2423
    %v2450 = vadd.f32 %v1720, %v2419
    %v2451 = vadd.f32 %v1722, %v2423
    %v2452 = vadd.f32 %v1726, %v2419
    %v2453 = vadd.f32 %v1728, %v2423
    %v2454 = vadd.f32 %v1732, %v2419
    %v2455 = vadd.f32 %v1734, %v2423
    %v2456 = vadd.f32 %v1738, %v2419
    %v2457 = vadd.f32 %v1740, %v2423
    %v2458 = vadd.f32 %v1744, %v2419
    %v2459 = vadd.f32 %v1746, %v2423
    %v2460 = vadd.f32 %v1750, %v2419
    %v2461 = vadd.f32 %v1752, %v2423
    %v2462 = vadd.f32 %v1756, %v2419
    %v2463 = vadd.f32 %v1758, %v2423
    %v2464 = vadd.f32 %v1762, %v2419
    %v2465 = vadd.f32 %v1764, %v2423
    %v2466 = vadd.f32 %v1768, %v2419
    %v2467 = vadd.f32 %v1770, %v2423
    %v2468 = vadd.f32 %v1774, %v2419
    %v2469 = vadd.f32 %v1776, %v2423
    %v2470 = vadd.f32 %v1780, %v2419
    %v2471 = vadd.f32 %v1782, %v2423
    %v2472 = vadd.f32 %v1786, %v2419
    %v2473 = vadd.f32 %v1788, %v2423
    %v2474 = vadd.f32 %v1792, %v2419
    %v2475 = vadd.f32 %v1794, %v2423
    %v2476 = vadd.f32 %v1798, %v2419
    %v2477 = vadd.f32 %v1800, %v2423
    %v2478 = vadd.f32 %v1804, %v2419
    %v2479 = vadd.f32 %v1806, %v2423
    %v2480 = vadd.f32 %v1810, %v2419
    %v2481 = vadd.f32 %v1812, %v2423
    %v2482 = vadd.f32 %v1816, %v2419
    %v2483 = vadd.f32 %v1818, %v2423
    %v2484 = vadd.f32 %v1822, %v2419
    %v2485 = vadd.f32 %v1824, %v2423
    %v2486 = vadd.f32 %v1828, %v2419
    %v2487 = vadd.f32 %v1830, %v2423
    %v2488 = vadd.f32 %v1834, %v2419
    %v2489 = vadd.f32 %v1836, %v2423
    %v2490 = vadd.f32 %v1840, %v2419
    %v2491 = vadd.f32 %v1842, %v2423
    %v2492 = vadd.f32 %v1846, %v2419
    %v2493 = vadd.f32 %v1848, %v2423
    %v2494 = vadd.f32 %v1852, %v2419
    %v2495 = vadd.f32 %v1854, %v2423
    %v2496 = vadd.f32 %v1858, %v2419
    %v2497 = vadd.f32 %v1860, %v2423
    %v2498 = vadd.f32 %v1864, %v2419
    %v2499 = vadd.f32 %v1866, %v2423
    %v2500 = vadd.f32 %v1870, %v2419
    %v2501 = vadd.f32 %v1872, %v2423
    %v2502 = vadd.f32 %v1876, %v2419
    %v2503 = vadd.f32 %v1878, %v2423
    %v2504 = vadd.f32 %v1882, %v2419
    %v2505 = vadd.f32 %v1884, %v2423
    %v2506 = vadd.f32 %v1888, %v2419
    %v2507 = vadd.f32 %v1890, %v2423
    %v2508 = vadd.f32 %v1894, %v2419
    %v2509 = vadd.f32 %v1896, %v2423
    %v2510 = vadd.f32 %v1900, %v2419
    %v2511 = vadd.f32 %v1902, %v2423
    %v2512 = vadd.f32 %v1906, %v2419
    %v2513 = vadd.f32 %v1908, %v2423
    %v2514 = vadd.f32 %v1912, %v2419
    %v2515 = vadd.f32 %v1914, %v2423
    %v2516 = vadd.f32 %v1918, %v2419
    %v2517 = vadd.f32 %v1920, %v2423
    %v2518 = vadd.f32 %v1924, %v2419
    %v2519 = vadd.f32 %v1926, %v2423
    %v2520 = vadd.f32 %v1930, %v2419
    %v2521 = vadd.f32 %v1932, %v2423
    %v2522 = vadd.f32 %v1936, %v2419
    %v2523 = vadd.f32 %v1938, %v2423
    %v2524 = vadd.f32 %v1942, %v2419
    %v2525 = vadd.f32 %v1944, %v2423
    %v2526 = vadd.f32 %v1948, %v2419
    %v2527 = vadd.f32 %v1950, %v2423
    %v2528 = vadd.f32 %v1954, %v2419
    %v2529 = vadd.f32 %v1956, %v2423
    %v2530 = vadd.f32 %v1960, %v2419
    %v2531 = vadd.f32 %v1962, %v2423
    %v2532 = vadd.f32 %v1966, %v2419
    %v2533 = vadd.f32 %v1968, %v2423
    %v2534 = vadd.f32 %v1972, %v2419
    %v2535 = vadd.f32 %v1974, %v2423
    %v2536 = vadd.f32 %v1978, %v2419
    %v2537 = vadd.f32 %v1980, %v2423
    %v2538 = vadd.f32 %v1984, %v2419
    %v2539 = vadd.f32 %v1986, %v2423
    %v2540 = vadd.f32 %v1990, %v2419
    %v2541 = vadd.f32 %v1992, %v2423
    %v2542 = vadd.f32 %v1996, %v2419
    %v2543 = vadd.f32 %v1998, %v2423
    %v2544 = vadd.f32 %v2002, %v2419
    %v2545 = vadd.f32 %v2004, %v2423
    %v2546 = vadd.f32 %v2008, %v2419
    %v2547 = vadd.f32 %v2010, %v2423
    %v2548 = vadd.f32 %v2014, %v2419
    %v2549 = vadd.f32 %v2016, %v2423
    %v2550 = vadd.f32 %v2020, %v2419
    %v2551 = vadd.f32 %v2022, %v2423
    %v2552 = vadd.f32 %v2026, %v2419
    %v2553 = vadd.f32 %v2028, %v2423
    %v2554 = vadd.f32 %v2032, %v2419
    %v2555 = vadd.f32 %v2034, %v2423
    %v2556 = vadd.f32 %v2038, %v2419
    %v2557 = vadd.f32 %v2040, %v2423
    %v2558 = vadd.f32 %v2044, %v2419
    %v2559 = vadd.f32 %v2046, %v2423
    %v2560 = vadd.f32 %v2050, %v2419
    %v2561 = vadd.f32 %v2052, %v2423
    %v2562 = vadd.f32 %v2056, %v2419
    %v2563 = vadd.f32 %v2058, %v2423
    %v2564 = vadd.f32 %v2062, %v2419
    %v2565 = vadd.f32 %v2064, %v2423
    %v2566 = vadd.f32 %v2068, %v2419
    %v2567 = vadd.f32 %v2070, %v2423
    %v2568 = vadd.f32 %v2074, %v2419
    %v2569 = vadd.f32 %v2076, %v2423
    %v2570 = vadd.f32 %v2080, %v2419
    %v2571 = vadd.f32 %v2082, %v2423
    %v2572 = vadd.f32 %v2086, %v2419
    %v2573 = vadd.f32 %v2088, %v2423
    %v2574 = vadd.f32 %v2092, %v2419
    %v2575 = vadd.f32 %v2094, %v2423
    %v2576 = vadd.f32 %v2098, %v2419
    %v2577 = vadd.f32 %v2100, %v2423
    %v2578 = vadd.f32 %v2104, %v2419
    %v2579 = vadd.f32 %v2106, %v2423
    %v2580 = vadd.f32 %v2110, %v2419
    %v2581 = vadd.f32 %v2112, %v2423
    %v2582 = vadd.f32 %v2116, %v2419
    %v2583 = vadd.f32 %v2118, %v2423
    %v2584 = vadd.f32 %v2122, %v2419
    %v2585 = vadd.f32 %v2124, %v2423
    %v2586 = vadd.f32 %v2128, %v2419
    %v2587 = vadd.f32 %v2130, %v2423
    %v2588 = vadd.f32 %v2134, %v2419
    %v2589 = vadd.f32 %v2136, %v2423
    %v2590 = vadd.f32 %v2140, %v2419
    %v2591 = vadd.f32 %v2142, %v2423
    %v2592 = vadd.f32 %v2146, %v2419
    %v2593 = vadd.f32 %v2148, %v2423
    %v2594 = vadd.f32 %v2152, %v2419
    %v2595 = vadd.f32 %v2154, %v2423
    %v2596 = vadd.f32 %v2158, %v2419
    %v2597 = vadd.f32 %v2160, %v2423
    %v2598 = vadd.f32 %v2164, %v2419
    %v2599 = vadd.f32 %v2166, %v2423
    %v2600 = vadd.f32 %v2170, %v2419
    %v2601 = vadd.f32 %v2172, %v2423
    %v2602 = vadd.f32 %v2176, %v2419
    %v2603 = vadd.f32 %v2178, %v2423
    %v2604 = vadd.f32 %v2182, %v2419
    %v2605 = vadd.f32 %v2184, %v2423
    %v2606 = vadd.f32 %v2188, %v2419
    %v2607 = vadd.f32 %v2190, %v2423
    %v2608 = vadd.f32 %v2194, %v2419
    %v2609 = vadd.f32 %v2196, %v2423
    %v2610 = vadd.f32 %v2200, %v2419
    %v2611 = vadd.f32 %v2202, %v2423
    %v2612 = vadd.f32 %v2206, %v2419
    %v2613 = vadd.f32 %v2208, %v2423
    %v2614 = vadd.f32 %v2212, %v2419
    %v2615 = vadd.f32 %v2214, %v2423
    %v2616 = vadd.f32 %v2218, %v2419
    %v2617 = vadd.f32 %v2220, %v2423
    %v2618 = vadd.f32 %v2224, %v2419
    %v2619 = vadd.f32 %v2226, %v2423
    %v2620 = vadd.f32 %v2230, %v2419
    %v2621 = vadd.f32 %v2232, %v2423
    %v2622 = vadd.f32 %v2236, %v2419
    %v2623 = vadd.f32 %v2238, %v2423
    %v2624 = vadd.f32 %v2242, %v2419
    %v2625 = vadd.f32 %v2244, %v2423
    %v2626 = vadd.f32 %v2248, %v2419
    %v2627 = vadd.f32 %v2250, %v2423
    %v2628 = vadd.f32 %v2254, %v2419
    %v2629 = vadd.f32 %v2256, %v2423
    %v2630 = vadd.f32 %v2260, %v2419
    %v2631 = vadd.f32 %v2262, %v2423
    %v2632 = vadd.f32 %v2266, %v2419
    %v2633 = vadd.f32 %v2268, %v2423
    %v2634 = vadd.f32 %v2272, %v2419
    %v2635 = vadd.f32 %v2274, %v2423
    %v2636 = vadd.f32 %v2278, %v2419
    %v2637 = vadd.f32 %v2280, %v2423
    %v2638 = vadd.f32 %v2284, %v2419
    %v2639 = vadd.f32 %v2286, %v2423
    %v2640 = vadd.f32 %v2290, %v2419
    %v2641 = vadd.f32 %v2292, %v2423
    %v2642 = vadd.f32 %v2296, %v2419
    %v2643 = vadd.f32 %v2298, %v2423
    %v2644 = vadd.f32 %v2302, %v2419
    %v2645 = vadd.f32 %v2304, %v2423
    %v2646 = vadd.f32 %v2308, %v2419
    %v2647 = vadd.f32 %v2310, %v2423
    %v2648 = vadd.f32 %v2314, %v2419
    %v2649 = vadd.f32 %v2316, %v2423
    %v2650 = vadd.f32 %v2320, %v2419
    %v2651 = vadd.f32 %v2322, %v2423
    %v2652 = vadd.f32 %v2326, %v2419
    %v2653 = vadd.f32 %v2328, %v2423
    %v2654 = vadd.f32 %v2332, %v2419
    %v2655 = vadd.f32 %v2334, %v2423
    %v2656 = vadd.f32 %v2338, %v2419
    %v2657 = vadd.f32 %v2340, %v2423
    %v2658 = vadd.f32 %v2344, %v2419
    %v2659 = vadd.f32 %v2346, %v2423
    %v2660 = vadd.f32 %v2350, %v2419
    %v2661 = vadd.f32 %v2352, %v2423
    %v2662 = vadd.f32 %v2356, %v2419
    %v2663 = vadd.f32 %v2358, %v2423
    %v2664 = vadd.f32 %v2362, %v2419
    %v2665 = vadd.f32 %v2364, %v2423
    %v2666 = vadd.f32 %v2368, %v2419
    %v2667 = vadd.f32 %v2370, %v2423
    %v2668 = vadd.f32 %v2374, %v2419
    %v2669 = vadd.f32 %v2376, %v2423
    %v2670 = vadd.f32 %v2380, %v2419
    %v2671 = vadd.f32 %v2382, %v2423
    %v2672 = vadd.f32 %v2386, %v2419
    %v2673 = vadd.f32 %v2388, %v2423
    %v2674 = vadd.f32 %v2392, %v2419
    %v2675 = vadd.f32 %v2394, %v2423
    %v2676 = vadd.f32 %v2398, %v2419
    %v2677 = vadd.f32 %v2400, %v2423
    %v2678 = vadd.f32 %v2404, %v2419
    %v2679 = vadd.f32 %v2406, %v2423
    %v2680 = vadd.f32 %v2410, %v2419
    %v2681 = vadd.f32 %v2412, %v2423
    %vm2682 = vcmp.gt.f32.partialorder %v2426, 0.0
    %vm2683 = vcmp.gt.f32.partialorder %v2427, 0.0
    %vm2684 = vcmp.gt.f32.partialorder %v2428, 0.0
    %vm2685 = vcmp.gt.f32.partialorder %v2429, 0.0
    %vm2686 = vcmp.gt.f32.partialorder %v2430, 0.0
    %vm2687 = vcmp.gt.f32.partialorder %v2431, 0.0
    %vm2688 = vcmp.gt.f32.partialorder %v2432, 0.0
    %vm2689 = vcmp.gt.f32.partialorder %v2433, 0.0
    %vm2690 = vcmp.gt.f32.partialorder %v2434, 0.0
    %vm2691 = vcmp.gt.f32.partialorder %v2435, 0.0
    %vm2692 = vcmp.gt.f32.partialorder %v2436, 0.0
    %vm2693 = vcmp.gt.f32.partialorder %v2437, 0.0
    %vm2694 = vcmp.gt.f32.partialorder %v2438, 0.0
    %vm2695 = vcmp.gt.f32.partialorder %v2439, 0.0
    %vm2696 = vcmp.gt.f32.partialorder %v2440, 0.0
    %vm2697 = vcmp.gt.f32.partialorder %v2441, 0.0
    %vm2698 = vcmp.gt.f32.partialorder %v2442, 0.0
    %vm2699 = vcmp.gt.f32.partialorder %v2443, 0.0
    %vm2700 = vcmp.gt.f32.partialorder %v2444, 0.0
    %vm2701 = vcmp.gt.f32.partialorder %v2445, 0.0
    %vm2702 = vcmp.gt.f32.partialorder %v2446, 0.0
    %vm2703 = vcmp.gt.f32.partialorder %v2447, 0.0
    %vm2704 = vcmp.gt.f32.partialorder %v2448, 0.0
    %vm2705 = vcmp.gt.f32.partialorder %v2449, 0.0
    %vm2706 = vcmp.gt.f32.partialorder %v2450, 0.0
    %vm2707 = vcmp.gt.f32.partialorder %v2451, 0.0
    %vm2708 = vcmp.gt.f32.partialorder %v2452, 0.0
    %vm2709 = vcmp.gt.f32.partialorder %v2453, 0.0
    %vm2710 = vcmp.gt.f32.partialorder %v2454, 0.0
    %vm2711 = vcmp.gt.f32.partialorder %v2455, 0.0
    %vm2712 = vcmp.gt.f32.partialorder %v2456, 0.0
    %vm2713 = vcmp.gt.f32.partialorder %v2457, 0.0
    %vm2714 = vcmp.gt.f32.partialorder %v2458, 0.0
    %vm2715 = vcmp.gt.f32.partialorder %v2459, 0.0
    %vm2716 = vcmp.gt.f32.partialorder %v2460, 0.0
    %vm2717 = vcmp.gt.f32.partialorder %v2461, 0.0
    %vm2718 = vcmp.gt.f32.partialorder %v2462, 0.0
    %vm2719 = vcmp.gt.f32.partialorder %v2463, 0.0
    %vm2720 = vcmp.gt.f32.partialorder %v2464, 0.0
    %vm2721 = vcmp.gt.f32.partialorder %v2465, 0.0
    %vm2722 = vcmp.gt.f32.partialorder %v2466, 0.0
    %vm2723 = vcmp.gt.f32.partialorder %v2467, 0.0
    %vm2724 = vcmp.gt.f32.partialorder %v2468, 0.0
    %vm2725 = vcmp.gt.f32.partialorder %v2469, 0.0
    %vm2726 = vcmp.gt.f32.partialorder %v2470, 0.0
    %vm2727 = vcmp.gt.f32.partialorder %v2471, 0.0
    %vm2728 = vcmp.gt.f32.partialorder %v2472, 0.0
    %vm2729 = vcmp.gt.f32.partialorder %v2473, 0.0
    %vm2730 = vcmp.gt.f32.partialorder %v2474, 0.0
    %vm2731 = vcmp.gt.f32.partialorder %v2475, 0.0
    %vm2732 = vcmp.gt.f32.partialorder %v2476, 0.0
    %vm2733 = vcmp.gt.f32.partialorder %v2477, 0.0
    %vm2734 = vcmp.gt.f32.partialorder %v2478, 0.0
    %vm2735 = vcmp.gt.f32.partialorder %v2479, 0.0
    %vm2736 = vcmp.gt.f32.partialorder %v2480, 0.0
    %vm2737 = vcmp.gt.f32.partialorder %v2481, 0.0
    %vm2738 = vcmp.gt.f32.partialorder %v2482, 0.0
    %vm2739 = vcmp.gt.f32.partialorder %v2483, 0.0
    %vm2740 = vcmp.gt.f32.partialorder %v2484, 0.0
    %vm2741 = vcmp.gt.f32.partialorder %v2485, 0.0
    %vm2742 = vcmp.gt.f32.partialorder %v2486, 0.0
    %vm2743 = vcmp.gt.f32.partialorder %v2487, 0.0
    %vm2744 = vcmp.gt.f32.partialorder %v2488, 0.0
    %vm2745 = vcmp.gt.f32.partialorder %v2489, 0.0
    %vm2746 = vcmp.gt.f32.partialorder %v2490, 0.0
    %vm2747 = vcmp.gt.f32.partialorder %v2491, 0.0
    %vm2748 = vcmp.gt.f32.partialorder %v2492, 0.0
    %vm2749 = vcmp.gt.f32.partialorder %v2493, 0.0
    %vm2750 = vcmp.gt.f32.partialorder %v2494, 0.0
    %vm2751 = vcmp.gt.f32.partialorder %v2495, 0.0
    %vm2752 = vcmp.gt.f32.partialorder %v2496, 0.0
    %vm2753 = vcmp.gt.f32.partialorder %v2497, 0.0
    %vm2754 = vcmp.gt.f32.partialorder %v2498, 0.0
    %vm2755 = vcmp.gt.f32.partialorder %v2499, 0.0
    %vm2756 = vcmp.gt.f32.partialorder %v2500, 0.0
    %vm2757 = vcmp.gt.f32.partialorder %v2501, 0.0
    %vm2758 = vcmp.gt.f32.partialorder %v2502, 0.0
    %vm2759 = vcmp.gt.f32.partialorder %v2503, 0.0
    %vm2760 = vcmp.gt.f32.partialorder %v2504, 0.0
    %vm2761 = vcmp.gt.f32.partialorder %v2505, 0.0
    %vm2762 = vcmp.gt.f32.partialorder %v2506, 0.0
    %vm2763 = vcmp.gt.f32.partialorder %v2507, 0.0
    %vm2764 = vcmp.gt.f32.partialorder %v2508, 0.0
    %vm2765 = vcmp.gt.f32.partialorder %v2509, 0.0
    %vm2766 = vcmp.gt.f32.partialorder %v2510, 0.0
    %vm2767 = vcmp.gt.f32.partialorder %v2511, 0.0
    %vm2768 = vcmp.gt.f32.partialorder %v2512, 0.0
    %vm2769 = vcmp.gt.f32.partialorder %v2513, 0.0
    %vm2770 = vcmp.gt.f32.partialorder %v2514, 0.0
    %vm2771 = vcmp.gt.f32.partialorder %v2515, 0.0
    %vm2772 = vcmp.gt.f32.partialorder %v2516, 0.0
    %vm2773 = vcmp.gt.f32.partialorder %v2517, 0.0
    %vm2774 = vcmp.gt.f32.partialorder %v2518, 0.0
    %vm2775 = vcmp.gt.f32.partialorder %v2519, 0.0
    %vm2776 = vcmp.gt.f32.partialorder %v2520, 0.0
    %vm2777 = vcmp.gt.f32.partialorder %v2521, 0.0
    %vm2778 = vcmp.gt.f32.partialorder %v2522, 0.0
    %vm2779 = vcmp.gt.f32.partialorder %v2523, 0.0
    %vm2780 = vcmp.gt.f32.partialorder %v2524, 0.0
    %vm2781 = vcmp.gt.f32.partialorder %v2525, 0.0
    %vm2782 = vcmp.gt.f32.partialorder %v2526, 0.0
    %vm2783 = vcmp.gt.f32.partialorder %v2527, 0.0
    %vm2784 = vcmp.gt.f32.partialorder %v2528, 0.0
    %vm2785 = vcmp.gt.f32.partialorder %v2529, 0.0
    %vm2786 = vcmp.gt.f32.partialorder %v2530, 0.0
    %vm2787 = vcmp.gt.f32.partialorder %v2531, 0.0
    %vm2788 = vcmp.gt.f32.partialorder %v2532, 0.0
    %vm2789 = vcmp.gt.f32.partialorder %v2533, 0.0
    %vm2790 = vcmp.gt.f32.partialorder %v2534, 0.0
    %vm2791 = vcmp.gt.f32.partialorder %v2535, 0.0
    %vm2792 = vcmp.gt.f32.partialorder %v2536, 0.0
    %vm2793 = vcmp.gt.f32.partialorder %v2537, 0.0
    %vm2794 = vcmp.gt.f32.partialorder %v2538, 0.0
    %vm2795 = vcmp.gt.f32.partialorder %v2539, 0.0
    %vm2796 = vcmp.gt.f32.partialorder %v2540, 0.0
    %vm2797 = vcmp.gt.f32.partialorder %v2541, 0.0
    %vm2798 = vcmp.gt.f32.partialorder %v2542, 0.0
    %vm2799 = vcmp.gt.f32.partialorder %v2543, 0.0
    %vm2800 = vcmp.gt.f32.partialorder %v2544, 0.0
    %vm2801 = vcmp.gt.f32.partialorder %v2545, 0.0
    %vm2802 = vcmp.gt.f32.partialorder %v2546, 0.0
    %vm2803 = vcmp.gt.f32.partialorder %v2547, 0.0
    %vm2804 = vcmp.gt.f32.partialorder %v2548, 0.0
    %vm2805 = vcmp.gt.f32.partialorder %v2549, 0.0
    %vm2806 = vcmp.gt.f32.partialorder %v2550, 0.0
    %vm2807 = vcmp.gt.f32.partialorder %v2551, 0.0
    %vm2808 = vcmp.gt.f32.partialorder %v2552, 0.0
    %vm2809 = vcmp.gt.f32.partialorder %v2553, 0.0
    %vm2810 = vcmp.gt.f32.partialorder %v2554, 0.0
    %vm2811 = vcmp.gt.f32.partialorder %v2555, 0.0
    %vm2812 = vcmp.gt.f32.partialorder %v2556, 0.0
    %vm2813 = vcmp.gt.f32.partialorder %v2557, 0.0
    %vm2814 = vcmp.gt.f32.partialorder %v2558, 0.0
    %vm2815 = vcmp.gt.f32.partialorder %v2559, 0.0
    %vm2816 = vcmp.gt.f32.partialorder %v2560, 0.0
    %vm2817 = vcmp.gt.f32.partialorder %v2561, 0.0
    %vm2818 = vcmp.gt.f32.partialorder %v2562, 0.0
    %vm2819 = vcmp.gt.f32.partialorder %v2563, 0.0
    %vm2820 = vcmp.gt.f32.partialorder %v2564, 0.0
    %vm2821 = vcmp.gt.f32.partialorder %v2565, 0.0
    %vm2822 = vcmp.gt.f32.partialorder %v2566, 0.0
    %vm2823 = vcmp.gt.f32.partialorder %v2567, 0.0
    %vm2824 = vcmp.gt.f32.partialorder %v2568, 0.0
    %vm2825 = vcmp.gt.f32.partialorder %v2569, 0.0
    %vm2826 = vcmp.gt.f32.partialorder %v2570, 0.0
    %vm2827 = vcmp.gt.f32.partialorder %v2571, 0.0
    %vm2828 = vcmp.gt.f32.partialorder %v2572, 0.0
    %vm2829 = vcmp.gt.f32.partialorder %v2573, 0.0
    %vm2830 = vcmp.gt.f32.partialorder %v2574, 0.0
    %vm2831 = vcmp.gt.f32.partialorder %v2575, 0.0
    %vm2832 = vcmp.gt.f32.partialorder %v2576, 0.0
    %vm2833 = vcmp.gt.f32.partialorder %v2577, 0.0
    %vm2834 = vcmp.gt.f32.partialorder %v2578, 0.0
    %vm2835 = vcmp.gt.f32.partialorder %v2579, 0.0
    %vm2836 = vcmp.gt.f32.partialorder %v2580, 0.0
    %vm2837 = vcmp.gt.f32.partialorder %v2581, 0.0
    %vm2838 = vcmp.gt.f32.partialorder %v2582, 0.0
    %vm2839 = vcmp.gt.f32.partialorder %v2583, 0.0
    %vm2840 = vcmp.gt.f32.partialorder %v2584, 0.0
    %vm2841 = vcmp.gt.f32.partialorder %v2585, 0.0
    %vm2842 = vcmp.gt.f32.partialorder %v2586, 0.0
    %vm2843 = vcmp.gt.f32.partialorder %v2587, 0.0
    %vm2844 = vcmp.gt.f32.partialorder %v2588, 0.0
    %vm2845 = vcmp.gt.f32.partialorder %v2589, 0.0
    %vm2846 = vcmp.gt.f32.partialorder %v2590, 0.0
    %vm2847 = vcmp.gt.f32.partialorder %v2591, 0.0
    %vm2848 = vcmp.gt.f32.partialorder %v2592, 0.0
    %vm2849 = vcmp.gt.f32.partialorder %v2593, 0.0
    %vm2850 = vcmp.gt.f32.partialorder %v2594, 0.0
    %vm2851 = vcmp.gt.f32.partialorder %v2595, 0.0
    %vm2852 = vcmp.gt.f32.partialorder %v2596, 0.0
    %vm2853 = vcmp.gt.f32.partialorder %v2597, 0.0
    %vm2854 = vcmp.gt.f32.partialorder %v2598, 0.0
    %vm2855 = vcmp.gt.f32.partialorder %v2599, 0.0
    %vm2856 = vcmp.gt.f32.partialorder %v2600, 0.0
    %vm2857 = vcmp.gt.f32.partialorder %v2601, 0.0
    %vm2858 = vcmp.gt.f32.partialorder %v2602, 0.0
    %vm2859 = vcmp.gt.f32.partialorder %v2603, 0.0
    %vm2860 = vcmp.gt.f32.partialorder %v2604, 0.0
    %vm2861 = vcmp.gt.f32.partialorder %v2605, 0.0
    %vm2862 = vcmp.gt.f32.partialorder %v2606, 0.0
    %vm2863 = vcmp.gt.f32.partialorder %v2607, 0.0
    %vm2864 = vcmp.gt.f32.partialorder %v2608, 0.0
    %vm2865 = vcmp.gt.f32.partialorder %v2609, 0.0
    %vm2866 = vcmp.gt.f32.partialorder %v2610, 0.0
    %vm2867 = vcmp.gt.f32.partialorder %v2611, 0.0
    %vm2868 = vcmp.gt.f32.partialorder %v2612, 0.0
    %vm2869 = vcmp.gt.f32.partialorder %v2613, 0.0
    %vm2870 = vcmp.gt.f32.partialorder %v2614, 0.0
    %vm2871 = vcmp.gt.f32.partialorder %v2615, 0.0
    %vm2872 = vcmp.gt.f32.partialorder %v2616, 0.0
    %vm2873 = vcmp.gt.f32.partialorder %v2617, 0.0
    %vm2874 = vcmp.gt.f32.partialorder %v2618, 0.0
    %vm2875 = vcmp.gt.f32.partialorder %v2619, 0.0
    %vm2876 = vcmp.gt.f32.partialorder %v2620, 0.0
    %vm2877 = vcmp.gt.f32.partialorder %v2621, 0.0
    %vm2878 = vcmp.gt.f32.partialorder %v2622, 0.0
    %vm2879 = vcmp.gt.f32.partialorder %v2623, 0.0
    %vm2880 = vcmp.gt.f32.partialorder %v2624, 0.0
    %vm2881 = vcmp.gt.f32.partialorder %v2625, 0.0
    %vm2882 = vcmp.gt.f32.partialorder %v2626, 0.0
    %vm2883 = vcmp.gt.f32.partialorder %v2627, 0.0
    %vm2884 = vcmp.gt.f32.partialorder %v2628, 0.0
    %vm2885 = vcmp.gt.f32.partialorder %v2629, 0.0
    %vm2886 = vcmp.gt.f32.partialorder %v2630, 0.0
    %vm2887 = vcmp.gt.f32.partialorder %v2631, 0.0
    %vm2888 = vcmp.gt.f32.partialorder %v2632, 0.0
    %vm2889 = vcmp.gt.f32.partialorder %v2633, 0.0
    %vm2890 = vcmp.gt.f32.partialorder %v2634, 0.0
    %vm2891 = vcmp.gt.f32.partialorder %v2635, 0.0
    %vm2892 = vcmp.gt.f32.partialorder %v2636, 0.0
    %vm2893 = vcmp.gt.f32.partialorder %v2637, 0.0
    %vm2894 = vcmp.gt.f32.partialorder %v2638, 0.0
    %vm2895 = vcmp.gt.f32.partialorder %v2639, 0.0
    %vm2896 = vcmp.gt.f32.partialorder %v2640, 0.0
    %vm2897 = vcmp.gt.f32.partialorder %v2641, 0.0
    %vm2898 = vcmp.gt.f32.partialorder %v2642, 0.0
    %vm2899 = vcmp.gt.f32.partialorder %v2643, 0.0
    %vm2900 = vcmp.gt.f32.partialorder %v2644, 0.0
    %vm2901 = vcmp.gt.f32.partialorder %v2645, 0.0
    %vm2902 = vcmp.gt.f32.partialorder %v2646, 0.0
    %vm2903 = vcmp.gt.f32.partialorder %v2647, 0.0
    %vm2904 = vcmp.gt.f32.partialorder %v2648, 0.0
    %vm2905 = vcmp.gt.f32.partialorder %v2649, 0.0
    %vm2906 = vcmp.gt.f32.partialorder %v2650, 0.0
    %vm2907 = vcmp.gt.f32.partialorder %v2651, 0.0
    %vm2908 = vcmp.gt.f32.partialorder %v2652, 0.0
    %vm2909 = vcmp.gt.f32.partialorder %v2653, 0.0
    %vm2910 = vcmp.gt.f32.partialorder %v2654, 0.0
    %vm2911 = vcmp.gt.f32.partialorder %v2655, 0.0
    %vm2912 = vcmp.gt.f32.partialorder %v2656, 0.0
    %vm2913 = vcmp.gt.f32.partialorder %v2657, 0.0
    %vm2914 = vcmp.gt.f32.partialorder %v2658, 0.0
    %vm2915 = vcmp.gt.f32.partialorder %v2659, 0.0
    %vm2916 = vcmp.gt.f32.partialorder %v2660, 0.0
    %vm2917 = vcmp.gt.f32.partialorder %v2661, 0.0
    %vm2918 = vcmp.gt.f32.partialorder %v2662, 0.0
    %vm2919 = vcmp.gt.f32.partialorder %v2663, 0.0
    %vm2920 = vcmp.gt.f32.partialorder %v2664, 0.0
    %vm2921 = vcmp.gt.f32.partialorder %v2665, 0.0
    %vm2922 = vcmp.gt.f32.partialorder %v2666, 0.0
    %vm2923 = vcmp.gt.f32.partialorder %v2667, 0.0
    %vm2924 = vcmp.gt.f32.partialorder %v2668, 0.0
    %vm2925 = vcmp.gt.f32.partialorder %v2669, 0.0
    %vm2926 = vcmp.gt.f32.partialorder %v2670, 0.0
    %vm2927 = vcmp.gt.f32.partialorder %v2671, 0.0
    %vm2928 = vcmp.gt.f32.partialorder %v2672, 0.0
    %vm2929 = vcmp.gt.f32.partialorder %v2673, 0.0
    %vm2930 = vcmp.gt.f32.partialorder %v2674, 0.0
    %vm2931 = vcmp.gt.f32.partialorder %v2675, 0.0
    %vm2932 = vcmp.gt.f32.partialorder %v2676, 0.0
    %vm2933 = vcmp.gt.f32.partialorder %v2677, 0.0
    %vm2934 = vcmp.gt.f32.partialorder %v2678, 0.0
    %vm2935 = vcmp.gt.f32.partialorder %v2679, 0.0
    %vm2936 = vcmp.gt.f32.partialorder %v2680, 0.0
    %vm2937 = vcmp.gt.f32.partialorder %v2681, 0.0
    %v2938 = vmul.f32 %v2426, 0.01
    %v2939 = vmul.f32 %v2427, 0.01
    %v2940 = vmul.f32 %v2428, 0.01
    %v2941 = vmul.f32 %v2429, 0.01
    %v2942 = vmul.f32 %v2430, 0.01
    %v2943 = vmul.f32 %v2431, 0.01
    %v2944 = vmul.f32 %v2432, 0.01
    %v2945 = vmul.f32 %v2433, 0.01
    %v2946 = vmul.f32 %v2434, 0.01
    %v2947 = vmul.f32 %v2435, 0.01
    %v2948 = vmul.f32 %v2436, 0.01
    %v2949 = vmul.f32 %v2437, 0.01
    %v2950 = vmul.f32 %v2438, 0.01
    %v2951 = vmul.f32 %v2439, 0.01
    %v2952 = vmul.f32 %v2440, 0.01
    %v2953 = vmul.f32 %v2441, 0.01
    %v2954 = vmul.f32 %v2442, 0.01
    %v2955 = vmul.f32 %v2443, 0.01
    %v2956 = vmul.f32 %v2444, 0.01
    %v2957 = vmul.f32 %v2445, 0.01
    %v2958 = vmul.f32 %v2446, 0.01
    %v2959 = vmul.f32 %v2447, 0.01
    %v2960 = vmul.f32 %v2448, 0.01
    %v2961 = vmul.f32 %v2449, 0.01
    %v2962 = vmul.f32 %v2450, 0.01
    %v2963 = vmul.f32 %v2451, 0.01
    %v2964 = vmul.f32 %v2452, 0.01
    %v2965 = vmul.f32 %v2453, 0.01
    %v2966 = vmul.f32 %v2454, 0.01
    %v2967 = vmul.f32 %v2455, 0.01
    %v2968 = vmul.f32 %v2456, 0.01
    %v2969 = vmul.f32 %v2457, 0.01
    %v2970 = vmul.f32 %v2458, 0.01
    %v2971 = vmul.f32 %v2459, 0.01
    %v2972 = vmul.f32 %v2460, 0.01
    %v2973 = vmul.f32 %v2461, 0.01
    %v2974 = vmul.f32 %v2462, 0.01
    %v2975 = vmul.f32 %v2463, 0.01
    %v2976 = vmul.f32 %v2464, 0.01
    %v2977 = vmul.f32 %v2465, 0.01
    %v2978 = vmul.f32 %v2466, 0.01
    %v2979 = vmul.f32 %v2467, 0.01
    %v2980 = vmul.f32 %v2468, 0.01
    %v2981 = vmul.f32 %v2469, 0.01
    %v2982 = vmul.f32 %v2470, 0.01
    %v2983 = vmul.f32 %v2471, 0.01
    %v2984 = vmul.f32 %v2472, 0.01
    %v2985 = vmul.f32 %v2473, 0.01
    %v2986 = vmul.f32 %v2474, 0.01
    %v2987 = vmul.f32 %v2475, 0.01
    %v2988 = vmul.f32 %v2476, 0.01
    %v2989 = vmul.f32 %v2477, 0.01
    %v2990 = vmul.f32 %v2478, 0.01
    %v2991 = vmul.f32 %v2479, 0.01
    %v2992 = vmul.f32 %v2480, 0.01
    %v2993 = vmul.f32 %v2481, 0.01
    %v2994 = vmul.f32 %v2482, 0.01
    %v2995 = vmul.f32 %v2483, 0.01
    %v2996 = vmul.f32 %v2484, 0.01
    %v2997 = vmul.f32 %v2485, 0.01
    %v2998 = vmul.f32 %v2486, 0.01
    %v2999 = vmul.f32 %v2487, 0.01
    %v3000 = vmul.f32 %v2488, 0.01
    %v3001 = vmul.f32 %v2489, 0.01
    %v3002 = vmul.f32 %v2490, 0.01
    %v3003 = vmul.f32 %v2491, 0.01
    %v3004 = vmul.f32 %v2492, 0.01
    %v3005 = vmul.f32 %v2493, 0.01
    %v3006 = vmul.f32 %v2494, 0.01
    %v3007 = vmul.f32 %v2495, 0.01
    %v3008 = vmul.f32 %v2496, 0.01
    %v3009 = vmul.f32 %v2497, 0.01
    %v3010 = vmul.f32 %v2498, 0.01
    %v3011 = vmul.f32 %v2499, 0.01
    %v3012 = vmul.f32 %v2500, 0.01
    %v3013 = vmul.f32 %v2501, 0.01
    %v3014 = vmul.f32 %v2502, 0.01
    %v3015 = vmul.f32 %v2503, 0.01
    %v3016 = vmul.f32 %v2504, 0.01
    %v3017 = vmul.f32 %v2505, 0.01
    %v3018 = vmul.f32 %v2506, 0.01
    %v3019 = vmul.f32 %v2507, 0.01
    %v3020 = vmul.f32 %v2508, 0.01
    %v3021 = vmul.f32 %v2509, 0.01
    %v3022 = vmul.f32 %v2510, 0.01
    %v3023 = vmul.f32 %v2511, 0.01
    %v3024 = vmul.f32 %v2512, 0.01
    %v3025 = vmul.f32 %v2513, 0.01
    %v3026 = vmul.f32 %v2514, 0.01
    %v3027 = vmul.f32 %v2515, 0.01
    %v3028 = vmul.f32 %v2516, 0.01
    %v3029 = vmul.f32 %v2517, 0.01
    %v3030 = vmul.f32 %v2518, 0.01
    %v3031 = vmul.f32 %v2519, 0.01
    %v3032 = vmul.f32 %v2520, 0.01
    %v3033 = vmul.f32 %v2521, 0.01
    %v3034 = vmul.f32 %v2522, 0.01
    %v3035 = vmul.f32 %v2523, 0.01
    %v3036 = vmul.f32 %v2524, 0.01
    %v3037 = vmul.f32 %v2525, 0.01
    %v3038 = vmul.f32 %v2526, 0.01
    %v3039 = vmul.f32 %v2527, 0.01
    %v3040 = vmul.f32 %v2528, 0.01
    %v3041 = vmul.f32 %v2529, 0.01
    %v3042 = vmul.f32 %v2530, 0.01
    %v3043 = vmul.f32 %v2531, 0.01
    %v3044 = vmul.f32 %v2532, 0.01
    %v3045 = vmul.f32 %v2533, 0.01
    %v3046 = vmul.f32 %v2534, 0.01
    %v3047 = vmul.f32 %v2535, 0.01
    %v3048 = vmul.f32 %v2536, 0.01
    %v3049 = vmul.f32 %v2537, 0.01
    %v3050 = vmul.f32 %v2538, 0.01
    %v3051 = vmul.f32 %v2539, 0.01
    %v3052 = vmul.f32 %v2540, 0.01
    %v3053 = vmul.f32 %v2541, 0.01
    %v3054 = vmul.f32 %v2542, 0.01
    %v3055 = vmul.f32 %v2543, 0.01
    %v3056 = vmul.f32 %v2544, 0.01
    %v3057 = vmul.f32 %v2545, 0.01
    %v3058 = vmul.f32 %v2546, 0.01
    %v3059 = vmul.f32 %v2547, 0.01
    %v3060 = vmul.f32 %v2548, 0.01
    %v3061 = vmul.f32 %v2549, 0.01
    %v3062 = vmul.f32 %v2550, 0.01
    %v3063 = vmul.f32 %v2551, 0.01
    %v3064 = vmul.f32 %v2552, 0.01
    %v3065 = vmul.f32 %v2553, 0.01
    %v3066 = vmul.f32 %v2554, 0.01
    %v3067 = vmul.f32 %v2555, 0.01
    %v3068 = vmul.f32 %v2556, 0.01
    %v3069 = vmul.f32 %v2557, 0.01
    %v3070 = vmul.f32 %v2558, 0.01
    %v3071 = vmul.f32 %v2559, 0.01
    %v3072 = vmul.f32 %v2560, 0.01
    %v3073 = vmul.f32 %v2561, 0.01
    %v3074 = vmul.f32 %v2562, 0.01
    %v3075 = vmul.f32 %v2563, 0.01
    %v3076 = vmul.f32 %v2564, 0.01
    %v3077 = vmul.f32 %v2565, 0.01
    %v3078 = vmul.f32 %v2566, 0.01
    %v3079 = vmul.f32 %v2567, 0.01
    %v3080 = vmul.f32 %v2568, 0.01
    %v3081 = vmul.f32 %v2569, 0.01
    %v3082 = vmul.f32 %v2570, 0.01
    %v3083 = vmul.f32 %v2571, 0.01
    %v3084 = vmul.f32 %v2572, 0.01
    %v3085 = vmul.f32 %v2573, 0.01
    %v3086 = vmul.f32 %v2574, 0.01
    %v3087 = vmul.f32 %v2575, 0.01
    %v3088 = vmul.f32 %v2576, 0.01
    %v3089 = vmul.f32 %v2577, 0.01
    %v3090 = vmul.f32 %v2578, 0.01
    %v3091 = vmul.f32 %v2579, 0.01
    %v3092 = vmul.f32 %v2580, 0.01
    %v3093 = vmul.f32 %v2581, 0.01
    %v3094 = vmul.f32 %v2582, 0.01
    %v3095 = vmul.f32 %v2583, 0.01
    %v3096 = vmul.f32 %v2584, 0.01
    %v3097 = vmul.f32 %v2585, 0.01
    %v3098 = vmul.f32 %v2586, 0.01
    %v3099 = vmul.f32 %v2587, 0.01
    %v3100 = vmul.f32 %v2588, 0.01
    %v3101 = vmul.f32 %v2589, 0.01
    %v3102 = vmul.f32 %v2590, 0.01
    %v3103 = vmul.f32 %v2591, 0.01
    %v3104 = vmul.f32 %v2592, 0.01
    %v3105 = vmul.f32 %v2593, 0.01
    %v3106 = vmul.f32 %v2594, 0.01
    %v3107 = vmul.f32 %v2595, 0.01
    %v3108 = vmul.f32 %v2596, 0.01
    %v3109 = vmul.f32 %v2597, 0.01
    %v3110 = vmul.f32 %v2598, 0.01
    %v3111 = vmul.f32 %v2599, 0.01
    %v3112 = vmul.f32 %v2600, 0.01
    %v3113 = vmul.f32 %v2601, 0.01
    %v3114 = vmul.f32 %v2602, 0.01
    %v3115 = vmul.f32 %v2603, 0.01
    %v3116 = vmul.f32 %v2604, 0.01
    %v3117 = vmul.f32 %v2605, 0.01
    %v3118 = vmul.f32 %v2606, 0.01
    %v3119 = vmul.f32 %v2607, 0.01
    %v3120 = vmul.f32 %v2608, 0.01
    %v3121 = vmul.f32 %v2609, 0.01
    %v3122 = vmul.f32 %v2610, 0.01
    %v3123 = vmul.f32 %v2611, 0.01
    %v3124 = vmul.f32 %v2612, 0.01
    %v3125 = vmul.f32 %v2613, 0.01
    %v3126 = vmul.f32 %v2614, 0.01
    %v3127 = vmul.f32 %v2615, 0.01
    %v3128 = vmul.f32 %v2616, 0.01
    %v3129 = vmul.f32 %v2617, 0.01
    %v3130 = vmul.f32 %v2618, 0.01
    %v3131 = vmul.f32 %v2619, 0.01
    %v3132 = vmul.f32 %v2620, 0.01
    %v3133 = vmul.f32 %v2621, 0.01
    %v3134 = vmul.f32 %v2622, 0.01
    %v3135 = vmul.f32 %v2623, 0.01
    %v3136 = vmul.f32 %v2624, 0.01
    %v3137 = vmul.f32 %v2625, 0.01
    %v3138 = vmul.f32 %v2626, 0.01
    %v3139 = vmul.f32 %v2627, 0.01
    %v3140 = vmul.f32 %v2628, 0.01
    %v3141 = vmul.f32 %v2629, 0.01
    %v3142 = vmul.f32 %v2630, 0.01
    %v3143 = vmul.f32 %v2631, 0.01
    %v3144 = vmul.f32 %v2632, 0.01
    %v3145 = vmul.f32 %v2633, 0.01
    %v3146 = vmul.f32 %v2634, 0.01
    %v3147 = vmul.f32 %v2635, 0.01
    %v3148 = vmul.f32 %v2636, 0.01
    %v3149 = vmul.f32 %v2637, 0.01
    %v3150 = vmul.f32 %v2638, 0.01
    %v3151 = vmul.f32 %v2639, 0.01
    %v3152 = vmul.f32 %v2640, 0.01
    %v3153 = vmul.f32 %v2641, 0.01
    %v3154 = vmul.f32 %v2642, 0.01
    %v3155 = vmul.f32 %v2643, 0.01
    %v3156 = vmul.f32 %v2644, 0.01
    %v3157 = vmul.f32 %v2645, 0.01
    %v3158 = vmul.f32 %v2646, 0.01
    %v3159 = vmul.f32 %v2647, 0.01
    %v3160 = vmul.f32 %v2648, 0.01
    %v3161 = vmul.f32 %v2649, 0.01
    %v3162 = vmul.f32 %v2650, 0.01
    %v3163 = vmul.f32 %v2651, 0.01
    %v3164 = vmul.f32 %v2652, 0.01
    %v3165 = vmul.f32 %v2653, 0.01
    %v3166 = vmul.f32 %v2654, 0.01
    %v3167 = vmul.f32 %v2655, 0.01
    %v3168 = vmul.f32 %v2656, 0.01
    %v3169 = vmul.f32 %v2657, 0.01
    %v3170 = vmul.f32 %v2658, 0.01
    %v3171 = vmul.f32 %v2659, 0.01
    %v3172 = vmul.f32 %v2660, 0.01
    %v3173 = vmul.f32 %v2661, 0.01
    %v3174 = vmul.f32 %v2662, 0.01
    %v3175 = vmul.f32 %v2663, 0.01
    %v3176 = vmul.f32 %v2664, 0.01
    %v3177 = vmul.f32 %v2665, 0.01
    %v3178 = vmul.f32 %v2666, 0.01
    %v3179 = vmul.f32 %v2667, 0.01
    %v3180 = vmul.f32 %v2668, 0.01
    %v3181 = vmul.f32 %v2669, 0.01
    %v3182 = vmul.f32 %v2670, 0.01
    %v3183 = vmul.f32 %v2671, 0.01
    %v3184 = vmul.f32 %v2672, 0.01
    %v3185 = vmul.f32 %v2673, 0.01
    %v3186 = vmul.f32 %v2674, 0.01
    %v3187 = vmul.f32 %v2675, 0.01
    %v3188 = vmul.f32 %v2676, 0.01
    %v3189 = vmul.f32 %v2677, 0.01
    %v3190 = vmul.f32 %v2678, 0.01
    %v3191 = vmul.f32 %v2679, 0.01
    %v3192 = vmul.f32 %v2680, 0.01
    %v3193 = vmul.f32 %v2681, 0.01
    %v3194 = vsel %vm2682, %v2426, %v2938
    %v3195 = vsel %vm2683, %v2427, %v2939
    %v3196 = vsel %vm2684, %v2428, %v2940
    %v3197 = vsel %vm2685, %v2429, %v2941
    %v3198 = vsel %vm2686, %v2430, %v2942
    %v3199 = vsel %vm2687, %v2431, %v2943
    %v3200 = vsel %vm2688, %v2432, %v2944
    %v3201 = vsel %vm2689, %v2433, %v2945
    %v3202 = vsel %vm2690, %v2434, %v2946
    %v3203 = vsel %vm2691, %v2435, %v2947
    %v3204 = vsel %vm2692, %v2436, %v2948
    %v3205 = vsel %vm2693, %v2437, %v2949
    %v3206 = vsel %vm2694, %v2438, %v2950
    %v3207 = vsel %vm2695, %v2439, %v2951
    %v3208 = vsel %vm2696, %v2440, %v2952
    %v3209 = vsel %vm2697, %v2441, %v2953
    %v3210 = vsel %vm2698, %v2442, %v2954
    %v3211 = vsel %vm2699, %v2443, %v2955
    %v3212 = vsel %vm2700, %v2444, %v2956
    %v3213 = vsel %vm2701, %v2445, %v2957
    %v3214 = vsel %vm2702, %v2446, %v2958
    %v3215 = vsel %vm2703, %v2447, %v2959
    %v3216 = vsel %vm2704, %v2448, %v2960
    %v3217 = vsel %vm2705, %v2449, %v2961
    %v3218 = vsel %vm2706, %v2450, %v2962
    %v3219 = vsel %vm2707, %v2451, %v2963
    %v3220 = vsel %vm2708, %v2452, %v2964
    %v3221 = vsel %vm2709, %v2453, %v2965
    %v3222 = vsel %vm2710, %v2454, %v2966
    %v3223 = vsel %vm2711, %v2455, %v2967
    %v3224 = vsel %vm2712, %v2456, %v2968
    %v3225 = vsel %vm2713, %v2457, %v2969
    %v3226 = vsel %vm2714, %v2458, %v2970
    %v3227 = vsel %vm2715, %v2459, %v2971
    %v3228 = vsel %vm2716, %v2460, %v2972
    %v3229 = vsel %vm2717, %v2461, %v2973
    %v3230 = vsel %vm2718, %v2462, %v2974
    %v3231 = vsel %vm2719, %v2463, %v2975
    %v3232 = vsel %vm2720, %v2464, %v2976
    %v3233 = vsel %vm2721, %v2465, %v2977
    %v3234 = vsel %vm2722, %v2466, %v2978
    %v3235 = vsel %vm2723, %v2467, %v2979
    %v3236 = vsel %vm2724, %v2468, %v2980
    %v3237 = vsel %vm2725, %v2469, %v2981
    %v3238 = vsel %vm2726, %v2470, %v2982
    %v3239 = vsel %vm2727, %v2471, %v2983
    %v3240 = vsel %vm2728, %v2472, %v2984
    %v3241 = vsel %vm2729, %v2473, %v2985
    %v3242 = vsel %vm2730, %v2474, %v2986
    %v3243 = vsel %vm2731, %v2475, %v2987
    %v3244 = vsel %vm2732, %v2476, %v2988
    %v3245 = vsel %vm2733, %v2477, %v2989
    %v3246 = vsel %vm2734, %v2478, %v2990
    %v3247 = vsel %vm2735, %v2479, %v2991
    %v3248 = vsel %vm2736, %v2480, %v2992
    %v3249 = vsel %vm2737, %v2481, %v2993
    %v3250 = vsel %vm2738, %v2482, %v2994
    %v3251 = vsel %vm2739, %v2483, %v2995
    %v3252 = vsel %vm2740, %v2484, %v2996
    %v3253 = vsel %vm2741, %v2485, %v2997
    %v3254 = vsel %vm2742, %v2486, %v2998
    %v3255 = vsel %vm2743, %v2487, %v2999
    %v3256 = vsel %vm2744, %v2488, %v3000
    %v3257 = vsel %vm2745, %v2489, %v3001
    %v3258 = vsel %vm2746, %v2490, %v3002
    %v3259 = vsel %vm2747, %v2491, %v3003
    %v3260 = vsel %vm2748, %v2492, %v3004
    %v3261 = vsel %vm2749, %v2493, %v3005
    %v3262 = vsel %vm2750, %v2494, %v3006
    %v3263 = vsel %vm2751, %v2495, %v3007
    %v3264 = vsel %vm2752, %v2496, %v3008
    %v3265 = vsel %vm2753, %v2497, %v3009
    %v3266 = vsel %vm2754, %v2498, %v3010
    %v3267 = vsel %vm2755, %v2499, %v3011
    %v3268 = vsel %vm2756, %v2500, %v3012
    %v3269 = vsel %vm2757, %v2501, %v3013
    %v3270 = vsel %vm2758, %v2502, %v3014
    %v3271 = vsel %vm2759, %v2503, %v3015
    %v3272 = vsel %vm2760, %v2504, %v3016
    %v3273 = vsel %vm2761, %v2505, %v3017
    %v3274 = vsel %vm2762, %v2506, %v3018
    %v3275 = vsel %vm2763, %v2507, %v3019
    %v3276 = vsel %vm2764, %v2508, %v3020
    %v3277 = vsel %vm2765, %v2509, %v3021
    %v3278 = vsel %vm2766, %v2510, %v3022
    %v3279 = vsel %vm2767, %v2511, %v3023
    %v3280 = vsel %vm2768, %v2512, %v3024
    %v3281 = vsel %vm2769, %v2513, %v3025
    %v3282 = vsel %vm2770, %v2514, %v3026
    %v3283 = vsel %vm2771, %v2515, %v3027
    %v3284 = vsel %vm2772, %v2516, %v3028
    %v3285 = vsel %vm2773, %v2517, %v3029
    %v3286 = vsel %vm2774, %v2518, %v3030
    %v3287 = vsel %vm2775, %v2519, %v3031
    %v3288 = vsel %vm2776, %v2520, %v3032
    %v3289 = vsel %vm2777, %v2521, %v3033
    %v3290 = vsel %vm2778, %v2522, %v3034
    %v3291 = vsel %vm2779, %v2523, %v3035
    %v3292 = vsel %vm2780, %v2524, %v3036
    %v3293 = vsel %vm2781, %v2525, %v3037
    %v3294 = vsel %vm2782, %v2526, %v3038
    %v3295 = vsel %vm2783, %v2527, %v3039
    %v3296 = vsel %vm2784, %v2528, %v3040
    %v3297 = vsel %vm2785, %v2529, %v3041
    %v3298 = vsel %vm2786, %v2530, %v3042
    %v3299 = vsel %vm2787, %v2531, %v3043
    %v3300 = vsel %vm2788, %v2532, %v3044
    %v3301 = vsel %vm2789, %v2533, %v3045
    %v3302 = vsel %vm2790, %v2534, %v3046
    %v3303 = vsel %vm2791, %v2535, %v3047
    %v3304 = vsel %vm2792, %v2536, %v3048
    %v3305 = vsel %vm2793, %v2537, %v3049
    %v3306 = vsel %vm2794, %v2538, %v3050
    %v3307 = vsel %vm2795, %v2539, %v3051
    %v3308 = vsel %vm2796, %v2540, %v3052
    %v3309 = vsel %vm2797, %v2541, %v3053
    %v3310 = vsel %vm2798, %v2542, %v3054
    %v3311 = vsel %vm2799, %v2543, %v3055
    %v3312 = vsel %vm2800, %v2544, %v3056
    %v3313 = vsel %vm2801, %v2545, %v3057
    %v3314 = vsel %vm2802, %v2546, %v3058
    %v3315 = vsel %vm2803, %v2547, %v3059
    %v3316 = vsel %vm2804, %v2548, %v3060
    %v3317 = vsel %vm2805, %v2549, %v3061
    %v3318 = vsel %vm2806, %v2550, %v3062
    %v3319 = vsel %vm2807, %v2551, %v3063
    %v3320 = vsel %vm2808, %v2552, %v3064
    %v3321 = vsel %vm2809, %v2553, %v3065
    %v3322 = vsel %vm2810, %v2554, %v3066
    %v3323 = vsel %vm2811, %v2555, %v3067
    %v3324 = vsel %vm2812, %v2556, %v3068
    %v3325 = vsel %vm2813, %v2557, %v3069
    %v3326 = vsel %vm2814, %v2558, %v3070
    %v3327 = vsel %vm2815, %v2559, %v3071
    %v3328 = vsel %vm2816, %v2560, %v3072
    %v3329 = vsel %vm2817, %v2561, %v3073
    %v3330 = vsel %vm2818, %v2562, %v3074
    %v3331 = vsel %vm2819, %v2563, %v3075
    %v3332 = vsel %vm2820, %v2564, %v3076
    %v3333 = vsel %vm2821, %v2565, %v3077
    %v3334 = vsel %vm2822, %v2566, %v3078
    %v3335 = vsel %vm2823, %v2567, %v3079
    %v3336 = vsel %vm2824, %v2568, %v3080
    %v3337 = vsel %vm2825, %v2569, %v3081
    %v3338 = vsel %vm2826, %v2570, %v3082
    %v3339 = vsel %vm2827, %v2571, %v3083
    %v3340 = vsel %vm2828, %v2572, %v3084
    %v3341 = vsel %vm2829, %v2573, %v3085
    %v3342 = vsel %vm2830, %v2574, %v3086
    %v3343 = vsel %vm2831, %v2575, %v3087
    %v3344 = vsel %vm2832, %v2576, %v3088
    %v3345 = vsel %vm2833, %v2577, %v3089
    %v3346 = vsel %vm2834, %v2578, %v3090
    %v3347 = vsel %vm2835, %v2579, %v3091
    %v3348 = vsel %vm2836, %v2580, %v3092
    %v3349 = vsel %vm2837, %v2581, %v3093
    %v3350 = vsel %vm2838, %v2582, %v3094
    %v3351 = vsel %vm2839, %v2583, %v3095
    %v3352 = vsel %vm2840, %v2584, %v3096
    %v3353 = vsel %vm2841, %v2585, %v3097
    %v3354 = vsel %vm2842, %v2586, %v3098
    %v3355 = vsel %vm2843, %v2587, %v3099
    %v3356 = vsel %vm2844, %v2588, %v3100
    %v3357 = vsel %vm2845, %v2589, %v3101
    %v3358 = vsel %vm2846, %v2590, %v3102
    %v3359 = vsel %vm2847, %v2591, %v3103
    %v3360 = vsel %vm2848, %v2592, %v3104
    %v3361 = vsel %vm2849, %v2593, %v3105
    %v3362 = vsel %vm2850, %v2594, %v3106
    %v3363 = vsel %vm2851, %v2595, %v3107
    %v3364 = vsel %vm2852, %v2596, %v3108
    %v3365 = vsel %vm2853, %v2597, %v3109
    %v3366 = vsel %vm2854, %v2598, %v3110
    %v3367 = vsel %vm2855, %v2599, %v3111
    %v3368 = vsel %vm2856, %v2600, %v3112
    %v3369 = vsel %vm2857, %v2601, %v3113
    %v3370 = vsel %vm2858, %v2602, %v3114
    %v3371 = vsel %vm2859, %v2603, %v3115
    %v3372 = vsel %vm2860, %v2604, %v3116
    %v3373 = vsel %vm2861, %v2605, %v3117
    %v3374 = vsel %vm2862, %v2606, %v3118
    %v3375 = vsel %vm2863, %v2607, %v3119
    %v3376 = vsel %vm2864, %v2608, %v3120
    %v3377 = vsel %vm2865, %v2609, %v3121
    %v3378 = vsel %vm2866, %v2610, %v3122
    %v3379 = vsel %vm2867, %v2611, %v3123
    %v3380 = vsel %vm2868, %v2612, %v3124
    %v3381 = vsel %vm2869, %v2613, %v3125
    %v3382 = vsel %vm2870, %v2614, %v3126
    %v3383 = vsel %vm2871, %v2615, %v3127
    %v3384 = vsel %vm2872, %v2616, %v3128
    %v3385 = vsel %vm2873, %v2617, %v3129
    %v3386 = vsel %vm2874, %v2618, %v3130
    %v3387 = vsel %vm2875, %v2619, %v3131
    %v3388 = vsel %vm2876, %v2620, %v3132
    %v3389 = vsel %vm2877, %v2621, %v3133
    %v3390 = vsel %vm2878, %v2622, %v3134
    %v3391 = vsel %vm2879, %v2623, %v3135
    %v3392 = vsel %vm2880, %v2624, %v3136
    %v3393 = vsel %vm2881, %v2625, %v3137
    %v3394 = vsel %vm2882, %v2626, %v3138
    %v3395 = vsel %vm2883, %v2627, %v3139
    %v3396 = vsel %vm2884, %v2628, %v3140
    %v3397 = vsel %vm2885, %v2629, %v3141
    %v3398 = vsel %vm2886, %v2630, %v3142
    %v3399 = vsel %vm2887, %v2631, %v3143
    %v3400 = vsel %vm2888, %v2632, %v3144
    %v3401 = vsel %vm2889, %v2633, %v3145
    %v3402 = vsel %vm2890, %v2634, %v3146
    %v3403 = vsel %vm2891, %v2635, %v3147
    %v3404 = vsel %vm2892, %v2636, %v3148
    %v3405 = vsel %vm2893, %v2637, %v3149
    %v3406 = vsel %vm2894, %v2638, %v3150
    %v3407 = vsel %vm2895, %v2639, %v3151
    %v3408 = vsel %vm2896, %v2640, %v3152
    %v3409 = vsel %vm2897, %v2641, %v3153
    %v3410 = vsel %vm2898, %v2642, %v3154
    %v3411 = vsel %vm2899, %v2643, %v3155
    %v3412 = vsel %vm2900, %v2644, %v3156
    %v3413 = vsel %vm2901, %v2645, %v3157
    %v3414 = vsel %vm2902, %v2646, %v3158
    %v3415 = vsel %vm2903, %v2647, %v3159
    %v3416 = vsel %vm2904, %v2648, %v3160
    %v3417 = vsel %vm2905, %v2649, %v3161
    %v3418 = vsel %vm2906, %v2650, %v3162
    %v3419 = vsel %vm2907, %v2651, %v3163
    %v3420 = vsel %vm2908, %v2652, %v3164
    %v3421 = vsel %vm2909, %v2653, %v3165
    %v3422 = vsel %vm2910, %v2654, %v3166
    %v3423 = vsel %vm2911, %v2655, %v3167
    %v3424 = vsel %vm2912, %v2656, %v3168
    %v3425 = vsel %vm2913, %v2657, %v3169
    %v3426 = vsel %vm2914, %v2658, %v3170
    %v3427 = vsel %vm2915, %v2659, %v3171
    %v3428 = vsel %vm2916, %v2660, %v3172
    %v3429 = vsel %vm2917, %v2661, %v3173
    %v3430 = vsel %vm2918, %v2662, %v3174
    %v3431 = vsel %vm2919, %v2663, %v3175
    %v3432 = vsel %vm2920, %v2664, %v3176
    %v3433 = vsel %vm2921, %v2665, %v3177
    %v3434 = vsel %vm2922, %v2666, %v3178
    %v3435 = vsel %vm2923, %v2667, %v3179
    %v3436 = vsel %vm2924, %v2668, %v3180
    %v3437 = vsel %vm2925, %v2669, %v3181
    %v3438 = vsel %vm2926, %v2670, %v3182
    %v3439 = vsel %vm2927, %v2671, %v3183
    %v3440 = vsel %vm2928, %v2672, %v3184
    %v3441 = vsel %vm2929, %v2673, %v3185
    %v3442 = vsel %vm2930, %v2674, %v3186
    %v3443 = vsel %vm2931, %v2675, %v3187
    %v3444 = vsel %vm2932, %v2676, %v3188
    %v3445 = vsel %vm2933, %v2677, %v3189
    %v3446 = vsel %vm2934, %v2678, %v3190
    %v3447 = vsel %vm2935, %v2679, %v3191
    %v3448 = vsel %vm2936, %v2680, %v3192
    %v3449 = vsel %vm2937, %v2681, %v3193
    %v3450 = vld [vmem:[#allocation11] sm:$0xff]
    %v3451 = vld [vmem:[#allocation11 + $0x8] sm:$0xff]
    %v3452 = vld [vmem:[#allocation11 + $0x10] sm:$0xff]
    %v3453 = vld [vmem:[#allocation11 + $0x18] sm:$0xff]
    %v3454 = vld [vmem:[#allocation11 + $0x20] sm:$0xff]
    %v3455 = vld [vmem:[#allocation11 + $0x28] sm:$0xff]
    %v3456 = vld [vmem:[#allocation11 + $0x30] sm:$0xff]
    %v3457 = vld [vmem:[#allocation11 + $0x38] sm:$0xff]
    %v3458 = vld [vmem:[#allocation11 + $0x40] sm:$0xff]
    %v3459 = vld [vmem:[#allocation11 + $0x48] sm:$0xff]
    %v3460 = vld [vmem:[#allocation11 + $0x50] sm:$0xff]
    %v3461 = vld [vmem:[#allocation11 + $0x58] sm:$0xff]
    %v3462 = vld [vmem:[#allocation11 + $0x60] sm:$0xff]
    %v3463 = vld [vmem:[#allocation11 + $0x68] sm:$0xff]
    %v3464 = vld [vmem:[#allocation11 + $0x70] sm:$0xff]
    %v3465 = vld [vmem:[#allocation11 + $0x78] sm:$0xff]
    %v3466 = vld [vmem:[#allocation11 + $0x80] sm:$0xff]
    %v3467 = vld [vmem:[#allocation11 + $0x88] sm:$0xff]
    %v3468 = vld [vmem:[#allocation11 + $0x90] sm:$0xff]
    %v3469 = vld [vmem:[#allocation11 + $0x98] sm:$0xff]
    %v3470 = vld [vmem:[#allocation11 + $0xa0] sm:$0xff]
    %v3471 = vld [vmem:[#allocation11 + $0xa8] sm:$0xff]
    %v3472 = vld [vmem:[#allocation11 + $0xb0] sm:$0xff]
    %v3473 = vld [vmem:[#allocation11 + $0xb8] sm:$0xff]
    %v3474 = vld [vmem:[#allocation11 + $0xc0] sm:$0xff]
    %v3475 = vld [vmem:[#allocation11 + $0xc8] sm:$0xff]
    %v3476 = vld [vmem:[#allocation11 + $0xd0] sm:$0xff]
    %v3477 = vld [vmem:[#allocation11 + $0xd8] sm:$0xff]
    %v3478 = vld [vmem:[#allocation11 + $0xe0] sm:$0xff]
    %v3479 = vld [vmem:[#allocation11 + $0xe8] sm:$0xff]
    %v3480 = vld [vmem:[#allocation11 + $0xf0] sm:$0xff]
    %v3481 = vld [vmem:[#allocation11 + $0xf8] sm:$0xff]
    %v3482 = vld [vmem:[%s6] sm:$0x1]
    %v3484 = vlaneseq
    %v3485 = vshrl.u32 %v3484, 7
    %v3486 = vsub.s32 0, %v3485
    %v3487 = vrot.slane %v3482, %v3486
    %3489 = vmatprep.subr.mxu0 0.0
    %3490 = vmatpush1.msra.mxu0 %v3465
    %3491 = vmatprep.subr.mxu0 0.0
    %3492 = vmatpush1.msra.mxu0 %v3464
    %3493 = vmatprep.subr.mxu0 0.0
    %3494 = vmatpush1.msra.mxu0 %v3463
    %3495 = vmatprep.subr.mxu0 0.0
    %3496 = vmatpush1.msra.mxu0 %v3462
    %3497 = vmatprep.subr.mxu0 0.0
    %3498 = vmatpush1.msra.mxu0 %v3461
    %3499 = vmatprep.subr.mxu0 0.0
    %3500 = vmatpush1.msra.mxu0 %v3460
    %3501 = vmatprep.subr.mxu0 0.0
    %3502 = vmatpush1.msra.mxu0 %v3459
    %3503 = vmatprep.subr.mxu0 0.0
    %3504 = vmatpush1.msra.mxu0 %v3458
    %3505 = vmatprep.subr.mxu0 0.0
    %3506 = vmatpush1.msra.mxu0 %v3457
    %3507 = vmatprep.subr.mxu0 0.0
    %3508 = vmatpush1.msra.mxu0 %v3456
    %3509 = vmatprep.subr.mxu0 0.0
    %3510 = vmatpush1.msra.mxu0 %v3455
    %3511 = vmatprep.subr.mxu0 0.0
    %3512 = vmatpush1.msra.mxu0 %v3454
    %3513 = vmatprep.subr.mxu0 0.0
    %3514 = vmatpush1.msra.mxu0 %v3453
    %3515 = vmatprep.subr.mxu0 0.0
    %3516 = vmatpush1.msra.mxu0 %v3452
    %3517 = vmatprep.subr.mxu0 0.0
    %3518 = vmatpush1.msra.mxu0 %v3451
    %3519 = vmatprep.subr.mxu0 0.0
    %3520 = vmatpush1.msra.mxu0 %v3450
    %3521 = vmatprep.subr.mxu0 0.0
    %3522 = vmatpush2.msra.mxu0 %v3481
    %3523 = vmatprep.subr.mxu0 0.0
    %3524 = vmatpush2.msra.mxu0 %v3480
    %3525 = vmatprep.subr.mxu0 0.0
    %3526 = vmatpush2.msra.mxu0 %v3479
    %3527 = vmatprep.subr.mxu0 0.0
    %3528 = vmatpush2.msra.mxu0 %v3478
    %3529 = vmatprep.subr.mxu0 0.0
    %3530 = vmatpush2.msra.mxu0 %v3477
    %3531 = vmatprep.subr.mxu0 0.0
    %3532 = vmatpush2.msra.mxu0 %v3476
    %3533 = vmatprep.subr.mxu0 0.0
    %3534 = vmatpush2.msra.mxu0 %v3475
    %3535 = vmatprep.subr.mxu0 0.0
    %3536 = vmatpush2.msra.mxu0 %v3474
    %3537 = vmatprep.subr.mxu0 0.0
    %3538 = vmatpush2.msra.mxu0 %v3473
    %3539 = vmatprep.subr.mxu0 0.0
    %3540 = vmatpush2.msra.mxu0 %v3472
    %3541 = vmatprep.subr.mxu0 0.0
    %3542 = vmatpush2.msra.mxu0 %v3471
    %3543 = vmatprep.subr.mxu0 0.0
    %3544 = vmatpush2.msra.mxu0 %v3470
    %3545 = vmatprep.subr.mxu0 0.0
    %3546 = vmatpush2.msra.mxu0 %v3469
    %3547 = vmatprep.subr.mxu0 0.0
    %3548 = vmatpush2.msra.mxu0 %v3468
    %3549 = vmatprep.subr.mxu0 0.0
    %3550 = vmatpush2.msra.mxu0 %v3467
    %3551 = vmatprep.subr.mxu0 0.0
    %3552 = vmatpush2.msra.mxu0 %v3466
    %3553 = vmatprep.mubr.f32.mxu0 %v3195
    %3554 = vmatmul.mubr.f32.gmra.mxu0 %v3194
    %v3555 = vpop.f32.mrf.mxu0
    %v3556 = vadd.f32 %v3487, %v3555
    %v3557 = vpop.f32.mrf.mxu0
    %3558 = vmatprep.mubr.f32.mxu0 %v3197
    %3559 = vmatmul.mubr.f32.gmra.mxu0 %v3196
    %v3560 = vpop.f32.mrf.mxu0
    %v3561 = vadd.f32 %v3487, %v3560
    %v3562 = vpop.f32.mrf.mxu0
    %3563 = vmatprep.mubr.f32.mxu0 %v3199
    %3564 = vmatmul.mubr.f32.gmra.mxu0 %v3198
    %v3565 = vpop.f32.mrf.mxu0
    %v3566 = vadd.f32 %v3487, %v3565
    %v3567 = vpop.f32.mrf.mxu0
    %3568 = vmatprep.mubr.f32.mxu0 %v3201
    %3569 = vmatmul.mubr.f32.gmra.mxu0 %v3200
    %v3570 = vpop.f32.mrf.mxu0
    %v3571 = vadd.f32 %v3487, %v3570
    %v3572 = vpop.f32.mrf.mxu0
    %3573 = vmatprep.mubr.f32.mxu0 %v3203
    %3574 = vmatmul.mubr.f32.gmra.mxu0 %v3202
    %v3575 = vpop.f32.mrf.mxu0
    %v3576 = vadd.f32 %v3487, %v3575
    %v3577 = vpop.f32.mrf.mxu0
    %3578 = vmatprep.mubr.f32.mxu0 %v3205
    %3579 = vmatmul.mubr.f32.gmra.mxu0 %v3204
    %v3580 = vpop.f32.mrf.mxu0
    %v3581 = vadd.f32 %v3487, %v3580
    %v3582 = vpop.f32.mrf.mxu0
    %3583 = vmatprep.mubr.f32.mxu0 %v3207
    %3584 = vmatmul.mubr.f32.gmra.mxu0 %v3206
    %v3585 = vpop.f32.mrf.mxu0
    %v3586 = vadd.f32 %v3487, %v3585
    %v3587 = vpop.f32.mrf.mxu0
    %3588 = vmatprep.mubr.f32.mxu0 %v3209
    %3589 = vmatmul.mubr.f32.gmra.mxu0 %v3208
    %v3590 = vpop.f32.mrf.mxu0
    %v3591 = vadd.f32 %v3487, %v3590
    %v3592 = vpop.f32.mrf.mxu0
    %3593 = vmatprep.mubr.f32.mxu0 %v3211
    %3594 = vmatmul.mubr.f32.gmra.mxu0 %v3210
    %v3595 = vpop.f32.mrf.mxu0
    %v3596 = vadd.f32 %v3487, %v3595
    %v3597 = vpop.f32.mrf.mxu0
    %3598 = vmatprep.mubr.f32.mxu0 %v3213
    %3599 = vmatmul.mubr.f32.gmra.mxu0 %v3212
    %v3600 = vpop.f32.mrf.mxu0
    %v3601 = vadd.f32 %v3487, %v3600
    %v3602 = vpop.f32.mrf.mxu0
    %3603 = vmatprep.mubr.f32.mxu0 %v3215
    %3604 = vmatmul.mubr.f32.gmra.mxu0 %v3214
    %v3605 = vpop.f32.mrf.mxu0
    %v3606 = vadd.f32 %v3487, %v3605
    %v3607 = vpop.f32.mrf.mxu0
    %3608 = vmatprep.mubr.f32.mxu0 %v3217
    %3609 = vmatmul.mubr.f32.gmra.mxu0 %v3216
    %v3610 = vpop.f32.mrf.mxu0
    %v3611 = vadd.f32 %v3487, %v3610
    %v3612 = vpop.f32.mrf.mxu0
    %3613 = vmatprep.mubr.f32.mxu0 %v3219
    %3614 = vmatmul.mubr.f32.gmra.mxu0 %v3218
    %v3615 = vpop.f32.mrf.mxu0
    %v3616 = vadd.f32 %v3487, %v3615
    %v3617 = vpop.f32.mrf.mxu0
    %3618 = vmatprep.mubr.f32.mxu0 %v3221
    %3619 = vmatmul.mubr.f32.gmra.mxu0 %v3220
    %v3620 = vpop.f32.mrf.mxu0
    %v3621 = vadd.f32 %v3487, %v3620
    %v3622 = vpop.f32.mrf.mxu0
    %3623 = vmatprep.mubr.f32.mxu0 %v3223
    %3624 = vmatmul.mubr.f32.gmra.mxu0 %v3222
    %v3625 = vpop.f32.mrf.mxu0
    %v3626 = vadd.f32 %v3487, %v3625
    %v3627 = vpop.f32.mrf.mxu0
    %3628 = vmatprep.mubr.f32.mxu0 %v3225
    %3629 = vmatmul.mubr.f32.gmra.mxu0 %v3224
    %v3630 = vpop.f32.mrf.mxu0
    %v3631 = vadd.f32 %v3487, %v3630
    %v3632 = vpop.f32.mrf.mxu0
    %3633 = vmatprep.mubr.f32.mxu0 %v3227
    %3634 = vmatmul.mubr.f32.gmra.mxu0 %v3226
    %v3635 = vpop.f32.mrf.mxu0
    %v3636 = vadd.f32 %v3487, %v3635
    %v3637 = vpop.f32.mrf.mxu0
    %3638 = vmatprep.mubr.f32.mxu0 %v3229
    %3639 = vmatmul.mubr.f32.gmra.mxu0 %v3228
    %v3640 = vpop.f32.mrf.mxu0
    %v3641 = vadd.f32 %v3487, %v3640
    %v3642 = vpop.f32.mrf.mxu0
    %3643 = vmatprep.mubr.f32.mxu0 %v3231
    %3644 = vmatmul.mubr.f32.gmra.mxu0 %v3230
    %v3645 = vpop.f32.mrf.mxu0
    %v3646 = vadd.f32 %v3487, %v3645
    %v3647 = vpop.f32.mrf.mxu0
    %3648 = vmatprep.mubr.f32.mxu0 %v3233
    %3649 = vmatmul.mubr.f32.gmra.mxu0 %v3232
    %v3650 = vpop.f32.mrf.mxu0
    %v3651 = vadd.f32 %v3487, %v3650
    %v3652 = vpop.f32.mrf.mxu0
    %3653 = vmatprep.mubr.f32.mxu0 %v3235
    %3654 = vmatmul.mubr.f32.gmra.mxu0 %v3234
    %v3655 = vpop.f32.mrf.mxu0
    %v3656 = vadd.f32 %v3487, %v3655
    %v3657 = vpop.f32.mrf.mxu0
    %3658 = vmatprep.mubr.f32.mxu0 %v3237
    %3659 = vmatmul.mubr.f32.gmra.mxu0 %v3236
    %v3660 = vpop.f32.mrf.mxu0
    %v3661 = vadd.f32 %v3487, %v3660
    %v3662 = vpop.f32.mrf.mxu0
    %3663 = vmatprep.mubr.f32.mxu0 %v3239
    %3664 = vmatmul.mubr.f32.gmra.mxu0 %v3238
    %v3665 = vpop.f32.mrf.mxu0
    %v3666 = vadd.f32 %v3487, %v3665
    %v3667 = vpop.f32.mrf.mxu0
    %3668 = vmatprep.mubr.f32.mxu0 %v3241
    %3669 = vmatmul.mubr.f32.gmra.mxu0 %v3240
    %v3670 = vpop.f32.mrf.mxu0
    %v3671 = vadd.f32 %v3487, %v3670
    %v3672 = vpop.f32.mrf.mxu0
    %3673 = vmatprep.mubr.f32.mxu0 %v3243
    %3674 = vmatmul.mubr.f32.gmra.mxu0 %v3242
    %v3675 = vpop.f32.mrf.mxu0
    %v3676 = vadd.f32 %v3487, %v3675
    %v3677 = vpop.f32.mrf.mxu0
    %3678 = vmatprep.mubr.f32.mxu0 %v3245
    %3679 = vmatmul.mubr.f32.gmra.mxu0 %v3244
    %v3680 = vpop.f32.mrf.mxu0
    %v3681 = vadd.f32 %v3487, %v3680
    %v3682 = vpop.f32.mrf.mxu0
    %3683 = vmatprep.mubr.f32.mxu0 %v3247
    %3684 = vmatmul.mubr.f32.gmra.mxu0 %v3246
    %v3685 = vpop.f32.mrf.mxu0
    %v3686 = vadd.f32 %v3487, %v3685
    %v3687 = vpop.f32.mrf.mxu0
    %3688 = vmatprep.mubr.f32.mxu0 %v3249
    %3689 = vmatmul.mubr.f32.gmra.mxu0 %v3248
    %v3690 = vpop.f32.mrf.mxu0
    %v3691 = vadd.f32 %v3487, %v3690
    %v3692 = vpop.f32.mrf.mxu0
    %3693 = vmatprep.mubr.f32.mxu0 %v3251
    %3694 = vmatmul.mubr.f32.gmra.mxu0 %v3250
    %v3695 = vpop.f32.mrf.mxu0
    %v3696 = vadd.f32 %v3487, %v3695
    %v3697 = vpop.f32.mrf.mxu0
    %3698 = vmatprep.mubr.f32.mxu0 %v3253
    %3699 = vmatmul.mubr.f32.gmra.mxu0 %v3252
    %v3700 = vpop.f32.mrf.mxu0
    %v3701 = vadd.f32 %v3487, %v3700
    %v3702 = vpop.f32.mrf.mxu0
    %3703 = vmatprep.mubr.f32.mxu0 %v3255
    %3704 = vmatmul.mubr.f32.gmra.mxu0 %v3254
    %v3705 = vpop.f32.mrf.mxu0
    %v3706 = vadd.f32 %v3487, %v3705
    %v3707 = vpop.f32.mrf.mxu0
    %3708 = vmatprep.mubr.f32.mxu0 %v3257
    %3709 = vmatmul.mubr.f32.gmra.mxu0 %v3256
    %v3710 = vpop.f32.mrf.mxu0
    %v3711 = vadd.f32 %v3487, %v3710
    %v3712 = vpop.f32.mrf.mxu0
    %3713 = vmatprep.mubr.f32.mxu0 %v3259
    %3714 = vmatmul.mubr.f32.gmra.mxu0 %v3258
    %v3715 = vpop.f32.mrf.mxu0
    %v3716 = vadd.f32 %v3487, %v3715
    %v3717 = vpop.f32.mrf.mxu0
    %3718 = vmatprep.mubr.f32.mxu0 %v3261
    %3719 = vmatmul.mubr.f32.gmra.mxu0 %v3260
    %v3720 = vpop.f32.mrf.mxu0
    %v3721 = vadd.f32 %v3487, %v3720
    %v3722 = vpop.f32.mrf.mxu0
    %3723 = vmatprep.mubr.f32.mxu0 %v3263
    %3724 = vmatmul.mubr.f32.gmra.mxu0 %v3262
    %v3725 = vpop.f32.mrf.mxu0
    %v3726 = vadd.f32 %v3487, %v3725
    %v3727 = vpop.f32.mrf.mxu0
    %3728 = vmatprep.mubr.f32.mxu0 %v3265
    %3729 = vmatmul.mubr.f32.gmra.mxu0 %v3264
    %v3730 = vpop.f32.mrf.mxu0
    %v3731 = vadd.f32 %v3487, %v3730
    %v3732 = vpop.f32.mrf.mxu0
    %3733 = vmatprep.mubr.f32.mxu0 %v3267
    %3734 = vmatmul.mubr.f32.gmra.mxu0 %v3266
    %v3735 = vpop.f32.mrf.mxu0
    %v3736 = vadd.f32 %v3487, %v3735
    %v3737 = vpop.f32.mrf.mxu0
    %3738 = vmatprep.mubr.f32.mxu0 %v3269
    %3739 = vmatmul.mubr.f32.gmra.mxu0 %v3268
    %v3740 = vpop.f32.mrf.mxu0
    %v3741 = vadd.f32 %v3487, %v3740
    %v3742 = vpop.f32.mrf.mxu0
    %3743 = vmatprep.mubr.f32.mxu0 %v3271
    %3744 = vmatmul.mubr.f32.gmra.mxu0 %v3270
    %v3745 = vpop.f32.mrf.mxu0
    %v3746 = vadd.f32 %v3487, %v3745
    %v3747 = vpop.f32.mrf.mxu0
    %3748 = vmatprep.mubr.f32.mxu0 %v3273
    %3749 = vmatmul.mubr.f32.gmra.mxu0 %v3272
    %v3750 = vpop.f32.mrf.mxu0
    %v3751 = vadd.f32 %v3487, %v3750
    %v3752 = vpop.f32.mrf.mxu0
    %3753 = vmatprep.mubr.f32.mxu0 %v3275
    %3754 = vmatmul.mubr.f32.gmra.mxu0 %v3274
    %v3755 = vpop.f32.mrf.mxu0
    %v3756 = vadd.f32 %v3487, %v3755
    %v3757 = vpop.f32.mrf.mxu0
    %3758 = vmatprep.mubr.f32.mxu0 %v3277
    %3759 = vmatmul.mubr.f32.gmra.mxu0 %v3276
    %v3760 = vpop.f32.mrf.mxu0
    %v3761 = vadd.f32 %v3487, %v3760
    %v3762 = vpop.f32.mrf.mxu0
    %3763 = vmatprep.mubr.f32.mxu0 %v3279
    %3764 = vmatmul.mubr.f32.gmra.mxu0 %v3278
    %v3765 = vpop.f32.mrf.mxu0
    %v3766 = vadd.f32 %v3487, %v3765
    %v3767 = vpop.f32.mrf.mxu0
    %3768 = vmatprep.mubr.f32.mxu0 %v3281
    %3769 = vmatmul.mubr.f32.gmra.mxu0 %v3280
    %v3770 = vpop.f32.mrf.mxu0
    %v3771 = vadd.f32 %v3487, %v3770
    %v3772 = vpop.f32.mrf.mxu0
    %3773 = vmatprep.mubr.f32.mxu0 %v3283
    %3774 = vmatmul.mubr.f32.gmra.mxu0 %v3282
    %v3775 = vpop.f32.mrf.mxu0
    %v3776 = vadd.f32 %v3487, %v3775
    %v3777 = vpop.f32.mrf.mxu0
    %3778 = vmatprep.mubr.f32.mxu0 %v3285
    %3779 = vmatmul.mubr.f32.gmra.mxu0 %v3284
    %v3780 = vpop.f32.mrf.mxu0
    %v3781 = vadd.f32 %v3487, %v3780
    %v3782 = vpop.f32.mrf.mxu0
    %3783 = vmatprep.mubr.f32.mxu0 %v3287
    %3784 = vmatmul.mubr.f32.gmra.mxu0 %v3286
    %v3785 = vpop.f32.mrf.mxu0
    %v3786 = vadd.f32 %v3487, %v3785
    %v3787 = vpop.f32.mrf.mxu0
    %3788 = vmatprep.mubr.f32.mxu0 %v3289
    %3789 = vmatmul.mubr.f32.gmra.mxu0 %v3288
    %v3790 = vpop.f32.mrf.mxu0
    %v3791 = vadd.f32 %v3487, %v3790
    %v3792 = vpop.f32.mrf.mxu0
    %3793 = vmatprep.mubr.f32.mxu0 %v3291
    %3794 = vmatmul.mubr.f32.gmra.mxu0 %v3290
    %v3795 = vpop.f32.mrf.mxu0
    %v3796 = vadd.f32 %v3487, %v3795
    %v3797 = vpop.f32.mrf.mxu0
    %3798 = vmatprep.mubr.f32.mxu0 %v3293
    %3799 = vmatmul.mubr.f32.gmra.mxu0 %v3292
    %v3800 = vpop.f32.mrf.mxu0
    %v3801 = vadd.f32 %v3487, %v3800
    %v3802 = vpop.f32.mrf.mxu0
    %3803 = vmatprep.mubr.f32.mxu0 %v3295
    %3804 = vmatmul.mubr.f32.gmra.mxu0 %v3294
    %v3805 = vpop.f32.mrf.mxu0
    %v3806 = vadd.f32 %v3487, %v3805
    %v3807 = vpop.f32.mrf.mxu0
    %3808 = vmatprep.mubr.f32.mxu0 %v3297
    %3809 = vmatmul.mubr.f32.gmra.mxu0 %v3296
    %v3810 = vpop.f32.mrf.mxu0
    %v3811 = vadd.f32 %v3487, %v3810
    %v3812 = vpop.f32.mrf.mxu0
    %3813 = vmatprep.mubr.f32.mxu0 %v3299
    %3814 = vmatmul.mubr.f32.gmra.mxu0 %v3298
    %v3815 = vpop.f32.mrf.mxu0
    %v3816 = vadd.f32 %v3487, %v3815
    %v3817 = vpop.f32.mrf.mxu0
    %3818 = vmatprep.mubr.f32.mxu0 %v3301
    %3819 = vmatmul.mubr.f32.gmra.mxu0 %v3300
    %v3820 = vpop.f32.mrf.mxu0
    %v3821 = vadd.f32 %v3487, %v3820
    %v3822 = vpop.f32.mrf.mxu0
    %3823 = vmatprep.mubr.f32.mxu0 %v3303
    %3824 = vmatmul.mubr.f32.gmra.mxu0 %v3302
    %v3825 = vpop.f32.mrf.mxu0
    %v3826 = vadd.f32 %v3487, %v3825
    %v3827 = vpop.f32.mrf.mxu0
    %3828 = vmatprep.mubr.f32.mxu0 %v3305
    %3829 = vmatmul.mubr.f32.gmra.mxu0 %v3304
    %v3830 = vpop.f32.mrf.mxu0
    %v3831 = vadd.f32 %v3487, %v3830
    %v3832 = vpop.f32.mrf.mxu0
    %3833 = vmatprep.mubr.f32.mxu0 %v3307
    %3834 = vmatmul.mubr.f32.gmra.mxu0 %v3306
    %v3835 = vpop.f32.mrf.mxu0
    %v3836 = vadd.f32 %v3487, %v3835
    %v3837 = vpop.f32.mrf.mxu0
    %3838 = vmatprep.mubr.f32.mxu0 %v3309
    %3839 = vmatmul.mubr.f32.gmra.mxu0 %v3308
    %v3840 = vpop.f32.mrf.mxu0
    %v3841 = vadd.f32 %v3487, %v3840
    %v3842 = vpop.f32.mrf.mxu0
    %3843 = vmatprep.mubr.f32.mxu0 %v3311
    %3844 = vmatmul.mubr.f32.gmra.mxu0 %v3310
    %v3845 = vpop.f32.mrf.mxu0
    %v3846 = vadd.f32 %v3487, %v3845
    %v3847 = vpop.f32.mrf.mxu0
    %3848 = vmatprep.mubr.f32.mxu0 %v3313
    %3849 = vmatmul.mubr.f32.gmra.mxu0 %v3312
    %v3850 = vpop.f32.mrf.mxu0
    %v3851 = vadd.f32 %v3487, %v3850
    %v3852 = vpop.f32.mrf.mxu0
    %3853 = vmatprep.mubr.f32.mxu0 %v3315
    %3854 = vmatmul.mubr.f32.gmra.mxu0 %v3314
    %v3855 = vpop.f32.mrf.mxu0
    %v3856 = vadd.f32 %v3487, %v3855
    %v3857 = vpop.f32.mrf.mxu0
    %3858 = vmatprep.mubr.f32.mxu0 %v3317
    %3859 = vmatmul.mubr.f32.gmra.mxu0 %v3316
    %v3860 = vpop.f32.mrf.mxu0
    %v3861 = vadd.f32 %v3487, %v3860
    %v3862 = vpop.f32.mrf.mxu0
    %3863 = vmatprep.mubr.f32.mxu0 %v3319
    %3864 = vmatmul.mubr.f32.gmra.mxu0 %v3318
    %v3865 = vpop.f32.mrf.mxu0
    %v3866 = vadd.f32 %v3487, %v3865
    %v3867 = vpop.f32.mrf.mxu0
    %3868 = vmatprep.mubr.f32.mxu0 %v3321
    %3869 = vmatmul.mubr.f32.gmra.mxu0 %v3320
    %v3870 = vpop.f32.mrf.mxu0
    %v3871 = vadd.f32 %v3487, %v3870
    %v3872 = vpop.f32.mrf.mxu0
    %3873 = vmatprep.mubr.f32.mxu0 %v3323
    %3874 = vmatmul.mubr.f32.gmra.mxu0 %v3322
    %v3875 = vpop.f32.mrf.mxu0
    %v3876 = vadd.f32 %v3487, %v3875
    %v3877 = vpop.f32.mrf.mxu0
    %3878 = vmatprep.mubr.f32.mxu0 %v3325
    %3879 = vmatmul.mubr.f32.gmra.mxu0 %v3324
    %v3880 = vpop.f32.mrf.mxu0
    %v3881 = vadd.f32 %v3487, %v3880
    %v3882 = vpop.f32.mrf.mxu0
    %3883 = vmatprep.mubr.f32.mxu0 %v3327
    %3884 = vmatmul.mubr.f32.gmra.mxu0 %v3326
    %v3885 = vpop.f32.mrf.mxu0
    %v3886 = vadd.f32 %v3487, %v3885
    %v3887 = vpop.f32.mrf.mxu0
    %3888 = vmatprep.mubr.f32.mxu0 %v3329
    %3889 = vmatmul.mubr.f32.gmra.mxu0 %v3328
    %v3890 = vpop.f32.mrf.mxu0
    %v3891 = vadd.f32 %v3487, %v3890
    %v3892 = vpop.f32.mrf.mxu0
    %3893 = vmatprep.mubr.f32.mxu0 %v3331
    %3894 = vmatmul.mubr.f32.gmra.mxu0 %v3330
    %v3895 = vpop.f32.mrf.mxu0
    %v3896 = vadd.f32 %v3487, %v3895
    %v3897 = vpop.f32.mrf.mxu0
    %3898 = vmatprep.mubr.f32.mxu0 %v3333
    %3899 = vmatmul.mubr.f32.gmra.mxu0 %v3332
    %v3900 = vpop.f32.mrf.mxu0
    %v3901 = vadd.f32 %v3487, %v3900
    %v3902 = vpop.f32.mrf.mxu0
    %3903 = vmatprep.mubr.f32.mxu0 %v3335
    %3904 = vmatmul.mubr.f32.gmra.mxu0 %v3334
    %v3905 = vpop.f32.mrf.mxu0
    %v3906 = vadd.f32 %v3487, %v3905
    %v3907 = vpop.f32.mrf.mxu0
    %3908 = vmatprep.mubr.f32.mxu0 %v3337
    %3909 = vmatmul.mubr.f32.gmra.mxu0 %v3336
    %v3910 = vpop.f32.mrf.mxu0
    %v3911 = vadd.f32 %v3487, %v3910
    %v3912 = vpop.f32.mrf.mxu0
    %3913 = vmatprep.mubr.f32.mxu0 %v3339
    %3914 = vmatmul.mubr.f32.gmra.mxu0 %v3338
    %v3915 = vpop.f32.mrf.mxu0
    %v3916 = vadd.f32 %v3487, %v3915
    %v3917 = vpop.f32.mrf.mxu0
    %3918 = vmatprep.mubr.f32.mxu0 %v3341
    %3919 = vmatmul.mubr.f32.gmra.mxu0 %v3340
    %v3920 = vpop.f32.mrf.mxu0
    %v3921 = vadd.f32 %v3487, %v3920
    %v3922 = vpop.f32.mrf.mxu0
    %3923 = vmatprep.mubr.f32.mxu0 %v3343
    %3924 = vmatmul.mubr.f32.gmra.mxu0 %v3342
    %v3925 = vpop.f32.mrf.mxu0
    %v3926 = vadd.f32 %v3487, %v3925
    %v3927 = vpop.f32.mrf.mxu0
    %3928 = vmatprep.mubr.f32.mxu0 %v3345
    %3929 = vmatmul.mubr.f32.gmra.mxu0 %v3344
    %v3930 = vpop.f32.mrf.mxu0
    %v3931 = vadd.f32 %v3487, %v3930
    %v3932 = vpop.f32.mrf.mxu0
    %3933 = vmatprep.mubr.f32.mxu0 %v3347
    %3934 = vmatmul.mubr.f32.gmra.mxu0 %v3346
    %v3935 = vpop.f32.mrf.mxu0
    %v3936 = vadd.f32 %v3487, %v3935
    %v3937 = vpop.f32.mrf.mxu0
    %3938 = vmatprep.mubr.f32.mxu0 %v3349
    %3939 = vmatmul.mubr.f32.gmra.mxu0 %v3348
    %v3940 = vpop.f32.mrf.mxu0
    %v3941 = vadd.f32 %v3487, %v3940
    %v3942 = vpop.f32.mrf.mxu0
    %3943 = vmatprep.mubr.f32.mxu0 %v3351
    %3944 = vmatmul.mubr.f32.gmra.mxu0 %v3350
    %v3945 = vpop.f32.mrf.mxu0
    %v3946 = vadd.f32 %v3487, %v3945
    %v3947 = vpop.f32.mrf.mxu0
    %3948 = vmatprep.mubr.f32.mxu0 %v3353
    %3949 = vmatmul.mubr.f32.gmra.mxu0 %v3352
    %v3950 = vpop.f32.mrf.mxu0
    %v3951 = vadd.f32 %v3487, %v3950
    %v3952 = vpop.f32.mrf.mxu0
    %3953 = vmatprep.mubr.f32.mxu0 %v3355
    %3954 = vmatmul.mubr.f32.gmra.mxu0 %v3354
    %v3955 = vpop.f32.mrf.mxu0
    %v3956 = vadd.f32 %v3487, %v3955
    %v3957 = vpop.f32.mrf.mxu0
    %3958 = vmatprep.mubr.f32.mxu0 %v3357
    %3959 = vmatmul.mubr.f32.gmra.mxu0 %v3356
    %v3960 = vpop.f32.mrf.mxu0
    %v3961 = vadd.f32 %v3487, %v3960
    %v3962 = vpop.f32.mrf.mxu0
    %3963 = vmatprep.mubr.f32.mxu0 %v3359
    %3964 = vmatmul.mubr.f32.gmra.mxu0 %v3358
    %v3965 = vpop.f32.mrf.mxu0
    %v3966 = vadd.f32 %v3487, %v3965
    %v3967 = vpop.f32.mrf.mxu0
    %3968 = vmatprep.mubr.f32.mxu0 %v3361
    %3969 = vmatmul.mubr.f32.gmra.mxu0 %v3360
    %v3970 = vpop.f32.mrf.mxu0
    %v3971 = vadd.f32 %v3487, %v3970
    %v3972 = vpop.f32.mrf.mxu0
    %3973 = vmatprep.mubr.f32.mxu0 %v3363
    %3974 = vmatmul.mubr.f32.gmra.mxu0 %v3362
    %v3975 = vpop.f32.mrf.mxu0
    %v3976 = vadd.f32 %v3487, %v3975
    %v3977 = vpop.f32.mrf.mxu0
    %3978 = vmatprep.mubr.f32.mxu0 %v3365
    %3979 = vmatmul.mubr.f32.gmra.mxu0 %v3364
    %v3980 = vpop.f32.mrf.mxu0
    %v3981 = vadd.f32 %v3487, %v3980
    %v3982 = vpop.f32.mrf.mxu0
    %3983 = vmatprep.mubr.f32.mxu0 %v3367
    %3984 = vmatmul.mubr.f32.gmra.mxu0 %v3366
    %v3985 = vpop.f32.mrf.mxu0
    %v3986 = vadd.f32 %v3487, %v3985
    %v3987 = vpop.f32.mrf.mxu0
    %3988 = vmatprep.mubr.f32.mxu0 %v3369
    %3989 = vmatmul.mubr.f32.gmra.mxu0 %v3368
    %v3990 = vpop.f32.mrf.mxu0
    %v3991 = vadd.f32 %v3487, %v3990
    %v3992 = vpop.f32.mrf.mxu0
    %3993 = vmatprep.mubr.f32.mxu0 %v3371
    %3994 = vmatmul.mubr.f32.gmra.mxu0 %v3370
    %v3995 = vpop.f32.mrf.mxu0
    %v3996 = vadd.f32 %v3487, %v3995
    %v3997 = vpop.f32.mrf.mxu0
    %3998 = vmatprep.mubr.f32.mxu0 %v3373
    %3999 = vmatmul.mubr.f32.gmra.mxu0 %v3372
    %v4000 = vpop.f32.mrf.mxu0
    %v4001 = vadd.f32 %v3487, %v4000
    %v4002 = vpop.f32.mrf.mxu0
    %4003 = vmatprep.mubr.f32.mxu0 %v3375
    %4004 = vmatmul.mubr.f32.gmra.mxu0 %v3374
    %v4005 = vpop.f32.mrf.mxu0
    %v4006 = vadd.f32 %v3487, %v4005
    %v4007 = vpop.f32.mrf.mxu0
    %4008 = vmatprep.mubr.f32.mxu0 %v3377
    %4009 = vmatmul.mubr.f32.gmra.mxu0 %v3376
    %v4010 = vpop.f32.mrf.mxu0
    %v4011 = vadd.f32 %v3487, %v4010
    %v4012 = vpop.f32.mrf.mxu0
    %4013 = vmatprep.mubr.f32.mxu0 %v3379
    %4014 = vmatmul.mubr.f32.gmra.mxu0 %v3378
    %v4015 = vpop.f32.mrf.mxu0
    %v4016 = vadd.f32 %v3487, %v4015
    %v4017 = vpop.f32.mrf.mxu0
    %4018 = vmatprep.mubr.f32.mxu0 %v3381
    %4019 = vmatmul.mubr.f32.gmra.mxu0 %v3380
    %v4020 = vpop.f32.mrf.mxu0
    %v4021 = vadd.f32 %v3487, %v4020
    %v4022 = vpop.f32.mrf.mxu0
    %4023 = vmatprep.mubr.f32.mxu0 %v3383
    %4024 = vmatmul.mubr.f32.gmra.mxu0 %v3382
    %v4025 = vpop.f32.mrf.mxu0
    %v4026 = vadd.f32 %v3487, %v4025
    %v4027 = vpop.f32.mrf.mxu0
    %4028 = vmatprep.mubr.f32.mxu0 %v3385
    %4029 = vmatmul.mubr.f32.gmra.mxu0 %v3384
    %v4030 = vpop.f32.mrf.mxu0
    %v4031 = vadd.f32 %v3487, %v4030
    %v4032 = vpop.f32.mrf.mxu0
    %4033 = vmatprep.mubr.f32.mxu0 %v3387
    %4034 = vmatmul.mubr.f32.gmra.mxu0 %v3386
    %v4035 = vpop.f32.mrf.mxu0
    %v4036 = vadd.f32 %v3487, %v4035
    %v4037 = vpop.f32.mrf.mxu0
    %4038 = vmatprep.mubr.f32.mxu0 %v3389
    %4039 = vmatmul.mubr.f32.gmra.mxu0 %v3388
    %v4040 = vpop.f32.mrf.mxu0
    %v4041 = vadd.f32 %v3487, %v4040
    %v4042 = vpop.f32.mrf.mxu0
    %4043 = vmatprep.mubr.f32.mxu0 %v3391
    %4044 = vmatmul.mubr.f32.gmra.mxu0 %v3390
    %v4045 = vpop.f32.mrf.mxu0
    %v4046 = vadd.f32 %v3487, %v4045
    %v4047 = vpop.f32.mrf.mxu0
    %4048 = vmatprep.mubr.f32.mxu0 %v3393
    %4049 = vmatmul.mubr.f32.gmra.mxu0 %v3392
    %v4050 = vpop.f32.mrf.mxu0
    %v4051 = vadd.f32 %v3487, %v4050
    %v4052 = vpop.f32.mrf.mxu0
    %4053 = vmatprep.mubr.f32.mxu0 %v3395
    %4054 = vmatmul.mubr.f32.gmra.mxu0 %v3394
    %v4055 = vpop.f32.mrf.mxu0
    %v4056 = vadd.f32 %v3487, %v4055
    %v4057 = vpop.f32.mrf.mxu0
    %4058 = vmatprep.mubr.f32.mxu0 %v3397
    %4059 = vmatmul.mubr.f32.gmra.mxu0 %v3396
    %v4060 = vpop.f32.mrf.mxu0
    %v4061 = vadd.f32 %v3487, %v4060
    %v4062 = vpop.f32.mrf.mxu0
    %4063 = vmatprep.mubr.f32.mxu0 %v3399
    %4064 = vmatmul.mubr.f32.gmra.mxu0 %v3398
    %v4065 = vpop.f32.mrf.mxu0
    %v4066 = vadd.f32 %v3487, %v4065
    %v4067 = vpop.f32.mrf.mxu0
    %4068 = vmatprep.mubr.f32.mxu0 %v3401
    %4069 = vmatmul.mubr.f32.gmra.mxu0 %v3400
    %v4070 = vpop.f32.mrf.mxu0
    %v4071 = vadd.f32 %v3487, %v4070
    %v4072 = vpop.f32.mrf.mxu0
    %4073 = vmatprep.mubr.f32.mxu0 %v3403
    %4074 = vmatmul.mubr.f32.gmra.mxu0 %v3402
    %v4075 = vpop.f32.mrf.mxu0
    %v4076 = vadd.f32 %v3487, %v4075
    %v4077 = vpop.f32.mrf.mxu0
    %4078 = vmatprep.mubr.f32.mxu0 %v3405
    %4079 = vmatmul.mubr.f32.gmra.mxu0 %v3404
    %v4080 = vpop.f32.mrf.mxu0
    %v4081 = vadd.f32 %v3487, %v4080
    %v4082 = vpop.f32.mrf.mxu0
    %4083 = vmatprep.mubr.f32.mxu0 %v3407
    %4084 = vmatmul.mubr.f32.gmra.mxu0 %v3406
    %v4085 = vpop.f32.mrf.mxu0
    %v4086 = vadd.f32 %v3487, %v4085
    %v4087 = vpop.f32.mrf.mxu0
    %4088 = vmatprep.mubr.f32.mxu0 %v3409
    %4089 = vmatmul.mubr.f32.gmra.mxu0 %v3408
    %v4090 = vpop.f32.mrf.mxu0
    %v4091 = vadd.f32 %v3487, %v4090
    %v4092 = vpop.f32.mrf.mxu0
    %4093 = vmatprep.mubr.f32.mxu0 %v3411
    %4094 = vmatmul.mubr.f32.gmra.mxu0 %v3410
    %v4095 = vpop.f32.mrf.mxu0
    %v4096 = vadd.f32 %v3487, %v4095
    %v4097 = vpop.f32.mrf.mxu0
    %4098 = vmatprep.mubr.f32.mxu0 %v3413
    %4099 = vmatmul.mubr.f32.gmra.mxu0 %v3412
    %v4100 = vpop.f32.mrf.mxu0
    %v4101 = vadd.f32 %v3487, %v4100
    %v4102 = vpop.f32.mrf.mxu0
    %4103 = vmatprep.mubr.f32.mxu0 %v3415
    %4104 = vmatmul.mubr.f32.gmra.mxu0 %v3414
    %v4105 = vpop.f32.mrf.mxu0
    %v4106 = vadd.f32 %v3487, %v4105
    %v4107 = vpop.f32.mrf.mxu0
    %4108 = vmatprep.mubr.f32.mxu0 %v3417
    %4109 = vmatmul.mubr.f32.gmra.mxu0 %v3416
    %v4110 = vpop.f32.mrf.mxu0
    %v4111 = vadd.f32 %v3487, %v4110
    %v4112 = vpop.f32.mrf.mxu0
    %4113 = vmatprep.mubr.f32.mxu0 %v3419
    %4114 = vmatmul.mubr.f32.gmra.mxu0 %v3418
    %v4115 = vpop.f32.mrf.mxu0
    %v4116 = vadd.f32 %v3487, %v4115
    %v4117 = vpop.f32.mrf.mxu0
    %4118 = vmatprep.mubr.f32.mxu0 %v3421
    %4119 = vmatmul.mubr.f32.gmra.mxu0 %v3420
    %v4120 = vpop.f32.mrf.mxu0
    %v4121 = vadd.f32 %v3487, %v4120
    %v4122 = vpop.f32.mrf.mxu0
    %4123 = vmatprep.mubr.f32.mxu0 %v3423
    %4124 = vmatmul.mubr.f32.gmra.mxu0 %v3422
    %v4125 = vpop.f32.mrf.mxu0
    %v4126 = vadd.f32 %v3487, %v4125
    %v4127 = vpop.f32.mrf.mxu0
    %4128 = vmatprep.mubr.f32.mxu0 %v3425
    %4129 = vmatmul.mubr.f32.gmra.mxu0 %v3424
    %v4130 = vpop.f32.mrf.mxu0
    %v4131 = vadd.f32 %v3487, %v4130
    %v4132 = vpop.f32.mrf.mxu0
    %4133 = vmatprep.mubr.f32.mxu0 %v3427
    %4134 = vmatmul.mubr.f32.gmra.mxu0 %v3426
    %v4135 = vpop.f32.mrf.mxu0
    %v4136 = vadd.f32 %v3487, %v4135
    %v4137 = vpop.f32.mrf.mxu0
    %4138 = vmatprep.mubr.f32.mxu0 %v3429
    %4139 = vmatmul.mubr.f32.gmra.mxu0 %v3428
    %v4140 = vpop.f32.mrf.mxu0
    %v4141 = vadd.f32 %v3487, %v4140
    %v4142 = vpop.f32.mrf.mxu0
    %4143 = vmatprep.mubr.f32.mxu0 %v3431
    %4144 = vmatmul.mubr.f32.gmra.mxu0 %v3430
    %v4145 = vpop.f32.mrf.mxu0
    %v4146 = vadd.f32 %v3487, %v4145
    %v4147 = vpop.f32.mrf.mxu0
    %4148 = vmatprep.mubr.f32.mxu0 %v3433
    %4149 = vmatmul.mubr.f32.gmra.mxu0 %v3432
    %v4150 = vpop.f32.mrf.mxu0
    %v4151 = vadd.f32 %v3487, %v4150
    %v4152 = vpop.f32.mrf.mxu0
    %4153 = vmatprep.mubr.f32.mxu0 %v3435
    %4154 = vmatmul.mubr.f32.gmra.mxu0 %v3434
    %v4155 = vpop.f32.mrf.mxu0
    %v4156 = vadd.f32 %v3487, %v4155
    %v4157 = vpop.f32.mrf.mxu0
    %4158 = vmatprep.mubr.f32.mxu0 %v3437
    %4159 = vmatmul.mubr.f32.gmra.mxu0 %v3436
    %v4160 = vpop.f32.mrf.mxu0
    %v4161 = vadd.f32 %v3487, %v4160
    %v4162 = vpop.f32.mrf.mxu0
    %4163 = vmatprep.mubr.f32.mxu0 %v3439
    %4164 = vmatmul.mubr.f32.gmra.mxu0 %v3438
    %v4165 = vpop.f32.mrf.mxu0
    %v4166 = vadd.f32 %v3487, %v4165
    %v4167 = vpop.f32.mrf.mxu0
    %4168 = vmatprep.mubr.f32.mxu0 %v3441
    %4169 = vmatmul.mubr.f32.gmra.mxu0 %v3440
    %v4170 = vpop.f32.mrf.mxu0
    %v4171 = vadd.f32 %v3487, %v4170
    %v4172 = vpop.f32.mrf.mxu0
    %4173 = vmatprep.mubr.f32.mxu0 %v3443
    %4174 = vmatmul.mubr.f32.gmra.mxu0 %v3442
    %v4175 = vpop.f32.mrf.mxu0
    %v4176 = vadd.f32 %v3487, %v4175
    %v4177 = vpop.f32.mrf.mxu0
    %4178 = vmatprep.mubr.f32.mxu0 %v3445
    %4179 = vmatmul.mubr.f32.gmra.mxu0 %v3444
    %v4180 = vpop.f32.mrf.mxu0
    %v4181 = vadd.f32 %v3487, %v4180
    %v4182 = vpop.f32.mrf.mxu0
    %4183 = vmatprep.mubr.f32.mxu0 %v3447
    %4184 = vmatmul.mubr.f32.gmra.mxu0 %v3446
    %v4185 = vpop.f32.mrf.mxu0
    %v4186 = vadd.f32 %v3487, %v4185
    %v4187 = vpop.f32.mrf.mxu0
    %4188 = vmatprep.mubr.f32.mxu0 %v3449
    %4189 = vmatmul.mubr.f32.gmra.mxu0 %v3448
    %v4190 = vpop.f32.mrf.mxu0
    %v4191 = vadd.f32 %v3487, %v4190
    %v4192 = vpop.f32.mrf.mxu0
    %4193 = vdwg.mxu0
    %vm4194 = vcmp.gt.f32.partialorder %v3556, 0.0
    %vm4195 = vcmp.gt.f32.partialorder %v3561, 0.0
    %vm4196 = vcmp.gt.f32.partialorder %v3566, 0.0
    %vm4197 = vcmp.gt.f32.partialorder %v3571, 0.0
    %vm4198 = vcmp.gt.f32.partialorder %v3576, 0.0
    %vm4199 = vcmp.gt.f32.partialorder %v3581, 0.0
    %vm4200 = vcmp.gt.f32.partialorder %v3586, 0.0
    %vm4201 = vcmp.gt.f32.partialorder %v3591, 0.0
    %vm4202 = vcmp.gt.f32.partialorder %v3596, 0.0
    %vm4203 = vcmp.gt.f32.partialorder %v3601, 0.0
    %vm4204 = vcmp.gt.f32.partialorder %v3606, 0.0
    %vm4205 = vcmp.gt.f32.partialorder %v3611, 0.0
    %vm4206 = vcmp.gt.f32.partialorder %v3616, 0.0
    %vm4207 = vcmp.gt.f32.partialorder %v3621, 0.0
    %vm4208 = vcmp.gt.f32.partialorder %v3626, 0.0
    %vm4209 = vcmp.gt.f32.partialorder %v3631, 0.0
    %vm4210 = vcmp.gt.f32.partialorder %v3636, 0.0
    %vm4211 = vcmp.gt.f32.partialorder %v3641, 0.0
    %vm4212 = vcmp.gt.f32.partialorder %v3646, 0.0
    %vm4213 = vcmp.gt.f32.partialorder %v3651, 0.0
    %vm4214 = vcmp.gt.f32.partialorder %v3656, 0.0
    %vm4215 = vcmp.gt.f32.partialorder %v3661, 0.0
    %vm4216 = vcmp.gt.f32.partialorder %v3666, 0.0
    %vm4217 = vcmp.gt.f32.partialorder %v3671, 0.0
    %vm4218 = vcmp.gt.f32.partialorder %v3676, 0.0
    %vm4219 = vcmp.gt.f32.partialorder %v3681, 0.0
    %vm4220 = vcmp.gt.f32.partialorder %v3686, 0.0
    %vm4221 = vcmp.gt.f32.partialorder %v3691, 0.0
    %vm4222 = vcmp.gt.f32.partialorder %v3696, 0.0
    %vm4223 = vcmp.gt.f32.partialorder %v3701, 0.0
    %vm4224 = vcmp.gt.f32.partialorder %v3706, 0.0
    %vm4225 = vcmp.gt.f32.partialorder %v3711, 0.0
    %vm4226 = vcmp.gt.f32.partialorder %v3716, 0.0
    %vm4227 = vcmp.gt.f32.partialorder %v3721, 0.0
    %vm4228 = vcmp.gt.f32.partialorder %v3726, 0.0
    %vm4229 = vcmp.gt.f32.partialorder %v3731, 0.0
    %vm4230 = vcmp.gt.f32.partialorder %v3736, 0.0
    %vm4231 = vcmp.gt.f32.partialorder %v3741, 0.0
    %vm4232 = vcmp.gt.f32.partialorder %v3746, 0.0
    %vm4233 = vcmp.gt.f32.partialorder %v3751, 0.0
    %vm4234 = vcmp.gt.f32.partialorder %v3756, 0.0
    %vm4235 = vcmp.gt.f32.partialorder %v3761, 0.0
    %vm4236 = vcmp.gt.f32.partialorder %v3766, 0.0
    %vm4237 = vcmp.gt.f32.partialorder %v3771, 0.0
    %vm4238 = vcmp.gt.f32.partialorder %v3776, 0.0
    %vm4239 = vcmp.gt.f32.partialorder %v3781, 0.0
    %vm4240 = vcmp.gt.f32.partialorder %v3786, 0.0
    %vm4241 = vcmp.gt.f32.partialorder %v3791, 0.0
    %vm4242 = vcmp.gt.f32.partialorder %v3796, 0.0
    %vm4243 = vcmp.gt.f32.partialorder %v3801, 0.0
    %vm4244 = vcmp.gt.f32.partialorder %v3806, 0.0
    %vm4245 = vcmp.gt.f32.partialorder %v3811, 0.0
    %vm4246 = vcmp.gt.f32.partialorder %v3816, 0.0
    %vm4247 = vcmp.gt.f32.partialorder %v3821, 0.0
    %vm4248 = vcmp.gt.f32.partialorder %v3826, 0.0
    %vm4249 = vcmp.gt.f32.partialorder %v3831, 0.0
    %vm4250 = vcmp.gt.f32.partialorder %v3836, 0.0
    %vm4251 = vcmp.gt.f32.partialorder %v3841, 0.0
    %vm4252 = vcmp.gt.f32.partialorder %v3846, 0.0
    %vm4253 = vcmp.gt.f32.partialorder %v3851, 0.0
    %vm4254 = vcmp.gt.f32.partialorder %v3856, 0.0
    %vm4255 = vcmp.gt.f32.partialorder %v3861, 0.0
    %vm4256 = vcmp.gt.f32.partialorder %v3866, 0.0
    %vm4257 = vcmp.gt.f32.partialorder %v3871, 0.0
    %vm4258 = vcmp.gt.f32.partialorder %v3876, 0.0
    %vm4259 = vcmp.gt.f32.partialorder %v3881, 0.0
    %vm4260 = vcmp.gt.f32.partialorder %v3886, 0.0
    %vm4261 = vcmp.gt.f32.partialorder %v3891, 0.0
    %vm4262 = vcmp.gt.f32.partialorder %v3896, 0.0
    %vm4263 = vcmp.gt.f32.partialorder %v3901, 0.0
    %vm4264 = vcmp.gt.f32.partialorder %v3906, 0.0
    %vm4265 = vcmp.gt.f32.partialorder %v3911, 0.0
    %vm4266 = vcmp.gt.f32.partialorder %v3916, 0.0
    %vm4267 = vcmp.gt.f32.partialorder %v3921, 0.0
    %vm4268 = vcmp.gt.f32.partialorder %v3926, 0.0
    %vm4269 = vcmp.gt.f32.partialorder %v3931, 0.0
    %vm4270 = vcmp.gt.f32.partialorder %v3936, 0.0
    %vm4271 = vcmp.gt.f32.partialorder %v3941, 0.0
    %vm4272 = vcmp.gt.f32.partialorder %v3946, 0.0
    %vm4273 = vcmp.gt.f32.partialorder %v3951, 0.0
    %vm4274 = vcmp.gt.f32.partialorder %v3956, 0.0
    %vm4275 = vcmp.gt.f32.partialorder %v3961, 0.0
    %vm4276 = vcmp.gt.f32.partialorder %v3966, 0.0
    %vm4277 = vcmp.gt.f32.partialorder %v3971, 0.0
    %vm4278 = vcmp.gt.f32.partialorder %v3976, 0.0
    %vm4279 = vcmp.gt.f32.partialorder %v3981, 0.0
    %vm4280 = vcmp.gt.f32.partialorder %v3986, 0.0
    %vm4281 = vcmp.gt.f32.partialorder %v3991, 0.0
    %vm4282 = vcmp.gt.f32.partialorder %v3996, 0.0
    %vm4283 = vcmp.gt.f32.partialorder %v4001, 0.0
    %vm4284 = vcmp.gt.f32.partialorder %v4006, 0.0
    %vm4285 = vcmp.gt.f32.partialorder %v4011, 0.0
    %vm4286 = vcmp.gt.f32.partialorder %v4016, 0.0
    %vm4287 = vcmp.gt.f32.partialorder %v4021, 0.0
    %vm4288 = vcmp.gt.f32.partialorder %v4026, 0.0
    %vm4289 = vcmp.gt.f32.partialorder %v4031, 0.0
    %vm4290 = vcmp.gt.f32.partialorder %v4036, 0.0
    %vm4291 = vcmp.gt.f32.partialorder %v4041, 0.0
    %vm4292 = vcmp.gt.f32.partialorder %v4046, 0.0
    %vm4293 = vcmp.gt.f32.partialorder %v4051, 0.0
    %vm4294 = vcmp.gt.f32.partialorder %v4056, 0.0
    %vm4295 = vcmp.gt.f32.partialorder %v4061, 0.0
    %vm4296 = vcmp.gt.f32.partialorder %v4066, 0.0
    %vm4297 = vcmp.gt.f32.partialorder %v4071, 0.0
    %vm4298 = vcmp.gt.f32.partialorder %v4076, 0.0
    %vm4299 = vcmp.gt.f32.partialorder %v4081, 0.0
    %vm4300 = vcmp.gt.f32.partialorder %v4086, 0.0
    %vm4301 = vcmp.gt.f32.partialorder %v4091, 0.0
    %vm4302 = vcmp.gt.f32.partialorder %v4096, 0.0
    %vm4303 = vcmp.gt.f32.partialorder %v4101, 0.0
    %vm4304 = vcmp.gt.f32.partialorder %v4106, 0.0
    %vm4305 = vcmp.gt.f32.partialorder %v4111, 0.0
    %vm4306 = vcmp.gt.f32.partialorder %v4116, 0.0
    %vm4307 = vcmp.gt.f32.partialorder %v4121, 0.0
    %vm4308 = vcmp.gt.f32.partialorder %v4126, 0.0
    %vm4309 = vcmp.gt.f32.partialorder %v4131, 0.0
    %vm4310 = vcmp.gt.f32.partialorder %v4136, 0.0
    %vm4311 = vcmp.gt.f32.partialorder %v4141, 0.0
    %vm4312 = vcmp.gt.f32.partialorder %v4146, 0.0
    %vm4313 = vcmp.gt.f32.partialorder %v4151, 0.0
    %vm4314 = vcmp.gt.f32.partialorder %v4156, 0.0
    %vm4315 = vcmp.gt.f32.partialorder %v4161, 0.0
    %vm4316 = vcmp.gt.f32.partialorder %v4166, 0.0
    %vm4317 = vcmp.gt.f32.partialorder %v4171, 0.0
    %vm4318 = vcmp.gt.f32.partialorder %v4176, 0.0
    %vm4319 = vcmp.gt.f32.partialorder %v4181, 0.0
    %vm4320 = vcmp.gt.f32.partialorder %v4186, 0.0
    %vm4321 = vcmp.gt.f32.partialorder %v4191, 0.0
    %v4322 = vmul.f32 %v3556, 0.01
    %v4323 = vmul.f32 %v3561, 0.01
    %v4324 = vmul.f32 %v3566, 0.01
    %v4325 = vmul.f32 %v3571, 0.01
    %v4326 = vmul.f32 %v3576, 0.01
    %v4327 = vmul.f32 %v3581, 0.01
    %v4328 = vmul.f32 %v3586, 0.01
    %v4329 = vmul.f32 %v3591, 0.01
    %v4330 = vmul.f32 %v3596, 0.01
    %v4331 = vmul.f32 %v3601, 0.01
    %v4332 = vmul.f32 %v3606, 0.01
    %v4333 = vmul.f32 %v3611, 0.01
    %v4334 = vmul.f32 %v3616, 0.01
    %v4335 = vmul.f32 %v3621, 0.01
    %v4336 = vmul.f32 %v3626, 0.01
    %v4337 = vmul.f32 %v3631, 0.01
    %v4338 = vmul.f32 %v3636, 0.01
    %v4339 = vmul.f32 %v3641, 0.01
    %v4340 = vmul.f32 %v3646, 0.01
    %v4341 = vmul.f32 %v3651, 0.01
    %v4342 = vmul.f32 %v3656, 0.01
    %v4343 = vmul.f32 %v3661, 0.01
    %v4344 = vmul.f32 %v3666, 0.01
    %v4345 = vmul.f32 %v3671, 0.01
    %v4346 = vmul.f32 %v3676, 0.01
    %v4347 = vmul.f32 %v3681, 0.01
    %v4348 = vmul.f32 %v3686, 0.01
    %v4349 = vmul.f32 %v3691, 0.01
    %v4350 = vmul.f32 %v3696, 0.01
    %v4351 = vmul.f32 %v3701, 0.01
    %v4352 = vmul.f32 %v3706, 0.01
    %v4353 = vmul.f32 %v3711, 0.01
    %v4354 = vmul.f32 %v3716, 0.01
    %v4355 = vmul.f32 %v3721, 0.01
    %v4356 = vmul.f32 %v3726, 0.01
    %v4357 = vmul.f32 %v3731, 0.01
    %v4358 = vmul.f32 %v3736, 0.01
    %v4359 = vmul.f32 %v3741, 0.01
    %v4360 = vmul.f32 %v3746, 0.01
    %v4361 = vmul.f32 %v3751, 0.01
    %v4362 = vmul.f32 %v3756, 0.01
    %v4363 = vmul.f32 %v3761, 0.01
    %v4364 = vmul.f32 %v3766, 0.01
    %v4365 = vmul.f32 %v3771, 0.01
    %v4366 = vmul.f32 %v3776, 0.01
    %v4367 = vmul.f32 %v3781, 0.01
    %v4368 = vmul.f32 %v3786, 0.01
    %v4369 = vmul.f32 %v3791, 0.01
    %v4370 = vmul.f32 %v3796, 0.01
    %v4371 = vmul.f32 %v3801, 0.01
    %v4372 = vmul.f32 %v3806, 0.01
    %v4373 = vmul.f32 %v3811, 0.01
    %v4374 = vmul.f32 %v3816, 0.01
    %v4375 = vmul.f32 %v3821, 0.01
    %v4376 = vmul.f32 %v3826, 0.01
    %v4377 = vmul.f32 %v3831, 0.01
    %v4378 = vmul.f32 %v3836, 0.01
    %v4379 = vmul.f32 %v3841, 0.01
    %v4380 = vmul.f32 %v3846, 0.01
    %v4381 = vmul.f32 %v3851, 0.01
    %v4382 = vmul.f32 %v3856, 0.01
    %v4383 = vmul.f32 %v3861, 0.01
    %v4384 = vmul.f32 %v3866, 0.01
    %v4385 = vmul.f32 %v3871, 0.01
    %v4386 = vmul.f32 %v3876, 0.01
    %v4387 = vmul.f32 %v3881, 0.01
    %v4388 = vmul.f32 %v3886, 0.01
    %v4389 = vmul.f32 %v3891, 0.01
    %v4390 = vmul.f32 %v3896, 0.01
    %v4391 = vmul.f32 %v3901, 0.01
    %v4392 = vmul.f32 %v3906, 0.01
    %v4393 = vmul.f32 %v3911, 0.01
    %v4394 = vmul.f32 %v3916, 0.01
    %v4395 = vmul.f32 %v3921, 0.01
    %v4396 = vmul.f32 %v3926, 0.01
    %v4397 = vmul.f32 %v3931, 0.01
    %v4398 = vmul.f32 %v3936, 0.01
    %v4399 = vmul.f32 %v3941, 0.01
    %v4400 = vmul.f32 %v3946, 0.01
    %v4401 = vmul.f32 %v3951, 0.01
    %v4402 = vmul.f32 %v3956, 0.01
    %v4403 = vmul.f32 %v3961, 0.01
    %v4404 = vmul.f32 %v3966, 0.01
    %v4405 = vmul.f32 %v3971, 0.01
    %v4406 = vmul.f32 %v3976, 0.01
    %v4407 = vmul.f32 %v3981, 0.01
    %v4408 = vmul.f32 %v3986, 0.01
    %v4409 = vmul.f32 %v3991, 0.01
    %v4410 = vmul.f32 %v3996, 0.01
    %v4411 = vmul.f32 %v4001, 0.01
    %v4412 = vmul.f32 %v4006, 0.01
    %v4413 = vmul.f32 %v4011, 0.01
    %v4414 = vmul.f32 %v4016, 0.01
    %v4415 = vmul.f32 %v4021, 0.01
    %v4416 = vmul.f32 %v4026, 0.01
    %v4417 = vmul.f32 %v4031, 0.01
    %v4418 = vmul.f32 %v4036, 0.01
    %v4419 = vmul.f32 %v4041, 0.01
    %v4420 = vmul.f32 %v4046, 0.01
    %v4421 = vmul.f32 %v4051, 0.01
    %v4422 = vmul.f32 %v4056, 0.01
    %v4423 = vmul.f32 %v4061, 0.01
    %v4424 = vmul.f32 %v4066, 0.01
    %v4425 = vmul.f32 %v4071, 0.01
    %v4426 = vmul.f32 %v4076, 0.01
    %v4427 = vmul.f32 %v4081, 0.01
    %v4428 = vmul.f32 %v4086, 0.01
    %v4429 = vmul.f32 %v4091, 0.01
    %v4430 = vmul.f32 %v4096, 0.01
    %v4431 = vmul.f32 %v4101, 0.01
    %v4432 = vmul.f32 %v4106, 0.01
    %v4433 = vmul.f32 %v4111, 0.01
    %v4434 = vmul.f32 %v4116, 0.01
    %v4435 = vmul.f32 %v4121, 0.01
    %v4436 = vmul.f32 %v4126, 0.01
    %v4437 = vmul.f32 %v4131, 0.01
    %v4438 = vmul.f32 %v4136, 0.01
    %v4439 = vmul.f32 %v4141, 0.01
    %v4440 = vmul.f32 %v4146, 0.01
    %v4441 = vmul.f32 %v4151, 0.01
    %v4442 = vmul.f32 %v4156, 0.01
    %v4443 = vmul.f32 %v4161, 0.01
    %v4444 = vmul.f32 %v4166, 0.01
    %v4445 = vmul.f32 %v4171, 0.01
    %v4446 = vmul.f32 %v4176, 0.01
    %v4447 = vmul.f32 %v4181, 0.01
    %v4448 = vmul.f32 %v4186, 0.01
    %v4449 = vmul.f32 %v4191, 0.01
    %v4450 = vsel %vm4194, %v3556, %v4322
    %v4451 = vsel %vm4195, %v3561, %v4323
    %v4452 = vsel %vm4196, %v3566, %v4324
    %v4453 = vsel %vm4197, %v3571, %v4325
    %v4454 = vsel %vm4198, %v3576, %v4326
    %v4455 = vsel %vm4199, %v3581, %v4327
    %v4456 = vsel %vm4200, %v3586, %v4328
    %v4457 = vsel %vm4201, %v3591, %v4329
    %v4458 = vsel %vm4202, %v3596, %v4330
    %v4459 = vsel %vm4203, %v3601, %v4331
    %v4460 = vsel %vm4204, %v3606, %v4332
    %v4461 = vsel %vm4205, %v3611, %v4333
    %v4462 = vsel %vm4206, %v3616, %v4334
    %v4463 = vsel %vm4207, %v3621, %v4335
    %v4464 = vsel %vm4208, %v3626, %v4336
    %v4465 = vsel %vm4209, %v3631, %v4337
    %v4466 = vsel %vm4210, %v3636, %v4338
    %v4467 = vsel %vm4211, %v3641, %v4339
    %v4468 = vsel %vm4212, %v3646, %v4340
    %v4469 = vsel %vm4213, %v3651, %v4341
    %v4470 = vsel %vm4214, %v3656, %v4342
    %v4471 = vsel %vm4215, %v3661, %v4343
    %v4472 = vsel %vm4216, %v3666, %v4344
    %v4473 = vsel %vm4217, %v3671, %v4345
    %v4474 = vsel %vm4218, %v3676, %v4346
    %v4475 = vsel %vm4219, %v3681, %v4347
    %v4476 = vsel %vm4220, %v3686, %v4348
    %v4477 = vsel %vm4221, %v3691, %v4349
    %v4478 = vsel %vm4222, %v3696, %v4350
    %v4479 = vsel %vm4223, %v3701, %v4351
    %v4480 = vsel %vm4224, %v3706, %v4352
    %v4481 = vsel %vm4225, %v3711, %v4353
    %v4482 = vsel %vm4226, %v3716, %v4354
    %v4483 = vsel %vm4227, %v3721, %v4355
    %v4484 = vsel %vm4228, %v3726, %v4356
    %v4485 = vsel %vm4229, %v3731, %v4357
    %v4486 = vsel %vm4230, %v3736, %v4358
    %v4487 = vsel %vm4231, %v3741, %v4359
    %v4488 = vsel %vm4232, %v3746, %v4360
    %v4489 = vsel %vm4233, %v3751, %v4361
    %v4490 = vsel %vm4234, %v3756, %v4362
    %v4491 = vsel %vm4235, %v3761, %v4363
    %v4492 = vsel %vm4236, %v3766, %v4364
    %v4493 = vsel %vm4237, %v3771, %v4365
    %v4494 = vsel %vm4238, %v3776, %v4366
    %v4495 = vsel %vm4239, %v3781, %v4367
    %v4496 = vsel %vm4240, %v3786, %v4368
    %v4497 = vsel %vm4241, %v3791, %v4369
    %v4498 = vsel %vm4242, %v3796, %v4370
    %v4499 = vsel %vm4243, %v3801, %v4371
    %v4500 = vsel %vm4244, %v3806, %v4372
    %v4501 = vsel %vm4245, %v3811, %v4373
    %v4502 = vsel %vm4246, %v3816, %v4374
    %v4503 = vsel %vm4247, %v3821, %v4375
    %v4504 = vsel %vm4248, %v3826, %v4376
    %v4505 = vsel %vm4249, %v3831, %v4377
    %v4506 = vsel %vm4250, %v3836, %v4378
    %v4507 = vsel %vm4251, %v3841, %v4379
    %v4508 = vsel %vm4252, %v3846, %v4380
    %v4509 = vsel %vm4253, %v3851, %v4381
    %v4510 = vsel %vm4254, %v3856, %v4382
    %v4511 = vsel %vm4255, %v3861, %v4383
    %v4512 = vsel %vm4256, %v3866, %v4384
    %v4513 = vsel %vm4257, %v3871, %v4385
    %v4514 = vsel %vm4258, %v3876, %v4386
    %v4515 = vsel %vm4259, %v3881, %v4387
    %v4516 = vsel %vm4260, %v3886, %v4388
    %v4517 = vsel %vm4261, %v3891, %v4389
    %v4518 = vsel %vm4262, %v3896, %v4390
    %v4519 = vsel %vm4263, %v3901, %v4391
    %v4520 = vsel %vm4264, %v3906, %v4392
    %v4521 = vsel %vm4265, %v3911, %v4393
    %v4522 = vsel %vm4266, %v3916, %v4394
    %v4523 = vsel %vm4267, %v3921, %v4395
    %v4524 = vsel %vm4268, %v3926, %v4396
    %v4525 = vsel %vm4269, %v3931, %v4397
    %v4526 = vsel %vm4270, %v3936, %v4398
    %v4527 = vsel %vm4271, %v3941, %v4399
    %v4528 = vsel %vm4272, %v3946, %v4400
    %v4529 = vsel %vm4273, %v3951, %v4401
    %v4530 = vsel %vm4274, %v3956, %v4402
    %v4531 = vsel %vm4275, %v3961, %v4403
    %v4532 = vsel %vm4276, %v3966, %v4404
    %v4533 = vsel %vm4277, %v3971, %v4405
    %v4534 = vsel %vm4278, %v3976, %v4406
    %v4535 = vsel %vm4279, %v3981, %v4407
    %v4536 = vsel %vm4280, %v3986, %v4408
    %v4537 = vsel %vm4281, %v3991, %v4409
    %v4538 = vsel %vm4282, %v3996, %v4410
    %v4539 = vsel %vm4283, %v4001, %v4411
    %v4540 = vsel %vm4284, %v4006, %v4412
    %v4541 = vsel %vm4285, %v4011, %v4413
    %v4542 = vsel %vm4286, %v4016, %v4414
    %v4543 = vsel %vm4287, %v4021, %v4415
    %v4544 = vsel %vm4288, %v4026, %v4416
    %v4545 = vsel %vm4289, %v4031, %v4417
    %v4546 = vsel %vm4290, %v4036, %v4418
    %v4547 = vsel %vm4291, %v4041, %v4419
    %v4548 = vsel %vm4292, %v4046, %v4420
    %v4549 = vsel %vm4293, %v4051, %v4421
    %v4550 = vsel %vm4294, %v4056, %v4422
    %v4551 = vsel %vm4295, %v4061, %v4423
    %v4552 = vsel %vm4296, %v4066, %v4424
    %v4553 = vsel %vm4297, %v4071, %v4425
    %v4554 = vsel %vm4298, %v4076, %v4426
    %v4555 = vsel %vm4299, %v4081, %v4427
    %v4556 = vsel %vm4300, %v4086, %v4428
    %v4557 = vsel %vm4301, %v4091, %v4429
    %v4558 = vsel %vm4302, %v4096, %v4430
    %v4559 = vsel %vm4303, %v4101, %v4431
    %v4560 = vsel %vm4304, %v4106, %v4432
    %v4561 = vsel %vm4305, %v4111, %v4433
    %v4562 = vsel %vm4306, %v4116, %v4434
    %v4563 = vsel %vm4307, %v4121, %v4435
    %v4564 = vsel %vm4308, %v4126, %v4436
    %v4565 = vsel %vm4309, %v4131, %v4437
    %v4566 = vsel %vm4310, %v4136, %v4438
    %v4567 = vsel %vm4311, %v4141, %v4439
    %v4568 = vsel %vm4312, %v4146, %v4440
    %v4569 = vsel %vm4313, %v4151, %v4441
    %v4570 = vsel %vm4314, %v4156, %v4442
    %v4571 = vsel %vm4315, %v4161, %v4443
    %v4572 = vsel %vm4316, %v4166, %v4444
    %v4573 = vsel %vm4317, %v4171, %v4445
    %v4574 = vsel %vm4318, %v4176, %v4446
    %v4575 = vsel %vm4319, %v4181, %v4447
    %v4576 = vsel %vm4320, %v4186, %v4448
    %v4577 = vsel %vm4321, %v4191, %v4449
    %v4578 = vld [vmem:[%s7] sm:$0xff]
    %v4579 = vld [vmem:[%s7 + $0x8] sm:$0xff]
    %v4580 = vld [vmem:[%s7 + $0x10] sm:$0xff]
    %v4581 = vld [vmem:[%s7 + $0x18] sm:$0xff]
    %v4582 = vld [vmem:[%s7 + $0x20] sm:$0xff]
    %v4583 = vld [vmem:[%s7 + $0x28] sm:$0xff]
    %v4584 = vld [vmem:[%s7 + $0x30] sm:$0xff]
    %v4585 = vld [vmem:[%s7 + $0x38] sm:$0xff]
    %v4586 = vld [vmem:[%s7 + $0x40] sm:$0xff]
    %v4587 = vld [vmem:[%s7 + $0x48] sm:$0xff]
    %v4588 = vld [vmem:[%s7 + $0x50] sm:$0xff]
    %v4589 = vld [vmem:[%s7 + $0x58] sm:$0xff]
    %v4590 = vld [vmem:[%s7 + $0x60] sm:$0xff]
    %v4591 = vld [vmem:[%s7 + $0x68] sm:$0xff]
    %v4592 = vld [vmem:[%s7 + $0x70] sm:$0xff]
    %v4593 = vld [vmem:[%s7 + $0x78] sm:$0xff]
    %v4594 = vld [vmem:[%s8] sm:$0x1]
    %v4596 = vlaneseq
    %v4597 = vshrl.u32 %v4596, 7
    %v4598 = vsub.s32 0, %v4597
    %v4599 = vrot.slane %v4594, %v4598
    %4601 = vmatprep.subr.mxu0 0.0
    %4602 = vmatpush1.msra.mxu0 %v4593
    %4603 = vmatprep.subr.mxu0 0.0
    %4604 = vmatpush1.msra.mxu0 %v4592
    %4605 = vmatprep.subr.mxu0 0.0
    %4606 = vmatpush1.msra.mxu0 %v4591
    %4607 = vmatprep.subr.mxu0 0.0
    %4608 = vmatpush1.msra.mxu0 %v4590
    %4609 = vmatprep.subr.mxu0 0.0
    %4610 = vmatpush1.msra.mxu0 %v4589
    %4611 = vmatprep.subr.mxu0 0.0
    %4612 = vmatpush1.msra.mxu0 %v4588
    %4613 = vmatprep.subr.mxu0 0.0
    %4614 = vmatpush1.msra.mxu0 %v4587
    %4615 = vmatprep.subr.mxu0 0.0
    %4616 = vmatpush1.msra.mxu0 %v4586
    %4617 = vmatprep.subr.mxu0 0.0
    %4618 = vmatpush1.msra.mxu0 %v4585
    %4619 = vmatprep.subr.mxu0 0.0
    %4620 = vmatpush1.msra.mxu0 %v4584
    %4621 = vmatprep.subr.mxu0 0.0
    %4622 = vmatpush1.msra.mxu0 %v4583
    %4623 = vmatprep.subr.mxu0 0.0
    %4624 = vmatpush1.msra.mxu0 %v4582
    %4625 = vmatprep.subr.mxu0 0.0
    %4626 = vmatpush1.msra.mxu0 %v4581
    %4627 = vmatprep.subr.mxu0 0.0
    %4628 = vmatpush1.msra.mxu0 %v4580
    %4629 = vmatprep.subr.mxu0 0.0
    %4630 = vmatpush1.msra.mxu0 %v4579
    %4631 = vmatprep.subr.mxu0 0.0
    %4632 = vmatpush1.msra.mxu0 %v4578
    %4633 = vmatprep.subr.mxu0 0.0
    %4634 = vmatpush2.msra.mxu0 0.0
    %4635 = vmatprep.subr.mxu0 0.0
    %4636 = vmatpush2.msra.mxu0 0.0
    %4637 = vmatprep.subr.mxu0 0.0
    %4638 = vmatpush2.msra.mxu0 0.0
    %4639 = vmatprep.subr.mxu0 0.0
    %4640 = vmatpush2.msra.mxu0 0.0
    %4641 = vmatprep.subr.mxu0 0.0
    %4642 = vmatpush2.msra.mxu0 0.0
    %4643 = vmatprep.subr.mxu0 0.0
    %4644 = vmatpush2.msra.mxu0 0.0
    %4645 = vmatprep.subr.mxu0 0.0
    %4646 = vmatpush2.msra.mxu0 0.0
    %4647 = vmatprep.subr.mxu0 0.0
    %4648 = vmatpush2.msra.mxu0 0.0
    %4649 = vmatprep.subr.mxu0 0.0
    %4650 = vmatpush2.msra.mxu0 0.0
    %4651 = vmatprep.subr.mxu0 0.0
    %4652 = vmatpush2.msra.mxu0 0.0
    %4653 = vmatprep.subr.mxu0 0.0
    %4654 = vmatpush2.msra.mxu0 0.0
    %4655 = vmatprep.subr.mxu0 0.0
    %4656 = vmatpush2.msra.mxu0 0.0
    %4657 = vmatprep.subr.mxu0 0.0
    %4658 = vmatpush2.msra.mxu0 0.0
    %4659 = vmatprep.subr.mxu0 0.0
    %4660 = vmatpush2.msra.mxu0 0.0
    %4661 = vmatprep.subr.mxu0 0.0
    %4662 = vmatpush2.msra.mxu0 0.0
    %4663 = vmatprep.subr.mxu0 0.0
    %4664 = vmatpush2.msra.mxu0 0.0
    %4665 = vmatprep.mubr.f32.mxu0 0.0
    %4666 = vmatmul.mubr.f32.gmra.mxu0 %v4450
    %v4667 = vpop.f32.mrf.mxu0
    %v4668 = vadd.f32 %v4599, %v4667
    %v4669 = vpop.f32.mrf.mxu0
    %4670 = vmatprep.mubr.f32.mxu0 0.0
    %4671 = vmatmul.mubr.f32.gmra.mxu0 %v4451
    %v4672 = vpop.f32.mrf.mxu0
    %v4673 = vadd.f32 %v4599, %v4672
    %v4674 = vpop.f32.mrf.mxu0
    %4675 = vmatprep.mubr.f32.mxu0 0.0
    %4676 = vmatmul.mubr.f32.gmra.mxu0 %v4452
    %v4677 = vpop.f32.mrf.mxu0
    %v4678 = vadd.f32 %v4599, %v4677
    %v4679 = vpop.f32.mrf.mxu0
    %4680 = vmatprep.mubr.f32.mxu0 0.0
    %4681 = vmatmul.mubr.f32.gmra.mxu0 %v4453
    %v4682 = vpop.f32.mrf.mxu0
    %v4683 = vadd.f32 %v4599, %v4682
    %v4684 = vpop.f32.mrf.mxu0
    %4685 = vmatprep.mubr.f32.mxu0 0.0
    %4686 = vmatmul.mubr.f32.gmra.mxu0 %v4454
    %v4687 = vpop.f32.mrf.mxu0
    %v4688 = vadd.f32 %v4599, %v4687
    %v4689 = vpop.f32.mrf.mxu0
    %4690 = vmatprep.mubr.f32.mxu0 0.0
    %4691 = vmatmul.mubr.f32.gmra.mxu0 %v4455
    %v4692 = vpop.f32.mrf.mxu0
    %v4693 = vadd.f32 %v4599, %v4692
    %v4694 = vpop.f32.mrf.mxu0
    %4695 = vmatprep.mubr.f32.mxu0 0.0
    %4696 = vmatmul.mubr.f32.gmra.mxu0 %v4456
    %v4697 = vpop.f32.mrf.mxu0
    %v4698 = vadd.f32 %v4599, %v4697
    %v4699 = vpop.f32.mrf.mxu0
    %4700 = vmatprep.mubr.f32.mxu0 0.0
    %4701 = vmatmul.mubr.f32.gmra.mxu0 %v4457
    %v4702 = vpop.f32.mrf.mxu0
    %v4703 = vadd.f32 %v4599, %v4702
    %v4704 = vpop.f32.mrf.mxu0
    %4705 = vmatprep.mubr.f32.mxu0 0.0
    %4706 = vmatmul.mubr.f32.gmra.mxu0 %v4458
    %v4707 = vpop.f32.mrf.mxu0
    %v4708 = vadd.f32 %v4599, %v4707
    %v4709 = vpop.f32.mrf.mxu0
    %4710 = vmatprep.mubr.f32.mxu0 0.0
    %4711 = vmatmul.mubr.f32.gmra.mxu0 %v4459
    %v4712 = vpop.f32.mrf.mxu0
    %v4713 = vadd.f32 %v4599, %v4712
    %v4714 = vpop.f32.mrf.mxu0
    %4715 = vmatprep.mubr.f32.mxu0 0.0
    %4716 = vmatmul.mubr.f32.gmra.mxu0 %v4460
    %v4717 = vpop.f32.mrf.mxu0
    %v4718 = vadd.f32 %v4599, %v4717
    %v4719 = vpop.f32.mrf.mxu0
    %4720 = vmatprep.mubr.f32.mxu0 0.0
    %4721 = vmatmul.mubr.f32.gmra.mxu0 %v4461
    %v4722 = vpop.f32.mrf.mxu0
    %v4723 = vadd.f32 %v4599, %v4722
    %v4724 = vpop.f32.mrf.mxu0
    %4725 = vmatprep.mubr.f32.mxu0 0.0
    %4726 = vmatmul.mubr.f32.gmra.mxu0 %v4462
    %v4727 = vpop.f32.mrf.mxu0
    %v4728 = vadd.f32 %v4599, %v4727
    %v4729 = vpop.f32.mrf.mxu0
    %4730 = vmatprep.mubr.f32.mxu0 0.0
    %4731 = vmatmul.mubr.f32.gmra.mxu0 %v4463
    %v4732 = vpop.f32.mrf.mxu0
    %v4733 = vadd.f32 %v4599, %v4732
    %v4734 = vpop.f32.mrf.mxu0
    %4735 = vmatprep.mubr.f32.mxu0 0.0
    %4736 = vmatmul.mubr.f32.gmra.mxu0 %v4464
    %v4737 = vpop.f32.mrf.mxu0
    %v4738 = vadd.f32 %v4599, %v4737
    %v4739 = vpop.f32.mrf.mxu0
    %4740 = vmatprep.mubr.f32.mxu0 0.0
    %4741 = vmatmul.mubr.f32.gmra.mxu0 %v4465
    %v4742 = vpop.f32.mrf.mxu0
    %v4743 = vadd.f32 %v4599, %v4742
    %v4744 = vpop.f32.mrf.mxu0
    %4745 = vmatprep.mubr.f32.mxu0 0.0
    %4746 = vmatmul.mubr.f32.gmra.mxu0 %v4466
    %v4747 = vpop.f32.mrf.mxu0
    %v4748 = vadd.f32 %v4599, %v4747
    %v4749 = vpop.f32.mrf.mxu0
    %4750 = vmatprep.mubr.f32.mxu0 0.0
    %4751 = vmatmul.mubr.f32.gmra.mxu0 %v4467
    %v4752 = vpop.f32.mrf.mxu0
    %v4753 = vadd.f32 %v4599, %v4752
    %v4754 = vpop.f32.mrf.mxu0
    %4755 = vmatprep.mubr.f32.mxu0 0.0
    %4756 = vmatmul.mubr.f32.gmra.mxu0 %v4468
    %v4757 = vpop.f32.mrf.mxu0
    %v4758 = vadd.f32 %v4599, %v4757
    %v4759 = vpop.f32.mrf.mxu0
    %4760 = vmatprep.mubr.f32.mxu0 0.0
    %4761 = vmatmul.mubr.f32.gmra.mxu0 %v4469
    %v4762 = vpop.f32.mrf.mxu0
    %v4763 = vadd.f32 %v4599, %v4762
    %v4764 = vpop.f32.mrf.mxu0
    %4765 = vmatprep.mubr.f32.mxu0 0.0
    %4766 = vmatmul.mubr.f32.gmra.mxu0 %v4470
    %v4767 = vpop.f32.mrf.mxu0
    %v4768 = vadd.f32 %v4599, %v4767
    %v4769 = vpop.f32.mrf.mxu0
    %4770 = vmatprep.mubr.f32.mxu0 0.0
    %4771 = vmatmul.mubr.f32.gmra.mxu0 %v4471
    %v4772 = vpop.f32.mrf.mxu0
    %v4773 = vadd.f32 %v4599, %v4772
    %v4774 = vpop.f32.mrf.mxu0
    %4775 = vmatprep.mubr.f32.mxu0 0.0
    %4776 = vmatmul.mubr.f32.gmra.mxu0 %v4472
    %v4777 = vpop.f32.mrf.mxu0
    %v4778 = vadd.f32 %v4599, %v4777
    %v4779 = vpop.f32.mrf.mxu0
    %4780 = vmatprep.mubr.f32.mxu0 0.0
    %4781 = vmatmul.mubr.f32.gmra.mxu0 %v4473
    %v4782 = vpop.f32.mrf.mxu0
    %v4783 = vadd.f32 %v4599, %v4782
    %v4784 = vpop.f32.mrf.mxu0
    %4785 = vmatprep.mubr.f32.mxu0 0.0
    %4786 = vmatmul.mubr.f32.gmra.mxu0 %v4474
    %v4787 = vpop.f32.mrf.mxu0
    %v4788 = vadd.f32 %v4599, %v4787
    %v4789 = vpop.f32.mrf.mxu0
    %4790 = vmatprep.mubr.f32.mxu0 0.0
    %4791 = vmatmul.mubr.f32.gmra.mxu0 %v4475
    %v4792 = vpop.f32.mrf.mxu0
    %v4793 = vadd.f32 %v4599, %v4792
    %v4794 = vpop.f32.mrf.mxu0
    %4795 = vmatprep.mubr.f32.mxu0 0.0
    %4796 = vmatmul.mubr.f32.gmra.mxu0 %v4476
    %v4797 = vpop.f32.mrf.mxu0
    %v4798 = vadd.f32 %v4599, %v4797
    %v4799 = vpop.f32.mrf.mxu0
    %4800 = vmatprep.mubr.f32.mxu0 0.0
    %4801 = vmatmul.mubr.f32.gmra.mxu0 %v4477
    %v4802 = vpop.f32.mrf.mxu0
    %v4803 = vadd.f32 %v4599, %v4802
    %v4804 = vpop.f32.mrf.mxu0
    %4805 = vmatprep.mubr.f32.mxu0 0.0
    %4806 = vmatmul.mubr.f32.gmra.mxu0 %v4478
    %v4807 = vpop.f32.mrf.mxu0
    %v4808 = vadd.f32 %v4599, %v4807
    %v4809 = vpop.f32.mrf.mxu0
    %4810 = vmatprep.mubr.f32.mxu0 0.0
    %4811 = vmatmul.mubr.f32.gmra.mxu0 %v4479
    %v4812 = vpop.f32.mrf.mxu0
    %v4813 = vadd.f32 %v4599, %v4812
    %v4814 = vpop.f32.mrf.mxu0
    %4815 = vmatprep.mubr.f32.mxu0 0.0
    %4816 = vmatmul.mubr.f32.gmra.mxu0 %v4480
    %v4817 = vpop.f32.mrf.mxu0
    %v4818 = vadd.f32 %v4599, %v4817
    %v4819 = vpop.f32.mrf.mxu0
    %4820 = vmatprep.mubr.f32.mxu0 0.0
    %4821 = vmatmul.mubr.f32.gmra.mxu0 %v4481
    %v4822 = vpop.f32.mrf.mxu0
    %v4823 = vadd.f32 %v4599, %v4822
    %v4824 = vpop.f32.mrf.mxu0
    %4825 = vmatprep.mubr.f32.mxu0 0.0
    %4826 = vmatmul.mubr.f32.gmra.mxu0 %v4482
    %v4827 = vpop.f32.mrf.mxu0
    %v4828 = vadd.f32 %v4599, %v4827
    %v4829 = vpop.f32.mrf.mxu0
    %4830 = vmatprep.mubr.f32.mxu0 0.0
    %4831 = vmatmul.mubr.f32.gmra.mxu0 %v4483
    %v4832 = vpop.f32.mrf.mxu0
    %v4833 = vadd.f32 %v4599, %v4832
    %v4834 = vpop.f32.mrf.mxu0
    %4835 = vmatprep.mubr.f32.mxu0 0.0
    %4836 = vmatmul.mubr.f32.gmra.mxu0 %v4484
    %v4837 = vpop.f32.mrf.mxu0
    %v4838 = vadd.f32 %v4599, %v4837
    %v4839 = vpop.f32.mrf.mxu0
    %4840 = vmatprep.mubr.f32.mxu0 0.0
    %4841 = vmatmul.mubr.f32.gmra.mxu0 %v4485
    %v4842 = vpop.f32.mrf.mxu0
    %v4843 = vadd.f32 %v4599, %v4842
    %v4844 = vpop.f32.mrf.mxu0
    %4845 = vmatprep.mubr.f32.mxu0 0.0
    %4846 = vmatmul.mubr.f32.gmra.mxu0 %v4486
    %v4847 = vpop.f32.mrf.mxu0
    %v4848 = vadd.f32 %v4599, %v4847
    %v4849 = vpop.f32.mrf.mxu0
    %4850 = vmatprep.mubr.f32.mxu0 0.0
    %4851 = vmatmul.mubr.f32.gmra.mxu0 %v4487
    %v4852 = vpop.f32.mrf.mxu0
    %v4853 = vadd.f32 %v4599, %v4852
    %v4854 = vpop.f32.mrf.mxu0
    %4855 = vmatprep.mubr.f32.mxu0 0.0
    %4856 = vmatmul.mubr.f32.gmra.mxu0 %v4488
    %v4857 = vpop.f32.mrf.mxu0
    %v4858 = vadd.f32 %v4599, %v4857
    %v4859 = vpop.f32.mrf.mxu0
    %4860 = vmatprep.mubr.f32.mxu0 0.0
    %4861 = vmatmul.mubr.f32.gmra.mxu0 %v4489
    %v4862 = vpop.f32.mrf.mxu0
    %v4863 = vadd.f32 %v4599, %v4862
    %v4864 = vpop.f32.mrf.mxu0
    %4865 = vmatprep.mubr.f32.mxu0 0.0
    %4866 = vmatmul.mubr.f32.gmra.mxu0 %v4490
    %v4867 = vpop.f32.mrf.mxu0
    %v4868 = vadd.f32 %v4599, %v4867
    %v4869 = vpop.f32.mrf.mxu0
    %4870 = vmatprep.mubr.f32.mxu0 0.0
    %4871 = vmatmul.mubr.f32.gmra.mxu0 %v4491
    %v4872 = vpop.f32.mrf.mxu0
    %v4873 = vadd.f32 %v4599, %v4872
    %v4874 = vpop.f32.mrf.mxu0
    %4875 = vmatprep.mubr.f32.mxu0 0.0
    %4876 = vmatmul.mubr.f32.gmra.mxu0 %v4492
    %v4877 = vpop.f32.mrf.mxu0
    %v4878 = vadd.f32 %v4599, %v4877
    %v4879 = vpop.f32.mrf.mxu0
    %4880 = vmatprep.mubr.f32.mxu0 0.0
    %4881 = vmatmul.mubr.f32.gmra.mxu0 %v4493
    %v4882 = vpop.f32.mrf.mxu0
    %v4883 = vadd.f32 %v4599, %v4882
    %v4884 = vpop.f32.mrf.mxu0
    %4885 = vmatprep.mubr.f32.mxu0 0.0
    %4886 = vmatmul.mubr.f32.gmra.mxu0 %v4494
    %v4887 = vpop.f32.mrf.mxu0
    %v4888 = vadd.f32 %v4599, %v4887
    %v4889 = vpop.f32.mrf.mxu0
    %4890 = vmatprep.mubr.f32.mxu0 0.0
    %4891 = vmatmul.mubr.f32.gmra.mxu0 %v4495
    %v4892 = vpop.f32.mrf.mxu0
    %v4893 = vadd.f32 %v4599, %v4892
    %v4894 = vpop.f32.mrf.mxu0
    %4895 = vmatprep.mubr.f32.mxu0 0.0
    %4896 = vmatmul.mubr.f32.gmra.mxu0 %v4496
    %v4897 = vpop.f32.mrf.mxu0
    %v4898 = vadd.f32 %v4599, %v4897
    %v4899 = vpop.f32.mrf.mxu0
    %4900 = vmatprep.mubr.f32.mxu0 0.0
    %4901 = vmatmul.mubr.f32.gmra.mxu0 %v4497
    %v4902 = vpop.f32.mrf.mxu0
    %v4903 = vadd.f32 %v4599, %v4902
    %v4904 = vpop.f32.mrf.mxu0
    %4905 = vmatprep.mubr.f32.mxu0 0.0
    %4906 = vmatmul.mubr.f32.gmra.mxu0 %v4498
    %v4907 = vpop.f32.mrf.mxu0
    %v4908 = vadd.f32 %v4599, %v4907
    %v4909 = vpop.f32.mrf.mxu0
    %4910 = vmatprep.mubr.f32.mxu0 0.0
    %4911 = vmatmul.mubr.f32.gmra.mxu0 %v4499
    %v4912 = vpop.f32.mrf.mxu0
    %v4913 = vadd.f32 %v4599, %v4912
    %v4914 = vpop.f32.mrf.mxu0
    %4915 = vmatprep.mubr.f32.mxu0 0.0
    %4916 = vmatmul.mubr.f32.gmra.mxu0 %v4500
    %v4917 = vpop.f32.mrf.mxu0
    %v4918 = vadd.f32 %v4599, %v4917
    %v4919 = vpop.f32.mrf.mxu0
    %4920 = vmatprep.mubr.f32.mxu0 0.0
    %4921 = vmatmul.mubr.f32.gmra.mxu0 %v4501
    %v4922 = vpop.f32.mrf.mxu0
    %v4923 = vadd.f32 %v4599, %v4922
    %v4924 = vpop.f32.mrf.mxu0
    %4925 = vmatprep.mubr.f32.mxu0 0.0
    %4926 = vmatmul.mubr.f32.gmra.mxu0 %v4502
    %v4927 = vpop.f32.mrf.mxu0
    %v4928 = vadd.f32 %v4599, %v4927
    %v4929 = vpop.f32.mrf.mxu0
    %4930 = vmatprep.mubr.f32.mxu0 0.0
    %4931 = vmatmul.mubr.f32.gmra.mxu0 %v4503
    %v4932 = vpop.f32.mrf.mxu0
    %v4933 = vadd.f32 %v4599, %v4932
    %v4934 = vpop.f32.mrf.mxu0
    %4935 = vmatprep.mubr.f32.mxu0 0.0
    %4936 = vmatmul.mubr.f32.gmra.mxu0 %v4504
    %v4937 = vpop.f32.mrf.mxu0
    %v4938 = vadd.f32 %v4599, %v4937
    %v4939 = vpop.f32.mrf.mxu0
    %4940 = vmatprep.mubr.f32.mxu0 0.0
    %4941 = vmatmul.mubr.f32.gmra.mxu0 %v4505
    %v4942 = vpop.f32.mrf.mxu0
    %v4943 = vadd.f32 %v4599, %v4942
    %v4944 = vpop.f32.mrf.mxu0
    %4945 = vmatprep.mubr.f32.mxu0 0.0
    %4946 = vmatmul.mubr.f32.gmra.mxu0 %v4506
    %v4947 = vpop.f32.mrf.mxu0
    %v4948 = vadd.f32 %v4599, %v4947
    %v4949 = vpop.f32.mrf.mxu0
    %4950 = vmatprep.mubr.f32.mxu0 0.0
    %4951 = vmatmul.mubr.f32.gmra.mxu0 %v4507
    %v4952 = vpop.f32.mrf.mxu0
    %v4953 = vadd.f32 %v4599, %v4952
    %v4954 = vpop.f32.mrf.mxu0
    %4955 = vmatprep.mubr.f32.mxu0 0.0
    %4956 = vmatmul.mubr.f32.gmra.mxu0 %v4508
    %v4957 = vpop.f32.mrf.mxu0
    %v4958 = vadd.f32 %v4599, %v4957
    %v4959 = vpop.f32.mrf.mxu0
    %4960 = vmatprep.mubr.f32.mxu0 0.0
    %4961 = vmatmul.mubr.f32.gmra.mxu0 %v4509
    %v4962 = vpop.f32.mrf.mxu0
    %v4963 = vadd.f32 %v4599, %v4962
    %v4964 = vpop.f32.mrf.mxu0
    %4965 = vmatprep.mubr.f32.mxu0 0.0
    %4966 = vmatmul.mubr.f32.gmra.mxu0 %v4510
    %v4967 = vpop.f32.mrf.mxu0
    %v4968 = vadd.f32 %v4599, %v4967
    %v4969 = vpop.f32.mrf.mxu0
    %4970 = vmatprep.mubr.f32.mxu0 0.0
    %4971 = vmatmul.mubr.f32.gmra.mxu0 %v4511
    %v4972 = vpop.f32.mrf.mxu0
    %v4973 = vadd.f32 %v4599, %v4972
    %v4974 = vpop.f32.mrf.mxu0
    %4975 = vmatprep.mubr.f32.mxu0 0.0
    %4976 = vmatmul.mubr.f32.gmra.mxu0 %v4512
    %v4977 = vpop.f32.mrf.mxu0
    %v4978 = vadd.f32 %v4599, %v4977
    %v4979 = vpop.f32.mrf.mxu0
    %4980 = vmatprep.mubr.f32.mxu0 0.0
    %4981 = vmatmul.mubr.f32.gmra.mxu0 %v4513
    %v4982 = vpop.f32.mrf.mxu0
    %v4983 = vadd.f32 %v4599, %v4982
    %v4984 = vpop.f32.mrf.mxu0
    %4985 = vmatprep.mubr.f32.mxu0 0.0
    %4986 = vmatmul.mubr.f32.gmra.mxu0 %v4514
    %v4987 = vpop.f32.mrf.mxu0
    %v4988 = vadd.f32 %v4599, %v4987
    %v4989 = vpop.f32.mrf.mxu0
    %4990 = vmatprep.mubr.f32.mxu0 0.0
    %4991 = vmatmul.mubr.f32.gmra.mxu0 %v4515
    %v4992 = vpop.f32.mrf.mxu0
    %v4993 = vadd.f32 %v4599, %v4992
    %v4994 = vpop.f32.mrf.mxu0
    %4995 = vmatprep.mubr.f32.mxu0 0.0
    %4996 = vmatmul.mubr.f32.gmra.mxu0 %v4516
    %v4997 = vpop.f32.mrf.mxu0
    %v4998 = vadd.f32 %v4599, %v4997
    %v4999 = vpop.f32.mrf.mxu0
    %5000 = vmatprep.mubr.f32.mxu0 0.0
    %5001 = vmatmul.mubr.f32.gmra.mxu0 %v4517
    %v5002 = vpop.f32.mrf.mxu0
    %v5003 = vadd.f32 %v4599, %v5002
    %v5004 = vpop.f32.mrf.mxu0
    %5005 = vmatprep.mubr.f32.mxu0 0.0
    %5006 = vmatmul.mubr.f32.gmra.mxu0 %v4518
    %v5007 = vpop.f32.mrf.mxu0
    %v5008 = vadd.f32 %v4599, %v5007
    %v5009 = vpop.f32.mrf.mxu0
    %5010 = vmatprep.mubr.f32.mxu0 0.0
    %5011 = vmatmul.mubr.f32.gmra.mxu0 %v4519
    %v5012 = vpop.f32.mrf.mxu0
    %v5013 = vadd.f32 %v4599, %v5012
    %v5014 = vpop.f32.mrf.mxu0
    %5015 = vmatprep.mubr.f32.mxu0 0.0
    %5016 = vmatmul.mubr.f32.gmra.mxu0 %v4520
    %v5017 = vpop.f32.mrf.mxu0
    %v5018 = vadd.f32 %v4599, %v5017
    %v5019 = vpop.f32.mrf.mxu0
    %5020 = vmatprep.mubr.f32.mxu0 0.0
    %5021 = vmatmul.mubr.f32.gmra.mxu0 %v4521
    %v5022 = vpop.f32.mrf.mxu0
    %v5023 = vadd.f32 %v4599, %v5022
    %v5024 = vpop.f32.mrf.mxu0
    %5025 = vmatprep.mubr.f32.mxu0 0.0
    %5026 = vmatmul.mubr.f32.gmra.mxu0 %v4522
    %v5027 = vpop.f32.mrf.mxu0
    %v5028 = vadd.f32 %v4599, %v5027
    %v5029 = vpop.f32.mrf.mxu0
    %5030 = vmatprep.mubr.f32.mxu0 0.0
    %5031 = vmatmul.mubr.f32.gmra.mxu0 %v4523
    %v5032 = vpop.f32.mrf.mxu0
    %v5033 = vadd.f32 %v4599, %v5032
    %v5034 = vpop.f32.mrf.mxu0
    %5035 = vmatprep.mubr.f32.mxu0 0.0
    %5036 = vmatmul.mubr.f32.gmra.mxu0 %v4524
    %v5037 = vpop.f32.mrf.mxu0
    %v5038 = vadd.f32 %v4599, %v5037
    %v5039 = vpop.f32.mrf.mxu0
    %5040 = vmatprep.mubr.f32.mxu0 0.0
    %5041 = vmatmul.mubr.f32.gmra.mxu0 %v4525
    %v5042 = vpop.f32.mrf.mxu0
    %v5043 = vadd.f32 %v4599, %v5042
    %v5044 = vpop.f32.mrf.mxu0
    %5045 = vmatprep.mubr.f32.mxu0 0.0
    %5046 = vmatmul.mubr.f32.gmra.mxu0 %v4526
    %v5047 = vpop.f32.mrf.mxu0
    %v5048 = vadd.f32 %v4599, %v5047
    %v5049 = vpop.f32.mrf.mxu0
    %5050 = vmatprep.mubr.f32.mxu0 0.0
    %5051 = vmatmul.mubr.f32.gmra.mxu0 %v4527
    %v5052 = vpop.f32.mrf.mxu0
    %v5053 = vadd.f32 %v4599, %v5052
    %v5054 = vpop.f32.mrf.mxu0
    %5055 = vmatprep.mubr.f32.mxu0 0.0
    %5056 = vmatmul.mubr.f32.gmra.mxu0 %v4528
    %v5057 = vpop.f32.mrf.mxu0
    %v5058 = vadd.f32 %v4599, %v5057
    %v5059 = vpop.f32.mrf.mxu0
    %5060 = vmatprep.mubr.f32.mxu0 0.0
    %5061 = vmatmul.mubr.f32.gmra.mxu0 %v4529
    %v5062 = vpop.f32.mrf.mxu0
    %v5063 = vadd.f32 %v4599, %v5062
    %v5064 = vpop.f32.mrf.mxu0
    %5065 = vmatprep.mubr.f32.mxu0 0.0
    %5066 = vmatmul.mubr.f32.gmra.mxu0 %v4530
    %v5067 = vpop.f32.mrf.mxu0
    %v5068 = vadd.f32 %v4599, %v5067
    %v5069 = vpop.f32.mrf.mxu0
    %5070 = vmatprep.mubr.f32.mxu0 0.0
    %5071 = vmatmul.mubr.f32.gmra.mxu0 %v4531
    %v5072 = vpop.f32.mrf.mxu0
    %v5073 = vadd.f32 %v4599, %v5072
    %v5074 = vpop.f32.mrf.mxu0
    %5075 = vmatprep.mubr.f32.mxu0 0.0
    %5076 = vmatmul.mubr.f32.gmra.mxu0 %v4532
    %v5077 = vpop.f32.mrf.mxu0
    %v5078 = vadd.f32 %v4599, %v5077
    %v5079 = vpop.f32.mrf.mxu0
    %5080 = vmatprep.mubr.f32.mxu0 0.0
    %5081 = vmatmul.mubr.f32.gmra.mxu0 %v4533
    %v5082 = vpop.f32.mrf.mxu0
    %v5083 = vadd.f32 %v4599, %v5082
    %v5084 = vpop.f32.mrf.mxu0
    %5085 = vmatprep.mubr.f32.mxu0 0.0
    %5086 = vmatmul.mubr.f32.gmra.mxu0 %v4534
    %v5087 = vpop.f32.mrf.mxu0
    %v5088 = vadd.f32 %v4599, %v5087
    %v5089 = vpop.f32.mrf.mxu0
    %5090 = vmatprep.mubr.f32.mxu0 0.0
    %5091 = vmatmul.mubr.f32.gmra.mxu0 %v4535
    %v5092 = vpop.f32.mrf.mxu0
    %v5093 = vadd.f32 %v4599, %v5092
    %v5094 = vpop.f32.mrf.mxu0
    %5095 = vmatprep.mubr.f32.mxu0 0.0
    %5096 = vmatmul.mubr.f32.gmra.mxu0 %v4536
    %v5097 = vpop.f32.mrf.mxu0
    %v5098 = vadd.f32 %v4599, %v5097
    %v5099 = vpop.f32.mrf.mxu0
    %5100 = vmatprep.mubr.f32.mxu0 0.0
    %5101 = vmatmul.mubr.f32.gmra.mxu0 %v4537
    %v5102 = vpop.f32.mrf.mxu0
    %v5103 = vadd.f32 %v4599, %v5102
    %v5104 = vpop.f32.mrf.mxu0
    %5105 = vmatprep.mubr.f32.mxu0 0.0
    %5106 = vmatmul.mubr.f32.gmra.mxu0 %v4538
    %v5107 = vpop.f32.mrf.mxu0
    %v5108 = vadd.f32 %v4599, %v5107
    %v5109 = vpop.f32.mrf.mxu0
    %5110 = vmatprep.mubr.f32.mxu0 0.0
    %5111 = vmatmul.mubr.f32.gmra.mxu0 %v4539
    %v5112 = vpop.f32.mrf.mxu0
    %v5113 = vadd.f32 %v4599, %v5112
    %v5114 = vpop.f32.mrf.mxu0
    %5115 = vmatprep.mubr.f32.mxu0 0.0
    %5116 = vmatmul.mubr.f32.gmra.mxu0 %v4540
    %v5117 = vpop.f32.mrf.mxu0
    %v5118 = vadd.f32 %v4599, %v5117
    %v5119 = vpop.f32.mrf.mxu0
    %5120 = vmatprep.mubr.f32.mxu0 0.0
    %5121 = vmatmul.mubr.f32.gmra.mxu0 %v4541
    %v5122 = vpop.f32.mrf.mxu0
    %v5123 = vadd.f32 %v4599, %v5122
    %v5124 = vpop.f32.mrf.mxu0
    %5125 = vmatprep.mubr.f32.mxu0 0.0
    %5126 = vmatmul.mubr.f32.gmra.mxu0 %v4542
    %v5127 = vpop.f32.mrf.mxu0
    %v5128 = vadd.f32 %v4599, %v5127
    %v5129 = vpop.f32.mrf.mxu0
    %5130 = vmatprep.mubr.f32.mxu0 0.0
    %5131 = vmatmul.mubr.f32.gmra.mxu0 %v4543
    %v5132 = vpop.f32.mrf.mxu0
    %v5133 = vadd.f32 %v4599, %v5132
    %v5134 = vpop.f32.mrf.mxu0
    %5135 = vmatprep.mubr.f32.mxu0 0.0
    %5136 = vmatmul.mubr.f32.gmra.mxu0 %v4544
    %v5137 = vpop.f32.mrf.mxu0
    %v5138 = vadd.f32 %v4599, %v5137
    %v5139 = vpop.f32.mrf.mxu0
    %5140 = vmatprep.mubr.f32.mxu0 0.0
    %5141 = vmatmul.mubr.f32.gmra.mxu0 %v4545
    %v5142 = vpop.f32.mrf.mxu0
    %v5143 = vadd.f32 %v4599, %v5142
    %v5144 = vpop.f32.mrf.mxu0
    %5145 = vmatprep.mubr.f32.mxu0 0.0
    %5146 = vmatmul.mubr.f32.gmra.mxu0 %v4546
    %v5147 = vpop.f32.mrf.mxu0
    %v5148 = vadd.f32 %v4599, %v5147
    %v5149 = vpop.f32.mrf.mxu0
    %5150 = vmatprep.mubr.f32.mxu0 0.0
    %5151 = vmatmul.mubr.f32.gmra.mxu0 %v4547
    %v5152 = vpop.f32.mrf.mxu0
    %v5153 = vadd.f32 %v4599, %v5152
    %v5154 = vpop.f32.mrf.mxu0
    %5155 = vmatprep.mubr.f32.mxu0 0.0
    %5156 = vmatmul.mubr.f32.gmra.mxu0 %v4548
    %v5157 = vpop.f32.mrf.mxu0
    %v5158 = vadd.f32 %v4599, %v5157
    %v5159 = vpop.f32.mrf.mxu0
    %5160 = vmatprep.mubr.f32.mxu0 0.0
    %5161 = vmatmul.mubr.f32.gmra.mxu0 %v4549
    %v5162 = vpop.f32.mrf.mxu0
    %v5163 = vadd.f32 %v4599, %v5162
    %v5164 = vpop.f32.mrf.mxu0
    %5165 = vmatprep.mubr.f32.mxu0 0.0
    %5166 = vmatmul.mubr.f32.gmra.mxu0 %v4550
    %v5167 = vpop.f32.mrf.mxu0
    %v5168 = vadd.f32 %v4599, %v5167
    %v5169 = vpop.f32.mrf.mxu0
    %5170 = vmatprep.mubr.f32.mxu0 0.0
    %5171 = vmatmul.mubr.f32.gmra.mxu0 %v4551
    %v5172 = vpop.f32.mrf.mxu0
    %v5173 = vadd.f32 %v4599, %v5172
    %v5174 = vpop.f32.mrf.mxu0
    %5175 = vmatprep.mubr.f32.mxu0 0.0
    %5176 = vmatmul.mubr.f32.gmra.mxu0 %v4552
    %v5177 = vpop.f32.mrf.mxu0
    %v5178 = vadd.f32 %v4599, %v5177
    %v5179 = vpop.f32.mrf.mxu0
    %5180 = vmatprep.mubr.f32.mxu0 0.0
    %5181 = vmatmul.mubr.f32.gmra.mxu0 %v4553
    %v5182 = vpop.f32.mrf.mxu0
    %v5183 = vadd.f32 %v4599, %v5182
    %v5184 = vpop.f32.mrf.mxu0
    %5185 = vmatprep.mubr.f32.mxu0 0.0
    %5186 = vmatmul.mubr.f32.gmra.mxu0 %v4554
    %v5187 = vpop.f32.mrf.mxu0
    %v5188 = vadd.f32 %v4599, %v5187
    %v5189 = vpop.f32.mrf.mxu0
    %5190 = vmatprep.mubr.f32.mxu0 0.0
    %5191 = vmatmul.mubr.f32.gmra.mxu0 %v4555
    %v5192 = vpop.f32.mrf.mxu0
    %v5193 = vadd.f32 %v4599, %v5192
    %v5194 = vpop.f32.mrf.mxu0
    %5195 = vmatprep.mubr.f32.mxu0 0.0
    %5196 = vmatmul.mubr.f32.gmra.mxu0 %v4556
    %v5197 = vpop.f32.mrf.mxu0
    %v5198 = vadd.f32 %v4599, %v5197
    %v5199 = vpop.f32.mrf.mxu0
    %5200 = vmatprep.mubr.f32.mxu0 0.0
    %5201 = vmatmul.mubr.f32.gmra.mxu0 %v4557
    %v5202 = vpop.f32.mrf.mxu0
    %v5203 = vadd.f32 %v4599, %v5202
    %v5204 = vpop.f32.mrf.mxu0
    %5205 = vmatprep.mubr.f32.mxu0 0.0
    %5206 = vmatmul.mubr.f32.gmra.mxu0 %v4558
    %v5207 = vpop.f32.mrf.mxu0
    %v5208 = vadd.f32 %v4599, %v5207
    %v5209 = vpop.f32.mrf.mxu0
    %5210 = vmatprep.mubr.f32.mxu0 0.0
    %5211 = vmatmul.mubr.f32.gmra.mxu0 %v4559
    %v5212 = vpop.f32.mrf.mxu0
    %v5213 = vadd.f32 %v4599, %v5212
    %v5214 = vpop.f32.mrf.mxu0
    %5215 = vmatprep.mubr.f32.mxu0 0.0
    %5216 = vmatmul.mubr.f32.gmra.mxu0 %v4560
    %v5217 = vpop.f32.mrf.mxu0
    %v5218 = vadd.f32 %v4599, %v5217
    %v5219 = vpop.f32.mrf.mxu0
    %5220 = vmatprep.mubr.f32.mxu0 0.0
    %5221 = vmatmul.mubr.f32.gmra.mxu0 %v4561
    %v5222 = vpop.f32.mrf.mxu0
    %v5223 = vadd.f32 %v4599, %v5222
    %v5224 = vpop.f32.mrf.mxu0
    %5225 = vmatprep.mubr.f32.mxu0 0.0
    %5226 = vmatmul.mubr.f32.gmra.mxu0 %v4562
    %v5227 = vpop.f32.mrf.mxu0
    %v5228 = vadd.f32 %v4599, %v5227
    %v5229 = vpop.f32.mrf.mxu0
    %5230 = vmatprep.mubr.f32.mxu0 0.0
    %5231 = vmatmul.mubr.f32.gmra.mxu0 %v4563
    %v5232 = vpop.f32.mrf.mxu0
    %v5233 = vadd.f32 %v4599, %v5232
    %v5234 = vpop.f32.mrf.mxu0
    %5235 = vmatprep.mubr.f32.mxu0 0.0
    %5236 = vmatmul.mubr.f32.gmra.mxu0 %v4564
    %v5237 = vpop.f32.mrf.mxu0
    %v5238 = vadd.f32 %v4599, %v5237
    %v5239 = vpop.f32.mrf.mxu0
    %5240 = vmatprep.mubr.f32.mxu0 0.0
    %5241 = vmatmul.mubr.f32.gmra.mxu0 %v4565
    %v5242 = vpop.f32.mrf.mxu0
    %v5243 = vadd.f32 %v4599, %v5242
    %v5244 = vpop.f32.mrf.mxu0
    %5245 = vmatprep.mubr.f32.mxu0 0.0
    %5246 = vmatmul.mubr.f32.gmra.mxu0 %v4566
    %v5247 = vpop.f32.mrf.mxu0
    %v5248 = vadd.f32 %v4599, %v5247
    %v5249 = vpop.f32.mrf.mxu0
    %5250 = vmatprep.mubr.f32.mxu0 0.0
    %5251 = vmatmul.mubr.f32.gmra.mxu0 %v4567
    %v5252 = vpop.f32.mrf.mxu0
    %v5253 = vadd.f32 %v4599, %v5252
    %v5254 = vpop.f32.mrf.mxu0
    %5255 = vmatprep.mubr.f32.mxu0 0.0
    %5256 = vmatmul.mubr.f32.gmra.mxu0 %v4568
    %v5257 = vpop.f32.mrf.mxu0
    %v5258 = vadd.f32 %v4599, %v5257
    %v5259 = vpop.f32.mrf.mxu0
    %5260 = vmatprep.mubr.f32.mxu0 0.0
    %5261 = vmatmul.mubr.f32.gmra.mxu0 %v4569
    %v5262 = vpop.f32.mrf.mxu0
    %v5263 = vadd.f32 %v4599, %v5262
    %v5264 = vpop.f32.mrf.mxu0
    %5265 = vmatprep.mubr.f32.mxu0 0.0
    %5266 = vmatmul.mubr.f32.gmra.mxu0 %v4570
    %v5267 = vpop.f32.mrf.mxu0
    %v5268 = vadd.f32 %v4599, %v5267
    %v5269 = vpop.f32.mrf.mxu0
    %5270 = vmatprep.mubr.f32.mxu0 0.0
    %5271 = vmatmul.mubr.f32.gmra.mxu0 %v4571
    %v5272 = vpop.f32.mrf.mxu0
    %v5273 = vadd.f32 %v4599, %v5272
    %v5274 = vpop.f32.mrf.mxu0
    %5275 = vmatprep.mubr.f32.mxu0 0.0
    %5276 = vmatmul.mubr.f32.gmra.mxu0 %v4572
    %v5277 = vpop.f32.mrf.mxu0
    %v5278 = vadd.f32 %v4599, %v5277
    %v5279 = vpop.f32.mrf.mxu0
    %5280 = vmatprep.mubr.f32.mxu0 0.0
    %5281 = vmatmul.mubr.f32.gmra.mxu0 %v4573
    %v5282 = vpop.f32.mrf.mxu0
    %v5283 = vadd.f32 %v4599, %v5282
    %v5284 = vpop.f32.mrf.mxu0
    %5285 = vmatprep.mubr.f32.mxu0 0.0
    %5286 = vmatmul.mubr.f32.gmra.mxu0 %v4574
    %v5287 = vpop.f32.mrf.mxu0
    %v5288 = vadd.f32 %v4599, %v5287
    %v5289 = vpop.f32.mrf.mxu0
    %5290 = vmatprep.mubr.f32.mxu0 0.0
    %5291 = vmatmul.mubr.f32.gmra.mxu0 %v4575
    %v5292 = vpop.f32.mrf.mxu0
    %v5293 = vadd.f32 %v4599, %v5292
    %v5294 = vpop.f32.mrf.mxu0
    %5295 = vmatprep.mubr.f32.mxu0 0.0
    %5296 = vmatmul.mubr.f32.gmra.mxu0 %v4576
    %v5297 = vpop.f32.mrf.mxu0
    %v5298 = vadd.f32 %v4599, %v5297
    %v5299 = vpop.f32.mrf.mxu0
    %5300 = vmatprep.mubr.f32.mxu0 0.0
    %5301 = vmatmul.mubr.f32.gmra.mxu0 %v4577
    %v5302 = vpop.f32.mrf.mxu0
    %v5303 = vadd.f32 %v4599, %v5302
    %v5304 = vpop.f32.mrf.mxu0
    %5305 = vdwg.mxu0
    %vm5306 = vcmp.gt.f32.partialorder %v4668, 0.0
    %vm5307 = vcmp.gt.f32.partialorder %v4673, 0.0
    %vm5308 = vcmp.gt.f32.partialorder %v4678, 0.0
    %vm5309 = vcmp.gt.f32.partialorder %v4683, 0.0
    %vm5310 = vcmp.gt.f32.partialorder %v4688, 0.0
    %vm5311 = vcmp.gt.f32.partialorder %v4693, 0.0
    %vm5312 = vcmp.gt.f32.partialorder %v4698, 0.0
    %vm5313 = vcmp.gt.f32.partialorder %v4703, 0.0
    %vm5314 = vcmp.gt.f32.partialorder %v4708, 0.0
    %vm5315 = vcmp.gt.f32.partialorder %v4713, 0.0
    %vm5316 = vcmp.gt.f32.partialorder %v4718, 0.0
    %vm5317 = vcmp.gt.f32.partialorder %v4723, 0.0
    %vm5318 = vcmp.gt.f32.partialorder %v4728, 0.0
    %vm5319 = vcmp.gt.f32.partialorder %v4733, 0.0
    %vm5320 = vcmp.gt.f32.partialorder %v4738, 0.0
    %vm5321 = vcmp.gt.f32.partialorder %v4743, 0.0
    %vm5322 = vcmp.gt.f32.partialorder %v4748, 0.0
    %vm5323 = vcmp.gt.f32.partialorder %v4753, 0.0
    %vm5324 = vcmp.gt.f32.partialorder %v4758, 0.0
    %vm5325 = vcmp.gt.f32.partialorder %v4763, 0.0
    %vm5326 = vcmp.gt.f32.partialorder %v4768, 0.0
    %vm5327 = vcmp.gt.f32.partialorder %v4773, 0.0
    %vm5328 = vcmp.gt.f32.partialorder %v4778, 0.0
    %vm5329 = vcmp.gt.f32.partialorder %v4783, 0.0
    %vm5330 = vcmp.gt.f32.partialorder %v4788, 0.0
    %vm5331 = vcmp.gt.f32.partialorder %v4793, 0.0
    %vm5332 = vcmp.gt.f32.partialorder %v4798, 0.0
    %vm5333 = vcmp.gt.f32.partialorder %v4803, 0.0
    %vm5334 = vcmp.gt.f32.partialorder %v4808, 0.0
    %vm5335 = vcmp.gt.f32.partialorder %v4813, 0.0
    %vm5336 = vcmp.gt.f32.partialorder %v4818, 0.0
    %vm5337 = vcmp.gt.f32.partialorder %v4823, 0.0
    %vm5338 = vcmp.gt.f32.partialorder %v4828, 0.0
    %vm5339 = vcmp.gt.f32.partialorder %v4833, 0.0
    %vm5340 = vcmp.gt.f32.partialorder %v4838, 0.0
    %vm5341 = vcmp.gt.f32.partialorder %v4843, 0.0
    %vm5342 = vcmp.gt.f32.partialorder %v4848, 0.0
    %vm5343 = vcmp.gt.f32.partialorder %v4853, 0.0
    %vm5344 = vcmp.gt.f32.partialorder %v4858, 0.0
    %vm5345 = vcmp.gt.f32.partialorder %v4863, 0.0
    %vm5346 = vcmp.gt.f32.partialorder %v4868, 0.0
    %vm5347 = vcmp.gt.f32.partialorder %v4873, 0.0
    %vm5348 = vcmp.gt.f32.partialorder %v4878, 0.0
    %vm5349 = vcmp.gt.f32.partialorder %v4883, 0.0
    %vm5350 = vcmp.gt.f32.partialorder %v4888, 0.0
    %vm5351 = vcmp.gt.f32.partialorder %v4893, 0.0
    %vm5352 = vcmp.gt.f32.partialorder %v4898, 0.0
    %vm5353 = vcmp.gt.f32.partialorder %v4903, 0.0
    %vm5354 = vcmp.gt.f32.partialorder %v4908, 0.0
    %vm5355 = vcmp.gt.f32.partialorder %v4913, 0.0
    %vm5356 = vcmp.gt.f32.partialorder %v4918, 0.0
    %vm5357 = vcmp.gt.f32.partialorder %v4923, 0.0
    %vm5358 = vcmp.gt.f32.partialorder %v4928, 0.0
    %vm5359 = vcmp.gt.f32.partialorder %v4933, 0.0
    %vm5360 = vcmp.gt.f32.partialorder %v4938, 0.0
    %vm5361 = vcmp.gt.f32.partialorder %v4943, 0.0
    %vm5362 = vcmp.gt.f32.partialorder %v4948, 0.0
    %vm5363 = vcmp.gt.f32.partialorder %v4953, 0.0
    %vm5364 = vcmp.gt.f32.partialorder %v4958, 0.0
    %vm5365 = vcmp.gt.f32.partialorder %v4963, 0.0
    %vm5366 = vcmp.gt.f32.partialorder %v4968, 0.0
    %vm5367 = vcmp.gt.f32.partialorder %v4973, 0.0
    %vm5368 = vcmp.gt.f32.partialorder %v4978, 0.0
    %vm5369 = vcmp.gt.f32.partialorder %v4983, 0.0
    %vm5370 = vcmp.gt.f32.partialorder %v4988, 0.0
    %vm5371 = vcmp.gt.f32.partialorder %v4993, 0.0
    %vm5372 = vcmp.gt.f32.partialorder %v4998, 0.0
    %vm5373 = vcmp.gt.f32.partialorder %v5003, 0.0
    %vm5374 = vcmp.gt.f32.partialorder %v5008, 0.0
    %vm5375 = vcmp.gt.f32.partialorder %v5013, 0.0
    %vm5376 = vcmp.gt.f32.partialorder %v5018, 0.0
    %vm5377 = vcmp.gt.f32.partialorder %v5023, 0.0
    %vm5378 = vcmp.gt.f32.partialorder %v5028, 0.0
    %vm5379 = vcmp.gt.f32.partialorder %v5033, 0.0
    %vm5380 = vcmp.gt.f32.partialorder %v5038, 0.0
    %vm5381 = vcmp.gt.f32.partialorder %v5043, 0.0
    %vm5382 = vcmp.gt.f32.partialorder %v5048, 0.0
    %vm5383 = vcmp.gt.f32.partialorder %v5053, 0.0
    %vm5384 = vcmp.gt.f32.partialorder %v5058, 0.0
    %vm5385 = vcmp.gt.f32.partialorder %v5063, 0.0
    %vm5386 = vcmp.gt.f32.partialorder %v5068, 0.0
    %vm5387 = vcmp.gt.f32.partialorder %v5073, 0.0
    %vm5388 = vcmp.gt.f32.partialorder %v5078, 0.0
    %vm5389 = vcmp.gt.f32.partialorder %v5083, 0.0
    %vm5390 = vcmp.gt.f32.partialorder %v5088, 0.0
    %vm5391 = vcmp.gt.f32.partialorder %v5093, 0.0
    %vm5392 = vcmp.gt.f32.partialorder %v5098, 0.0
    %vm5393 = vcmp.gt.f32.partialorder %v5103, 0.0
    %vm5394 = vcmp.gt.f32.partialorder %v5108, 0.0
    %vm5395 = vcmp.gt.f32.partialorder %v5113, 0.0
    %vm5396 = vcmp.gt.f32.partialorder %v5118, 0.0
    %vm5397 = vcmp.gt.f32.partialorder %v5123, 0.0
    %vm5398 = vcmp.gt.f32.partialorder %v5128, 0.0
    %vm5399 = vcmp.gt.f32.partialorder %v5133, 0.0
    %vm5400 = vcmp.gt.f32.partialorder %v5138, 0.0
    %vm5401 = vcmp.gt.f32.partialorder %v5143, 0.0
    %vm5402 = vcmp.gt.f32.partialorder %v5148, 0.0
    %vm5403 = vcmp.gt.f32.partialorder %v5153, 0.0
    %vm5404 = vcmp.gt.f32.partialorder %v5158, 0.0
    %vm5405 = vcmp.gt.f32.partialorder %v5163, 0.0
    %vm5406 = vcmp.gt.f32.partialorder %v5168, 0.0
    %vm5407 = vcmp.gt.f32.partialorder %v5173, 0.0
    %vm5408 = vcmp.gt.f32.partialorder %v5178, 0.0
    %vm5409 = vcmp.gt.f32.partialorder %v5183, 0.0
    %vm5410 = vcmp.gt.f32.partialorder %v5188, 0.0
    %vm5411 = vcmp.gt.f32.partialorder %v5193, 0.0
    %vm5412 = vcmp.gt.f32.partialorder %v5198, 0.0
    %vm5413 = vcmp.gt.f32.partialorder %v5203, 0.0
    %vm5414 = vcmp.gt.f32.partialorder %v5208, 0.0
    %vm5415 = vcmp.gt.f32.partialorder %v5213, 0.0
    %vm5416 = vcmp.gt.f32.partialorder %v5218, 0.0
    %vm5417 = vcmp.gt.f32.partialorder %v5223, 0.0
    %vm5418 = vcmp.gt.f32.partialorder %v5228, 0.0
    %vm5419 = vcmp.gt.f32.partialorder %v5233, 0.0
    %vm5420 = vcmp.gt.f32.partialorder %v5238, 0.0
    %vm5421 = vcmp.gt.f32.partialorder %v5243, 0.0
    %vm5422 = vcmp.gt.f32.partialorder %v5248, 0.0
    %vm5423 = vcmp.gt.f32.partialorder %v5253, 0.0
    %vm5424 = vcmp.gt.f32.partialorder %v5258, 0.0
    %vm5425 = vcmp.gt.f32.partialorder %v5263, 0.0
    %vm5426 = vcmp.gt.f32.partialorder %v5268, 0.0
    %vm5427 = vcmp.gt.f32.partialorder %v5273, 0.0
    %vm5428 = vcmp.gt.f32.partialorder %v5278, 0.0
    %vm5429 = vcmp.gt.f32.partialorder %v5283, 0.0
    %vm5430 = vcmp.gt.f32.partialorder %v5288, 0.0
    %vm5431 = vcmp.gt.f32.partialorder %v5293, 0.0
    %vm5432 = vcmp.gt.f32.partialorder %v5298, 0.0
    %vm5433 = vcmp.gt.f32.partialorder %v5303, 0.0
    %v5434 = vmul.f32 %v4668, 0.01
    %v5435 = vmul.f32 %v4673, 0.01
    %v5436 = vmul.f32 %v4678, 0.01
    %v5437 = vmul.f32 %v4683, 0.01
    %v5438 = vmul.f32 %v4688, 0.01
    %v5439 = vmul.f32 %v4693, 0.01
    %v5440 = vmul.f32 %v4698, 0.01
    %v5441 = vmul.f32 %v4703, 0.01
    %v5442 = vmul.f32 %v4708, 0.01
    %v5443 = vmul.f32 %v4713, 0.01
    %v5444 = vmul.f32 %v4718, 0.01
    %v5445 = vmul.f32 %v4723, 0.01
    %v5446 = vmul.f32 %v4728, 0.01
    %v5447 = vmul.f32 %v4733, 0.01
    %v5448 = vmul.f32 %v4738, 0.01
    %v5449 = vmul.f32 %v4743, 0.01
    %v5450 = vmul.f32 %v4748, 0.01
    %v5451 = vmul.f32 %v4753, 0.01
    %v5452 = vmul.f32 %v4758, 0.01
    %v5453 = vmul.f32 %v4763, 0.01
    %v5454 = vmul.f32 %v4768, 0.01
    %v5455 = vmul.f32 %v4773, 0.01
    %v5456 = vmul.f32 %v4778, 0.01
    %v5457 = vmul.f32 %v4783, 0.01
    %v5458 = vmul.f32 %v4788, 0.01
    %v5459 = vmul.f32 %v4793, 0.01
    %v5460 = vmul.f32 %v4798, 0.01
    %v5461 = vmul.f32 %v4803, 0.01
    %v5462 = vmul.f32 %v4808, 0.01
    %v5463 = vmul.f32 %v4813, 0.01
    %v5464 = vmul.f32 %v4818, 0.01
    %v5465 = vmul.f32 %v4823, 0.01
    %v5466 = vmul.f32 %v4828, 0.01
    %v5467 = vmul.f32 %v4833, 0.01
    %v5468 = vmul.f32 %v4838, 0.01
    %v5469 = vmul.f32 %v4843, 0.01
    %v5470 = vmul.f32 %v4848, 0.01
    %v5471 = vmul.f32 %v4853, 0.01
    %v5472 = vmul.f32 %v4858, 0.01
    %v5473 = vmul.f32 %v4863, 0.01
    %v5474 = vmul.f32 %v4868, 0.01
    %v5475 = vmul.f32 %v4873, 0.01
    %v5476 = vmul.f32 %v4878, 0.01
    %v5477 = vmul.f32 %v4883, 0.01
    %v5478 = vmul.f32 %v4888, 0.01
    %v5479 = vmul.f32 %v4893, 0.01
    %v5480 = vmul.f32 %v4898, 0.01
    %v5481 = vmul.f32 %v4903, 0.01
    %v5482 = vmul.f32 %v4908, 0.01
    %v5483 = vmul.f32 %v4913, 0.01
    %v5484 = vmul.f32 %v4918, 0.01
    %v5485 = vmul.f32 %v4923, 0.01
    %v5486 = vmul.f32 %v4928, 0.01
    %v5487 = vmul.f32 %v4933, 0.01
    %v5488 = vmul.f32 %v4938, 0.01
    %v5489 = vmul.f32 %v4943, 0.01
    %v5490 = vmul.f32 %v4948, 0.01
    %v5491 = vmul.f32 %v4953, 0.01
    %v5492 = vmul.f32 %v4958, 0.01
    %v5493 = vmul.f32 %v4963, 0.01
    %v5494 = vmul.f32 %v4968, 0.01
    %v5495 = vmul.f32 %v4973, 0.01
    %v5496 = vmul.f32 %v4978, 0.01
    %v5497 = vmul.f32 %v4983, 0.01
    %v5498 = vmul.f32 %v4988, 0.01
    %v5499 = vmul.f32 %v4993, 0.01
    %v5500 = vmul.f32 %v4998, 0.01
    %v5501 = vmul.f32 %v5003, 0.01
    %v5502 = vmul.f32 %v5008, 0.01
    %v5503 = vmul.f32 %v5013, 0.01
    %v5504 = vmul.f32 %v5018, 0.01
    %v5505 = vmul.f32 %v5023, 0.01
    %v5506 = vmul.f32 %v5028, 0.01
    %v5507 = vmul.f32 %v5033, 0.01
    %v5508 = vmul.f32 %v5038, 0.01
    %v5509 = vmul.f32 %v5043, 0.01
    %v5510 = vmul.f32 %v5048, 0.01
    %v5511 = vmul.f32 %v5053, 0.01
    %v5512 = vmul.f32 %v5058, 0.01
    %v5513 = vmul.f32 %v5063, 0.01
    %v5514 = vmul.f32 %v5068, 0.01
    %v5515 = vmul.f32 %v5073, 0.01
    %v5516 = vmul.f32 %v5078, 0.01
    %v5517 = vmul.f32 %v5083, 0.01
    %v5518 = vmul.f32 %v5088, 0.01
    %v5519 = vmul.f32 %v5093, 0.01
    %v5520 = vmul.f32 %v5098, 0.01
    %v5521 = vmul.f32 %v5103, 0.01
    %v5522 = vmul.f32 %v5108, 0.01
    %v5523 = vmul.f32 %v5113, 0.01
    %v5524 = vmul.f32 %v5118, 0.01
    %v5525 = vmul.f32 %v5123, 0.01
    %v5526 = vmul.f32 %v5128, 0.01
    %v5527 = vmul.f32 %v5133, 0.01
    %v5528 = vmul.f32 %v5138, 0.01
    %v5529 = vmul.f32 %v5143, 0.01
    %v5530 = vmul.f32 %v5148, 0.01
    %v5531 = vmul.f32 %v5153, 0.01
    %v5532 = vmul.f32 %v5158, 0.01
    %v5533 = vmul.f32 %v5163, 0.01
    %v5534 = vmul.f32 %v5168, 0.01
    %v5535 = vmul.f32 %v5173, 0.01
    %v5536 = vmul.f32 %v5178, 0.01
    %v5537 = vmul.f32 %v5183, 0.01
    %v5538 = vmul.f32 %v5188, 0.01
    %v5539 = vmul.f32 %v5193, 0.01
    %v5540 = vmul.f32 %v5198, 0.01
    %v5541 = vmul.f32 %v5203, 0.01
    %v5542 = vmul.f32 %v5208, 0.01
    %v5543 = vmul.f32 %v5213, 0.01
    %v5544 = vmul.f32 %v5218, 0.01
    %v5545 = vmul.f32 %v5223, 0.01
    %v5546 = vmul.f32 %v5228, 0.01
    %v5547 = vmul.f32 %v5233, 0.01
    %v5548 = vmul.f32 %v5238, 0.01
    %v5549 = vmul.f32 %v5243, 0.01
    %v5550 = vmul.f32 %v5248, 0.01
    %v5551 = vmul.f32 %v5253, 0.01
    %v5552 = vmul.f32 %v5258, 0.01
    %v5553 = vmul.f32 %v5263, 0.01
    %v5554 = vmul.f32 %v5268, 0.01
    %v5555 = vmul.f32 %v5273, 0.01
    %v5556 = vmul.f32 %v5278, 0.01
    %v5557 = vmul.f32 %v5283, 0.01
    %v5558 = vmul.f32 %v5288, 0.01
    %v5559 = vmul.f32 %v5293, 0.01
    %v5560 = vmul.f32 %v5298, 0.01
    %v5561 = vmul.f32 %v5303, 0.01
    %v5562 = vsel %vm5306, %v4668, %v5434
    %v5563 = vsel %vm5307, %v4673, %v5435
    %v5564 = vsel %vm5308, %v4678, %v5436
    %v5565 = vsel %vm5309, %v4683, %v5437
    %v5566 = vsel %vm5310, %v4688, %v5438
    %v5567 = vsel %vm5311, %v4693, %v5439
    %v5568 = vsel %vm5312, %v4698, %v5440
    %v5569 = vsel %vm5313, %v4703, %v5441
    %v5570 = vsel %vm5314, %v4708, %v5442
    %v5571 = vsel %vm5315, %v4713, %v5443
    %v5572 = vsel %vm5316, %v4718, %v5444
    %v5573 = vsel %vm5317, %v4723, %v5445
    %v5574 = vsel %vm5318, %v4728, %v5446
    %v5575 = vsel %vm5319, %v4733, %v5447
    %v5576 = vsel %vm5320, %v4738, %v5448
    %v5577 = vsel %vm5321, %v4743, %v5449
    %v5578 = vsel %vm5322, %v4748, %v5450
    %v5579 = vsel %vm5323, %v4753, %v5451
    %v5580 = vsel %vm5324, %v4758, %v5452
    %v5581 = vsel %vm5325, %v4763, %v5453
    %v5582 = vsel %vm5326, %v4768, %v5454
    %v5583 = vsel %vm5327, %v4773, %v5455
    %v5584 = vsel %vm5328, %v4778, %v5456
    %v5585 = vsel %vm5329, %v4783, %v5457
    %v5586 = vsel %vm5330, %v4788, %v5458
    %v5587 = vsel %vm5331, %v4793, %v5459
    %v5588 = vsel %vm5332, %v4798, %v5460
    %v5589 = vsel %vm5333, %v4803, %v5461
    %v5590 = vsel %vm5334, %v4808, %v5462
    %v5591 = vsel %vm5335, %v4813, %v5463
    %v5592 = vsel %vm5336, %v4818, %v5464
    %v5593 = vsel %vm5337, %v4823, %v5465
    %v5594 = vsel %vm5338, %v4828, %v5466
    %v5595 = vsel %vm5339, %v4833, %v5467
    %v5596 = vsel %vm5340, %v4838, %v5468
    %v5597 = vsel %vm5341, %v4843, %v5469
    %v5598 = vsel %vm5342, %v4848, %v5470
    %v5599 = vsel %vm5343, %v4853, %v5471
    %v5600 = vsel %vm5344, %v4858, %v5472
    %v5601 = vsel %vm5345, %v4863, %v5473
    %v5602 = vsel %vm5346, %v4868, %v5474
    %v5603 = vsel %vm5347, %v4873, %v5475
    %v5604 = vsel %vm5348, %v4878, %v5476
    %v5605 = vsel %vm5349, %v4883, %v5477
    %v5606 = vsel %vm5350, %v4888, %v5478
    %v5607 = vsel %vm5351, %v4893, %v5479
    %v5608 = vsel %vm5352, %v4898, %v5480
    %v5609 = vsel %vm5353, %v4903, %v5481
    %v5610 = vsel %vm5354, %v4908, %v5482
    %v5611 = vsel %vm5355, %v4913, %v5483
    %v5612 = vsel %vm5356, %v4918, %v5484
    %v5613 = vsel %vm5357, %v4923, %v5485
    %v5614 = vsel %vm5358, %v4928, %v5486
    %v5615 = vsel %vm5359, %v4933, %v5487
    %v5616 = vsel %vm5360, %v4938, %v5488
    %v5617 = vsel %vm5361, %v4943, %v5489
    %v5618 = vsel %vm5362, %v4948, %v5490
    %v5619 = vsel %vm5363, %v4953, %v5491
    %v5620 = vsel %vm5364, %v4958, %v5492
    %v5621 = vsel %vm5365, %v4963, %v5493
    %v5622 = vsel %vm5366, %v4968, %v5494
    %v5623 = vsel %vm5367, %v4973, %v5495
    %v5624 = vsel %vm5368, %v4978, %v5496
    %v5625 = vsel %vm5369, %v4983, %v5497
    %v5626 = vsel %vm5370, %v4988, %v5498
    %v5627 = vsel %vm5371, %v4993, %v5499
    %v5628 = vsel %vm5372, %v4998, %v5500
    %v5629 = vsel %vm5373, %v5003, %v5501
    %v5630 = vsel %vm5374, %v5008, %v5502
    %v5631 = vsel %vm5375, %v5013, %v5503
    %v5632 = vsel %vm5376, %v5018, %v5504
    %v5633 = vsel %vm5377, %v5023, %v5505
    %v5634 = vsel %vm5378, %v5028, %v5506
    %v5635 = vsel %vm5379, %v5033, %v5507
    %v5636 = vsel %vm5380, %v5038, %v5508
    %v5637 = vsel %vm5381, %v5043, %v5509
    %v5638 = vsel %vm5382, %v5048, %v5510
    %v5639 = vsel %vm5383, %v5053, %v5511
    %v5640 = vsel %vm5384, %v5058, %v5512
    %v5641 = vsel %vm5385, %v5063, %v5513
    %v5642 = vsel %vm5386, %v5068, %v5514
    %v5643 = vsel %vm5387, %v5073, %v5515
    %v5644 = vsel %vm5388, %v5078, %v5516
    %v5645 = vsel %vm5389, %v5083, %v5517
    %v5646 = vsel %vm5390, %v5088, %v5518
    %v5647 = vsel %vm5391, %v5093, %v5519
    %v5648 = vsel %vm5392, %v5098, %v5520
    %v5649 = vsel %vm5393, %v5103, %v5521
    %v5650 = vsel %vm5394, %v5108, %v5522
    %v5651 = vsel %vm5395, %v5113, %v5523
    %v5652 = vsel %vm5396, %v5118, %v5524
    %v5653 = vsel %vm5397, %v5123, %v5525
    %v5654 = vsel %vm5398, %v5128, %v5526
    %v5655 = vsel %vm5399, %v5133, %v5527
    %v5656 = vsel %vm5400, %v5138, %v5528
    %v5657 = vsel %vm5401, %v5143, %v5529
    %v5658 = vsel %vm5402, %v5148, %v5530
    %v5659 = vsel %vm5403, %v5153, %v5531
    %v5660 = vsel %vm5404, %v5158, %v5532
    %v5661 = vsel %vm5405, %v5163, %v5533
    %v5662 = vsel %vm5406, %v5168, %v5534
    %v5663 = vsel %vm5407, %v5173, %v5535
    %v5664 = vsel %vm5408, %v5178, %v5536
    %v5665 = vsel %vm5409, %v5183, %v5537
    %v5666 = vsel %vm5410, %v5188, %v5538
    %v5667 = vsel %vm5411, %v5193, %v5539
    %v5668 = vsel %vm5412, %v5198, %v5540
    %v5669 = vsel %vm5413, %v5203, %v5541
    %v5670 = vsel %vm5414, %v5208, %v5542
    %v5671 = vsel %vm5415, %v5213, %v5543
    %v5672 = vsel %vm5416, %v5218, %v5544
    %v5673 = vsel %vm5417, %v5223, %v5545
    %v5674 = vsel %vm5418, %v5228, %v5546
    %v5675 = vsel %vm5419, %v5233, %v5547
    %v5676 = vsel %vm5420, %v5238, %v5548
    %v5677 = vsel %vm5421, %v5243, %v5549
    %v5678 = vsel %vm5422, %v5248, %v5550
    %v5679 = vsel %vm5423, %v5253, %v5551
    %v5680 = vsel %vm5424, %v5258, %v5552
    %v5681 = vsel %vm5425, %v5263, %v5553
    %v5682 = vsel %vm5426, %v5268, %v5554
    %v5683 = vsel %vm5427, %v5273, %v5555
    %v5684 = vsel %vm5428, %v5278, %v5556
    %v5685 = vsel %vm5429, %v5283, %v5557
    %v5686 = vsel %vm5430, %v5288, %v5558
    %v5687 = vsel %vm5431, %v5293, %v5559
    %v5688 = vsel %vm5432, %v5298, %v5560
    %v5689 = vsel %vm5433, %v5303, %v5561
    %v5690 = vld [vmem:[%s9] sm:$0x1]
    %v5692 = vlaneseq
    %v5693 = vshrl.u32 %v5692, 7
    %v5694 = vsub.s32 0, %v5693
    %v5695 = vrot.slane %v5690, %v5694
    %v5697 = vmul.f32 %v5562, %v5695
    %v5698 = vmul.f32 %v5563, %v5695
    %v5699 = vmul.f32 %v5564, %v5695
    %v5700 = vmul.f32 %v5565, %v5695
    %v5701 = vmul.f32 %v5566, %v5695
    %v5702 = vmul.f32 %v5567, %v5695
    %v5703 = vmul.f32 %v5568, %v5695
    %v5704 = vmul.f32 %v5569, %v5695
    %v5705 = vmul.f32 %v5570, %v5695
    %v5706 = vmul.f32 %v5571, %v5695
    %v5707 = vmul.f32 %v5572, %v5695
    %v5708 = vmul.f32 %v5573, %v5695
    %v5709 = vmul.f32 %v5574, %v5695
    %v5710 = vmul.f32 %v5575, %v5695
    %v5711 = vmul.f32 %v5576, %v5695
    %v5712 = vmul.f32 %v5577, %v5695
    %v5713 = vmul.f32 %v5578, %v5695
    %v5714 = vmul.f32 %v5579, %v5695
    %v5715 = vmul.f32 %v5580, %v5695
    %v5716 = vmul.f32 %v5581, %v5695
    %v5717 = vmul.f32 %v5582, %v5695
    %v5718 = vmul.f32 %v5583, %v5695
    %v5719 = vmul.f32 %v5584, %v5695
    %v5720 = vmul.f32 %v5585, %v5695
    %v5721 = vmul.f32 %v5586, %v5695
    %v5722 = vmul.f32 %v5587, %v5695
    %v5723 = vmul.f32 %v5588, %v5695
    %v5724 = vmul.f32 %v5589, %v5695
    %v5725 = vmul.f32 %v5590, %v5695
    %v5726 = vmul.f32 %v5591, %v5695
    %v5727 = vmul.f32 %v5592, %v5695
    %v5728 = vmul.f32 %v5593, %v5695
    %v5729 = vmul.f32 %v5594, %v5695
    %v5730 = vmul.f32 %v5595, %v5695
    %v5731 = vmul.f32 %v5596, %v5695
    %v5732 = vmul.f32 %v5597, %v5695
    %v5733 = vmul.f32 %v5598, %v5695
    %v5734 = vmul.f32 %v5599, %v5695
    %v5735 = vmul.f32 %v5600, %v5695
    %v5736 = vmul.f32 %v5601, %v5695
    %v5737 = vmul.f32 %v5602, %v5695
    %v5738 = vmul.f32 %v5603, %v5695
    %v5739 = vmul.f32 %v5604, %v5695
    %v5740 = vmul.f32 %v5605, %v5695
    %v5741 = vmul.f32 %v5606, %v5695
    %v5742 = vmul.f32 %v5607, %v5695
    %v5743 = vmul.f32 %v5608, %v5695
    %v5744 = vmul.f32 %v5609, %v5695
    %v5745 = vmul.f32 %v5610, %v5695
    %v5746 = vmul.f32 %v5611, %v5695
    %v5747 = vmul.f32 %v5612, %v5695
    %v5748 = vmul.f32 %v5613, %v5695
    %v5749 = vmul.f32 %v5614, %v5695
    %v5750 = vmul.f32 %v5615, %v5695
    %v5751 = vmul.f32 %v5616, %v5695
    %v5752 = vmul.f32 %v5617, %v5695
    %v5753 = vmul.f32 %v5618, %v5695
    %v5754 = vmul.f32 %v5619, %v5695
    %v5755 = vmul.f32 %v5620, %v5695
    %v5756 = vmul.f32 %v5621, %v5695
    %v5757 = vmul.f32 %v5622, %v5695
    %v5758 = vmul.f32 %v5623, %v5695
    %v5759 = vmul.f32 %v5624, %v5695
    %v5760 = vmul.f32 %v5625, %v5695
    %v5761 = vmul.f32 %v5626, %v5695
    %v5762 = vmul.f32 %v5627, %v5695
    %v5763 = vmul.f32 %v5628, %v5695
    %v5764 = vmul.f32 %v5629, %v5695
    %v5765 = vmul.f32 %v5630, %v5695
    %v5766 = vmul.f32 %v5631, %v5695
    %v5767 = vmul.f32 %v5632, %v5695
    %v5768 = vmul.f32 %v5633, %v5695
    %v5769 = vmul.f32 %v5634, %v5695
    %v5770 = vmul.f32 %v5635, %v5695
    %v5771 = vmul.f32 %v5636, %v5695
    %v5772 = vmul.f32 %v5637, %v5695
    %v5773 = vmul.f32 %v5638, %v5695
    %v5774 = vmul.f32 %v5639, %v5695
    %v5775 = vmul.f32 %v5640, %v5695
    %v5776 = vmul.f32 %v5641, %v5695
    %v5777 = vmul.f32 %v5642, %v5695
    %v5778 = vmul.f32 %v5643, %v5695
    %v5779 = vmul.f32 %v5644, %v5695
    %v5780 = vmul.f32 %v5645, %v5695
    %v5781 = vmul.f32 %v5646, %v5695
    %v5782 = vmul.f32 %v5647, %v5695
    %v5783 = vmul.f32 %v5648, %v5695
    %v5784 = vmul.f32 %v5649, %v5695
    %v5785 = vmul.f32 %v5650, %v5695
    %v5786 = vmul.f32 %v5651, %v5695
    %v5787 = vmul.f32 %v5652, %v5695
    %v5788 = vmul.f32 %v5653, %v5695
    %v5789 = vmul.f32 %v5654, %v5695
    %v5790 = vmul.f32 %v5655, %v5695
    %v5791 = vmul.f32 %v5656, %v5695
    %v5792 = vmul.f32 %v5657, %v5695
    %v5793 = vmul.f32 %v5658, %v5695
    %v5794 = vmul.f32 %v5659, %v5695
    %v5795 = vmul.f32 %v5660, %v5695
    %v5796 = vmul.f32 %v5661, %v5695
    %v5797 = vmul.f32 %v5662, %v5695
    %v5798 = vmul.f32 %v5663, %v5695
    %v5799 = vmul.f32 %v5664, %v5695
    %v5800 = vmul.f32 %v5665, %v5695
    %v5801 = vmul.f32 %v5666, %v5695
    %v5802 = vmul.f32 %v5667, %v5695
    %v5803 = vmul.f32 %v5668, %v5695
    %v5804 = vmul.f32 %v5669, %v5695
    %v5805 = vmul.f32 %v5670, %v5695
    %v5806 = vmul.f32 %v5671, %v5695
    %v5807 = vmul.f32 %v5672, %v5695
    %v5808 = vmul.f32 %v5673, %v5695
    %v5809 = vmul.f32 %v5674, %v5695
    %v5810 = vmul.f32 %v5675, %v5695
    %v5811 = vmul.f32 %v5676, %v5695
    %v5812 = vmul.f32 %v5677, %v5695
    %v5813 = vmul.f32 %v5678, %v5695
    %v5814 = vmul.f32 %v5679, %v5695
    %v5815 = vmul.f32 %v5680, %v5695
    %v5816 = vmul.f32 %v5681, %v5695
    %v5817 = vmul.f32 %v5682, %v5695
    %v5818 = vmul.f32 %v5683, %v5695
    %v5819 = vmul.f32 %v5684, %v5695
    %v5820 = vmul.f32 %v5685, %v5695
    %v5821 = vmul.f32 %v5686, %v5695
    %v5822 = vmul.f32 %v5687, %v5695
    %v5823 = vmul.f32 %v5688, %v5695
    %v5824 = vmul.f32 %v5689, %v5695
    %vm5825 = vcmask 523264
    %v5826 = vsel %vm5825, %v5697, 0.0
    %5827 = vadd.xlane.f32.xlu0 %v5826
    %v5828 = vpop.xlane.xlu0 %5827
    %v5829 = vsel %vm5825, %v5698, 0.0
    %5830 = vadd.xlane.f32.xlu0 %v5829
    %v5831 = vpop.xlane.xlu0 %5830
    %v5832 = vsel %vm5825, %v5699, 0.0
    %5833 = vadd.xlane.f32.xlu0 %v5832
    %v5834 = vpop.xlane.xlu0 %5833
    %v5835 = vsel %vm5825, %v5700, 0.0
    %5836 = vadd.xlane.f32.xlu0 %v5835
    %v5837 = vpop.xlane.xlu0 %5836
    %v5838 = vsel %vm5825, %v5701, 0.0
    %5839 = vadd.xlane.f32.xlu0 %v5838
    %v5840 = vpop.xlane.xlu0 %5839
    %v5841 = vsel %vm5825, %v5702, 0.0
    %5842 = vadd.xlane.f32.xlu0 %v5841
    %v5843 = vpop.xlane.xlu0 %5842
    %v5844 = vsel %vm5825, %v5703, 0.0
    %5845 = vadd.xlane.f32.xlu0 %v5844
    %v5846 = vpop.xlane.xlu0 %5845
    %v5847 = vsel %vm5825, %v5704, 0.0
    %5848 = vadd.xlane.f32.xlu0 %v5847
    %v5849 = vpop.xlane.xlu0 %5848
    %v5850 = vsel %vm5825, %v5705, 0.0
    %5851 = vadd.xlane.f32.xlu0 %v5850
    %v5852 = vpop.xlane.xlu0 %5851
    %v5853 = vsel %vm5825, %v5706, 0.0
    %5854 = vadd.xlane.f32.xlu0 %v5853
    %v5855 = vpop.xlane.xlu0 %5854
    %v5856 = vsel %vm5825, %v5707, 0.0
    %5857 = vadd.xlane.f32.xlu0 %v5856
    %v5858 = vpop.xlane.xlu0 %5857
    %v5859 = vsel %vm5825, %v5708, 0.0
    %5860 = vadd.xlane.f32.xlu0 %v5859
    %v5861 = vpop.xlane.xlu0 %5860
    %v5862 = vsel %vm5825, %v5709, 0.0
    %5863 = vadd.xlane.f32.xlu0 %v5862
    %v5864 = vpop.xlane.xlu0 %5863
    %v5865 = vsel %vm5825, %v5710, 0.0
    %5866 = vadd.xlane.f32.xlu0 %v5865
    %v5867 = vpop.xlane.xlu0 %5866
    %v5868 = vsel %vm5825, %v5711, 0.0
    %5869 = vadd.xlane.f32.xlu0 %v5868
    %v5870 = vpop.xlane.xlu0 %5869
    %v5871 = vsel %vm5825, %v5712, 0.0
    %5872 = vadd.xlane.f32.xlu0 %v5871
    %v5873 = vpop.xlane.xlu0 %5872
    %v5874 = vsel %vm5825, %v5713, 0.0
    %5875 = vadd.xlane.f32.xlu0 %v5874
    %v5876 = vpop.xlane.xlu0 %5875
    %v5877 = vsel %vm5825, %v5714, 0.0
    %5878 = vadd.xlane.f32.xlu0 %v5877
    %v5879 = vpop.xlane.xlu0 %5878
    %v5880 = vsel %vm5825, %v5715, 0.0
    %5881 = vadd.xlane.f32.xlu0 %v5880
    %v5882 = vpop.xlane.xlu0 %5881
    %v5883 = vsel %vm5825, %v5716, 0.0
    %5884 = vadd.xlane.f32.xlu0 %v5883
    %v5885 = vpop.xlane.xlu0 %5884
    %v5886 = vsel %vm5825, %v5717, 0.0
    %5887 = vadd.xlane.f32.xlu0 %v5886
    %v5888 = vpop.xlane.xlu0 %5887
    %v5889 = vsel %vm5825, %v5718, 0.0
    %5890 = vadd.xlane.f32.xlu0 %v5889
    %v5891 = vpop.xlane.xlu0 %5890
    %v5892 = vsel %vm5825, %v5719, 0.0
    %5893 = vadd.xlane.f32.xlu0 %v5892
    %v5894 = vpop.xlane.xlu0 %5893
    %v5895 = vsel %vm5825, %v5720, 0.0
    %5896 = vadd.xlane.f32.xlu0 %v5895
    %v5897 = vpop.xlane.xlu0 %5896
    %v5898 = vsel %vm5825, %v5721, 0.0
    %5899 = vadd.xlane.f32.xlu0 %v5898
    %v5900 = vpop.xlane.xlu0 %5899
    %v5901 = vsel %vm5825, %v5722, 0.0
    %5902 = vadd.xlane.f32.xlu0 %v5901
    %v5903 = vpop.xlane.xlu0 %5902
    %v5904 = vsel %vm5825, %v5723, 0.0
    %5905 = vadd.xlane.f32.xlu0 %v5904
    %v5906 = vpop.xlane.xlu0 %5905
    %v5907 = vsel %vm5825, %v5724, 0.0
    %5908 = vadd.xlane.f32.xlu0 %v5907
    %v5909 = vpop.xlane.xlu0 %5908
    %v5910 = vsel %vm5825, %v5725, 0.0
    %5911 = vadd.xlane.f32.xlu0 %v5910
    %v5912 = vpop.xlane.xlu0 %5911
    %v5913 = vsel %vm5825, %v5726, 0.0
    %5914 = vadd.xlane.f32.xlu0 %v5913
    %v5915 = vpop.xlane.xlu0 %5914
    %v5916 = vsel %vm5825, %v5727, 0.0
    %5917 = vadd.xlane.f32.xlu0 %v5916
    %v5918 = vpop.xlane.xlu0 %5917
    %v5919 = vsel %vm5825, %v5728, 0.0
    %5920 = vadd.xlane.f32.xlu0 %v5919
    %v5921 = vpop.xlane.xlu0 %5920
    %v5922 = vsel %vm5825, %v5729, 0.0
    %5923 = vadd.xlane.f32.xlu0 %v5922
    %v5924 = vpop.xlane.xlu0 %5923
    %v5925 = vsel %vm5825, %v5730, 0.0
    %5926 = vadd.xlane.f32.xlu0 %v5925
    %v5927 = vpop.xlane.xlu0 %5926
    %v5928 = vsel %vm5825, %v5731, 0.0
    %5929 = vadd.xlane.f32.xlu0 %v5928
    %v5930 = vpop.xlane.xlu0 %5929
    %v5931 = vsel %vm5825, %v5732, 0.0
    %5932 = vadd.xlane.f32.xlu0 %v5931
    %v5933 = vpop.xlane.xlu0 %5932
    %v5934 = vsel %vm5825, %v5733, 0.0
    %5935 = vadd.xlane.f32.xlu0 %v5934
    %v5936 = vpop.xlane.xlu0 %5935
    %v5937 = vsel %vm5825, %v5734, 0.0
    %5938 = vadd.xlane.f32.xlu0 %v5937
    %v5939 = vpop.xlane.xlu0 %5938
    %v5940 = vsel %vm5825, %v5735, 0.0
    %5941 = vadd.xlane.f32.xlu0 %v5940
    %v5942 = vpop.xlane.xlu0 %5941
    %v5943 = vsel %vm5825, %v5736, 0.0
    %5944 = vadd.xlane.f32.xlu0 %v5943
    %v5945 = vpop.xlane.xlu0 %5944
    %v5946 = vsel %vm5825, %v5737, 0.0
    %5947 = vadd.xlane.f32.xlu0 %v5946
    %v5948 = vpop.xlane.xlu0 %5947
    %v5949 = vsel %vm5825, %v5738, 0.0
    %5950 = vadd.xlane.f32.xlu0 %v5949
    %v5951 = vpop.xlane.xlu0 %5950
    %v5952 = vsel %vm5825, %v5739, 0.0
    %5953 = vadd.xlane.f32.xlu0 %v5952
    %v5954 = vpop.xlane.xlu0 %5953
    %v5955 = vsel %vm5825, %v5740, 0.0
    %5956 = vadd.xlane.f32.xlu0 %v5955
    %v5957 = vpop.xlane.xlu0 %5956
    %v5958 = vsel %vm5825, %v5741, 0.0
    %5959 = vadd.xlane.f32.xlu0 %v5958
    %v5960 = vpop.xlane.xlu0 %5959
    %v5961 = vsel %vm5825, %v5742, 0.0
    %5962 = vadd.xlane.f32.xlu0 %v5961
    %v5963 = vpop.xlane.xlu0 %5962
    %v5964 = vsel %vm5825, %v5743, 0.0
    %5965 = vadd.xlane.f32.xlu0 %v5964
    %v5966 = vpop.xlane.xlu0 %5965
    %v5967 = vsel %vm5825, %v5744, 0.0
    %5968 = vadd.xlane.f32.xlu0 %v5967
    %v5969 = vpop.xlane.xlu0 %5968
    %v5970 = vsel %vm5825, %v5745, 0.0
    %5971 = vadd.xlane.f32.xlu0 %v5970
    %v5972 = vpop.xlane.xlu0 %5971
    %v5973 = vsel %vm5825, %v5746, 0.0
    %5974 = vadd.xlane.f32.xlu0 %v5973
    %v5975 = vpop.xlane.xlu0 %5974
    %v5976 = vsel %vm5825, %v5747, 0.0
    %5977 = vadd.xlane.f32.xlu0 %v5976
    %v5978 = vpop.xlane.xlu0 %5977
    %v5979 = vsel %vm5825, %v5748, 0.0
    %5980 = vadd.xlane.f32.xlu0 %v5979
    %v5981 = vpop.xlane.xlu0 %5980
    %v5982 = vsel %vm5825, %v5749, 0.0
    %5983 = vadd.xlane.f32.xlu0 %v5982
    %v5984 = vpop.xlane.xlu0 %5983
    %v5985 = vsel %vm5825, %v5750, 0.0
    %5986 = vadd.xlane.f32.xlu0 %v5985
    %v5987 = vpop.xlane.xlu0 %5986
    %v5988 = vsel %vm5825, %v5751, 0.0
    %5989 = vadd.xlane.f32.xlu0 %v5988
    %v5990 = vpop.xlane.xlu0 %5989
    %v5991 = vsel %vm5825, %v5752, 0.0
    %5992 = vadd.xlane.f32.xlu0 %v5991
    %v5993 = vpop.xlane.xlu0 %5992
    %v5994 = vsel %vm5825, %v5753, 0.0
    %5995 = vadd.xlane.f32.xlu0 %v5994
    %v5996 = vpop.xlane.xlu0 %5995
    %v5997 = vsel %vm5825, %v5754, 0.0
    %5998 = vadd.xlane.f32.xlu0 %v5997
    %v5999 = vpop.xlane.xlu0 %5998
    %v6000 = vsel %vm5825, %v5755, 0.0
    %6001 = vadd.xlane.f32.xlu0 %v6000
    %v6002 = vpop.xlane.xlu0 %6001
    %v6003 = vsel %vm5825, %v5756, 0.0
    %6004 = vadd.xlane.f32.xlu0 %v6003
    %v6005 = vpop.xlane.xlu0 %6004
    %v6006 = vsel %vm5825, %v5757, 0.0
    %6007 = vadd.xlane.f32.xlu0 %v6006
    %v6008 = vpop.xlane.xlu0 %6007
    %v6009 = vsel %vm5825, %v5758, 0.0
    %6010 = vadd.xlane.f32.xlu0 %v6009
    %v6011 = vpop.xlane.xlu0 %6010
    %v6012 = vsel %vm5825, %v5759, 0.0
    %6013 = vadd.xlane.f32.xlu0 %v6012
    %v6014 = vpop.xlane.xlu0 %6013
    %v6015 = vsel %vm5825, %v5760, 0.0
    %6016 = vadd.xlane.f32.xlu0 %v6015
    %v6017 = vpop.xlane.xlu0 %6016
    %v6018 = vsel %vm5825, %v5761, 0.0
    %6019 = vadd.xlane.f32.xlu0 %v6018
    %v6020 = vpop.xlane.xlu0 %6019
    %v6021 = vsel %vm5825, %v5762, 0.0
    %6022 = vadd.xlane.f32.xlu0 %v6021
    %v6023 = vpop.xlane.xlu0 %6022
    %v6024 = vsel %vm5825, %v5763, 0.0
    %6025 = vadd.xlane.f32.xlu0 %v6024
    %v6026 = vpop.xlane.xlu0 %6025
    %v6027 = vsel %vm5825, %v5764, 0.0
    %6028 = vadd.xlane.f32.xlu0 %v6027
    %v6029 = vpop.xlane.xlu0 %6028
    %v6030 = vsel %vm5825, %v5765, 0.0
    %6031 = vadd.xlane.f32.xlu0 %v6030
    %v6032 = vpop.xlane.xlu0 %6031
    %v6033 = vsel %vm5825, %v5766, 0.0
    %6034 = vadd.xlane.f32.xlu0 %v6033
    %v6035 = vpop.xlane.xlu0 %6034
    %v6036 = vsel %vm5825, %v5767, 0.0
    %6037 = vadd.xlane.f32.xlu0 %v6036
    %v6038 = vpop.xlane.xlu0 %6037
    %v6039 = vsel %vm5825, %v5768, 0.0
    %6040 = vadd.xlane.f32.xlu0 %v6039
    %v6041 = vpop.xlane.xlu0 %6040
    %v6042 = vsel %vm5825, %v5769, 0.0
    %6043 = vadd.xlane.f32.xlu0 %v6042
    %v6044 = vpop.xlane.xlu0 %6043
    %v6045 = vsel %vm5825, %v5770, 0.0
    %6046 = vadd.xlane.f32.xlu0 %v6045
    %v6047 = vpop.xlane.xlu0 %6046
    %v6048 = vsel %vm5825, %v5771, 0.0
    %6049 = vadd.xlane.f32.xlu0 %v6048
    %v6050 = vpop.xlane.xlu0 %6049
    %v6051 = vsel %vm5825, %v5772, 0.0
    %6052 = vadd.xlane.f32.xlu0 %v6051
    %v6053 = vpop.xlane.xlu0 %6052
    %v6054 = vsel %vm5825, %v5773, 0.0
    %6055 = vadd.xlane.f32.xlu0 %v6054
    %v6056 = vpop.xlane.xlu0 %6055
    %v6057 = vsel %vm5825, %v5774, 0.0
    %6058 = vadd.xlane.f32.xlu0 %v6057
    %v6059 = vpop.xlane.xlu0 %6058
    %v6060 = vsel %vm5825, %v5775, 0.0
    %6061 = vadd.xlane.f32.xlu0 %v6060
    %v6062 = vpop.xlane.xlu0 %6061
    %v6063 = vsel %vm5825, %v5776, 0.0
    %6064 = vadd.xlane.f32.xlu0 %v6063
    %v6065 = vpop.xlane.xlu0 %6064
    %v6066 = vsel %vm5825, %v5777, 0.0
    %6067 = vadd.xlane.f32.xlu0 %v6066
    %v6068 = vpop.xlane.xlu0 %6067
    %v6069 = vsel %vm5825, %v5778, 0.0
    %6070 = vadd.xlane.f32.xlu0 %v6069
    %v6071 = vpop.xlane.xlu0 %6070
    %v6072 = vsel %vm5825, %v5779, 0.0
    %6073 = vadd.xlane.f32.xlu0 %v6072
    %v6074 = vpop.xlane.xlu0 %6073
    %v6075 = vsel %vm5825, %v5780, 0.0
    %6076 = vadd.xlane.f32.xlu0 %v6075
    %v6077 = vpop.xlane.xlu0 %6076
    %v6078 = vsel %vm5825, %v5781, 0.0
    %6079 = vadd.xlane.f32.xlu0 %v6078
    %v6080 = vpop.xlane.xlu0 %6079
    %v6081 = vsel %vm5825, %v5782, 0.0
    %6082 = vadd.xlane.f32.xlu0 %v6081
    %v6083 = vpop.xlane.xlu0 %6082
    %v6084 = vsel %vm5825, %v5783, 0.0
    %6085 = vadd.xlane.f32.xlu0 %v6084
    %v6086 = vpop.xlane.xlu0 %6085
    %v6087 = vsel %vm5825, %v5784, 0.0
    %6088 = vadd.xlane.f32.xlu0 %v6087
    %v6089 = vpop.xlane.xlu0 %6088
    %v6090 = vsel %vm5825, %v5785, 0.0
    %6091 = vadd.xlane.f32.xlu0 %v6090
    %v6092 = vpop.xlane.xlu0 %6091
    %v6093 = vsel %vm5825, %v5786, 0.0
    %6094 = vadd.xlane.f32.xlu0 %v6093
    %v6095 = vpop.xlane.xlu0 %6094
    %v6096 = vsel %vm5825, %v5787, 0.0
    %6097 = vadd.xlane.f32.xlu0 %v6096
    %v6098 = vpop.xlane.xlu0 %6097
    %v6099 = vsel %vm5825, %v5788, 0.0
    %6100 = vadd.xlane.f32.xlu0 %v6099
    %v6101 = vpop.xlane.xlu0 %6100
    %v6102 = vsel %vm5825, %v5789, 0.0
    %6103 = vadd.xlane.f32.xlu0 %v6102
    %v6104 = vpop.xlane.xlu0 %6103
    %v6105 = vsel %vm5825, %v5790, 0.0
    %6106 = vadd.xlane.f32.xlu0 %v6105
    %v6107 = vpop.xlane.xlu0 %6106
    %v6108 = vsel %vm5825, %v5791, 0.0
    %6109 = vadd.xlane.f32.xlu0 %v6108
    %v6110 = vpop.xlane.xlu0 %6109
    %v6111 = vsel %vm5825, %v5792, 0.0
    %6112 = vadd.xlane.f32.xlu0 %v6111
    %v6113 = vpop.xlane.xlu0 %6112
    %v6114 = vsel %vm5825, %v5793, 0.0
    %6115 = vadd.xlane.f32.xlu0 %v6114
    %v6116 = vpop.xlane.xlu0 %6115
    %v6117 = vsel %vm5825, %v5794, 0.0
    %6118 = vadd.xlane.f32.xlu0 %v6117
    %v6119 = vpop.xlane.xlu0 %6118
    %v6120 = vsel %vm5825, %v5795, 0.0
    %6121 = vadd.xlane.f32.xlu0 %v6120
    %v6122 = vpop.xlane.xlu0 %6121
    %v6123 = vsel %vm5825, %v5796, 0.0
    %6124 = vadd.xlane.f32.xlu0 %v6123
    %v6125 = vpop.xlane.xlu0 %6124
    %v6126 = vsel %vm5825, %v5797, 0.0
    %6127 = vadd.xlane.f32.xlu0 %v6126
    %v6128 = vpop.xlane.xlu0 %6127
    %v6129 = vsel %vm5825, %v5798, 0.0
    %6130 = vadd.xlane.f32.xlu0 %v6129
    %v6131 = vpop.xlane.xlu0 %6130
    %v6132 = vsel %vm5825, %v5799, 0.0
    %6133 = vadd.xlane.f32.xlu0 %v6132
    %v6134 = vpop.xlane.xlu0 %6133
    %v6135 = vsel %vm5825, %v5800, 0.0
    %6136 = vadd.xlane.f32.xlu0 %v6135
    %v6137 = vpop.xlane.xlu0 %6136
    %v6138 = vsel %vm5825, %v5801, 0.0
    %6139 = vadd.xlane.f32.xlu0 %v6138
    %v6140 = vpop.xlane.xlu0 %6139
    %v6141 = vsel %vm5825, %v5802, 0.0
    %6142 = vadd.xlane.f32.xlu0 %v6141
    %v6143 = vpop.xlane.xlu0 %6142
    %v6144 = vsel %vm5825, %v5803, 0.0
    %6145 = vadd.xlane.f32.xlu0 %v6144
    %v6146 = vpop.xlane.xlu0 %6145
    %v6147 = vsel %vm5825, %v5804, 0.0
    %6148 = vadd.xlane.f32.xlu0 %v6147
    %v6149 = vpop.xlane.xlu0 %6148
    %v6150 = vsel %vm5825, %v5805, 0.0
    %6151 = vadd.xlane.f32.xlu0 %v6150
    %v6152 = vpop.xlane.xlu0 %6151
    %v6153 = vsel %vm5825, %v5806, 0.0
    %6154 = vadd.xlane.f32.xlu0 %v6153
    %v6155 = vpop.xlane.xlu0 %6154
    %v6156 = vsel %vm5825, %v5807, 0.0
    %6157 = vadd.xlane.f32.xlu0 %v6156
    %v6158 = vpop.xlane.xlu0 %6157
    %v6159 = vsel %vm5825, %v5808, 0.0
    %6160 = vadd.xlane.f32.xlu0 %v6159
    %v6161 = vpop.xlane.xlu0 %6160
    %v6162 = vsel %vm5825, %v5809, 0.0
    %6163 = vadd.xlane.f32.xlu0 %v6162
    %v6164 = vpop.xlane.xlu0 %6163
    %v6165 = vsel %vm5825, %v5810, 0.0
    %6166 = vadd.xlane.f32.xlu0 %v6165
    %v6167 = vpop.xlane.xlu0 %6166
    %v6168 = vsel %vm5825, %v5811, 0.0
    %6169 = vadd.xlane.f32.xlu0 %v6168
    %v6170 = vpop.xlane.xlu0 %6169
    %v6171 = vsel %vm5825, %v5812, 0.0
    %6172 = vadd.xlane.f32.xlu0 %v6171
    %v6173 = vpop.xlane.xlu0 %6172
    %v6174 = vsel %vm5825, %v5813, 0.0
    %6175 = vadd.xlane.f32.xlu0 %v6174
    %v6176 = vpop.xlane.xlu0 %6175
    %v6177 = vsel %vm5825, %v5814, 0.0
    %6178 = vadd.xlane.f32.xlu0 %v6177
    %v6179 = vpop.xlane.xlu0 %6178
    %v6180 = vsel %vm5825, %v5815, 0.0
    %6181 = vadd.xlane.f32.xlu0 %v6180
    %v6182 = vpop.xlane.xlu0 %6181
    %v6183 = vsel %vm5825, %v5816, 0.0
    %6184 = vadd.xlane.f32.xlu0 %v6183
    %v6185 = vpop.xlane.xlu0 %6184
    %v6186 = vsel %vm5825, %v5817, 0.0
    %6187 = vadd.xlane.f32.xlu0 %v6186
    %v6188 = vpop.xlane.xlu0 %6187
    %v6189 = vsel %vm5825, %v5818, 0.0
    %6190 = vadd.xlane.f32.xlu0 %v6189
    %v6191 = vpop.xlane.xlu0 %6190
    %v6192 = vsel %vm5825, %v5819, 0.0
    %6193 = vadd.xlane.f32.xlu0 %v6192
    %v6194 = vpop.xlane.xlu0 %6193
    %v6195 = vsel %vm5825, %v5820, 0.0
    %6196 = vadd.xlane.f32.xlu0 %v6195
    %v6197 = vpop.xlane.xlu0 %6196
    %v6198 = vsel %vm5825, %v5821, 0.0
    %6199 = vadd.xlane.f32.xlu0 %v6198
    %v6200 = vpop.xlane.xlu0 %6199
    %v6201 = vsel %vm5825, %v5822, 0.0
    %6202 = vadd.xlane.f32.xlu0 %v6201
    %v6203 = vpop.xlane.xlu0 %6202
    %v6204 = vsel %vm5825, %v5823, 0.0
    %6205 = vadd.xlane.f32.xlu0 %v6204
    %v6206 = vpop.xlane.xlu0 %6205
    %v6207 = vsel %vm5825, %v5824, 0.0
    %6208 = vadd.xlane.f32.xlu0 %v6207
    %v6209 = vpop.xlane.xlu0 %6208
    %s6210 = sld [smem:[#allocation2]]
    %v6211 = vstv %s6210
    %v6212 = vadd.f32 %v5828, %v6211
    %v6213 = vadd.f32 %v5831, %v6211
    %v6214 = vadd.f32 %v5834, %v6211
    %v6215 = vadd.f32 %v5837, %v6211
    %v6216 = vadd.f32 %v5840, %v6211
    %v6217 = vadd.f32 %v5843, %v6211
    %v6218 = vadd.f32 %v5846, %v6211
    %v6219 = vadd.f32 %v5849, %v6211
    %v6220 = vadd.f32 %v5852, %v6211
    %v6221 = vadd.f32 %v5855, %v6211
    %v6222 = vadd.f32 %v5858, %v6211
    %v6223 = vadd.f32 %v5861, %v6211
    %v6224 = vadd.f32 %v5864, %v6211
    %v6225 = vadd.f32 %v5867, %v6211
    %v6226 = vadd.f32 %v5870, %v6211
    %v6227 = vadd.f32 %v5873, %v6211
    %v6228 = vadd.f32 %v5876, %v6211
    %v6229 = vadd.f32 %v5879, %v6211
    %v6230 = vadd.f32 %v5882, %v6211
    %v6231 = vadd.f32 %v5885, %v6211
    %v6232 = vadd.f32 %v5888, %v6211
    %v6233 = vadd.f32 %v5891, %v6211
    %v6234 = vadd.f32 %v5894, %v6211
    %v6235 = vadd.f32 %v5897, %v6211
    %v6236 = vadd.f32 %v5900, %v6211
    %v6237 = vadd.f32 %v5903, %v6211
    %v6238 = vadd.f32 %v5906, %v6211
    %v6239 = vadd.f32 %v5909, %v6211
    %v6240 = vadd.f32 %v5912, %v6211
    %v6241 = vadd.f32 %v5915, %v6211
    %v6242 = vadd.f32 %v5918, %v6211
    %v6243 = vadd.f32 %v5921, %v6211
    %v6244 = vadd.f32 %v5924, %v6211
    %v6245 = vadd.f32 %v5927, %v6211
    %v6246 = vadd.f32 %v5930, %v6211
    %v6247 = vadd.f32 %v5933, %v6211
    %v6248 = vadd.f32 %v5936, %v6211
    %v6249 = vadd.f32 %v5939, %v6211
    %v6250 = vadd.f32 %v5942, %v6211
    %v6251 = vadd.f32 %v5945, %v6211
    %v6252 = vadd.f32 %v5948, %v6211
    %v6253 = vadd.f32 %v5951, %v6211
    %v6254 = vadd.f32 %v5954, %v6211
    %v6255 = vadd.f32 %v5957, %v6211
    %v6256 = vadd.f32 %v5960, %v6211
    %v6257 = vadd.f32 %v5963, %v6211
    %v6258 = vadd.f32 %v5966, %v6211
    %v6259 = vadd.f32 %v5969, %v6211
    %v6260 = vadd.f32 %v5972, %v6211
    %v6261 = vadd.f32 %v5975, %v6211
    %v6262 = vadd.f32 %v5978, %v6211
    %v6263 = vadd.f32 %v5981, %v6211
    %v6264 = vadd.f32 %v5984, %v6211
    %v6265 = vadd.f32 %v5987, %v6211
    %v6266 = vadd.f32 %v5990, %v6211
    %v6267 = vadd.f32 %v5993, %v6211
    %v6268 = vadd.f32 %v5996, %v6211
    %v6269 = vadd.f32 %v5999, %v6211
    %v6270 = vadd.f32 %v6002, %v6211
    %v6271 = vadd.f32 %v6005, %v6211
    %v6272 = vadd.f32 %v6008, %v6211
    %v6273 = vadd.f32 %v6011, %v6211
    %v6274 = vadd.f32 %v6014, %v6211
    %v6275 = vadd.f32 %v6017, %v6211
    %v6276 = vadd.f32 %v6020, %v6211
    %v6277 = vadd.f32 %v6023, %v6211
    %v6278 = vadd.f32 %v6026, %v6211
    %v6279 = vadd.f32 %v6029, %v6211
    %v6280 = vadd.f32 %v6032, %v6211
    %v6281 = vadd.f32 %v6035, %v6211
    %v6282 = vadd.f32 %v6038, %v6211
    %v6283 = vadd.f32 %v6041, %v6211
    %v6284 = vadd.f32 %v6044, %v6211
    %v6285 = vadd.f32 %v6047, %v6211
    %v6286 = vadd.f32 %v6050, %v6211
    %v6287 = vadd.f32 %v6053, %v6211
    %v6288 = vadd.f32 %v6056, %v6211
    %v6289 = vadd.f32 %v6059, %v6211
    %v6290 = vadd.f32 %v6062, %v6211
    %v6291 = vadd.f32 %v6065, %v6211
    %v6292 = vadd.f32 %v6068, %v6211
    %v6293 = vadd.f32 %v6071, %v6211
    %v6294 = vadd.f32 %v6074, %v6211
    %v6295 = vadd.f32 %v6077, %v6211
    %v6296 = vadd.f32 %v6080, %v6211
    %v6297 = vadd.f32 %v6083, %v6211
    %v6298 = vadd.f32 %v6086, %v6211
    %v6299 = vadd.f32 %v6089, %v6211
    %v6300 = vadd.f32 %v6092, %v6211
    %v6301 = vadd.f32 %v6095, %v6211
    %v6302 = vadd.f32 %v6098, %v6211
    %v6303 = vadd.f32 %v6101, %v6211
    %v6304 = vadd.f32 %v6104, %v6211
    %v6305 = vadd.f32 %v6107, %v6211
    %v6306 = vadd.f32 %v6110, %v6211
    %v6307 = vadd.f32 %v6113, %v6211
    %v6308 = vadd.f32 %v6116, %v6211
    %v6309 = vadd.f32 %v6119, %v6211
    %v6310 = vadd.f32 %v6122, %v6211
    %v6311 = vadd.f32 %v6125, %v6211
    %v6312 = vadd.f32 %v6128, %v6211
    %v6313 = vadd.f32 %v6131, %v6211
    %v6314 = vadd.f32 %v6134, %v6211
    %v6315 = vadd.f32 %v6137, %v6211
    %v6316 = vadd.f32 %v6140, %v6211
    %v6317 = vadd.f32 %v6143, %v6211
    %v6318 = vadd.f32 %v6146, %v6211
    %v6319 = vadd.f32 %v6149, %v6211
    %v6320 = vadd.f32 %v6152, %v6211
    %v6321 = vadd.f32 %v6155, %v6211
    %v6322 = vadd.f32 %v6158, %v6211
    %v6323 = vadd.f32 %v6161, %v6211
    %v6324 = vadd.f32 %v6164, %v6211
    %v6325 = vadd.f32 %v6167, %v6211
    %v6326 = vadd.f32 %v6170, %v6211
    %v6327 = vadd.f32 %v6173, %v6211
    %v6328 = vadd.f32 %v6176, %v6211
    %v6329 = vadd.f32 %v6179, %v6211
    %v6330 = vadd.f32 %v6182, %v6211
    %v6331 = vadd.f32 %v6185, %v6211
    %v6332 = vadd.f32 %v6188, %v6211
    %v6333 = vadd.f32 %v6191, %v6211
    %v6334 = vadd.f32 %v6194, %v6211
    %v6335 = vadd.f32 %v6197, %v6211
    %v6336 = vadd.f32 %v6200, %v6211
    %v6337 = vadd.f32 %v6203, %v6211
    %v6338 = vadd.f32 %v6206, %v6211
    %v6339 = vadd.f32 %v6209, %v6211
    %v6340 = vxor.u32 %v6212, 2147483648
    %v6341 = vxor.u32 %v6213, 2147483648
    %v6342 = vxor.u32 %v6214, 2147483648
    %v6343 = vxor.u32 %v6215, 2147483648
    %v6344 = vxor.u32 %v6216, 2147483648
    %v6345 = vxor.u32 %v6217, 2147483648
    %v6346 = vxor.u32 %v6218, 2147483648
    %v6347 = vxor.u32 %v6219, 2147483648
    %v6348 = vxor.u32 %v6220, 2147483648
    %v6349 = vxor.u32 %v6221, 2147483648
    %v6350 = vxor.u32 %v6222, 2147483648
    %v6351 = vxor.u32 %v6223, 2147483648
    %v6352 = vxor.u32 %v6224, 2147483648
    %v6353 = vxor.u32 %v6225, 2147483648
    %v6354 = vxor.u32 %v6226, 2147483648
    %v6355 = vxor.u32 %v6227, 2147483648
    %v6356 = vxor.u32 %v6228, 2147483648
    %v6357 = vxor.u32 %v6229, 2147483648
    %v6358 = vxor.u32 %v6230, 2147483648
    %v6359 = vxor.u32 %v6231, 2147483648
    %v6360 = vxor.u32 %v6232, 2147483648
    %v6361 = vxor.u32 %v6233, 2147483648
    %v6362 = vxor.u32 %v6234, 2147483648
    %v6363 = vxor.u32 %v6235, 2147483648
    %v6364 = vxor.u32 %v6236, 2147483648
    %v6365 = vxor.u32 %v6237, 2147483648
    %v6366 = vxor.u32 %v6238, 2147483648
    %v6367 = vxor.u32 %v6239, 2147483648
    %v6368 = vxor.u32 %v6240, 2147483648
    %v6369 = vxor.u32 %v6241, 2147483648
    %v6370 = vxor.u32 %v6242, 2147483648
    %v6371 = vxor.u32 %v6243, 2147483648
    %v6372 = vxor.u32 %v6244, 2147483648
    %v6373 = vxor.u32 %v6245, 2147483648
    %v6374 = vxor.u32 %v6246, 2147483648
    %v6375 = vxor.u32 %v6247, 2147483648
    %v6376 = vxor.u32 %v6248, 2147483648
    %v6377 = vxor.u32 %v6249, 2147483648
    %v6378 = vxor.u32 %v6250, 2147483648
    %v6379 = vxor.u32 %v6251, 2147483648
    %v6380 = vxor.u32 %v6252, 2147483648
    %v6381 = vxor.u32 %v6253, 2147483648
    %v6382 = vxor.u32 %v6254, 2147483648
    %v6383 = vxor.u32 %v6255, 2147483648
    %v6384 = vxor.u32 %v6256, 2147483648
    %v6385 = vxor.u32 %v6257, 2147483648
    %v6386 = vxor.u32 %v6258, 2147483648
    %v6387 = vxor.u32 %v6259, 2147483648
    %v6388 = vxor.u32 %v6260, 2147483648
    %v6389 = vxor.u32 %v6261, 2147483648
    %v6390 = vxor.u32 %v6262, 2147483648
    %v6391 = vxor.u32 %v6263, 2147483648
    %v6392 = vxor.u32 %v6264, 2147483648
    %v6393 = vxor.u32 %v6265, 2147483648
    %v6394 = vxor.u32 %v6266, 2147483648
    %v6395 = vxor.u32 %v6267, 2147483648
    %v6396 = vxor.u32 %v6268, 2147483648
    %v6397 = vxor.u32 %v6269, 2147483648
    %v6398 = vxor.u32 %v6270, 2147483648
    %v6399 = vxor.u32 %v6271, 2147483648
    %v6400 = vxor.u32 %v6272, 2147483648
    %v6401 = vxor.u32 %v6273, 2147483648
    %v6402 = vxor.u32 %v6274, 2147483648
    %v6403 = vxor.u32 %v6275, 2147483648
    %v6404 = vxor.u32 %v6276, 2147483648
    %v6405 = vxor.u32 %v6277, 2147483648
    %v6406 = vxor.u32 %v6278, 2147483648
    %v6407 = vxor.u32 %v6279, 2147483648
    %v6408 = vxor.u32 %v6280, 2147483648
    %v6409 = vxor.u32 %v6281, 2147483648
    %v6410 = vxor.u32 %v6282, 2147483648
    %v6411 = vxor.u32 %v6283, 2147483648
    %v6412 = vxor.u32 %v6284, 2147483648
    %v6413 = vxor.u32 %v6285, 2147483648
    %v6414 = vxor.u32 %v6286, 2147483648
    %v6415 = vxor.u32 %v6287, 2147483648
    %v6416 = vxor.u32 %v6288, 2147483648
    %v6417 = vxor.u32 %v6289, 2147483648
    %v6418 = vxor.u32 %v6290, 2147483648
    %v6419 = vxor.u32 %v6291, 2147483648
    %v6420 = vxor.u32 %v6292, 2147483648
    %v6421 = vxor.u32 %v6293, 2147483648
    %v6422 = vxor.u32 %v6294, 2147483648
    %v6423 = vxor.u32 %v6295, 2147483648
    %v6424 = vxor.u32 %v6296, 2147483648
    %v6425 = vxor.u32 %v6297, 2147483648
    %v6426 = vxor.u32 %v6298, 2147483648
    %v6427 = vxor.u32 %v6299, 2147483648
    %v6428 = vxor.u32 %v6300, 2147483648
    %v6429 = vxor.u32 %v6301, 2147483648
    %v6430 = vxor.u32 %v6302, 2147483648
    %v6431 = vxor.u32 %v6303, 2147483648
    %v6432 = vxor.u32 %v6304, 2147483648
    %v6433 = vxor.u32 %v6305, 2147483648
    %v6434 = vxor.u32 %v6306, 2147483648
    %v6435 = vxor.u32 %v6307, 2147483648
    %v6436 = vxor.u32 %v6308, 2147483648
    %v6437 = vxor.u32 %v6309, 2147483648
    %v6438 = vxor.u32 %v6310, 2147483648
    %v6439 = vxor.u32 %v6311, 2147483648
    %v6440 = vxor.u32 %v6312, 2147483648
    %v6441 = vxor.u32 %v6313, 2147483648
    %v6442 = vxor.u32 %v6314, 2147483648
    %v6443 = vxor.u32 %v6315, 2147483648
    %v6444 = vxor.u32 %v6316, 2147483648
    %v6445 = vxor.u32 %v6317, 2147483648
    %v6446 = vxor.u32 %v6318, 2147483648
    %v6447 = vxor.u32 %v6319, 2147483648
    %v6448 = vxor.u32 %v6320, 2147483648
    %v6449 = vxor.u32 %v6321, 2147483648
    %v6450 = vxor.u32 %v6322, 2147483648
    %v6451 = vxor.u32 %v6323, 2147483648
    %v6452 = vxor.u32 %v6324, 2147483648
    %v6453 = vxor.u32 %v6325, 2147483648
    %v6454 = vxor.u32 %v6326, 2147483648
    %v6455 = vxor.u32 %v6327, 2147483648
    %v6456 = vxor.u32 %v6328, 2147483648
    %v6457 = vxor.u32 %v6329, 2147483648
    %v6458 = vxor.u32 %v6330, 2147483648
    %v6459 = vxor.u32 %v6331, 2147483648
    %v6460 = vxor.u32 %v6332, 2147483648
    %v6461 = vxor.u32 %v6333, 2147483648
    %v6462 = vxor.u32 %v6334, 2147483648
    %v6463 = vxor.u32 %v6335, 2147483648
    %v6464 = vxor.u32 %v6336, 2147483648
    %v6465 = vxor.u32 %v6337, 2147483648
    %v6466 = vxor.u32 %v6338, 2147483648
    %v6467 = vxor.u32 %v6339, 2147483648
    %v6468 = vmul.f32 %v6340, 1.442695
    %v6469 = vpow.pop %v6468
    %v6470 = vmul.f32 %v6341, 1.442695
    %v6471 = vpow.pop %v6470
    %v6472 = vmul.f32 %v6342, 1.442695
    %v6473 = vpow.pop %v6472
    %v6474 = vmul.f32 %v6343, 1.442695
    %v6475 = vpow.pop %v6474
    %v6476 = vmul.f32 %v6344, 1.442695
    %v6477 = vpow.pop %v6476
    %v6478 = vmul.f32 %v6345, 1.442695
    %v6479 = vpow.pop %v6478
    %v6480 = vmul.f32 %v6346, 1.442695
    %v6481 = vpow.pop %v6480
    %v6482 = vmul.f32 %v6347, 1.442695
    %v6483 = vpow.pop %v6482
    %v6484 = vmul.f32 %v6348, 1.442695
    %v6485 = vpow.pop %v6484
    %v6486 = vmul.f32 %v6349, 1.442695
    %v6487 = vpow.pop %v6486
    %v6488 = vmul.f32 %v6350, 1.442695
    %v6489 = vpow.pop %v6488
    %v6490 = vmul.f32 %v6351, 1.442695
    %v6491 = vpow.pop %v6490
    %v6492 = vmul.f32 %v6352, 1.442695
    %v6493 = vpow.pop %v6492
    %v6494 = vmul.f32 %v6353, 1.442695
    %v6495 = vpow.pop %v6494
    %v6496 = vmul.f32 %v6354, 1.442695
    %v6497 = vpow.pop %v6496
    %v6498 = vmul.f32 %v6355, 1.442695
    %v6499 = vpow.pop %v6498
    %v6500 = vmul.f32 %v6356, 1.442695
    %v6501 = vpow.pop %v6500
    %v6502 = vmul.f32 %v6357, 1.442695
    %v6503 = vpow.pop %v6502
    %v6504 = vmul.f32 %v6358, 1.442695
    %v6505 = vpow.pop %v6504
    %v6506 = vmul.f32 %v6359, 1.442695
    %v6507 = vpow.pop %v6506
    %v6508 = vmul.f32 %v6360, 1.442695
    %v6509 = vpow.pop %v6508
    %v6510 = vmul.f32 %v6361, 1.442695
    %v6511 = vpow.pop %v6510
    %v6512 = vmul.f32 %v6362, 1.442695
    %v6513 = vpow.pop %v6512
    %v6514 = vmul.f32 %v6363, 1.442695
    %v6515 = vpow.pop %v6514
    %v6516 = vmul.f32 %v6364, 1.442695
    %v6517 = vpow.pop %v6516
    %v6518 = vmul.f32 %v6365, 1.442695
    %v6519 = vpow.pop %v6518
    %v6520 = vmul.f32 %v6366, 1.442695
    %v6521 = vpow.pop %v6520
    %v6522 = vmul.f32 %v6367, 1.442695
    %v6523 = vpow.pop %v6522
    %v6524 = vmul.f32 %v6368, 1.442695
    %v6525 = vpow.pop %v6524
    %v6526 = vmul.f32 %v6369, 1.442695
    %v6527 = vpow.pop %v6526
    %v6528 = vmul.f32 %v6370, 1.442695
    %v6529 = vpow.pop %v6528
    %v6530 = vmul.f32 %v6371, 1.442695
    %v6531 = vpow.pop %v6530
    %v6532 = vmul.f32 %v6372, 1.442695
    %v6533 = vpow.pop %v6532
    %v6534 = vmul.f32 %v6373, 1.442695
    %v6535 = vpow.pop %v6534
    %v6536 = vmul.f32 %v6374, 1.442695
    %v6537 = vpow.pop %v6536
    %v6538 = vmul.f32 %v6375, 1.442695
    %v6539 = vpow.pop %v6538
    %v6540 = vmul.f32 %v6376, 1.442695
    %v6541 = vpow.pop %v6540
    %v6542 = vmul.f32 %v6377, 1.442695
    %v6543 = vpow.pop %v6542
    %v6544 = vmul.f32 %v6378, 1.442695
    %v6545 = vpow.pop %v6544
    %v6546 = vmul.f32 %v6379, 1.442695
    %v6547 = vpow.pop %v6546
    %v6548 = vmul.f32 %v6380, 1.442695
    %v6549 = vpow.pop %v6548
    %v6550 = vmul.f32 %v6381, 1.442695
    %v6551 = vpow.pop %v6550
    %v6552 = vmul.f32 %v6382, 1.442695
    %v6553 = vpow.pop %v6552
    %v6554 = vmul.f32 %v6383, 1.442695
    %v6555 = vpow.pop %v6554
    %v6556 = vmul.f32 %v6384, 1.442695
    %v6557 = vpow.pop %v6556
    %v6558 = vmul.f32 %v6385, 1.442695
    %v6559 = vpow.pop %v6558
    %v6560 = vmul.f32 %v6386, 1.442695
    %v6561 = vpow.pop %v6560
    %v6562 = vmul.f32 %v6387, 1.442695
    %v6563 = vpow.pop %v6562
    %v6564 = vmul.f32 %v6388, 1.442695
    %v6565 = vpow.pop %v6564
    %v6566 = vmul.f32 %v6389, 1.442695
    %v6567 = vpow.pop %v6566
    %v6568 = vmul.f32 %v6390, 1.442695
    %v6569 = vpow.pop %v6568
    %v6570 = vmul.f32 %v6391, 1.442695
    %v6571 = vpow.pop %v6570
    %v6572 = vmul.f32 %v6392, 1.442695
    %v6573 = vpow.pop %v6572
    %v6574 = vmul.f32 %v6393, 1.442695
    %v6575 = vpow.pop %v6574
    %v6576 = vmul.f32 %v6394, 1.442695
    %v6577 = vpow.pop %v6576
    %v6578 = vmul.f32 %v6395, 1.442695
    %v6579 = vpow.pop %v6578
    %v6580 = vmul.f32 %v6396, 1.442695
    %v6581 = vpow.pop %v6580
    %v6582 = vmul.f32 %v6397, 1.442695
    %v6583 = vpow.pop %v6582
    %v6584 = vmul.f32 %v6398, 1.442695
    %v6585 = vpow.pop %v6584
    %v6586 = vmul.f32 %v6399, 1.442695
    %v6587 = vpow.pop %v6586
    %v6588 = vmul.f32 %v6400, 1.442695
    %v6589 = vpow.pop %v6588
    %v6590 = vmul.f32 %v6401, 1.442695
    %v6591 = vpow.pop %v6590
    %v6592 = vmul.f32 %v6402, 1.442695
    %v6593 = vpow.pop %v6592
    %v6594 = vmul.f32 %v6403, 1.442695
    %v6595 = vpow.pop %v6594
    %v6596 = vmul.f32 %v6404, 1.442695
    %v6597 = vpow.pop %v6596
    %v6598 = vmul.f32 %v6405, 1.442695
    %v6599 = vpow.pop %v6598
    %v6600 = vmul.f32 %v6406, 1.442695
    %v6601 = vpow.pop %v6600
    %v6602 = vmul.f32 %v6407, 1.442695
    %v6603 = vpow.pop %v6602
    %v6604 = vmul.f32 %v6408, 1.442695
    %v6605 = vpow.pop %v6604
    %v6606 = vmul.f32 %v6409, 1.442695
    %v6607 = vpow.pop %v6606
    %v6608 = vmul.f32 %v6410, 1.442695
    %v6609 = vpow.pop %v6608
    %v6610 = vmul.f32 %v6411, 1.442695
    %v6611 = vpow.pop %v6610
    %v6612 = vmul.f32 %v6412, 1.442695
    %v6613 = vpow.pop %v6612
    %v6614 = vmul.f32 %v6413, 1.442695
    %v6615 = vpow.pop %v6614
    %v6616 = vmul.f32 %v6414, 1.442695
    %v6617 = vpow.pop %v6616
    %v6618 = vmul.f32 %v6415, 1.442695
    %v6619 = vpow.pop %v6618
    %v6620 = vmul.f32 %v6416, 1.442695
    %v6621 = vpow.pop %v6620
    %v6622 = vmul.f32 %v6417, 1.442695
    %v6623 = vpow.pop %v6622
    %v6624 = vmul.f32 %v6418, 1.442695
    %v6625 = vpow.pop %v6624
    %v6626 = vmul.f32 %v6419, 1.442695
    %v6627 = vpow.pop %v6626
    %v6628 = vmul.f32 %v6420, 1.442695
    %v6629 = vpow.pop %v6628
    %v6630 = vmul.f32 %v6421, 1.442695
    %v6631 = vpow.pop %v6630
    %v6632 = vmul.f32 %v6422, 1.442695
    %v6633 = vpow.pop %v6632
    %v6634 = vmul.f32 %v6423, 1.442695
    %v6635 = vpow.pop %v6634
    %v6636 = vmul.f32 %v6424, 1.442695
    %v6637 = vpow.pop %v6636
    %v6638 = vmul.f32 %v6425, 1.442695
    %v6639 = vpow.pop %v6638
    %v6640 = vmul.f32 %v6426, 1.442695
    %v6641 = vpow.pop %v6640
    %v6642 = vmul.f32 %v6427, 1.442695
    %v6643 = vpow.pop %v6642
    %v6644 = vmul.f32 %v6428, 1.442695
    %v6645 = vpow.pop %v6644
    %v6646 = vmul.f32 %v6429, 1.442695
    %v6647 = vpow.pop %v6646
    %v6648 = vmul.f32 %v6430, 1.442695
    %v6649 = vpow.pop %v6648
    %v6650 = vmul.f32 %v6431, 1.442695
    %v6651 = vpow.pop %v6650
    %v6652 = vmul.f32 %v6432, 1.442695
    %v6653 = vpow.pop %v6652
    %v6654 = vmul.f32 %v6433, 1.442695
    %v6655 = vpow.pop %v6654
    %v6656 = vmul.f32 %v6434, 1.442695
    %v6657 = vpow.pop %v6656
    %v6658 = vmul.f32 %v6435, 1.442695
    %v6659 = vpow.pop %v6658
    %v6660 = vmul.f32 %v6436, 1.442695
    %v6661 = vpow.pop %v6660
    %v6662 = vmul.f32 %v6437, 1.442695
    %v6663 = vpow.pop %v6662
    %v6664 = vmul.f32 %v6438, 1.442695
    %v6665 = vpow.pop %v6664
    %v6666 = vmul.f32 %v6439, 1.442695
    %v6667 = vpow.pop %v6666
    %v6668 = vmul.f32 %v6440, 1.442695
    %v6669 = vpow.pop %v6668
    %v6670 = vmul.f32 %v6441, 1.442695
    %v6671 = vpow.pop %v6670
    %v6672 = vmul.f32 %v6442, 1.442695
    %v6673 = vpow.pop %v6672
    %v6674 = vmul.f32 %v6443, 1.442695
    %v6675 = vpow.pop %v6674
    %v6676 = vmul.f32 %v6444, 1.442695
    %v6677 = vpow.pop %v6676
    %v6678 = vmul.f32 %v6445, 1.442695
    %v6679 = vpow.pop %v6678
    %v6680 = vmul.f32 %v6446, 1.442695
    %v6681 = vpow.pop %v6680
    %v6682 = vmul.f32 %v6447, 1.442695
    %v6683 = vpow.pop %v6682
    %v6684 = vmul.f32 %v6448, 1.442695
    %v6685 = vpow.pop %v6684
    %v6686 = vmul.f32 %v6449, 1.442695
    %v6687 = vpow.pop %v6686
    %v6688 = vmul.f32 %v6450, 1.442695
    %v6689 = vpow.pop %v6688
    %v6690 = vmul.f32 %v6451, 1.442695
    %v6691 = vpow.pop %v6690
    %v6692 = vmul.f32 %v6452, 1.442695
    %v6693 = vpow.pop %v6692
    %v6694 = vmul.f32 %v6453, 1.442695
    %v6695 = vpow.pop %v6694
    %v6696 = vmul.f32 %v6454, 1.442695
    %v6697 = vpow.pop %v6696
    %v6698 = vmul.f32 %v6455, 1.442695
    %v6699 = vpow.pop %v6698
    %v6700 = vmul.f32 %v6456, 1.442695
    %v6701 = vpow.pop %v6700
    %v6702 = vmul.f32 %v6457, 1.442695
    %v6703 = vpow.pop %v6702
    %v6704 = vmul.f32 %v6458, 1.442695
    %v6705 = vpow.pop %v6704
    %v6706 = vmul.f32 %v6459, 1.442695
    %v6707 = vpow.pop %v6706
    %v6708 = vmul.f32 %v6460, 1.442695
    %v6709 = vpow.pop %v6708
    %v6710 = vmul.f32 %v6461, 1.442695
    %v6711 = vpow.pop %v6710
    %v6712 = vmul.f32 %v6462, 1.442695
    %v6713 = vpow.pop %v6712
    %v6714 = vmul.f32 %v6463, 1.442695
    %v6715 = vpow.pop %v6714
    %v6716 = vmul.f32 %v6464, 1.442695
    %v6717 = vpow.pop %v6716
    %v6718 = vmul.f32 %v6465, 1.442695
    %v6719 = vpow.pop %v6718
    %v6720 = vmul.f32 %v6466, 1.442695
    %v6721 = vpow.pop %v6720
    %v6722 = vmul.f32 %v6467, 1.442695
    %v6723 = vpow.pop %v6722
    %v6724 = vadd.f32 %v6469, 1.0
    %v6725 = vadd.f32 %v6471, 1.0
    %v6726 = vadd.f32 %v6473, 1.0
    %v6727 = vadd.f32 %v6475, 1.0
    %v6728 = vadd.f32 %v6477, 1.0
    %v6729 = vadd.f32 %v6479, 1.0
    %v6730 = vadd.f32 %v6481, 1.0
    %v6731 = vadd.f32 %v6483, 1.0
    %v6732 = vadd.f32 %v6485, 1.0
    %v6733 = vadd.f32 %v6487, 1.0
    %v6734 = vadd.f32 %v6489, 1.0
    %v6735 = vadd.f32 %v6491, 1.0
    %v6736 = vadd.f32 %v6493, 1.0
    %v6737 = vadd.f32 %v6495, 1.0
    %v6738 = vadd.f32 %v6497, 1.0
    %v6739 = vadd.f32 %v6499, 1.0
    %v6740 = vadd.f32 %v6501, 1.0
    %v6741 = vadd.f32 %v6503, 1.0
    %v6742 = vadd.f32 %v6505, 1.0
    %v6743 = vadd.f32 %v6507, 1.0
    %v6744 = vadd.f32 %v6509, 1.0
    %v6745 = vadd.f32 %v6511, 1.0
    %v6746 = vadd.f32 %v6513, 1.0
    %v6747 = vadd.f32 %v6515, 1.0
    %v6748 = vadd.f32 %v6517, 1.0
    %v6749 = vadd.f32 %v6519, 1.0
    %v6750 = vadd.f32 %v6521, 1.0
    %v6751 = vadd.f32 %v6523, 1.0
    %v6752 = vadd.f32 %v6525, 1.0
    %v6753 = vadd.f32 %v6527, 1.0
    %v6754 = vadd.f32 %v6529, 1.0
    %v6755 = vadd.f32 %v6531, 1.0
    %v6756 = vadd.f32 %v6533, 1.0
    %v6757 = vadd.f32 %v6535, 1.0
    %v6758 = vadd.f32 %v6537, 1.0
    %v6759 = vadd.f32 %v6539, 1.0
    %v6760 = vadd.f32 %v6541, 1.0
    %v6761 = vadd.f32 %v6543, 1.0
    %v6762 = vadd.f32 %v6545, 1.0
    %v6763 = vadd.f32 %v6547, 1.0
    %v6764 = vadd.f32 %v6549, 1.0
    %v6765 = vadd.f32 %v6551, 1.0
    %v6766 = vadd.f32 %v6553, 1.0
    %v6767 = vadd.f32 %v6555, 1.0
    %v6768 = vadd.f32 %v6557, 1.0
    %v6769 = vadd.f32 %v6559, 1.0
    %v6770 = vadd.f32 %v6561, 1.0
    %v6771 = vadd.f32 %v6563, 1.0
    %v6772 = vadd.f32 %v6565, 1.0
    %v6773 = vadd.f32 %v6567, 1.0
    %v6774 = vadd.f32 %v6569, 1.0
    %v6775 = vadd.f32 %v6571, 1.0
    %v6776 = vadd.f32 %v6573, 1.0
    %v6777 = vadd.f32 %v6575, 1.0
    %v6778 = vadd.f32 %v6577, 1.0
    %v6779 = vadd.f32 %v6579, 1.0
    %v6780 = vadd.f32 %v6581, 1.0
    %v6781 = vadd.f32 %v6583, 1.0
    %v6782 = vadd.f32 %v6585, 1.0
    %v6783 = vadd.f32 %v6587, 1.0
    %v6784 = vadd.f32 %v6589, 1.0
    %v6785 = vadd.f32 %v6591, 1.0
    %v6786 = vadd.f32 %v6593, 1.0
    %v6787 = vadd.f32 %v6595, 1.0
    %v6788 = vadd.f32 %v6597, 1.0
    %v6789 = vadd.f32 %v6599, 1.0
    %v6790 = vadd.f32 %v6601, 1.0
    %v6791 = vadd.f32 %v6603, 1.0
    %v6792 = vadd.f32 %v6605, 1.0
    %v6793 = vadd.f32 %v6607, 1.0
    %v6794 = vadd.f32 %v6609, 1.0
    %v6795 = vadd.f32 %v6611, 1.0
    %v6796 = vadd.f32 %v6613, 1.0
    %v6797 = vadd.f32 %v6615, 1.0
    %v6798 = vadd.f32 %v6617, 1.0
    %v6799 = vadd.f32 %v6619, 1.0
    %v6800 = vadd.f32 %v6621, 1.0
    %v6801 = vadd.f32 %v6623, 1.0
    %v6802 = vadd.f32 %v6625, 1.0
    %v6803 = vadd.f32 %v6627, 1.0
    %v6804 = vadd.f32 %v6629, 1.0
    %v6805 = vadd.f32 %v6631, 1.0
    %v6806 = vadd.f32 %v6633, 1.0
    %v6807 = vadd.f32 %v6635, 1.0
    %v6808 = vadd.f32 %v6637, 1.0
    %v6809 = vadd.f32 %v6639, 1.0
    %v6810 = vadd.f32 %v6641, 1.0
    %v6811 = vadd.f32 %v6643, 1.0
    %v6812 = vadd.f32 %v6645, 1.0
    %v6813 = vadd.f32 %v6647, 1.0
    %v6814 = vadd.f32 %v6649, 1.0
    %v6815 = vadd.f32 %v6651, 1.0
    %v6816 = vadd.f32 %v6653, 1.0
    %v6817 = vadd.f32 %v6655, 1.0
    %v6818 = vadd.f32 %v6657, 1.0
    %v6819 = vadd.f32 %v6659, 1.0
    %v6820 = vadd.f32 %v6661, 1.0
    %v6821 = vadd.f32 %v6663, 1.0
    %v6822 = vadd.f32 %v6665, 1.0
    %v6823 = vadd.f32 %v6667, 1.0
    %v6824 = vadd.f32 %v6669, 1.0
    %v6825 = vadd.f32 %v6671, 1.0
    %v6826 = vadd.f32 %v6673, 1.0
    %v6827 = vadd.f32 %v6675, 1.0
    %v6828 = vadd.f32 %v6677, 1.0
    %v6829 = vadd.f32 %v6679, 1.0
    %v6830 = vadd.f32 %v6681, 1.0
    %v6831 = vadd.f32 %v6683, 1.0
    %v6832 = vadd.f32 %v6685, 1.0
    %v6833 = vadd.f32 %v6687, 1.0
    %v6834 = vadd.f32 %v6689, 1.0
    %v6835 = vadd.f32 %v6691, 1.0
    %v6836 = vadd.f32 %v6693, 1.0
    %v6837 = vadd.f32 %v6695, 1.0
    %v6838 = vadd.f32 %v6697, 1.0
    %v6839 = vadd.f32 %v6699, 1.0
    %v6840 = vadd.f32 %v6701, 1.0
    %v6841 = vadd.f32 %v6703, 1.0
    %v6842 = vadd.f32 %v6705, 1.0
    %v6843 = vadd.f32 %v6707, 1.0
    %v6844 = vadd.f32 %v6709, 1.0
    %v6845 = vadd.f32 %v6711, 1.0
    %v6846 = vadd.f32 %v6713, 1.0
    %v6847 = vadd.f32 %v6715, 1.0
    %v6848 = vadd.f32 %v6717, 1.0
    %v6849 = vadd.f32 %v6719, 1.0
    %v6850 = vadd.f32 %v6721, 1.0
    %v6851 = vadd.f32 %v6723, 1.0
    %v6852 = vrcp.pop %v6724
    %v6853 = vmul.f32 1.0, %v6852
    %v6854 = vrcp.pop %v6725
    %v6855 = vmul.f32 1.0, %v6854
    %v6856 = vrcp.pop %v6726
    %v6857 = vmul.f32 1.0, %v6856
    %v6858 = vrcp.pop %v6727
    %v6859 = vmul.f32 1.0, %v6858
    %v6860 = vrcp.pop %v6728
    %v6861 = vmul.f32 1.0, %v6860
    %v6862 = vrcp.pop %v6729
    %v6863 = vmul.f32 1.0, %v6862
    %v6864 = vrcp.pop %v6730
    %v6865 = vmul.f32 1.0, %v6864
    %v6866 = vrcp.pop %v6731
    %v6867 = vmul.f32 1.0, %v6866
    %v6868 = vrcp.pop %v6732
    %v6869 = vmul.f32 1.0, %v6868
    %v6870 = vrcp.pop %v6733
    %v6871 = vmul.f32 1.0, %v6870
    %v6872 = vrcp.pop %v6734
    %v6873 = vmul.f32 1.0, %v6872
    %v6874 = vrcp.pop %v6735
    %v6875 = vmul.f32 1.0, %v6874
    %v6876 = vrcp.pop %v6736
    %v6877 = vmul.f32 1.0, %v6876
    %v6878 = vrcp.pop %v6737
    %v6879 = vmul.f32 1.0, %v6878
    %v6880 = vrcp.pop %v6738
    %v6881 = vmul.f32 1.0, %v6880
    %v6882 = vrcp.pop %v6739
    %v6883 = vmul.f32 1.0, %v6882
    %v6884 = vrcp.pop %v6740
    %v6885 = vmul.f32 1.0, %v6884
    %v6886 = vrcp.pop %v6741
    %v6887 = vmul.f32 1.0, %v6886
    %v6888 = vrcp.pop %v6742
    %v6889 = vmul.f32 1.0, %v6888
    %v6890 = vrcp.pop %v6743
    %v6891 = vmul.f32 1.0, %v6890
    %v6892 = vrcp.pop %v6744
    %v6893 = vmul.f32 1.0, %v6892
    %v6894 = vrcp.pop %v6745
    %v6895 = vmul.f32 1.0, %v6894
    %v6896 = vrcp.pop %v6746
    %v6897 = vmul.f32 1.0, %v6896
    %v6898 = vrcp.pop %v6747
    %v6899 = vmul.f32 1.0, %v6898
    %v6900 = vrcp.pop %v6748
    %v6901 = vmul.f32 1.0, %v6900
    %v6902 = vrcp.pop %v6749
    %v6903 = vmul.f32 1.0, %v6902
    %v6904 = vrcp.pop %v6750
    %v6905 = vmul.f32 1.0, %v6904
    %v6906 = vrcp.pop %v6751
    %v6907 = vmul.f32 1.0, %v6906
    %v6908 = vrcp.pop %v6752
    %v6909 = vmul.f32 1.0, %v6908
    %v6910 = vrcp.pop %v6753
    %v6911 = vmul.f32 1.0, %v6910
    %v6912 = vrcp.pop %v6754
    %v6913 = vmul.f32 1.0, %v6912
    %v6914 = vrcp.pop %v6755
    %v6915 = vmul.f32 1.0, %v6914
    %v6916 = vrcp.pop %v6756
    %v6917 = vmul.f32 1.0, %v6916
    %v6918 = vrcp.pop %v6757
    %v6919 = vmul.f32 1.0, %v6918
    %v6920 = vrcp.pop %v6758
    %v6921 = vmul.f32 1.0, %v6920
    %v6922 = vrcp.pop %v6759
    %v6923 = vmul.f32 1.0, %v6922
    %v6924 = vrcp.pop %v6760
    %v6925 = vmul.f32 1.0, %v6924
    %v6926 = vrcp.pop %v6761
    %v6927 = vmul.f32 1.0, %v6926
    %v6928 = vrcp.pop %v6762
    %v6929 = vmul.f32 1.0, %v6928
    %v6930 = vrcp.pop %v6763
    %v6931 = vmul.f32 1.0, %v6930
    %v6932 = vrcp.pop %v6764
    %v6933 = vmul.f32 1.0, %v6932
    %v6934 = vrcp.pop %v6765
    %v6935 = vmul.f32 1.0, %v6934
    %v6936 = vrcp.pop %v6766
    %v6937 = vmul.f32 1.0, %v6936
    %v6938 = vrcp.pop %v6767
    %v6939 = vmul.f32 1.0, %v6938
    %v6940 = vrcp.pop %v6768
    %v6941 = vmul.f32 1.0, %v6940
    %v6942 = vrcp.pop %v6769
    %v6943 = vmul.f32 1.0, %v6942
    %v6944 = vrcp.pop %v6770
    %v6945 = vmul.f32 1.0, %v6944
    %v6946 = vrcp.pop %v6771
    %v6947 = vmul.f32 1.0, %v6946
    %v6948 = vrcp.pop %v6772
    %v6949 = vmul.f32 1.0, %v6948
    %v6950 = vrcp.pop %v6773
    %v6951 = vmul.f32 1.0, %v6950
    %v6952 = vrcp.pop %v6774
    %v6953 = vmul.f32 1.0, %v6952
    %v6954 = vrcp.pop %v6775
    %v6955 = vmul.f32 1.0, %v6954
    %v6956 = vrcp.pop %v6776
    %v6957 = vmul.f32 1.0, %v6956
    %v6958 = vrcp.pop %v6777
    %v6959 = vmul.f32 1.0, %v6958
    %v6960 = vrcp.pop %v6778
    %v6961 = vmul.f32 1.0, %v6960
    %v6962 = vrcp.pop %v6779
    %v6963 = vmul.f32 1.0, %v6962
    %v6964 = vrcp.pop %v6780
    %v6965 = vmul.f32 1.0, %v6964
    %v6966 = vrcp.pop %v6781
    %v6967 = vmul.f32 1.0, %v6966
    %v6968 = vrcp.pop %v6782
    %v6969 = vmul.f32 1.0, %v6968
    %v6970 = vrcp.pop %v6783
    %v6971 = vmul.f32 1.0, %v6970
    %v6972 = vrcp.pop %v6784
    %v6973 = vmul.f32 1.0, %v6972
    %v6974 = vrcp.pop %v6785
    %v6975 = vmul.f32 1.0, %v6974
    %v6976 = vrcp.pop %v6786
    %v6977 = vmul.f32 1.0, %v6976
    %v6978 = vrcp.pop %v6787
    %v6979 = vmul.f32 1.0, %v6978
    %v6980 = vrcp.pop %v6788
    %v6981 = vmul.f32 1.0, %v6980
    %v6982 = vrcp.pop %v6789
    %v6983 = vmul.f32 1.0, %v6982
    %v6984 = vrcp.pop %v6790
    %v6985 = vmul.f32 1.0, %v6984
    %v6986 = vrcp.pop %v6791
    %v6987 = vmul.f32 1.0, %v6986
    %v6988 = vrcp.pop %v6792
    %v6989 = vmul.f32 1.0, %v6988
    %v6990 = vrcp.pop %v6793
    %v6991 = vmul.f32 1.0, %v6990
    %v6992 = vrcp.pop %v6794
    %v6993 = vmul.f32 1.0, %v6992
    %v6994 = vrcp.pop %v6795
    %v6995 = vmul.f32 1.0, %v6994
    %v6996 = vrcp.pop %v6796
    %v6997 = vmul.f32 1.0, %v6996
    %v6998 = vrcp.pop %v6797
    %v6999 = vmul.f32 1.0, %v6998
    %v7000 = vrcp.pop %v6798
    %v7001 = vmul.f32 1.0, %v7000
    %v7002 = vrcp.pop %v6799
    %v7003 = vmul.f32 1.0, %v7002
    %v7004 = vrcp.pop %v6800
    %v7005 = vmul.f32 1.0, %v7004
    %v7006 = vrcp.pop %v6801
    %v7007 = vmul.f32 1.0, %v7006
    %v7008 = vrcp.pop %v6802
    %v7009 = vmul.f32 1.0, %v7008
    %v7010 = vrcp.pop %v6803
    %v7011 = vmul.f32 1.0, %v7010
    %v7012 = vrcp.pop %v6804
    %v7013 = vmul.f32 1.0, %v7012
    %v7014 = vrcp.pop %v6805
    %v7015 = vmul.f32 1.0, %v7014
    %v7016 = vrcp.pop %v6806
    %v7017 = vmul.f32 1.0, %v7016
    %v7018 = vrcp.pop %v6807
    %v7019 = vmul.f32 1.0, %v7018
    %v7020 = vrcp.pop %v6808
    %v7021 = vmul.f32 1.0, %v7020
    %v7022 = vrcp.pop %v6809
    %v7023 = vmul.f32 1.0, %v7022
    %v7024 = vrcp.pop %v6810
    %v7025 = vmul.f32 1.0, %v7024
    %v7026 = vrcp.pop %v6811
    %v7027 = vmul.f32 1.0, %v7026
    %v7028 = vrcp.pop %v6812
    %v7029 = vmul.f32 1.0, %v7028
    %v7030 = vrcp.pop %v6813
    %v7031 = vmul.f32 1.0, %v7030
    %v7032 = vrcp.pop %v6814
    %v7033 = vmul.f32 1.0, %v7032
    %v7034 = vrcp.pop %v6815
    %v7035 = vmul.f32 1.0, %v7034
    %v7036 = vrcp.pop %v6816
    %v7037 = vmul.f32 1.0, %v7036
    %v7038 = vrcp.pop %v6817
    %v7039 = vmul.f32 1.0, %v7038
    %v7040 = vrcp.pop %v6818
    %v7041 = vmul.f32 1.0, %v7040
    %v7042 = vrcp.pop %v6819
    %v7043 = vmul.f32 1.0, %v7042
    %v7044 = vrcp.pop %v6820
    %v7045 = vmul.f32 1.0, %v7044
    %v7046 = vrcp.pop %v6821
    %v7047 = vmul.f32 1.0, %v7046
    %v7048 = vrcp.pop %v6822
    %v7049 = vmul.f32 1.0, %v7048
    %v7050 = vrcp.pop %v6823
    %v7051 = vmul.f32 1.0, %v7050
    %v7052 = vrcp.pop %v6824
    %v7053 = vmul.f32 1.0, %v7052
    %v7054 = vrcp.pop %v6825
    %v7055 = vmul.f32 1.0, %v7054
    %v7056 = vrcp.pop %v6826
    %v7057 = vmul.f32 1.0, %v7056
    %v7058 = vrcp.pop %v6827
    %v7059 = vmul.f32 1.0, %v7058
    %v7060 = vrcp.pop %v6828
    %v7061 = vmul.f32 1.0, %v7060
    %v7062 = vrcp.pop %v6829
    %v7063 = vmul.f32 1.0, %v7062
    %v7064 = vrcp.pop %v6830
    %v7065 = vmul.f32 1.0, %v7064
    %v7066 = vrcp.pop %v6831
    %v7067 = vmul.f32 1.0, %v7066
    %v7068 = vrcp.pop %v6832
    %v7069 = vmul.f32 1.0, %v7068
    %v7070 = vrcp.pop %v6833
    %v7071 = vmul.f32 1.0, %v7070
    %v7072 = vrcp.pop %v6834
    %v7073 = vmul.f32 1.0, %v7072
    %v7074 = vrcp.pop %v6835
    %v7075 = vmul.f32 1.0, %v7074
    %v7076 = vrcp.pop %v6836
    %v7077 = vmul.f32 1.0, %v7076
    %v7078 = vrcp.pop %v6837
    %v7079 = vmul.f32 1.0, %v7078
    %v7080 = vrcp.pop %v6838
    %v7081 = vmul.f32 1.0, %v7080
    %v7082 = vrcp.pop %v6839
    %v7083 = vmul.f32 1.0, %v7082
    %v7084 = vrcp.pop %v6840
    %v7085 = vmul.f32 1.0, %v7084
    %v7086 = vrcp.pop %v6841
    %v7087 = vmul.f32 1.0, %v7086
    %v7088 = vrcp.pop %v6842
    %v7089 = vmul.f32 1.0, %v7088
    %v7090 = vrcp.pop %v6843
    %v7091 = vmul.f32 1.0, %v7090
    %v7092 = vrcp.pop %v6844
    %v7093 = vmul.f32 1.0, %v7092
    %v7094 = vrcp.pop %v6845
    %v7095 = vmul.f32 1.0, %v7094
    %v7096 = vrcp.pop %v6846
    %v7097 = vmul.f32 1.0, %v7096
    %v7098 = vrcp.pop %v6847
    %v7099 = vmul.f32 1.0, %v7098
    %v7100 = vrcp.pop %v6848
    %v7101 = vmul.f32 1.0, %v7100
    %v7102 = vrcp.pop %v6849
    %v7103 = vmul.f32 1.0, %v7102
    %v7104 = vrcp.pop %v6850
    %v7105 = vmul.f32 1.0, %v7104
    %v7106 = vrcp.pop %v6851
    %v7107 = vmul.f32 1.0, %v7106
    %v7236 = vlaneseq
    %v7237 = vand.u32 %v7236, 127
    %v7238 = vlaneseq
    %v7239 = vshrl.u32 %v7238, 7
    %v7240 = vsub.s32 %v7237, %v7239
    %v7241 = vrot.slane %v6853, %v7240
    %v7242 = vadd.s32 %v7237, 4294967288
    %v7243 = vlaneseq
    %v7244 = vshrl.u32 %v7243, 7
    %v7245 = vsub.s32 %v7242, %v7244
    %v7246 = vrot.slane %v6855, %v7245
    %vm7247 = vcmask 130112
    %v7248 = vsel %vm7247, %v7246, %v7241
    %v7249 = vadd.s32 %v7237, 4294967280
    %v7250 = vlaneseq
    %v7251 = vshrl.u32 %v7250, 7
    %v7252 = vsub.s32 %v7249, %v7251
    %v7253 = vrot.slane %v6857, %v7252
    %vm7254 = vcmask 195712
    %v7255 = vsel %vm7254, %v7253, %v7248
    %v7256 = vadd.s32 %v7237, 4294967272
    %v7257 = vlaneseq
    %v7258 = vshrl.u32 %v7257, 7
    %v7259 = vsub.s32 %v7256, %v7258
    %v7260 = vrot.slane %v6859, %v7259
    %vm7261 = vcmask 261312
    %v7262 = vsel %vm7261, %v7260, %v7255
    %v7263 = vadd.s32 %v7237, 4294967264
    %v7264 = vlaneseq
    %v7265 = vshrl.u32 %v7264, 7
    %v7266 = vsub.s32 %v7263, %v7265
    %v7267 = vrot.slane %v6861, %v7266
    %vm7268 = vcmask 326912
    %v7269 = vsel %vm7268, %v7267, %v7262
    %v7270 = vadd.s32 %v7237, 4294967256
    %v7271 = vlaneseq
    %v7272 = vshrl.u32 %v7271, 7
    %v7273 = vsub.s32 %v7270, %v7272
    %v7274 = vrot.slane %v6863, %v7273
    %vm7275 = vcmask 392512
    %v7276 = vsel %vm7275, %v7274, %v7269
    %v7277 = vadd.s32 %v7237, 4294967248
    %v7278 = vlaneseq
    %v7279 = vshrl.u32 %v7278, 7
    %v7280 = vsub.s32 %v7277, %v7279
    %v7281 = vrot.slane %v6865, %v7280
    %vm7282 = vcmask 458112
    %v7283 = vsel %vm7282, %v7281, %v7276
    %v7284 = vadd.s32 %v7237, 4294967240
    %v7285 = vlaneseq
    %v7286 = vshrl.u32 %v7285, 7
    %v7287 = vsub.s32 %v7284, %v7286
    %v7288 = vrot.slane %v6867, %v7287
    %vm7289 = vcmask 523712
    %v7290 = vsel %vm7289, %v7288, %v7283
    %v7291 = vadd.s32 %v7237, 4294967232
    %v7292 = vlaneseq
    %v7293 = vshrl.u32 %v7292, 7
    %v7294 = vsub.s32 %v7291, %v7293
    %v7295 = vrot.slane %v6869, %v7294
    %vm7296 = vcmask 589312
    %v7297 = vsel %vm7296, %v7295, %v7290
    %v7298 = vadd.s32 %v7237, 4294967224
    %v7299 = vlaneseq
    %v7300 = vshrl.u32 %v7299, 7
    %v7301 = vsub.s32 %v7298, %v7300
    %v7302 = vrot.slane %v6871, %v7301
    %vm7303 = vcmask 654912
    %v7304 = vsel %vm7303, %v7302, %v7297
    %v7305 = vadd.s32 %v7237, 4294967216
    %v7306 = vlaneseq
    %v7307 = vshrl.u32 %v7306, 7
    %v7308 = vsub.s32 %v7305, %v7307
    %v7309 = vrot.slane %v6873, %v7308
    %vm7310 = vcmask 720512
    %v7311 = vsel %vm7310, %v7309, %v7304
    %v7312 = vadd.s32 %v7237, 4294967208
    %v7313 = vlaneseq
    %v7314 = vshrl.u32 %v7313, 7
    %v7315 = vsub.s32 %v7312, %v7314
    %v7316 = vrot.slane %v6875, %v7315
    %vm7317 = vcmask 786112
    %v7318 = vsel %vm7317, %v7316, %v7311
    %v7319 = vadd.s32 %v7237, 4294967200
    %v7320 = vlaneseq
    %v7321 = vshrl.u32 %v7320, 7
    %v7322 = vsub.s32 %v7319, %v7321
    %v7323 = vrot.slane %v6877, %v7322
    %vm7324 = vcmask 851712
    %v7325 = vsel %vm7324, %v7323, %v7318
    %v7326 = vadd.s32 %v7237, 4294967192
    %v7327 = vlaneseq
    %v7328 = vshrl.u32 %v7327, 7
    %v7329 = vsub.s32 %v7326, %v7328
    %v7330 = vrot.slane %v6879, %v7329
    %vm7331 = vcmask 917312
    %v7332 = vsel %vm7331, %v7330, %v7325
    %v7333 = vadd.s32 %v7237, 4294967184
    %v7334 = vlaneseq
    %v7335 = vshrl.u32 %v7334, 7
    %v7336 = vsub.s32 %v7333, %v7335
    %v7337 = vrot.slane %v6881, %v7336
    %vm7338 = vcmask 982912
    %v7339 = vsel %vm7338, %v7337, %v7332
    %v7340 = vadd.s32 %v7237, 4294967176
    %v7341 = vlaneseq
    %v7342 = vshrl.u32 %v7341, 7
    %v7343 = vsub.s32 %v7340, %v7342
    %v7344 = vrot.slane %v6883, %v7343
    %vm7345 = vcmask 1048512
    %v7346 = vsel %vm7345, %v7344, %v7339
    %v7347 = vlaneseq
    %v7348 = vshrl.u32 %v7347, 7
    %v7349 = vsub.s32 %v7237, %v7348
    %v7350 = vrot.slane %v6885, %v7349
    %v7351 = vlaneseq
    %v7352 = vshrl.u32 %v7351, 7
    %v7353 = vsub.s32 %v7242, %v7352
    %v7354 = vrot.slane %v6887, %v7353
    %v7355 = vsel %vm7247, %v7354, %v7350
    %v7356 = vlaneseq
    %v7357 = vshrl.u32 %v7356, 7
    %v7358 = vsub.s32 %v7249, %v7357
    %v7359 = vrot.slane %v6889, %v7358
    %v7360 = vsel %vm7254, %v7359, %v7355
    %v7361 = vlaneseq
    %v7362 = vshrl.u32 %v7361, 7
    %v7363 = vsub.s32 %v7256, %v7362
    %v7364 = vrot.slane %v6891, %v7363
    %v7365 = vsel %vm7261, %v7364, %v7360
    %v7366 = vlaneseq
    %v7367 = vshrl.u32 %v7366, 7
    %v7368 = vsub.s32 %v7263, %v7367
    %v7369 = vrot.slane %v6893, %v7368
    %v7370 = vsel %vm7268, %v7369, %v7365
    %v7371 = vlaneseq
    %v7372 = vshrl.u32 %v7371, 7
    %v7373 = vsub.s32 %v7270, %v7372
    %v7374 = vrot.slane %v6895, %v7373
    %v7375 = vsel %vm7275, %v7374, %v7370
    %v7376 = vlaneseq
    %v7377 = vshrl.u32 %v7376, 7
    %v7378 = vsub.s32 %v7277, %v7377
    %v7379 = vrot.slane %v6897, %v7378
    %v7380 = vsel %vm7282, %v7379, %v7375
    %v7381 = vlaneseq
    %v7382 = vshrl.u32 %v7381, 7
    %v7383 = vsub.s32 %v7284, %v7382
    %v7384 = vrot.slane %v6899, %v7383
    %v7385 = vsel %vm7289, %v7384, %v7380
    %v7386 = vlaneseq
    %v7387 = vshrl.u32 %v7386, 7
    %v7388 = vsub.s32 %v7291, %v7387
    %v7389 = vrot.slane %v6901, %v7388
    %v7390 = vsel %vm7296, %v7389, %v7385
    %v7391 = vlaneseq
    %v7392 = vshrl.u32 %v7391, 7
    %v7393 = vsub.s32 %v7298, %v7392
    %v7394 = vrot.slane %v6903, %v7393
    %v7395 = vsel %vm7303, %v7394, %v7390
    %v7396 = vlaneseq
    %v7397 = vshrl.u32 %v7396, 7
    %v7398 = vsub.s32 %v7305, %v7397
    %v7399 = vrot.slane %v6905, %v7398
    %v7400 = vsel %vm7310, %v7399, %v7395
    %v7401 = vlaneseq
    %v7402 = vshrl.u32 %v7401, 7
    %v7403 = vsub.s32 %v7312, %v7402
    %v7404 = vrot.slane %v6907, %v7403
    %v7405 = vsel %vm7317, %v7404, %v7400
    %v7406 = vlaneseq
    %v7407 = vshrl.u32 %v7406, 7
    %v7408 = vsub.s32 %v7319, %v7407
    %v7409 = vrot.slane %v6909, %v7408
    %v7410 = vsel %vm7324, %v7409, %v7405
    %v7411 = vlaneseq
    %v7412 = vshrl.u32 %v7411, 7
    %v7413 = vsub.s32 %v7326, %v7412
    %v7414 = vrot.slane %v6911, %v7413
    %v7415 = vsel %vm7331, %v7414, %v7410
    %v7416 = vlaneseq
    %v7417 = vshrl.u32 %v7416, 7
    %v7418 = vsub.s32 %v7333, %v7417
    %v7419 = vrot.slane %v6913, %v7418
    %v7420 = vsel %vm7338, %v7419, %v7415
    %v7421 = vlaneseq
    %v7422 = vshrl.u32 %v7421, 7
    %v7423 = vsub.s32 %v7340, %v7422
    %v7424 = vrot.slane %v6915, %v7423
    %v7425 = vsel %vm7345, %v7424, %v7420
    %v7426 = vlaneseq
    %v7427 = vshrl.u32 %v7426, 7
    %v7428 = vsub.s32 %v7237, %v7427
    %v7429 = vrot.slane %v6917, %v7428
    %v7430 = vlaneseq
    %v7431 = vshrl.u32 %v7430, 7
    %v7432 = vsub.s32 %v7242, %v7431
    %v7433 = vrot.slane %v6919, %v7432
    %v7434 = vsel %vm7247, %v7433, %v7429
    %v7435 = vlaneseq
    %v7436 = vshrl.u32 %v7435, 7
    %v7437 = vsub.s32 %v7249, %v7436
    %v7438 = vrot.slane %v6921, %v7437
    %v7439 = vsel %vm7254, %v7438, %v7434
    %v7440 = vlaneseq
    %v7441 = vshrl.u32 %v7440, 7
    %v7442 = vsub.s32 %v7256, %v7441
    %v7443 = vrot.slane %v6923, %v7442
    %v7444 = vsel %vm7261, %v7443, %v7439
    %v7445 = vlaneseq
    %v7446 = vshrl.u32 %v7445, 7
    %v7447 = vsub.s32 %v7263, %v7446
    %v7448 = vrot.slane %v6925, %v7447
    %v7449 = vsel %vm7268, %v7448, %v7444
    %v7450 = vlaneseq
    %v7451 = vshrl.u32 %v7450, 7
    %v7452 = vsub.s32 %v7270, %v7451
    %v7453 = vrot.slane %v6927, %v7452
    %v7454 = vsel %vm7275, %v7453, %v7449
    %v7455 = vlaneseq
    %v7456 = vshrl.u32 %v7455, 7
    %v7457 = vsub.s32 %v7277, %v7456
    %v7458 = vrot.slane %v6929, %v7457
    %v7459 = vsel %vm7282, %v7458, %v7454
    %v7460 = vlaneseq
    %v7461 = vshrl.u32 %v7460, 7
    %v7462 = vsub.s32 %v7284, %v7461
    %v7463 = vrot.slane %v6931, %v7462
    %v7464 = vsel %vm7289, %v7463, %v7459
    %v7465 = vlaneseq
    %v7466 = vshrl.u32 %v7465, 7
    %v7467 = vsub.s32 %v7291, %v7466
    %v7468 = vrot.slane %v6933, %v7467
    %v7469 = vsel %vm7296, %v7468, %v7464
    %v7470 = vlaneseq
    %v7471 = vshrl.u32 %v7470, 7
    %v7472 = vsub.s32 %v7298, %v7471
    %v7473 = vrot.slane %v6935, %v7472
    %v7474 = vsel %vm7303, %v7473, %v7469
    %v7475 = vlaneseq
    %v7476 = vshrl.u32 %v7475, 7
    %v7477 = vsub.s32 %v7305, %v7476
    %v7478 = vrot.slane %v6937, %v7477
    %v7479 = vsel %vm7310, %v7478, %v7474
    %v7480 = vlaneseq
    %v7481 = vshrl.u32 %v7480, 7
    %v7482 = vsub.s32 %v7312, %v7481
    %v7483 = vrot.slane %v6939, %v7482
    %v7484 = vsel %vm7317, %v7483, %v7479
    %v7485 = vlaneseq
    %v7486 = vshrl.u32 %v7485, 7
    %v7487 = vsub.s32 %v7319, %v7486
    %v7488 = vrot.slane %v6941, %v7487
    %v7489 = vsel %vm7324, %v7488, %v7484
    %v7490 = vlaneseq
    %v7491 = vshrl.u32 %v7490, 7
    %v7492 = vsub.s32 %v7326, %v7491
    %v7493 = vrot.slane %v6943, %v7492
    %v7494 = vsel %vm7331, %v7493, %v7489
    %v7495 = vlaneseq
    %v7496 = vshrl.u32 %v7495, 7
    %v7497 = vsub.s32 %v7333, %v7496
    %v7498 = vrot.slane %v6945, %v7497
    %v7499 = vsel %vm7338, %v7498, %v7494
    %v7500 = vlaneseq
    %v7501 = vshrl.u32 %v7500, 7
    %v7502 = vsub.s32 %v7340, %v7501
    %v7503 = vrot.slane %v6947, %v7502
    %v7504 = vsel %vm7345, %v7503, %v7499
    %v7505 = vlaneseq
    %v7506 = vshrl.u32 %v7505, 7
    %v7507 = vsub.s32 %v7237, %v7506
    %v7508 = vrot.slane %v6949, %v7507
    %v7509 = vlaneseq
    %v7510 = vshrl.u32 %v7509, 7
    %v7511 = vsub.s32 %v7242, %v7510
    %v7512 = vrot.slane %v6951, %v7511
    %v7513 = vsel %vm7247, %v7512, %v7508
    %v7514 = vlaneseq
    %v7515 = vshrl.u32 %v7514, 7
    %v7516 = vsub.s32 %v7249, %v7515
    %v7517 = vrot.slane %v6953, %v7516
    %v7518 = vsel %vm7254, %v7517, %v7513
    %v7519 = vlaneseq
    %v7520 = vshrl.u32 %v7519, 7
    %v7521 = vsub.s32 %v7256, %v7520
    %v7522 = vrot.slane %v6955, %v7521
    %v7523 = vsel %vm7261, %v7522, %v7518
    %v7524 = vlaneseq
    %v7525 = vshrl.u32 %v7524, 7
    %v7526 = vsub.s32 %v7263, %v7525
    %v7527 = vrot.slane %v6957, %v7526
    %v7528 = vsel %vm7268, %v7527, %v7523
    %v7529 = vlaneseq
    %v7530 = vshrl.u32 %v7529, 7
    %v7531 = vsub.s32 %v7270, %v7530
    %v7532 = vrot.slane %v6959, %v7531
    %v7533 = vsel %vm7275, %v7532, %v7528
    %v7534 = vlaneseq
    %v7535 = vshrl.u32 %v7534, 7
    %v7536 = vsub.s32 %v7277, %v7535
    %v7537 = vrot.slane %v6961, %v7536
    %v7538 = vsel %vm7282, %v7537, %v7533
    %v7539 = vlaneseq
    %v7540 = vshrl.u32 %v7539, 7
    %v7541 = vsub.s32 %v7284, %v7540
    %v7542 = vrot.slane %v6963, %v7541
    %v7543 = vsel %vm7289, %v7542, %v7538
    %v7544 = vlaneseq
    %v7545 = vshrl.u32 %v7544, 7
    %v7546 = vsub.s32 %v7291, %v7545
    %v7547 = vrot.slane %v6965, %v7546
    %v7548 = vsel %vm7296, %v7547, %v7543
    %v7549 = vlaneseq
    %v7550 = vshrl.u32 %v7549, 7
    %v7551 = vsub.s32 %v7298, %v7550
    %v7552 = vrot.slane %v6967, %v7551
    %v7553 = vsel %vm7303, %v7552, %v7548
    %v7554 = vlaneseq
    %v7555 = vshrl.u32 %v7554, 7
    %v7556 = vsub.s32 %v7305, %v7555
    %v7557 = vrot.slane %v6969, %v7556
    %v7558 = vsel %vm7310, %v7557, %v7553
    %v7559 = vlaneseq
    %v7560 = vshrl.u32 %v7559, 7
    %v7561 = vsub.s32 %v7312, %v7560
    %v7562 = vrot.slane %v6971, %v7561
    %v7563 = vsel %vm7317, %v7562, %v7558
    %v7564 = vlaneseq
    %v7565 = vshrl.u32 %v7564, 7
    %v7566 = vsub.s32 %v7319, %v7565
    %v7567 = vrot.slane %v6973, %v7566
    %v7568 = vsel %vm7324, %v7567, %v7563
    %v7569 = vlaneseq
    %v7570 = vshrl.u32 %v7569, 7
    %v7571 = vsub.s32 %v7326, %v7570
    %v7572 = vrot.slane %v6975, %v7571
    %v7573 = vsel %vm7331, %v7572, %v7568
    %v7574 = vlaneseq
    %v7575 = vshrl.u32 %v7574, 7
    %v7576 = vsub.s32 %v7333, %v7575
    %v7577 = vrot.slane %v6977, %v7576
    %v7578 = vsel %vm7338, %v7577, %v7573
    %v7579 = vlaneseq
    %v7580 = vshrl.u32 %v7579, 7
    %v7581 = vsub.s32 %v7340, %v7580
    %v7582 = vrot.slane %v6979, %v7581
    %v7583 = vsel %vm7345, %v7582, %v7578
    %v7584 = vlaneseq
    %v7585 = vshrl.u32 %v7584, 7
    %v7586 = vsub.s32 %v7237, %v7585
    %v7587 = vrot.slane %v6981, %v7586
    %v7588 = vlaneseq
    %v7589 = vshrl.u32 %v7588, 7
    %v7590 = vsub.s32 %v7242, %v7589
    %v7591 = vrot.slane %v6983, %v7590
    %v7592 = vsel %vm7247, %v7591, %v7587
    %v7593 = vlaneseq
    %v7594 = vshrl.u32 %v7593, 7
    %v7595 = vsub.s32 %v7249, %v7594
    %v7596 = vrot.slane %v6985, %v7595
    %v7597 = vsel %vm7254, %v7596, %v7592
    %v7598 = vlaneseq
    %v7599 = vshrl.u32 %v7598, 7
    %v7600 = vsub.s32 %v7256, %v7599
    %v7601 = vrot.slane %v6987, %v7600
    %v7602 = vsel %vm7261, %v7601, %v7597
    %v7603 = vlaneseq
    %v7604 = vshrl.u32 %v7603, 7
    %v7605 = vsub.s32 %v7263, %v7604
    %v7606 = vrot.slane %v6989, %v7605
    %v7607 = vsel %vm7268, %v7606, %v7602
    %v7608 = vlaneseq
    %v7609 = vshrl.u32 %v7608, 7
    %v7610 = vsub.s32 %v7270, %v7609
    %v7611 = vrot.slane %v6991, %v7610
    %v7612 = vsel %vm7275, %v7611, %v7607
    %v7613 = vlaneseq
    %v7614 = vshrl.u32 %v7613, 7
    %v7615 = vsub.s32 %v7277, %v7614
    %v7616 = vrot.slane %v6993, %v7615
    %v7617 = vsel %vm7282, %v7616, %v7612
    %v7618 = vlaneseq
    %v7619 = vshrl.u32 %v7618, 7
    %v7620 = vsub.s32 %v7284, %v7619
    %v7621 = vrot.slane %v6995, %v7620
    %v7622 = vsel %vm7289, %v7621, %v7617
    %v7623 = vlaneseq
    %v7624 = vshrl.u32 %v7623, 7
    %v7625 = vsub.s32 %v7291, %v7624
    %v7626 = vrot.slane %v6997, %v7625
    %v7627 = vsel %vm7296, %v7626, %v7622
    %v7628 = vlaneseq
    %v7629 = vshrl.u32 %v7628, 7
    %v7630 = vsub.s32 %v7298, %v7629
    %v7631 = vrot.slane %v6999, %v7630
    %v7632 = vsel %vm7303, %v7631, %v7627
    %v7633 = vlaneseq
    %v7634 = vshrl.u32 %v7633, 7
    %v7635 = vsub.s32 %v7305, %v7634
    %v7636 = vrot.slane %v7001, %v7635
    %v7637 = vsel %vm7310, %v7636, %v7632
    %v7638 = vlaneseq
    %v7639 = vshrl.u32 %v7638, 7
    %v7640 = vsub.s32 %v7312, %v7639
    %v7641 = vrot.slane %v7003, %v7640
    %v7642 = vsel %vm7317, %v7641, %v7637
    %v7643 = vlaneseq
    %v7644 = vshrl.u32 %v7643, 7
    %v7645 = vsub.s32 %v7319, %v7644
    %v7646 = vrot.slane %v7005, %v7645
    %v7647 = vsel %vm7324, %v7646, %v7642
    %v7648 = vlaneseq
    %v7649 = vshrl.u32 %v7648, 7
    %v7650 = vsub.s32 %v7326, %v7649
    %v7651 = vrot.slane %v7007, %v7650
    %v7652 = vsel %vm7331, %v7651, %v7647
    %v7653 = vlaneseq
    %v7654 = vshrl.u32 %v7653, 7
    %v7655 = vsub.s32 %v7333, %v7654
    %v7656 = vrot.slane %v7009, %v7655
    %v7657 = vsel %vm7338, %v7656, %v7652
    %v7658 = vlaneseq
    %v7659 = vshrl.u32 %v7658, 7
    %v7660 = vsub.s32 %v7340, %v7659
    %v7661 = vrot.slane %v7011, %v7660
    %v7662 = vsel %vm7345, %v7661, %v7657
    %v7663 = vlaneseq
    %v7664 = vshrl.u32 %v7663, 7
    %v7665 = vsub.s32 %v7237, %v7664
    %v7666 = vrot.slane %v7013, %v7665
    %v7667 = vlaneseq
    %v7668 = vshrl.u32 %v7667, 7
    %v7669 = vsub.s32 %v7242, %v7668
    %v7670 = vrot.slane %v7015, %v7669
    %v7671 = vsel %vm7247, %v7670, %v7666
    %v7672 = vlaneseq
    %v7673 = vshrl.u32 %v7672, 7
    %v7674 = vsub.s32 %v7249, %v7673
    %v7675 = vrot.slane %v7017, %v7674
    %v7676 = vsel %vm7254, %v7675, %v7671
    %v7677 = vlaneseq
    %v7678 = vshrl.u32 %v7677, 7
    %v7679 = vsub.s32 %v7256, %v7678
    %v7680 = vrot.slane %v7019, %v7679
    %v7681 = vsel %vm7261, %v7680, %v7676
    %v7682 = vlaneseq
    %v7683 = vshrl.u32 %v7682, 7
    %v7684 = vsub.s32 %v7263, %v7683
    %v7685 = vrot.slane %v7021, %v7684
    %v7686 = vsel %vm7268, %v7685, %v7681
    %v7687 = vlaneseq
    %v7688 = vshrl.u32 %v7687, 7
    %v7689 = vsub.s32 %v7270, %v7688
    %v7690 = vrot.slane %v7023, %v7689
    %v7691 = vsel %vm7275, %v7690, %v7686
    %v7692 = vlaneseq
    %v7693 = vshrl.u32 %v7692, 7
    %v7694 = vsub.s32 %v7277, %v7693
    %v7695 = vrot.slane %v7025, %v7694
    %v7696 = vsel %vm7282, %v7695, %v7691
    %v7697 = vlaneseq
    %v7698 = vshrl.u32 %v7697, 7
    %v7699 = vsub.s32 %v7284, %v7698
    %v7700 = vrot.slane %v7027, %v7699
    %v7701 = vsel %vm7289, %v7700, %v7696
    %v7702 = vlaneseq
    %v7703 = vshrl.u32 %v7702, 7
    %v7704 = vsub.s32 %v7291, %v7703
    %v7705 = vrot.slane %v7029, %v7704
    %v7706 = vsel %vm7296, %v7705, %v7701
    %v7707 = vlaneseq
    %v7708 = vshrl.u32 %v7707, 7
    %v7709 = vsub.s32 %v7298, %v7708
    %v7710 = vrot.slane %v7031, %v7709
    %v7711 = vsel %vm7303, %v7710, %v7706
    %v7712 = vlaneseq
    %v7713 = vshrl.u32 %v7712, 7
    %v7714 = vsub.s32 %v7305, %v7713
    %v7715 = vrot.slane %v7033, %v7714
    %v7716 = vsel %vm7310, %v7715, %v7711
    %v7717 = vlaneseq
    %v7718 = vshrl.u32 %v7717, 7
    %v7719 = vsub.s32 %v7312, %v7718
    %v7720 = vrot.slane %v7035, %v7719
    %v7721 = vsel %vm7317, %v7720, %v7716
    %v7722 = vlaneseq
    %v7723 = vshrl.u32 %v7722, 7
    %v7724 = vsub.s32 %v7319, %v7723
    %v7725 = vrot.slane %v7037, %v7724
    %v7726 = vsel %vm7324, %v7725, %v7721
    %v7727 = vlaneseq
    %v7728 = vshrl.u32 %v7727, 7
    %v7729 = vsub.s32 %v7326, %v7728
    %v7730 = vrot.slane %v7039, %v7729
    %v7731 = vsel %vm7331, %v7730, %v7726
    %v7732 = vlaneseq
    %v7733 = vshrl.u32 %v7732, 7
    %v7734 = vsub.s32 %v7333, %v7733
    %v7735 = vrot.slane %v7041, %v7734
    %v7736 = vsel %vm7338, %v7735, %v7731
    %v7737 = vlaneseq
    %v7738 = vshrl.u32 %v7737, 7
    %v7739 = vsub.s32 %v7340, %v7738
    %v7740 = vrot.slane %v7043, %v7739
    %v7741 = vsel %vm7345, %v7740, %v7736
    %v7742 = vlaneseq
    %v7743 = vshrl.u32 %v7742, 7
    %v7744 = vsub.s32 %v7237, %v7743
    %v7745 = vrot.slane %v7045, %v7744
    %v7746 = vlaneseq
    %v7747 = vshrl.u32 %v7746, 7
    %v7748 = vsub.s32 %v7242, %v7747
    %v7749 = vrot.slane %v7047, %v7748
    %v7750 = vsel %vm7247, %v7749, %v7745
    %v7751 = vlaneseq
    %v7752 = vshrl.u32 %v7751, 7
    %v7753 = vsub.s32 %v7249, %v7752
    %v7754 = vrot.slane %v7049, %v7753
    %v7755 = vsel %vm7254, %v7754, %v7750
    %v7756 = vlaneseq
    %v7757 = vshrl.u32 %v7756, 7
    %v7758 = vsub.s32 %v7256, %v7757
    %v7759 = vrot.slane %v7051, %v7758
    %v7760 = vsel %vm7261, %v7759, %v7755
    %v7761 = vlaneseq
    %v7762 = vshrl.u32 %v7761, 7
    %v7763 = vsub.s32 %v7263, %v7762
    %v7764 = vrot.slane %v7053, %v7763
    %v7765 = vsel %vm7268, %v7764, %v7760
    %v7766 = vlaneseq
    %v7767 = vshrl.u32 %v7766, 7
    %v7768 = vsub.s32 %v7270, %v7767
    %v7769 = vrot.slane %v7055, %v7768
    %v7770 = vsel %vm7275, %v7769, %v7765
    %v7771 = vlaneseq
    %v7772 = vshrl.u32 %v7771, 7
    %v7773 = vsub.s32 %v7277, %v7772
    %v7774 = vrot.slane %v7057, %v7773
    %v7775 = vsel %vm7282, %v7774, %v7770
    %v7776 = vlaneseq
    %v7777 = vshrl.u32 %v7776, 7
    %v7778 = vsub.s32 %v7284, %v7777
    %v7779 = vrot.slane %v7059, %v7778
    %v7780 = vsel %vm7289, %v7779, %v7775
    %v7781 = vlaneseq
    %v7782 = vshrl.u32 %v7781, 7
    %v7783 = vsub.s32 %v7291, %v7782
    %v7784 = vrot.slane %v7061, %v7783
    %v7785 = vsel %vm7296, %v7784, %v7780
    %v7786 = vlaneseq
    %v7787 = vshrl.u32 %v7786, 7
    %v7788 = vsub.s32 %v7298, %v7787
    %v7789 = vrot.slane %v7063, %v7788
    %v7790 = vsel %vm7303, %v7789, %v7785
    %v7791 = vlaneseq
    %v7792 = vshrl.u32 %v7791, 7
    %v7793 = vsub.s32 %v7305, %v7792
    %v7794 = vrot.slane %v7065, %v7793
    %v7795 = vsel %vm7310, %v7794, %v7790
    %v7796 = vlaneseq
    %v7797 = vshrl.u32 %v7796, 7
    %v7798 = vsub.s32 %v7312, %v7797
    %v7799 = vrot.slane %v7067, %v7798
    %v7800 = vsel %vm7317, %v7799, %v7795
    %v7801 = vlaneseq
    %v7802 = vshrl.u32 %v7801, 7
    %v7803 = vsub.s32 %v7319, %v7802
    %v7804 = vrot.slane %v7069, %v7803
    %v7805 = vsel %vm7324, %v7804, %v7800
    %v7806 = vlaneseq
    %v7807 = vshrl.u32 %v7806, 7
    %v7808 = vsub.s32 %v7326, %v7807
    %v7809 = vrot.slane %v7071, %v7808
    %v7810 = vsel %vm7331, %v7809, %v7805
    %v7811 = vlaneseq
    %v7812 = vshrl.u32 %v7811, 7
    %v7813 = vsub.s32 %v7333, %v7812
    %v7814 = vrot.slane %v7073, %v7813
    %v7815 = vsel %vm7338, %v7814, %v7810
    %v7816 = vlaneseq
    %v7817 = vshrl.u32 %v7816, 7
    %v7818 = vsub.s32 %v7340, %v7817
    %v7819 = vrot.slane %v7075, %v7818
    %v7820 = vsel %vm7345, %v7819, %v7815
    %v7821 = vlaneseq
    %v7822 = vshrl.u32 %v7821, 7
    %v7823 = vsub.s32 %v7237, %v7822
    %v7824 = vrot.slane %v7077, %v7823
    %v7825 = vlaneseq
    %v7826 = vshrl.u32 %v7825, 7
    %v7827 = vsub.s32 %v7242, %v7826
    %v7828 = vrot.slane %v7079, %v7827
    %v7829 = vsel %vm7247, %v7828, %v7824
    %v7830 = vlaneseq
    %v7831 = vshrl.u32 %v7830, 7
    %v7832 = vsub.s32 %v7249, %v7831
    %v7833 = vrot.slane %v7081, %v7832
    %v7834 = vsel %vm7254, %v7833, %v7829
    %v7835 = vlaneseq
    %v7836 = vshrl.u32 %v7835, 7
    %v7837 = vsub.s32 %v7256, %v7836
    %v7838 = vrot.slane %v7083, %v7837
    %v7839 = vsel %vm7261, %v7838, %v7834
    %v7840 = vlaneseq
    %v7841 = vshrl.u32 %v7840, 7
    %v7842 = vsub.s32 %v7263, %v7841
    %v7843 = vrot.slane %v7085, %v7842
    %v7844 = vsel %vm7268, %v7843, %v7839
    %v7845 = vlaneseq
    %v7846 = vshrl.u32 %v7845, 7
    %v7847 = vsub.s32 %v7270, %v7846
    %v7848 = vrot.slane %v7087, %v7847
    %v7849 = vsel %vm7275, %v7848, %v7844
    %v7850 = vlaneseq
    %v7851 = vshrl.u32 %v7850, 7
    %v7852 = vsub.s32 %v7277, %v7851
    %v7853 = vrot.slane %v7089, %v7852
    %v7854 = vsel %vm7282, %v7853, %v7849
    %v7855 = vlaneseq
    %v7856 = vshrl.u32 %v7855, 7
    %v7857 = vsub.s32 %v7284, %v7856
    %v7858 = vrot.slane %v7091, %v7857
    %v7859 = vsel %vm7289, %v7858, %v7854
    %v7860 = vlaneseq
    %v7861 = vshrl.u32 %v7860, 7
    %v7862 = vsub.s32 %v7291, %v7861
    %v7863 = vrot.slane %v7093, %v7862
    %v7864 = vsel %vm7296, %v7863, %v7859
    %v7865 = vlaneseq
    %v7866 = vshrl.u32 %v7865, 7
    %v7867 = vsub.s32 %v7298, %v7866
    %v7868 = vrot.slane %v7095, %v7867
    %v7869 = vsel %vm7303, %v7868, %v7864
    %v7870 = vlaneseq
    %v7871 = vshrl.u32 %v7870, 7
    %v7872 = vsub.s32 %v7305, %v7871
    %v7873 = vrot.slane %v7097, %v7872
    %v7874 = vsel %vm7310, %v7873, %v7869
    %v7875 = vlaneseq
    %v7876 = vshrl.u32 %v7875, 7
    %v7877 = vsub.s32 %v7312, %v7876
    %v7878 = vrot.slane %v7099, %v7877
    %v7879 = vsel %vm7317, %v7878, %v7874
    %v7880 = vlaneseq
    %v7881 = vshrl.u32 %v7880, 7
    %v7882 = vsub.s32 %v7319, %v7881
    %v7883 = vrot.slane %v7101, %v7882
    %v7884 = vsel %vm7324, %v7883, %v7879
    %v7885 = vlaneseq
    %v7886 = vshrl.u32 %v7885, 7
    %v7887 = vsub.s32 %v7326, %v7886
    %v7888 = vrot.slane %v7103, %v7887
    %v7889 = vsel %vm7331, %v7888, %v7884
    %v7890 = vlaneseq
    %v7891 = vshrl.u32 %v7890, 7
    %v7892 = vsub.s32 %v7333, %v7891
    %v7893 = vrot.slane %v7105, %v7892
    %v7894 = vsel %vm7338, %v7893, %v7889
    %v7895 = vlaneseq
    %v7896 = vshrl.u32 %v7895, 7
    %v7897 = vsub.s32 %v7340, %v7896
    %v7898 = vrot.slane %v7107, %v7897
    %v7899 = vsel %vm7345, %v7898, %v7894
    %vm7900 = vcmask 1041409
    %v7901 = vsel %vm7900, %v7425, %v7346
    %vm7902 = vcmask 1042434
    %v7903 = vsel %vm7902, %v7504, %v7901
    %vm7904 = vcmask 1043459
    %v7905 = vsel %vm7904, %v7583, %v7903
    %vm7906 = vcmask 1044484
    %v7907 = vsel %vm7906, %v7662, %v7905
    %vm7908 = vcmask 1045509
    %v7909 = vsel %vm7908, %v7741, %v7907
    %vm7910 = vcmask 1046534
    %v7911 = vsel %vm7910, %v7820, %v7909
    %vm7912 = vcmask 1047559
    %v7913 = vsel %vm7912, %v7899, %v7911
    %7915 = vst [vmem:[#allocation12] sm:$0xff] %v7913
    // Predicated region
    $region66: #{tpu_custom_call.1} parent=1 // pred_check
      _
    $region67: #{tpu_custom_call.1} parent=1 // pred_check_branch
      %7917 = sbr.rel (0) target = $region69
    $region68: #{tpu_custom_call.1} parent=1 // pred_region
      %s7919 = ssub.s32 128, 128
      %7920 = vsyncadd [#allocation5], %s7919
      %s7922 = sshll.u32 [#allocation12], 4
      %s7923 = int_to_ptr.vmem [resolvable:$true] %s7922
      %7925 = dma.vmem_to_hbm [thread:$0]  %s7923, 128, %s11, [#allocation5]
    $region69: #{tpu_custom_call.1} parent=1 // pred_fallthru
      _
    // Predicated region
    $region70: #{tpu_custom_call.1} parent=1 // pred_check
      _
    $region71: #{tpu_custom_call.1} parent=1 // pred_check_branch
      %7927 = sbr.rel (0) target = $region73
    $region72: #{tpu_custom_call.1} parent=1 // pred_region
      %7928 = dma.done [#allocation5], 128
    $region73: #{tpu_custom_call.1} parent=1 // pred_fallthru
      _
    %7929 = vsyncpa [#allocation4], 1
    %7930 = vsyncpa [#allocation7], 1
    %7931 = vsyncpa [#allocation10], 1
    %7932 = vsyncpa [#allocation5], 1

</llo_original>
